<compile_context>
chip_gen: v7x
topology: tpu7x:2x2x1
jax: 0.10.0
libtpu: 0.0.40
codegen_flags: <defaults>
</compile_context>

<pallas_src>
import functools

import jax
import jax.numpy as jnp
from jax import lax
from jax.experimental import pallas as pl
from jax.experimental.pallas import tpu as pltpu

_LANE = 128
_EPS = 1e-5
_ACT_DTYPE = jnp.bfloat16          # inter-layer / pre-norm storage dtype


def _round_up(x, m):
    return ((x + m - 1) // m) * m


def _get_vmem_limits():
    """Per-generation VMEM limit and double-buffered working-set budget."""
    cap = None
    try:
        info = pltpu.get_tpu_info()
        cap = getattr(info, "vmem_capacity_bytes", None)
    except Exception:
        cap = None
    if not cap:
        cap = 64 * 1024 * 1024                    # conservative (v7x per-core)
    limit = max(min(int(cap) - 8 * 1024 * 1024, 112 * 1024 * 1024),
                32 * 1024 * 1024)
    budget = int(limit * 0.75)
    return limit, budget


_VMEM_LIMIT, _VMEM_BUDGET = _get_vmem_limits()


def _cparams(semantics):
    return pltpu.CompilerParams(dimension_semantics=semantics,
                                vmem_limit_bytes=_VMEM_LIMIT)


def _choose_tp(P, per_row_bytes, resident_bytes):
    """Largest multiple-of-8 divisor of P whose double-buffered per-tile
    working set (2 * TP * per_row_bytes) plus resident_bytes fits the budget.
    Falls back to the smallest workable divisor instead of blindly returning P."""
    avail = _VMEM_BUDGET - resident_bytes
    max_tp = max(avail // max(2 * per_row_bytes, 1), 8)
    best = None
    tp = 8
    while tp <= P:
        if P % tp == 0 and tp <= max_tp:
            best = tp
        tp += 8
    if best is None:
        tp = 8
        while tp <= P:                 # smallest multiple-of-8 divisor
            if P % tp == 0:
                best = tp
                break
            tp += 8
        if best is None:
            best = P                   # no multiple-of-8 divisor exists at all
    return best


# ----------------------------------------------------------------------------
# Kernels
# ----------------------------------------------------------------------------
def _make_matmul_act_kernel(do_relu, do_tanh):
    """(patches @ W + b) [relu|tanh] for layers without InstanceNorm."""
    def kernel(p_ref, w_ref, b_ref, o_ref):
        y = jnp.dot(p_ref[0], w_ref[...], preferred_element_type=jnp.float32)
        y = y + b_ref[...]
        if do_relu:
            y = jnp.maximum(y, 0.0)
        if do_tanh:
            y = jnp.tanh(y)
        o_ref[0] = y.astype(o_ref.dtype)
    return kernel


def _make_fused_convnorm_kernel(TP, n_tiles, inv_count, do_relu, has_residual,
                                groups, cp, eps=_EPS):
    """Single-pass conv(matmul) + InstanceNorm (+residual) (+ReLU).

    The output block (1, P, groups*cp) is resident in VMEM across the
    'arbitrary' P grid axis; pre-norm activations are staged there, per-column
    sum / sum-of-squares accumulate in VMEM scratch, and the last P step
    normalizes the resident block in place (group-phases share statistics).
    Bias is intentionally omitted: InstanceNorm (affine=False) cancels it."""
    def kernel(*refs):
        if has_residual:
            p_ref, w_ref, r_ref, o_ref, sum_ref, sq_ref = refs
        else:
            p_ref, w_ref, o_ref, sum_ref, sq_ref = refs
        p = pl.program_id(1)

        z = jnp.dot(p_ref[0], w_ref[...], preferred_element_type=jnp.float32)
        start = pl.multiple_of(p * TP, TP)
        o_ref[0, pl.ds(start, TP), :] = z.astype(o_ref.dtype)

        @pl.when(p == 0)
        def _():
            sum_ref[...] = jnp.zeros_like(sum_ref)
            sq_ref[...] = jnp.zeros_like(sq_ref)

        sum_ref[...] += jnp.sum(z, axis=0, keepdims=True)
        sq_ref[...] += jnp.sum(z * z, axis=0, keepdims=True)

        @pl.when(p == n_tiles - 1)
        def _():
            s = sum_ref[...]
            q = sq_ref[...]
            if groups > 1:
                s_c = s[:, 0:cp]
                q_c = q[:, 0:cp]
                for g in range(1, groups):
                    s_c = s_c + s[:, g * cp:(g + 1) * cp]
                    q_c = q_c + q[:, g * cp:(g + 1) * cp]
                s = jnp.concatenate([s_c] * groups, axis=1)
                q = jnp.concatenate([q_c] * groups, axis=1)
            mean = s * inv_count
            var = jnp.maximum(q * inv_count - mean * mean, 0.0)
            inv = lax.rsqrt(var + eps)

            def norm_tile(t, carry):
                off = pl.multiple_of(t * TP, TP)
                yt = o_ref[0, pl.ds(off, TP), :].astype(jnp.float32)
                yt = (yt - mean) * inv
                if has_residual:
                    yt = yt + r_ref[0, pl.ds(off, TP), :].astype(jnp.float32)
                if do_relu:
                    yt = jnp.maximum(yt, 0.0)
                o_ref[0, pl.ds(off, TP), :] = yt.astype(o_ref.dtype)
                return carry

            lax.fori_loop(0, n_tiles, norm_tile, 0)
    return kernel


def _matmul_stats_kernel(p_ref, w_ref, y_ref, sum_ref, sq_ref):
    """Two-pass fallback, pass 1: matmul per P-tile (bf16 pre-norm out) and
    per-column sum / sumsq accumulated into resident output blocks."""
    p = pl.program_id(1)
    z = jnp.dot(p_ref[0], w_ref[...], preferred_element_type=jnp.float32)
    y_ref[0] = z.astype(y_ref.dtype)

    @pl.when(p == 0)
    def _():
        sum_ref[...] = jnp.zeros_like(sum_ref)
        sq_ref[...] = jnp.zeros_like(sq_ref)

    sum_ref[0] += jnp.sum(z, axis=0, keepdims=True)
    sq_ref[0] += jnp.sum(z * z, axis=0, keepdims=True)


def _make_norm_finalize_kernel(inv_count, do_relu, has_residual, groups, cp,
                               eps=_EPS):
    """Two-pass fallback, pass 2: normalize (+residual) (+ReLU)."""
    def kernel(*refs):
        if has_residual:
            y_ref, sum_ref, sq_ref, r_ref, o_ref = refs
        else:
            y_ref, sum_ref, sq_ref, o_ref = refs
        s = sum_ref[0]
        q = sq_ref[0]
        if groups > 1:
            s_c = s[:, 0:cp]
            q_c = q[:, 0:cp]
            for g in range(1, groups):
                s_c = s_c + s[:, g * cp:(g + 1) * cp]
                q_c = q_c + q[:, g * cp:(g + 1) * cp]
            s = jnp.concatenate([s_c] * groups, axis=1)
            q = jnp.concatenate([q_c] * groups, axis=1)
        mean = s * inv_count
        var = jnp.maximum(q * inv_count - mean * mean, 0.0)
        inv = lax.rsqrt(var + eps)
        y = (y_ref[0].astype(jnp.float32) - mean) * inv
        if has_residual:
            y = y + r_ref[0].astype(jnp.float32)
        if do_relu:
            y = jnp.maximum(y, 0.0)
        o_ref[0] = y.astype(o_ref.dtype)
    return kernel


# ----------------------------------------------------------------------------
# Pallas wrappers
# ----------------------------------------------------------------------------
def fused_conv_act(patches, w_mat, bias, *, do_relu=False, do_tanh=False,
                   out_dtype=_ACT_DTYPE):
    """No-norm path: (patches @ W + b) [act].  Returns ((N,P,Cp), Cp)."""
    N, P, K = patches.shape
    C = w_mat.shape[1]
    Kp = _round_up(K, _LANE)
    Cp = _round_up(C, _LANE)
    patches_p = jnp.pad(patches, ((0, 0), (0, 0), (0, Kp - K))).astype(jnp.bfloat16)
    w_p = jnp.pad(w_mat, ((0, Kp - K), (0, Cp - C))).astype(jnp.bfloat16)
    b_p = jnp.pad(bias, (0, Cp - C)).reshape(1, Cp).astype(jnp.float32)

    out_bytes = jnp.dtype(out_dtype).itemsize
    TP = _choose_tp(P, Kp * 2 + Cp * out_bytes, Kp * Cp * 2 + Cp * 4)

    out = pl.pallas_call(
        _make_matmul_act_kernel(do_relu, do_tanh),
        out_shape=jax.ShapeDtypeStruct((N, P, Cp), out_dtype),
        grid=(N, P // TP),
        in_specs=[
            pl.BlockSpec((1, TP, Kp), lambda n, p: (n, p, 0)),
            pl.BlockSpec((Kp, Cp), lambda n, p: (0, 0)),     # resident weights
            pl.BlockSpec((1, Cp), lambda n, p: (0, 0)),
        ],
        out_specs=pl.BlockSpec((1, TP, Cp), lambda n, p: (n, p, 0)),
        compiler_params=_cparams(("parallel", "parallel")),
    )(patches_p, w_p, b_p)
    return out, Cp


def fused_conv_instnorm(patches, w_groups, *, do_relu, residual=None):
    """InstanceNorm(conv(patches)) [+residual] [ReLU].

    patches : (N, P, K) im2col patches.
    w_groups: list of G matrices (K, C).  G>1 = sub-pixel phases of the same C
              output channels sharing per-channel statistics (count = G*P).
    residual: optional (N, P, C) activation added after normalization.
    Returns ((N, P, G*Cp) in _ACT_DTYPE, Cp); caller slices channel blocks.
    Bias is omitted (exactly cancelled by affine-free InstanceNorm)."""
    G = len(w_groups)
    N, P, K = patches.shape
    C = w_groups[0].shape[1]
    Kp = _round_up(K, _LANE)
    Cp = _round_up(C, _LANE)
    Wout = G * Cp
    has_res = residual is not None
    assert not (G > 1 and has_res)

    patches_p = jnp.pad(patches, ((0, 0), (0, 0), (0, Kp - K))).astype(jnp.bfloat16)
    w_p = jnp.concatenate(
        [jnp.pad(w, ((0, Kp - K), (0, Cp - C))) for w in w_groups],
        axis=1).astype(jnp.bfloat16)
    res_p = None
    if has_res:
        res_p = jnp.pad(residual, ((0, 0), (0, 0), (0, Cp - C))).astype(jnp.bfloat16)

    inv_count = 1.0 / float(G * P)
    act_bytes = jnp.dtype(_ACT_DTYPE).itemsize

    # ---- single-pass (preferred): pre-norm block stays resident in VMEM ----
    resident = (P * Wout * act_bytes                       # resident output
                + (P * Cp * act_bytes if has_res else 0)   # resident residual
                + Kp * Wout * 2                            # resident weights
                + 2 * Wout * 4)                            # stats scratch
    min_tp = 8 if P >= 8 else P
    single_pass = resident + 2 * min_tp * Kp * 2 <= _VMEM_BUDGET

    if single_pass:
        TP = _choose_tp(P, Kp * 2, resident)
        n_tiles = P // TP
        in_arrays = [patches_p, w_p]
        in_specs = [
            pl.BlockSpec((1, TP, Kp), lambda n, p: (n, p, 0)),
            pl.BlockSpec((Kp, Wout), lambda n, p: (0, 0)),        # resident
        ]
        if has_res:
            in_arrays.append(res_p)
            in_specs.append(pl.BlockSpec((1, P, Cp), lambda n, p: (n, 0, 0)))
        out = pl.pallas_call(
            _make_fused_convnorm_kernel(TP, n_tiles, inv_count, do_relu,
                                        has_res, G, Cp),
            out_shape=jax.ShapeDtypeStruct((N, P, Wout), _ACT_DTYPE),
            grid=(N, n_tiles),
            in_specs=in_specs,
            out_specs=pl.BlockSpec((1, P, Wout), lambda n, p: (n, 0, 0)),
            scratch_shapes=[pltpu.VMEM((1, Wout), jnp.float32),
                            pltpu.VMEM((1, Wout), jnp.float32)],
            compiler_params=_cparams(("parallel", "arbitrary")),
        )(*in_arrays)
        return out, Cp

    # ---- two-pass fallback (pre-norm tensor too large for VMEM residency) ----
    TP1 = _choose_tp(P, Kp * 2 + Wout * act_bytes, Kp * Wout * 2 + 2 * Wout * 4)
    y, s_sum, s_sq = pl.pallas_call(
        _matmul_stats_kernel,
        out_shape=(
            jax.ShapeDtypeStruct((N, P, Wout), _ACT_DTYPE),
            jax.ShapeDtypeStruct((N, 1, Wout), jnp.float32),
            jax.ShapeDtypeStruct((N, 1, Wout), jnp.float32),
        ),
        grid=(N, P // TP1),
        in_specs=[
            pl.BlockSpec((1, TP1, Kp), lambda n, p: (n, p, 0)),
            pl.BlockSpec((Kp, Wout), lambda n, p: (0, 0)),
        ],
        out_specs=(
            pl.BlockSpec((1, TP1, Wout), lambda n, p: (n, p, 0)),
            pl.BlockSpec((1, 1, Wout), lambda n, p: (n, 0, 0)),   # resident
            pl.BlockSpec((1, 1, Wout), lambda n, p: (n, 0, 0)),   # resident
        ),
        compiler_params=_cparams(("parallel", "arbitrary")),
    )(patches_p, w_p)

    row_bytes = Wout * (2 * act_bytes) + (Cp * act_bytes if has_res else 0)
    TP2 = _choose_tp(P, row_bytes, 2 * Wout * 4)
    in_arrays = [y, s_sum, s_sq]
    in_specs = [
        pl.BlockSpec((1, TP2, Wout), lambda n, p: (n, p, 0)),
        pl.BlockSpec((1, 1, Wout), lambda n, p: (n, 0, 0)),
        pl.BlockSpec((1, 1, Wout), lambda n, p: (n, 0, 0)),
    ]
    if has_res:
        in_arrays.append(res_p)
        in_specs.append(pl.BlockSpec((1, TP2, Cp), lambda n, p: (n, p, 0)))
    out = pl.pallas_call(
        _make_norm_finalize_kernel(inv_count, do_relu, has_res, G, Cp),
        out_shape=jax.ShapeDtypeStruct((N, P, Wout), _ACT_DTYPE),
        grid=(N, P // TP2),
        in_specs=in_specs,
        out_specs=pl.BlockSpec((1, TP2, Wout), lambda n, p: (n, p, 0)),
        compiler_params=_cparams(("parallel", "parallel")),
    )(*in_arrays)
    return out, Cp


# ----------------------------------------------------------------------------
# Glue: padding / im2col / weight reshaping / pixel shuffle (layout only)
# ----------------------------------------------------------------------------
def _im2col(x, kh, kw, stride):
    """x: (N, H, W, C) already padded -> (N, Ho*Wo, kh*kw*C), Ho, Wo."""
    N, H, W, C = x.shape
    Ho = (H - kh) // stride + 1
    Wo = (W - kw) // stride + 1
    cols = []
    for i in range(kh):
        for j in range(kw):
            cols.append(
                x[:, i:i + (Ho - 1) * stride + 1:stride,
                     j:j + (Wo - 1) * stride + 1:stride, :])
    patches = jnp.stack(cols, axis=3)                 # (N, Ho, Wo, kh*kw, C)
    return patches.reshape(N, Ho * Wo, kh * kw * C), Ho, Wo


def _weight_to_mat(w):
    """PyTorch conv weight (Cout, Cin, kh, kw) -> (kh*kw*Cin, Cout)."""
    cout, cin, kh, kw = w.shape
    return jnp.transpose(w, (2, 3, 1, 0)).reshape(kh * kw * cin, cout)


def _convT_subpixel_weights(w):
    """PyTorch ConvTranspose2d weight (Cin, Cout, 3, 3) for stride 2, pad 1,
    output_padding 1 -> 4 phase matrices [(2*2*Cin, Cout)] consumed against
    2x2 im2col patches of the input zero-padded by 1 at bottom/right.
    Phase order is (di, dj) row-major:  out[2i+di, 2j+dj] = phase[di*2+dj][i, j]."""
    cin, cout, kh, kw = w.shape
    assert kh == 3 and kw == 3
    # equivalent forward-conv weight: w_eq[cout, cin, a, b] = w[cin, cout, 2-a, 2-b]
    w_eq = jnp.transpose(w[:, :, ::-1, ::-1], (1, 0, 2, 3))
    mats = []
    for di in (0, 1):
        for dj in (0, 1):
            m = jnp.zeros((2, 2, cin, cout), w.dtype)
            for u in (0, 1):
                for v in (0, 1):
                    if (di == 0 and u == 1) or (dj == 0 and v == 1):
                        continue
                    a = 1 if di == 0 else 2 * u
                    b = 1 if dj == 0 else 2 * v
                    m = m.at[u, v].set(jnp.transpose(w_eq[:, :, a, b], (1, 0)))
            mats.append(m.reshape(2 * 2 * cin, cout))
    return mats


def conv2d_reflect(x, w, b, stride, pad, *, do_norm, do_relu, do_tanh=False,
                   residual=None, out_dtype=_ACT_DTYPE):
    """x: (N,H,W,Cin) NHWC; w: PyTorch Conv2d weight (Cout,Cin,kh,kw)."""
    N = x.shape[0]
    kh, kw = w.shape[2], w.shape[3]
    c_out = w.shape[0]
    xp = jnp.pad(x, ((0, 0), (pad, pad), (pad, pad), (0, 0)), mode="reflect")
    patches, Ho, Wo = _im2col(xp, kh, kw, stride)
    w_mat = _weight_to_mat(w)
    if do_norm:
        res_flat = None
        if residual is not None:
            res_flat = residual.reshape(N, Ho * Wo, residual.shape[3])
        out, _ = fused_conv_instnorm(patches, [w_mat], do_relu=do_relu,
                                     residual=res_flat)
    else:
        out, _ = fused_conv_act(patches, w_mat, b, do_relu=do_relu,
                                do_tanh=do_tanh, out_dtype=out_dtype)
    return out[..., :c_out].reshape(N, Ho, Wo, c_out)


def conv_transpose2d_subpixel(x, w, *, do_relu):
    """ConvTranspose2d(k=3, s=2, p=1, output_padding=1) + InstanceNorm + ReLU
    via stride^2 sub-pixel decomposition (bias cancelled by InstanceNorm)."""
    N, H, W, _ = x.shape
    c_out = w.shape[1]
    xp = jnp.pad(x, ((0, 0), (0, 1), (0, 1), (0, 0)))      # zero bottom/right
    patches, Ho, Wo = _im2col(xp, 2, 2, 1)                  # Ho=H, Wo=W
    w_groups = _convT_subpixel_weights(w)
    out, Cp = fused_conv_instnorm(patches, w_groups, do_relu=do_relu)
    # (N, H*W, 4*Cp) -> pixel shuffle -> (N, 2H, 2W, c_out)
    phases = [out[:, :, g * Cp:g * Cp + c_out] for g in range(4)]
    t = jnp.stack(phases, axis=2).reshape(N, H, W, 2, 2, c_out)
    t = jnp.transpose(t, (0, 1, 3, 2, 4, 5))
    return t.reshape(N, 2 * H, 2 * W, c_out)


# ----------------------------------------------------------------------------
# Generator: parameter init + forward
# ----------------------------------------------------------------------------
def init_generator_params(key, img_channels, num_features, num_residuals):
    params = {}

    def conv_init(key, cout, cin, k):
        kw_, kb_ = jax.random.split(key)
        fan_in = cin * k * k
        bound = 1.0 / jnp.sqrt(fan_in)
        w = jax.random.uniform(kw_, (cout, cin, k, k), jnp.float32, -bound, bound)
        b = jax.random.uniform(kb_, (cout,), jnp.float32, -bound, bound)
        return w, b

    def convT_init(key, cin, cout, k):
        kw_, kb_ = jax.random.split(key)
        fan_in = cin * k * k
        bound = 1.0 / jnp.sqrt(fan_in)
        w = jax.random.uniform(kw_, (cin, cout, k, k), jnp.float32, -bound, bound)
        b = jax.random.uniform(kb_, (cout,), jnp.float32, -bound, bound)
        return w, b

    nf = num_features
    keys = jax.random.split(key, 6 + 2 * num_residuals)
    ki = iter(keys)

    params["initial_w"], params["initial_b"] = conv_init(next(ki), nf, img_channels, 7)
    params["down0_w"], params["down0_b"] = conv_init(next(ki), nf * 2, nf, 3)
    params["down1_w"], params["down1_b"] = conv_init(next(ki), nf * 4, nf * 2, 3)
    for i in range(num_residuals):
        params[f"res{i}_w1"], params[f"res{i}_b1"] = conv_init(next(ki), nf * 4, nf * 4, 3)
        params[f"res{i}_w2"], params[f"res{i}_b2"] = conv_init(next(ki), nf * 4, nf * 4, 3)
    params["up0_w"], params["up0_b"] = convT_init(next(ki), nf * 4, nf * 2, 3)
    params["up1_w"], params["up1_b"] = convT_init(next(ki), nf * 2, nf, 3)
    params["last_w"], params["last_b"] = conv_init(next(ki), img_channels, nf, 7)
    return params


def generator_forward(params, x_nchw, num_residuals):
    # NCHW (PyTorch) -> NHWC (kernel layout)
    x = jnp.transpose(x_nchw, (0, 2, 3, 1)).astype(jnp.float32)

    # initial: bare Conv2d (reflect pad 3), bias, no norm / act
    x = conv2d_reflect(x, params["initial_w"], params["initial_b"], 1, 3,
                       do_norm=False, do_relu=False)

    # down blocks: conv s2 + InstanceNorm + ReLU  (bias cancelled by IN)
    x = conv2d_reflect(x, params["down0_w"], None, 2, 1, do_norm=True, do_relu=True)
    x = conv2d_reflect(x, params["down1_w"], None, 2, 1, do_norm=True, do_relu=True)

    # residual blocks: x + IN(conv(ReLU(IN(conv(x)))))
    for i in range(num_residuals):
        y = conv2d_reflect(x, params[f"res{i}_w1"], None, 1, 1,
                           do_norm=True, do_relu=True)
        x = conv2d_reflect(y, params[f"res{i}_w2"], None, 1, 1,
                           do_norm=True, do_relu=False, residual=x)

    # up blocks: ConvTranspose2d s2 + InstanceNorm + ReLU (sub-pixel decomposed)
    x = conv_transpose2d_subpixel(x, params["up0_w"], do_relu=True)
    x = conv_transpose2d_subpixel(x, params["up1_w"], do_relu=True)

    # last: Conv2d (reflect pad 3) + tanh (fused into the kernel), f32 output
    x = conv2d_reflect(x, params["last_w"], params["last_b"], 1, 3,
                       do_norm=False, do_relu=False, do_tanh=True,
                       out_dtype=jnp.float32)

    # NHWC -> NCHW
    return jnp.transpose(x, (0, 3, 1, 2))


if __name__ == "__main__":
    IMG_CHANNELS = 3
    NUM_FEATURES = 8
    NUM_RESIDUALS = 2
    BATCH, SPATIAL = 2, 16

    key = jax.random.PRNGKey(0)
    k_params, k_x = jax.random.split(key)

    params = init_generator_params(k_params, IMG_CHANNELS, NUM_FEATURES, NUM_RESIDUALS)
    x = jax.random.normal(k_x, (BATCH, IMG_CHANNELS, SPATIAL, SPATIAL), jnp.float32)

    fwd = jax.jit(functools.partial(generator_forward, num_residuals=NUM_RESIDUALS))
    out = fwd(params, x)
    jax.block_until_ready(out)

    assert out.shape == (BATCH, IMG_CHANNELS, SPATIAL, SPATIAL), out.shape
    assert bool(jnp.all(jnp.isfinite(out)))
    assert bool(jnp.all(jnp.abs(out) <= 1.0 + 1e-6))  # tanh output range
    print("KERNEL_OK")
</pallas_src>

<mosaic_0001>
module attributes {stable_mosaic.version = 11 : i64} {
  func.func @kernel(%arg0: i32, %arg1: i32, %arg2: memref<1x256x256xbf16, #tpu.memory_space<vmem>>, %arg3: memref<256x128xbf16, #tpu.memory_space<vmem>>, %arg4: memref<1x128xf32, #tpu.memory_space<vmem>>, %arg5: memref<1x256x128xbf16, #tpu.memory_space<vmem>>) attributes {dimension_semantics = [#tpu.dimension_semantics<parallel>, #tpu.dimension_semantics<parallel>], iteration_bounds = array<i64: 2, 1>, scalar_prefetch = 0 : i64, scratch_operands = 0 : i64, tpu.core_type = #tpu.core_type<tc>, window_params = [{transform_indices = @transform_0, window_bounds = array<i64: 1, 256, 256>}, {pipeline_mode = #tpu.pipeline_mode<synchronous>, transform_indices = @transform_1, window_bounds = array<i64: 256, 128>}, {pipeline_mode = #tpu.pipeline_mode<synchronous>, transform_indices = @transform_2, window_bounds = array<i64: 1, 128>}, {transform_indices = @transform_3, window_bounds = array<i64: 1, 256, 128>}]} {
    %c0 = arith.constant 0 : index
    %c0_0 = arith.constant 0 : index
    %c0_1 = arith.constant 0 : index
    %0 = vector.load %arg2[%c0, %c0_0, %c0_1] : memref<1x256x256xbf16, #tpu.memory_space<vmem>>, vector<1x256x256xbf16>
    %1 = vector.shape_cast %0 : vector<1x256x256xbf16> to vector<256x256xbf16>
    %c0_2 = arith.constant 0 : index
    %c0_3 = arith.constant 0 : index
    %2 = vector.load %arg3[%c0_2, %c0_3] : memref<256x128xbf16, #tpu.memory_space<vmem>>, vector<256x128xbf16>
    %cst = arith.constant dense<0.000000e+00> : vector<256x128xf32>
    %3 = tpu.matmul %1, %2, %cst {dimension_numbers = #tpu.dot_dimension_numbers<[1], [0], [0], [1], [0, 0, 1, 1], [], []>} : vector<256x256xbf16>, vector<256x128xbf16>, vector<256x128xf32> -> vector<256x128xf32>
    %c0_4 = arith.constant 0 : index
    %c0_5 = arith.constant 0 : index
    %4 = vector.load %arg4[%c0_4, %c0_5] : memref<1x128xf32, #tpu.memory_space<vmem>>, vector<1x128xf32>
    %5 = vector.broadcast %4 : vector<1x128xf32> to vector<256x128xf32>
    %6 = arith.addf %3, %5 : vector<256x128xf32>
    %7 = arith.truncf %6 : vector<256x128xf32> to vector<256x128xbf16>
    %c0_6 = arith.constant 0 : index
    %c0_7 = arith.constant 0 : index
    %c0_8 = arith.constant 0 : index
    %8 = vector.load %arg5[%c0_6, %c0_7, %c0_8] : memref<1x256x128xbf16, #tpu.memory_space<vmem>>, vector<1x256x128xbf16>
    %9 = vector.shape_cast %8 : vector<1x256x128xbf16> to vector<256x128xbf16>
    %10 = vector.shape_cast %7 : vector<256x128xbf16> to vector<1x256x128xbf16>
    tpu.vector_store %arg5[%c0_6, %c0_7, %c0_8], %10 {strides = array<i32>} : memref<1x256x128xbf16, #tpu.memory_space<vmem>>, vector<1x256x128xbf16>,
    return
  }
  func.func @transform_0(%arg0: i32, %arg1: i32) -> (i32, i32, i32) {
    %c0_i32 = arith.constant 0 : i32
    %c0_i32_0 = arith.constant 0 : i32
    return %arg0, %arg1, %c0_i32 : i32, i32, i32
  }
  func.func @transform_1(%arg0: i32, %arg1: i32) -> (i32, i32) {
    %c0_i32 = arith.constant 0 : i32
    %c0_i32_0 = arith.constant 0 : i32
    %c0_i32_1 = arith.constant 0 : i32
    return %c0_i32, %c0_i32_0 : i32, i32
  }
  func.func @transform_2(%arg0: i32, %arg1: i32) -> (i32, i32) {
    %c0_i32 = arith.constant 0 : i32
    %c0_i32_0 = arith.constant 0 : i32
    %c0_i32_1 = arith.constant 0 : i32
    return %c0_i32, %c0_i32_0 : i32, i32
  }
  func.func @transform_3(%arg0: i32, %arg1: i32) -> (i32, i32, i32) {
    %c0_i32 = arith.constant 0 : i32
    %c0_i32_0 = arith.constant 0 : i32
    return %arg0, %arg1, %c0_i32 : i32, i32, i32
  }
}

module attributes {stable_mosaic.version = 11 : i64} {
  func.func @kernel(%arg0: i32, %arg1: i32, %arg2: memref<1x64x128xbf16, #tpu.memory_space<vmem>>, %arg3: memref<128x128xbf16, #tpu.memory_space<vmem>>, %arg4: memref<1x64x128xbf16, #tpu.memory_space<vmem>>, %arg5: memref<1x128xf32, #tpu.memory_space<vmem>>, %arg6: memref<1x128xf32, #tpu.memory_space<vmem>>) attributes {dimension_semantics = [#tpu.dimension_semantics<parallel>, #tpu.dimension_semantics<arbitrary>], iteration_bounds = array<i64: 2, 1>, scalar_prefetch = 0 : i64, scratch_operands = 2 : i64, tpu.core_type = #tpu.core_type<tc>, window_params = [{transform_indices = @transform_0, window_bounds = array<i64: 1, 64, 128>}, {pipeline_mode = #tpu.pipeline_mode<synchronous>, transform_indices = @transform_1, window_bounds = array<i64: 128, 128>}, {transform_indices = @transform_2, window_bounds = array<i64: 1, 64, 128>}]} {
    %c0 = arith.constant 0 : index
    %c0_0 = arith.constant 0 : index
    %c0_1 = arith.constant 0 : index
    %0 = vector.load %arg2[%c0, %c0_0, %c0_1] : memref<1x64x128xbf16, #tpu.memory_space<vmem>>, vector<1x64x128xbf16>
    %1 = vector.shape_cast %0 : vector<1x64x128xbf16> to vector<64x128xbf16>
    %c0_2 = arith.constant 0 : index
    %c0_3 = arith.constant 0 : index
    %2 = vector.load %arg3[%c0_2, %c0_3] : memref<128x128xbf16, #tpu.memory_space<vmem>>, vector<128x128xbf16>
    %cst = arith.constant dense<0.000000e+00> : vector<64x128xf32>
    %3 = tpu.matmul %1, %2, %cst {dimension_numbers = #tpu.dot_dimension_numbers<[1], [0], [0], [1], [0, 0, 1, 1], [], []>} : vector<64x128xbf16>, vector<128x128xbf16>, vector<64x128xf32> -> vector<64x128xf32>
    %c64_i32 = arith.constant 64 : i32
    %4 = arith.muli %arg1, %c64_i32 : i32
    %5 = tpu.assume_multiple %4, 64 : i32
    %6 = arith.truncf %3 : vector<64x128xf32> to vector<64x128xbf16>
    %c0_4 = arith.constant 0 : index
    %7 = arith.index_cast %5 : i32 to index
    %c0_5 = arith.constant 0 : index
    %8 = vector.load %arg4[%c0_4, %7, %c0_5] : memref<1x64x128xbf16, #tpu.memory_space<vmem>>, vector<1x64x128xbf16>
    %9 = vector.shape_cast %8 : vector<1x64x128xbf16> to vector<64x128xbf16>
    %10 = vector.shape_cast %6 : vector<64x128xbf16> to vector<1x64x128xbf16>
    tpu.vector_store %arg4[%c0_4, %7, %c0_5], %10 {strides = array<i32>} : memref<1x64x128xbf16, #tpu.memory_space<vmem>>, vector<1x64x128xbf16>,
    %c0_i32 = arith.constant 0 : i32
    %11 = arith.cmpi eq, %arg1, %c0_i32 : i32
    %12 = arith.extui %11 : i1 to i32
    %c0_i32_6 = arith.constant 0 : i32
    %13 = arith.cmpi ne, %12, %c0_i32_6 : i32
    scf.if %13 {
      %cst_19 = arith.constant 0.000000e+00 : f32
      %28 = vector.broadcast %cst_19 : f32 to vector<1x128xf32>
      %c0_20 = arith.constant 0 : index
      %c0_21 = arith.constant 0 : index
      %29 = vector.load %arg5[%c0_20, %c0_21] : memref<1x128xf32, #tpu.memory_space<vmem>>, vector<1x128xf32>
      tpu.vector_store %arg5[%c0_20, %c0_21], %28 {strides = array<i32>} : memref<1x128xf32, #tpu.memory_space<vmem>>, vector<1x128xf32>,
      %cst_22 = arith.constant 0.000000e+00 : f32
      %30 = vector.broadcast %cst_22 : f32 to vector<1x128xf32>
      %c0_23 = arith.constant 0 : index
      %c0_24 = arith.constant 0 : index
      %31 = vector.load %arg6[%c0_23, %c0_24] : memref<1x128xf32, #tpu.memory_space<vmem>>, vector<1x128xf32>
      tpu.vector_store %arg6[%c0_23, %c0_24], %30 {strides = array<i32>} : memref<1x128xf32, #tpu.memory_space<vmem>>, vector<1x128xf32>,
    } else {
    }
    %c0_7 = arith.constant 0 : index
    %c0_8 = arith.constant 0 : index
    %14 = vector.load %arg5[%c0_7, %c0_8] : memref<1x128xf32, #tpu.memory_space<vmem>>, vector<1x128xf32>
    %cst_9 = arith.constant dense<0.000000e+00> : vector<128xf32>
    %15 = vector.multi_reduction <add>, %3, %cst_9 [0] : vector<64x128xf32> to vector<128xf32>
    %16 = vector.shape_cast %15 : vector<128xf32> to vector<1x128xf32>
    %17 = arith.addf %14, %16 : vector<1x128xf32>
    %c0_10 = arith.constant 0 : index
    %c0_11 = arith.constant 0 : index
    %18 = vector.load %arg5[%c0_10, %c0_11] : memref<1x128xf32, #tpu.memory_space<vmem>>, vector<1x128xf32>
    tpu.vector_store %arg5[%c0_10, %c0_11], %17 {strides = array<i32>} : memref<1x128xf32, #tpu.memory_space<vmem>>, vector<1x128xf32>,
    %c0_12 = arith.constant 0 : index
    %c0_13 = arith.constant 0 : index
    %19 = vector.load %arg6[%c0_12, %c0_13] : memref<1x128xf32, #tpu.memory_space<vmem>>, vector<1x128xf32>
    %20 = arith.mulf %3, %3 : vector<64x128xf32>
    %cst_14 = arith.constant dense<0.000000e+00> : vector<128xf32>
    %21 = vector.multi_reduction <add>, %20, %cst_14 [0] : vector<64x128xf32> to vector<128xf32>
    %22 = vector.shape_cast %21 : vector<128xf32> to vector<1x128xf32>
    %23 = arith.addf %19, %22 : vector<1x128xf32>
    %c0_15 = arith.constant 0 : index
    %c0_16 = arith.constant 0 : index
    %24 = vector.load %arg6[%c0_15, %c0_16] : memref<1x128xf32, #tpu.memory_space<vmem>>, vector<1x128xf32>
    tpu.vector_store %arg6[%c0_15, %c0_16], %23 {strides = array<i32>} : memref<1x128xf32, #tpu.memory_space<vmem>>, vector<1x128xf32>,
    %c0_i32_17 = arith.constant 0 : i32
    %25 = arith.cmpi eq, %arg1, %c0_i32_17 : i32
    %26 = arith.extui %25 : i1 to i32
    %c0_i32_18 = arith.constant 0 : i32
    %27 = arith.cmpi ne, %26, %c0_i32_18 : i32
    scf.if %27 {
      %c0_19 = arith.constant 0 : index
      %c0_20 = arith.constant 0 : index
      %28 = vector.load %arg5[%c0_19, %c0_20] : memref<1x128xf32, #tpu.memory_space<vmem>>, vector<1x128xf32>
      %c0_21 = arith.constant 0 : index
      %c0_22 = arith.constant 0 : index
      %29 = vector.load %arg6[%c0_21, %c0_22] : memref<1x128xf32, #tpu.memory_space<vmem>>, vector<1x128xf32>
      %cst_23 = arith.constant 1.562500e-02 : f32
      %30 = vector.broadcast %cst_23 : f32 to vector<1x128xf32>
      %31 = arith.mulf %28, %30 : vector<1x128xf32>
      %cst_24 = arith.constant 1.562500e-02 : f32
      %32 = vector.broadcast %cst_24 : f32 to vector<1x128xf32>
      %33 = arith.mulf %29, %32 : vector<1x128xf32>
      %34 = arith.mulf %31, %31 : vector<1x128xf32>
      %35 = arith.subf %33, %34 : vector<1x128xf32>
      %cst_25 = arith.constant 0.000000e+00 : f32
      %36 = vector.broadcast %cst_25 : f32 to vector<1x128xf32>
      %37 = arith.maximumf %35, %36 : vector<1x128xf32>
      %cst_26 = arith.constant 9.99999974E-6 : f32
      %38 = vector.broadcast %cst_26 : f32 to vector<1x128xf32>
      %39 = arith.addf %37, %38 : vector<1x128xf32>
      %40 = math.rsqrt %39 : vector<1x128xf32>
      %c0_i32_27 = arith.constant 0 : i32
      %c64_i32_28 = arith.constant 64 : i32
      %41 = arith.muli %c0_i32_27, %c64_i32_28 : i32
      %42 = tpu.assume_multiple %41, 64 : i32
      %c0_29 = arith.constant 0 : index
      %43 = arith.index_cast %42 : i32 to index
      %c0_30 = arith.constant 0 : index
      %44 = vector.load %arg4[%c0_29, %43, %c0_30] : memref<1x64x128xbf16, #tpu.memory_space<vmem>>, vector<1x64x128xbf16>
      %45 = vector.shape_cast %44 : vector<1x64x128xbf16> to vector<64x128xbf16>
      %46 = arith.extf %45 : vector<64x128xbf16> to vector<64x128xf32>
      %47 = vector.broadcast %31 : vector<1x128xf32> to vector<64x128xf32>
      %48 = arith.subf %46, %47 : vector<64x128xf32>
      %49 = vector.broadcast %40 : vector<1x128xf32> to vector<64x128xf32>
      %50 = arith.mulf %48, %49 : vector<64x128xf32>
      %cst_31 = arith.constant 0.000000e+00 : f32
      %51 = vector.broadcast %cst_31 : f32 to vector<64x128xf32>
      %52 = arith.maximumf %50, %51 : vector<64x128xf32>
      %53 = arith.truncf %52 : vector<64x128xf32> to vector<64x128xbf16>
      %c0_32 = arith.constant 0 : index
      %54 = arith.index_cast %42 : i32 to index
      %c0_33 = arith.constant 0 : index
      %55 = vector.load %arg4[%c0_32, %54, %c0_33] : memref<1x64x128xbf16, #tpu.memory_space<vmem>>, vector<1x64x128xbf16>
      %56 = vector.shape_cast %55 : vector<1x64x128xbf16> to vector<64x128xbf16>
      %57 = vector.shape_cast %53 : vector<64x128xbf16> to vector<1x64x128xbf16>
      tpu.vector_store %arg4[%c0_32, %54, %c0_33], %57 {strides = array<i32>} : memref<1x64x128xbf16, #tpu.memory_space<vmem>>, vector<1x64x128xbf16>,
      %c1_i32 = arith.constant 1 : i32
    } else {
    }
    return
  }
  func.func @transform_0(%arg0: i32, %arg1: i32) -> (i32, i32, i32) {
    %c0_i32 = arith.constant 0 : i32
    %c0_i32_0 = arith.constant 0 : i32
    return %arg0, %arg1, %c0_i32 : i32, i32, i32
  }
  func.func @transform_1(%arg0: i32, %arg1: i32) -> (i32, i32) {
    %c0_i32 = arith.constant 0 : i32
    %c0_i32_0 = arith.constant 0 : i32
    %c0_i32_1 = arith.constant 0 : i32
    return %c0_i32, %c0_i32_0 : i32, i32
  }
  func.func @transform_2(%arg0: i32, %arg1: i32) -> (i32, i32, i32) {
    %c0_i32 = arith.constant 0 : i32
    %c0_i32_0 = arith.constant 0 : i32
    %c0_i32_1 = arith.constant 0 : i32
    return %arg0, %c0_i32, %c0_i32_0 : i32, i32, i32
  }
}

module attributes {stable_mosaic.version = 11 : i64} {
  func.func @kernel(%arg0: i32, %arg1: i32, %arg2: memref<1x16x256xbf16, #tpu.memory_space<vmem>>, %arg3: memref<256x128xbf16, #tpu.memory_space<vmem>>, %arg4: memref<1x16x128xbf16, #tpu.memory_space<vmem>>, %arg5: memref<1x128xf32, #tpu.memory_space<vmem>>, %arg6: memref<1x128xf32, #tpu.memory_space<vmem>>) attributes {dimension_semantics = [#tpu.dimension_semantics<parallel>, #tpu.dimension_semantics<arbitrary>], iteration_bounds = array<i64: 2, 1>, scalar_prefetch = 0 : i64, scratch_operands = 2 : i64, tpu.core_type = #tpu.core_type<tc>, window_params = [{transform_indices = @transform_0, window_bounds = array<i64: 1, 16, 256>}, {pipeline_mode = #tpu.pipeline_mode<synchronous>, transform_indices = @transform_1, window_bounds = array<i64: 256, 128>}, {transform_indices = @transform_2, window_bounds = array<i64: 1, 16, 128>}]} {
    %c0 = arith.constant 0 : index
    %c0_0 = arith.constant 0 : index
    %c0_1 = arith.constant 0 : index
    %0 = vector.load %arg2[%c0, %c0_0, %c0_1] : memref<1x16x256xbf16, #tpu.memory_space<vmem>>, vector<1x16x256xbf16>
    %1 = vector.shape_cast %0 : vector<1x16x256xbf16> to vector<16x256xbf16>
    %c0_2 = arith.constant 0 : index
    %c0_3 = arith.constant 0 : index
    %2 = vector.load %arg3[%c0_2, %c0_3] : memref<256x128xbf16, #tpu.memory_space<vmem>>, vector<256x128xbf16>
    %cst = arith.constant dense<0.000000e+00> : vector<16x128xf32>
    %3 = tpu.matmul %1, %2, %cst {dimension_numbers = #tpu.dot_dimension_numbers<[1], [0], [0], [1], [0, 0, 1, 1], [], []>} : vector<16x256xbf16>, vector<256x128xbf16>, vector<16x128xf32> -> vector<16x128xf32>
    %c16_i32 = arith.constant 16 : i32
    %4 = arith.muli %arg1, %c16_i32 : i32
    %5 = tpu.assume_multiple %4, 16 : i32
    %6 = arith.truncf %3 : vector<16x128xf32> to vector<16x128xbf16>
    %c0_4 = arith.constant 0 : index
    %7 = arith.index_cast %5 : i32 to index
    %c0_5 = arith.constant 0 : index
    %8 = vector.load %arg4[%c0_4, %7, %c0_5] : memref<1x16x128xbf16, #tpu.memory_space<vmem>>, vector<1x16x128xbf16>
    %9 = vector.shape_cast %8 : vector<1x16x128xbf16> to vector<16x128xbf16>
    %10 = vector.shape_cast %6 : vector<16x128xbf16> to vector<1x16x128xbf16>
    tpu.vector_store %arg4[%c0_4, %7, %c0_5], %10 {strides = array<i32>} : memref<1x16x128xbf16, #tpu.memory_space<vmem>>, vector<1x16x128xbf16>,
    %c0_i32 = arith.constant 0 : i32
    %11 = arith.cmpi eq, %arg1, %c0_i32 : i32
    %12 = arith.extui %11 : i1 to i32
    %c0_i32_6 = arith.constant 0 : i32
    %13 = arith.cmpi ne, %12, %c0_i32_6 : i32
    scf.if %13 {
      %cst_19 = arith.constant 0.000000e+00 : f32
      %28 = vector.broadcast %cst_19 : f32 to vector<1x128xf32>
      %c0_20 = arith.constant 0 : index
      %c0_21 = arith.constant 0 : index
      %29 = vector.load %arg5[%c0_20, %c0_21] : memref<1x128xf32, #tpu.memory_space<vmem>>, vector<1x128xf32>
      tpu.vector_store %arg5[%c0_20, %c0_21], %28 {strides = array<i32>} : memref<1x128xf32, #tpu.memory_space<vmem>>, vector<1x128xf32>,
      %cst_22 = arith.constant 0.000000e+00 : f32
      %30 = vector.broadcast %cst_22 : f32 to vector<1x128xf32>
      %c0_23 = arith.constant 0 : index
      %c0_24 = arith.constant 0 : index
      %31 = vector.load %arg6[%c0_23, %c0_24] : memref<1x128xf32, #tpu.memory_space<vmem>>, vector<1x128xf32>
      tpu.vector_store %arg6[%c0_23, %c0_24], %30 {strides = array<i32>} : memref<1x128xf32, #tpu.memory_space<vmem>>, vector<1x128xf32>,
    } else {
    }
    %c0_7 = arith.constant 0 : index
    %c0_8 = arith.constant 0 : index
    %14 = vector.load %arg5[%c0_7, %c0_8] : memref<1x128xf32, #tpu.memory_space<vmem>>, vector<1x128xf32>
    %cst_9 = arith.constant dense<0.000000e+00> : vector<128xf32>
    %15 = vector.multi_reduction <add>, %3, %cst_9 [0] : vector<16x128xf32> to vector<128xf32>
    %16 = vector.shape_cast %15 : vector<128xf32> to vector<1x128xf32>
    %17 = arith.addf %14, %16 : vector<1x128xf32>
    %c0_10 = arith.constant 0 : index
    %c0_11 = arith.constant 0 : index
    %18 = vector.load %arg5[%c0_10, %c0_11] : memref<1x128xf32, #tpu.memory_space<vmem>>, vector<1x128xf32>
    tpu.vector_store %arg5[%c0_10, %c0_11], %17 {strides = array<i32>} : memref<1x128xf32, #tpu.memory_space<vmem>>, vector<1x128xf32>,
    %c0_12 = arith.constant 0 : index
    %c0_13 = arith.constant 0 : index
    %19 = vector.load %arg6[%c0_12, %c0_13] : memref<1x128xf32, #tpu.memory_space<vmem>>, vector<1x128xf32>
    %20 = arith.mulf %3, %3 : vector<16x128xf32>
    %cst_14 = arith.constant dense<0.000000e+00> : vector<128xf32>
    %21 = vector.multi_reduction <add>, %20, %cst_14 [0] : vector<16x128xf32> to vector<128xf32>
    %22 = vector.shape_cast %21 : vector<128xf32> to vector<1x128xf32>
    %23 = arith.addf %19, %22 : vector<1x128xf32>
    %c0_15 = arith.constant 0 : index
    %c0_16 = arith.constant 0 : index
    %24 = vector.load %arg6[%c0_15, %c0_16] : memref<1x128xf32, #tpu.memory_space<vmem>>, vector<1x128xf32>
    tpu.vector_store %arg6[%c0_15, %c0_16], %23 {strides = array<i32>} : memref<1x128xf32, #tpu.memory_space<vmem>>, vector<1x128xf32>,
    %c0_i32_17 = arith.constant 0 : i32
    %25 = arith.cmpi eq, %arg1, %c0_i32_17 : i32
    %26 = arith.extui %25 : i1 to i32
    %c0_i32_18 = arith.constant 0 : i32
    %27 = arith.cmpi ne, %26, %c0_i32_18 : i32
    scf.if %27 {
      %c0_19 = arith.constant 0 : index
      %c0_20 = arith.constant 0 : index
      %28 = vector.load %arg5[%c0_19, %c0_20] : memref<1x128xf32, #tpu.memory_space<vmem>>, vector<1x128xf32>
      %c0_21 = arith.constant 0 : index
      %c0_22 = arith.constant 0 : index
      %29 = vector.load %arg6[%c0_21, %c0_22] : memref<1x128xf32, #tpu.memory_space<vmem>>, vector<1x128xf32>
      %cst_23 = arith.constant 6.250000e-02 : f32
      %30 = vector.broadcast %cst_23 : f32 to vector<1x128xf32>
      %31 = arith.mulf %28, %30 : vector<1x128xf32>
      %cst_24 = arith.constant 6.250000e-02 : f32
      %32 = vector.broadcast %cst_24 : f32 to vector<1x128xf32>
      %33 = arith.mulf %29, %32 : vector<1x128xf32>
      %34 = arith.mulf %31, %31 : vector<1x128xf32>
      %35 = arith.subf %33, %34 : vector<1x128xf32>
      %cst_25 = arith.constant 0.000000e+00 : f32
      %36 = vector.broadcast %cst_25 : f32 to vector<1x128xf32>
      %37 = arith.maximumf %35, %36 : vector<1x128xf32>
      %cst_26 = arith.constant 9.99999974E-6 : f32
      %38 = vector.broadcast %cst_26 : f32 to vector<1x128xf32>
      %39 = arith.addf %37, %38 : vector<1x128xf32>
      %40 = math.rsqrt %39 : vector<1x128xf32>
      %c0_i32_27 = arith.constant 0 : i32
      %c16_i32_28 = arith.constant 16 : i32
      %41 = arith.muli %c0_i32_27, %c16_i32_28 : i32
      %42 = tpu.assume_multiple %41, 16 : i32
      %c0_29 = arith.constant 0 : index
      %43 = arith.index_cast %42 : i32 to index
      %c0_30 = arith.constant 0 : index
      %44 = vector.load %arg4[%c0_29, %43, %c0_30] : memref<1x16x128xbf16, #tpu.memory_space<vmem>>, vector<1x16x128xbf16>
      %45 = vector.shape_cast %44 : vector<1x16x128xbf16> to vector<16x128xbf16>
      %46 = arith.extf %45 : vector<16x128xbf16> to vector<16x128xf32>
      %47 = vector.broadcast %31 : vector<1x128xf32> to vector<16x128xf32>
      %48 = arith.subf %46, %47 : vector<16x128xf32>
      %49 = vector.broadcast %40 : vector<1x128xf32> to vector<16x128xf32>
      %50 = arith.mulf %48, %49 : vector<16x128xf32>
      %cst_31 = arith.constant 0.000000e+00 : f32
      %51 = vector.broadcast %cst_31 : f32 to vector<16x128xf32>
      %52 = arith.maximumf %50, %51 : vector<16x128xf32>
      %53 = arith.truncf %52 : vector<16x128xf32> to vector<16x128xbf16>
      %c0_32 = arith.constant 0 : index
      %54 = arith.index_cast %42 : i32 to index
      %c0_33 = arith.constant 0 : index
      %55 = vector.load %arg4[%c0_32, %54, %c0_33] : memref<1x16x128xbf16, #tpu.memory_space<vmem>>, vector<1x16x128xbf16>
      %56 = vector.shape_cast %55 : vector<1x16x128xbf16> to vector<16x128xbf16>
      %57 = vector.shape_cast %53 : vector<16x128xbf16> to vector<1x16x128xbf16>
      tpu.vector_store %arg4[%c0_32, %54, %c0_33], %57 {strides = array<i32>} : memref<1x16x128xbf16, #tpu.memory_space<vmem>>, vector<1x16x128xbf16>,
      %c1_i32 = arith.constant 1 : i32
    } else {
    }
    return
  }
  func.func @transform_0(%arg0: i32, %arg1: i32) -> (i32, i32, i32) {
    %c0_i32 = arith.constant 0 : i32
    %c0_i32_0 = arith.constant 0 : i32
    return %arg0, %arg1, %c0_i32 : i32, i32, i32
  }
  func.func @transform_1(%arg0: i32, %arg1: i32) -> (i32, i32) {
    %c0_i32 = arith.constant 0 : i32
    %c0_i32_0 = arith.constant 0 : i32
    %c0_i32_1 = arith.constant 0 : i32
    return %c0_i32, %c0_i32_0 : i32, i32
  }
  func.func @transform_2(%arg0: i32, %arg1: i32) -> (i32, i32, i32) {
    %c0_i32 = arith.constant 0 : i32
    %c0_i32_0 = arith.constant 0 : i32
    %c0_i32_1 = arith.constant 0 : i32
    return %arg0, %c0_i32, %c0_i32_0 : i32, i32, i32
  }
}

module attributes {stable_mosaic.version = 11 : i64} {
  func.func @kernel(%arg0: i32, %arg1: i32, %arg2: memref<1x16x384xbf16, #tpu.memory_space<vmem>>, %arg3: memref<384x128xbf16, #tpu.memory_space<vmem>>, %arg4: memref<1x16x128xbf16, #tpu.memory_space<vmem>>, %arg5: memref<1x16x128xbf16, #tpu.memory_space<vmem>>, %arg6: memref<1x128xf32, #tpu.memory_space<vmem>>, %arg7: memref<1x128xf32, #tpu.memory_space<vmem>>) attributes {dimension_semantics = [#tpu.dimension_semantics<parallel>, #tpu.dimension_semantics<arbitrary>], iteration_bounds = array<i64: 2, 1>, scalar_prefetch = 0 : i64, scratch_operands = 2 : i64, tpu.core_type = #tpu.core_type<tc>, window_params = [{transform_indices = @transform_0, window_bounds = array<i64: 1, 16, 384>}, {pipeline_mode = #tpu.pipeline_mode<synchronous>, transform_indices = @transform_1, window_bounds = array<i64: 384, 128>}, {transform_indices = @transform_2, window_bounds = array<i64: 1, 16, 128>}, {transform_indices = @transform_3, window_bounds = array<i64: 1, 16, 128>}]} {
    %c0 = arith.constant 0 : index
    %c0_0 = arith.constant 0 : index
    %c0_1 = arith.constant 0 : index
    %0 = vector.load %arg2[%c0, %c0_0, %c0_1] : memref<1x16x384xbf16, #tpu.memory_space<vmem>>, vector<1x16x384xbf16>
    %1 = vector.shape_cast %0 : vector<1x16x384xbf16> to vector<16x384xbf16>
    %c0_2 = arith.constant 0 : index
    %c0_3 = arith.constant 0 : index
    %2 = vector.load %arg3[%c0_2, %c0_3] : memref<384x128xbf16, #tpu.memory_space<vmem>>, vector<384x128xbf16>
    %cst = arith.constant dense<0.000000e+00> : vector<16x128xf32>
    %3 = tpu.matmul %1, %2, %cst {dimension_numbers = #tpu.dot_dimension_numbers<[1], [0], [0], [1], [0, 0, 1, 1], [], []>} : vector<16x384xbf16>, vector<384x128xbf16>, vector<16x128xf32> -> vector<16x128xf32>
    %c16_i32 = arith.constant 16 : i32
    %4 = arith.muli %arg1, %c16_i32 : i32
    %5 = tpu.assume_multiple %4, 16 : i32
    %6 = arith.truncf %3 : vector<16x128xf32> to vector<16x128xbf16>
    %c0_4 = arith.constant 0 : index
    %7 = arith.index_cast %5 : i32 to index
    %c0_5 = arith.constant 0 : index
    %8 = vector.load %arg5[%c0_4, %7, %c0_5] : memref<1x16x128xbf16, #tpu.memory_space<vmem>>, vector<1x16x128xbf16>
    %9 = vector.shape_cast %8 : vector<1x16x128xbf16> to vector<16x128xbf16>
    %10 = vector.shape_cast %6 : vector<16x128xbf16> to vector<1x16x128xbf16>
    tpu.vector_store %arg5[%c0_4, %7, %c0_5], %10 {strides = array<i32>} : memref<1x16x128xbf16, #tpu.memory_space<vmem>>, vector<1x16x128xbf16>,
    %c0_i32 = arith.constant 0 : i32
    %11 = arith.cmpi eq, %arg1, %c0_i32 : i32
    %12 = arith.extui %11 : i1 to i32
    %c0_i32_6 = arith.constant 0 : i32
    %13 = arith.cmpi ne, %12, %c0_i32_6 : i32
    scf.if %13 {
      %cst_19 = arith.constant 0.000000e+00 : f32
      %28 = vector.broadcast %cst_19 : f32 to vector<1x128xf32>
      %c0_20 = arith.constant 0 : index
      %c0_21 = arith.constant 0 : index
      %29 = vector.load %arg6[%c0_20, %c0_21] : memref<1x128xf32, #tpu.memory_space<vmem>>, vector<1x128xf32>
      tpu.vector_store %arg6[%c0_20, %c0_21], %28 {strides = array<i32>} : memref<1x128xf32, #tpu.memory_space<vmem>>, vector<1x128xf32>,
      %cst_22 = arith.constant 0.000000e+00 : f32
      %30 = vector.broadcast %cst_22 : f32 to vector<1x128xf32>
      %c0_23 = arith.constant 0 : index
      %c0_24 = arith.constant 0 : index
      %31 = vector.load %arg7[%c0_23, %c0_24] : memref<1x128xf32, #tpu.memory_space<vmem>>, vector<1x128xf32>
      tpu.vector_store %arg7[%c0_23, %c0_24], %30 {strides = array<i32>} : memref<1x128xf32, #tpu.memory_space<vmem>>, vector<1x128xf32>,
    } else {
    }
    %c0_7 = arith.constant 0 : index
    %c0_8 = arith.constant 0 : index
    %14 = vector.load %arg6[%c0_7, %c0_8] : memref<1x128xf32, #tpu.memory_space<vmem>>, vector<1x128xf32>
    %cst_9 = arith.constant dense<0.000000e+00> : vector<128xf32>
    %15 = vector.multi_reduction <add>, %3, %cst_9 [0] : vector<16x128xf32> to vector<128xf32>
    %16 = vector.shape_cast %15 : vector<128xf32> to vector<1x128xf32>
    %17 = arith.addf %14, %16 : vector<1x128xf32>
    %c0_10 = arith.constant 0 : index
    %c0_11 = arith.constant 0 : index
    %18 = vector.load %arg6[%c0_10, %c0_11] : memref<1x128xf32, #tpu.memory_space<vmem>>, vector<1x128xf32>
    tpu.vector_store %arg6[%c0_10, %c0_11], %17 {strides = array<i32>} : memref<1x128xf32, #tpu.memory_space<vmem>>, vector<1x128xf32>,
    %c0_12 = arith.constant 0 : index
    %c0_13 = arith.constant 0 : index
    %19 = vector.load %arg7[%c0_12, %c0_13] : memref<1x128xf32, #tpu.memory_space<vmem>>, vector<1x128xf32>
    %20 = arith.mulf %3, %3 : vector<16x128xf32>
    %cst_14 = arith.constant dense<0.000000e+00> : vector<128xf32>
    %21 = vector.multi_reduction <add>, %20, %cst_14 [0] : vector<16x128xf32> to vector<128xf32>
    %22 = vector.shape_cast %21 : vector<128xf32> to vector<1x128xf32>
    %23 = arith.addf %19, %22 : vector<1x128xf32>
    %c0_15 = arith.constant 0 : index
    %c0_16 = arith.constant 0 : index
    %24 = vector.load %arg7[%c0_15, %c0_16] : memref<1x128xf32, #tpu.memory_space<vmem>>, vector<1x128xf32>
    tpu.vector_store %arg7[%c0_15, %c0_16], %23 {strides = array<i32>} : memref<1x128xf32, #tpu.memory_space<vmem>>, vector<1x128xf32>,
    %c0_i32_17 = arith.constant 0 : i32
    %25 = arith.cmpi eq, %arg1, %c0_i32_17 : i32
    %26 = arith.extui %25 : i1 to i32
    %c0_i32_18 = arith.constant 0 : i32
    %27 = arith.cmpi ne, %26, %c0_i32_18 : i32
    scf.if %27 {
      %c0_19 = arith.constant 0 : index
      %c0_20 = arith.constant 0 : index
      %28 = vector.load %arg6[%c0_19, %c0_20] : memref<1x128xf32, #tpu.memory_space<vmem>>, vector<1x128xf32>
      %c0_21 = arith.constant 0 : index
      %c0_22 = arith.constant 0 : index
      %29 = vector.load %arg7[%c0_21, %c0_22] : memref<1x128xf32, #tpu.memory_space<vmem>>, vector<1x128xf32>
      %cst_23 = arith.constant 6.250000e-02 : f32
      %30 = vector.broadcast %cst_23 : f32 to vector<1x128xf32>
      %31 = arith.mulf %28, %30 : vector<1x128xf32>
      %cst_24 = arith.constant 6.250000e-02 : f32
      %32 = vector.broadcast %cst_24 : f32 to vector<1x128xf32>
      %33 = arith.mulf %29, %32 : vector<1x128xf32>
      %34 = arith.mulf %31, %31 : vector<1x128xf32>
      %35 = arith.subf %33, %34 : vector<1x128xf32>
      %cst_25 = arith.constant 0.000000e+00 : f32
      %36 = vector.broadcast %cst_25 : f32 to vector<1x128xf32>
      %37 = arith.maximumf %35, %36 : vector<1x128xf32>
      %cst_26 = arith.constant 9.99999974E-6 : f32
      %38 = vector.broadcast %cst_26 : f32 to vector<1x128xf32>
      %39 = arith.addf %37, %38 : vector<1x128xf32>
      %40 = math.rsqrt %39 : vector<1x128xf32>
      %c0_i32_27 = arith.constant 0 : i32
      %c16_i32_28 = arith.constant 16 : i32
      %41 = arith.muli %c0_i32_27, %c16_i32_28 : i32
      %42 = tpu.assume_multiple %41, 16 : i32
      %c0_29 = arith.constant 0 : index
      %43 = arith.index_cast %42 : i32 to index
      %c0_30 = arith.constant 0 : index
      %44 = vector.load %arg5[%c0_29, %43, %c0_30] : memref<1x16x128xbf16, #tpu.memory_space<vmem>>, vector<1x16x128xbf16>
      %45 = vector.shape_cast %44 : vector<1x16x128xbf16> to vector<16x128xbf16>
      %46 = arith.extf %45 : vector<16x128xbf16> to vector<16x128xf32>
      %47 = vector.broadcast %31 : vector<1x128xf32> to vector<16x128xf32>
      %48 = arith.subf %46, %47 : vector<16x128xf32>
      %49 = vector.broadcast %40 : vector<1x128xf32> to vector<16x128xf32>
      %50 = arith.mulf %48, %49 : vector<16x128xf32>
      %c0_31 = arith.constant 0 : index
      %51 = arith.index_cast %42 : i32 to index
      %c0_32 = arith.constant 0 : index
      %52 = vector.load %arg4[%c0_31, %51, %c0_32] : memref<1x16x128xbf16, #tpu.memory_space<vmem>>, vector<1x16x128xbf16>
      %53 = vector.shape_cast %52 : vector<1x16x128xbf16> to vector<16x128xbf16>
      %54 = arith.extf %53 : vector<16x128xbf16> to vector<16x128xf32>
      %55 = arith.addf %50, %54 : vector<16x128xf32>
      %56 = arith.truncf %55 : vector<16x128xf32> to vector<16x128xbf16>
      %c0_33 = arith.constant 0 : index
      %57 = arith.index_cast %42 : i32 to index
      %c0_34 = arith.constant 0 : index
      %58 = vector.load %arg5[%c0_33, %57, %c0_34] : memref<1x16x128xbf16, #tpu.memory_space<vmem>>, vector<1x16x128xbf16>
      %59 = vector.shape_cast %58 : vector<1x16x128xbf16> to vector<16x128xbf16>
      %60 = vector.shape_cast %56 : vector<16x128xbf16> to vector<1x16x128xbf16>
      tpu.vector_store %arg5[%c0_33, %57, %c0_34], %60 {strides = array<i32>} : memref<1x16x128xbf16, #tpu.memory_space<vmem>>, vector<1x16x128xbf16>,
      %c1_i32 = arith.constant 1 : i32
    } else {
    }
    return
  }
  func.func @transform_0(%arg0: i32, %arg1: i32) -> (i32, i32, i32) {
    %c0_i32 = arith.constant 0 : i32
    %c0_i32_0 = arith.constant 0 : i32
    return %arg0, %arg1, %c0_i32 : i32, i32, i32
  }
  func.func @transform_1(%arg0: i32, %arg1: i32) -> (i32, i32) {
    %c0_i32 = arith.constant 0 : i32
    %c0_i32_0 = arith.constant 0 : i32
    %c0_i32_1 = arith.constant 0 : i32
    return %c0_i32, %c0_i32_0 : i32, i32
  }
  func.func @transform_2(%arg0: i32, %arg1: i32) -> (i32, i32, i32) {
    %c0_i32 = arith.constant 0 : i32
    %c0_i32_0 = arith.constant 0 : i32
    %c0_i32_1 = arith.constant 0 : i32
    return %arg0, %c0_i32, %c0_i32_0 : i32, i32, i32
  }
  func.func @transform_3(%arg0: i32, %arg1: i32) -> (i32, i32, i32) {
    %c0_i32 = arith.constant 0 : i32
    %c0_i32_0 = arith.constant 0 : i32
    %c0_i32_1 = arith.constant 0 : i32
    return %arg0, %c0_i32, %c0_i32_0 : i32, i32, i32
  }
}

module attributes {stable_mosaic.version = 11 : i64} {
  func.func @kernel(%arg0: i32, %arg1: i32, %arg2: memref<1x16x384xbf16, #tpu.memory_space<vmem>>, %arg3: memref<384x128xbf16, #tpu.memory_space<vmem>>, %arg4: memref<1x16x128xbf16, #tpu.memory_space<vmem>>, %arg5: memref<1x128xf32, #tpu.memory_space<vmem>>, %arg6: memref<1x128xf32, #tpu.memory_space<vmem>>) attributes {dimension_semantics = [#tpu.dimension_semantics<parallel>, #tpu.dimension_semantics<arbitrary>], iteration_bounds = array<i64: 2, 1>, scalar_prefetch = 0 : i64, scratch_operands = 2 : i64, tpu.core_type = #tpu.core_type<tc>, window_params = [{transform_indices = @transform_0, window_bounds = array<i64: 1, 16, 384>}, {pipeline_mode = #tpu.pipeline_mode<synchronous>, transform_indices = @transform_1, window_bounds = array<i64: 384, 128>}, {transform_indices = @transform_2, window_bounds = array<i64: 1, 16, 128>}]} {
    %c0 = arith.constant 0 : index
    %c0_0 = arith.constant 0 : index
    %c0_1 = arith.constant 0 : index
    %0 = vector.load %arg2[%c0, %c0_0, %c0_1] : memref<1x16x384xbf16, #tpu.memory_space<vmem>>, vector<1x16x384xbf16>
    %1 = vector.shape_cast %0 : vector<1x16x384xbf16> to vector<16x384xbf16>
    %c0_2 = arith.constant 0 : index
    %c0_3 = arith.constant 0 : index
    %2 = vector.load %arg3[%c0_2, %c0_3] : memref<384x128xbf16, #tpu.memory_space<vmem>>, vector<384x128xbf16>
    %cst = arith.constant dense<0.000000e+00> : vector<16x128xf32>
    %3 = tpu.matmul %1, %2, %cst {dimension_numbers = #tpu.dot_dimension_numbers<[1], [0], [0], [1], [0, 0, 1, 1], [], []>} : vector<16x384xbf16>, vector<384x128xbf16>, vector<16x128xf32> -> vector<16x128xf32>
    %c16_i32 = arith.constant 16 : i32
    %4 = arith.muli %arg1, %c16_i32 : i32
    %5 = tpu.assume_multiple %4, 16 : i32
    %6 = arith.truncf %3 : vector<16x128xf32> to vector<16x128xbf16>
    %c0_4 = arith.constant 0 : index
    %7 = arith.index_cast %5 : i32 to index
    %c0_5 = arith.constant 0 : index
    %8 = vector.load %arg4[%c0_4, %7, %c0_5] : memref<1x16x128xbf16, #tpu.memory_space<vmem>>, vector<1x16x128xbf16>
    %9 = vector.shape_cast %8 : vector<1x16x128xbf16> to vector<16x128xbf16>
    %10 = vector.shape_cast %6 : vector<16x128xbf16> to vector<1x16x128xbf16>
    tpu.vector_store %arg4[%c0_4, %7, %c0_5], %10 {strides = array<i32>} : memref<1x16x128xbf16, #tpu.memory_space<vmem>>, vector<1x16x128xbf16>,
    %c0_i32 = arith.constant 0 : i32
    %11 = arith.cmpi eq, %arg1, %c0_i32 : i32
    %12 = arith.extui %11 : i1 to i32
    %c0_i32_6 = arith.constant 0 : i32
    %13 = arith.cmpi ne, %12, %c0_i32_6 : i32
    scf.if %13 {
      %cst_19 = arith.constant 0.000000e+00 : f32
      %28 = vector.broadcast %cst_19 : f32 to vector<1x128xf32>
      %c0_20 = arith.constant 0 : index
      %c0_21 = arith.constant 0 : index
      %29 = vector.load %arg5[%c0_20, %c0_21] : memref<1x128xf32, #tpu.memory_space<vmem>>, vector<1x128xf32>
      tpu.vector_store %arg5[%c0_20, %c0_21], %28 {strides = array<i32>} : memref<1x128xf32, #tpu.memory_space<vmem>>, vector<1x128xf32>,
      %cst_22 = arith.constant 0.000000e+00 : f32
      %30 = vector.broadcast %cst_22 : f32 to vector<1x128xf32>
      %c0_23 = arith.constant 0 : index
      %c0_24 = arith.constant 0 : index
      %31 = vector.load %arg6[%c0_23, %c0_24] : memref<1x128xf32, #tpu.memory_space<vmem>>, vector<1x128xf32>
      tpu.vector_store %arg6[%c0_23, %c0_24], %30 {strides = array<i32>} : memref<1x128xf32, #tpu.memory_space<vmem>>, vector<1x128xf32>,
    } else {
    }
    %c0_7 = arith.constant 0 : index
    %c0_8 = arith.constant 0 : index
    %14 = vector.load %arg5[%c0_7, %c0_8] : memref<1x128xf32, #tpu.memory_space<vmem>>, vector<1x128xf32>
    %cst_9 = arith.constant dense<0.000000e+00> : vector<128xf32>
    %15 = vector.multi_reduction <add>, %3, %cst_9 [0] : vector<16x128xf32> to vector<128xf32>
    %16 = vector.shape_cast %15 : vector<128xf32> to vector<1x128xf32>
    %17 = arith.addf %14, %16 : vector<1x128xf32>
    %c0_10 = arith.constant 0 : index
    %c0_11 = arith.constant 0 : index
    %18 = vector.load %arg5[%c0_10, %c0_11] : memref<1x128xf32, #tpu.memory_space<vmem>>, vector<1x128xf32>
    tpu.vector_store %arg5[%c0_10, %c0_11], %17 {strides = array<i32>} : memref<1x128xf32, #tpu.memory_space<vmem>>, vector<1x128xf32>,
    %c0_12 = arith.constant 0 : index
    %c0_13 = arith.constant 0 : index
    %19 = vector.load %arg6[%c0_12, %c0_13] : memref<1x128xf32, #tpu.memory_space<vmem>>, vector<1x128xf32>
    %20 = arith.mulf %3, %3 : vector<16x128xf32>
    %cst_14 = arith.constant dense<0.000000e+00> : vector<128xf32>
    %21 = vector.multi_reduction <add>, %20, %cst_14 [0] : vector<16x128xf32> to vector<128xf32>
    %22 = vector.shape_cast %21 : vector<128xf32> to vector<1x128xf32>
    %23 = arith.addf %19, %22 : vector<1x128xf32>
    %c0_15 = arith.constant 0 : index
    %c0_16 = arith.constant 0 : index
    %24 = vector.load %arg6[%c0_15, %c0_16] : memref<1x128xf32, #tpu.memory_space<vmem>>, vector<1x128xf32>
    tpu.vector_store %arg6[%c0_15, %c0_16], %23 {strides = array<i32>} : memref<1x128xf32, #tpu.memory_space<vmem>>, vector<1x128xf32>,
    %c0_i32_17 = arith.constant 0 : i32
    %25 = arith.cmpi eq, %arg1, %c0_i32_17 : i32
    %26 = arith.extui %25 : i1 to i32
    %c0_i32_18 = arith.constant 0 : i32
    %27 = arith.cmpi ne, %26, %c0_i32_18 : i32
    scf.if %27 {
      %c0_19 = arith.constant 0 : index
      %c0_20 = arith.constant 0 : index
      %28 = vector.load %arg5[%c0_19, %c0_20] : memref<1x128xf32, #tpu.memory_space<vmem>>, vector<1x128xf32>
      %c0_21 = arith.constant 0 : index
      %c0_22 = arith.constant 0 : index
      %29 = vector.load %arg6[%c0_21, %c0_22] : memref<1x128xf32, #tpu.memory_space<vmem>>, vector<1x128xf32>
      %cst_23 = arith.constant 6.250000e-02 : f32
      %30 = vector.broadcast %cst_23 : f32 to vector<1x128xf32>
      %31 = arith.mulf %28, %30 : vector<1x128xf32>
      %cst_24 = arith.constant 6.250000e-02 : f32
      %32 = vector.broadcast %cst_24 : f32 to vector<1x128xf32>
      %33 = arith.mulf %29, %32 : vector<1x128xf32>
      %34 = arith.mulf %31, %31 : vector<1x128xf32>
      %35 = arith.subf %33, %34 : vector<1x128xf32>
      %cst_25 = arith.constant 0.000000e+00 : f32
      %36 = vector.broadcast %cst_25 : f32 to vector<1x128xf32>
      %37 = arith.maximumf %35, %36 : vector<1x128xf32>
      %cst_26 = arith.constant 9.99999974E-6 : f32
      %38 = vector.broadcast %cst_26 : f32 to vector<1x128xf32>
      %39 = arith.addf %37, %38 : vector<1x128xf32>
      %40 = math.rsqrt %39 : vector<1x128xf32>
      %c0_i32_27 = arith.constant 0 : i32
      %c16_i32_28 = arith.constant 16 : i32
      %41 = arith.muli %c0_i32_27, %c16_i32_28 : i32
      %42 = tpu.assume_multiple %41, 16 : i32
      %c0_29 = arith.constant 0 : index
      %43 = arith.index_cast %42 : i32 to index
      %c0_30 = arith.constant 0 : index
      %44 = vector.load %arg4[%c0_29, %43, %c0_30] : memref<1x16x128xbf16, #tpu.memory_space<vmem>>, vector<1x16x128xbf16>
      %45 = vector.shape_cast %44 : vector<1x16x128xbf16> to vector<16x128xbf16>
      %46 = arith.extf %45 : vector<16x128xbf16> to vector<16x128xf32>
      %47 = vector.broadcast %31 : vector<1x128xf32> to vector<16x128xf32>
      %48 = arith.subf %46, %47 : vector<16x128xf32>
      %49 = vector.broadcast %40 : vector<1x128xf32> to vector<16x128xf32>
      %50 = arith.mulf %48, %49 : vector<16x128xf32>
      %cst_31 = arith.constant 0.000000e+00 : f32
      %51 = vector.broadcast %cst_31 : f32 to vector<16x128xf32>
      %52 = arith.maximumf %50, %51 : vector<16x128xf32>
      %53 = arith.truncf %52 : vector<16x128xf32> to vector<16x128xbf16>
      %c0_32 = arith.constant 0 : index
      %54 = arith.index_cast %42 : i32 to index
      %c0_33 = arith.constant 0 : index
      %55 = vector.load %arg4[%c0_32, %54, %c0_33] : memref<1x16x128xbf16, #tpu.memory_space<vmem>>, vector<1x16x128xbf16>
      %56 = vector.shape_cast %55 : vector<1x16x128xbf16> to vector<16x128xbf16>
      %57 = vector.shape_cast %53 : vector<16x128xbf16> to vector<1x16x128xbf16>
      tpu.vector_store %arg4[%c0_32, %54, %c0_33], %57 {strides = array<i32>} : memref<1x16x128xbf16, #tpu.memory_space<vmem>>, vector<1x16x128xbf16>,
      %c1_i32 = arith.constant 1 : i32
    } else {
    }
    return
  }
  func.func @transform_0(%arg0: i32, %arg1: i32) -> (i32, i32, i32) {
    %c0_i32 = arith.constant 0 : i32
    %c0_i32_0 = arith.constant 0 : i32
    return %arg0, %arg1, %c0_i32 : i32, i32, i32
  }
  func.func @transform_1(%arg0: i32, %arg1: i32) -> (i32, i32) {
    %c0_i32 = arith.constant 0 : i32
    %c0_i32_0 = arith.constant 0 : i32
    %c0_i32_1 = arith.constant 0 : i32
    return %c0_i32, %c0_i32_0 : i32, i32
  }
  func.func @transform_2(%arg0: i32, %arg1: i32) -> (i32, i32, i32) {
    %c0_i32 = arith.constant 0 : i32
    %c0_i32_0 = arith.constant 0 : i32
    %c0_i32_1 = arith.constant 0 : i32
    return %arg0, %c0_i32, %c0_i32_0 : i32, i32, i32
  }
}

module attributes {stable_mosaic.version = 11 : i64} {
  func.func @kernel(%arg0: i32, %arg1: i32, %arg2: memref<1x16x128xbf16, #tpu.memory_space<vmem>>, %arg3: memref<128x512xbf16, #tpu.memory_space<vmem>>, %arg4: memref<1x16x512xbf16, #tpu.memory_space<vmem>>, %arg5: memref<1x512xf32, #tpu.memory_space<vmem>>, %arg6: memref<1x512xf32, #tpu.memory_space<vmem>>) attributes {dimension_semantics = [#tpu.dimension_semantics<parallel>, #tpu.dimension_semantics<arbitrary>], iteration_bounds = array<i64: 2, 1>, scalar_prefetch = 0 : i64, scratch_operands = 2 : i64, tpu.core_type = #tpu.core_type<tc>, window_params = [{transform_indices = @transform_0, window_bounds = array<i64: 1, 16, 128>}, {pipeline_mode = #tpu.pipeline_mode<synchronous>, transform_indices = @transform_1, window_bounds = array<i64: 128, 512>}, {transform_indices = @transform_2, window_bounds = array<i64: 1, 16, 512>}]} {
    %c0 = arith.constant 0 : index
    %c0_0 = arith.constant 0 : index
    %c0_1 = arith.constant 0 : index
    %0 = vector.load %arg2[%c0, %c0_0, %c0_1] : memref<1x16x128xbf16, #tpu.memory_space<vmem>>, vector<1x16x128xbf16>
    %1 = vector.shape_cast %0 : vector<1x16x128xbf16> to vector<16x128xbf16>
    %c0_2 = arith.constant 0 : index
    %c0_3 = arith.constant 0 : index
    %2 = vector.load %arg3[%c0_2, %c0_3] : memref<128x512xbf16, #tpu.memory_space<vmem>>, vector<128x512xbf16>
    %cst = arith.constant dense<0.000000e+00> : vector<16x512xf32>
    %3 = tpu.matmul %1, %2, %cst {dimension_numbers = #tpu.dot_dimension_numbers<[1], [0], [0], [1], [0, 0, 1, 1], [], []>} : vector<16x128xbf16>, vector<128x512xbf16>, vector<16x512xf32> -> vector<16x512xf32>
    %c16_i32 = arith.constant 16 : i32
    %4 = arith.muli %arg1, %c16_i32 : i32
    %5 = tpu.assume_multiple %4, 16 : i32
    %6 = arith.truncf %3 : vector<16x512xf32> to vector<16x512xbf16>
    %c0_4 = arith.constant 0 : index
    %7 = arith.index_cast %5 : i32 to index
    %c0_5 = arith.constant 0 : index
    %8 = vector.load %arg4[%c0_4, %7, %c0_5] : memref<1x16x512xbf16, #tpu.memory_space<vmem>>, vector<1x16x512xbf16>
    %9 = vector.shape_cast %8 : vector<1x16x512xbf16> to vector<16x512xbf16>
    %10 = vector.shape_cast %6 : vector<16x512xbf16> to vector<1x16x512xbf16>
    tpu.vector_store %arg4[%c0_4, %7, %c0_5], %10 {strides = array<i32>} : memref<1x16x512xbf16, #tpu.memory_space<vmem>>, vector<1x16x512xbf16>,
    %c0_i32 = arith.constant 0 : i32
    %11 = arith.cmpi eq, %arg1, %c0_i32 : i32
    %12 = arith.extui %11 : i1 to i32
    %c0_i32_6 = arith.constant 0 : i32
    %13 = arith.cmpi ne, %12, %c0_i32_6 : i32
    scf.if %13 {
      %cst_19 = arith.constant 0.000000e+00 : f32
      %28 = vector.broadcast %cst_19 : f32 to vector<1x512xf32>
      %c0_20 = arith.constant 0 : index
      %c0_21 = arith.constant 0 : index
      %29 = vector.load %arg5[%c0_20, %c0_21] : memref<1x512xf32, #tpu.memory_space<vmem>>, vector<1x512xf32>
      tpu.vector_store %arg5[%c0_20, %c0_21], %28 {strides = array<i32>} : memref<1x512xf32, #tpu.memory_space<vmem>>, vector<1x512xf32>,
      %cst_22 = arith.constant 0.000000e+00 : f32
      %30 = vector.broadcast %cst_22 : f32 to vector<1x512xf32>
      %c0_23 = arith.constant 0 : index
      %c0_24 = arith.constant 0 : index
      %31 = vector.load %arg6[%c0_23, %c0_24] : memref<1x512xf32, #tpu.memory_space<vmem>>, vector<1x512xf32>
      tpu.vector_store %arg6[%c0_23, %c0_24], %30 {strides = array<i32>} : memref<1x512xf32, #tpu.memory_space<vmem>>, vector<1x512xf32>,
    } else {
    }
    %c0_7 = arith.constant 0 : index
    %c0_8 = arith.constant 0 : index
    %14 = vector.load %arg5[%c0_7, %c0_8] : memref<1x512xf32, #tpu.memory_space<vmem>>, vector<1x512xf32>
    %cst_9 = arith.constant dense<0.000000e+00> : vector<512xf32>
    %15 = vector.multi_reduction <add>, %3, %cst_9 [0] : vector<16x512xf32> to vector<512xf32>
    %16 = vector.shape_cast %15 : vector<512xf32> to vector<1x512xf32>
    %17 = arith.addf %14, %16 : vector<1x512xf32>
    %c0_10 = arith.constant 0 : index
    %c0_11 = arith.constant 0 : index
    %18 = vector.load %arg5[%c0_10, %c0_11] : memref<1x512xf32, #tpu.memory_space<vmem>>, vector<1x512xf32>
    tpu.vector_store %arg5[%c0_10, %c0_11], %17 {strides = array<i32>} : memref<1x512xf32, #tpu.memory_space<vmem>>, vector<1x512xf32>,
    %c0_12 = arith.constant 0 : index
    %c0_13 = arith.constant 0 : index
    %19 = vector.load %arg6[%c0_12, %c0_13] : memref<1x512xf32, #tpu.memory_space<vmem>>, vector<1x512xf32>
    %20 = arith.mulf %3, %3 : vector<16x512xf32>
    %cst_14 = arith.constant dense<0.000000e+00> : vector<512xf32>
    %21 = vector.multi_reduction <add>, %20, %cst_14 [0] : vector<16x512xf32> to vector<512xf32>
    %22 = vector.shape_cast %21 : vector<512xf32> to vector<1x512xf32>
    %23 = arith.addf %19, %22 : vector<1x512xf32>
    %c0_15 = arith.constant 0 : index
    %c0_16 = arith.constant 0 : index
    %24 = vector.load %arg6[%c0_15, %c0_16] : memref<1x512xf32, #tpu.memory_space<vmem>>, vector<1x512xf32>
    tpu.vector_store %arg6[%c0_15, %c0_16], %23 {strides = array<i32>} : memref<1x512xf32, #tpu.memory_space<vmem>>, vector<1x512xf32>,
    %c0_i32_17 = arith.constant 0 : i32
    %25 = arith.cmpi eq, %arg1, %c0_i32_17 : i32
    %26 = arith.extui %25 : i1 to i32
    %c0_i32_18 = arith.constant 0 : i32
    %27 = arith.cmpi ne, %26, %c0_i32_18 : i32
    scf.if %27 {
      %c0_19 = arith.constant 0 : index
      %c0_20 = arith.constant 0 : index
      %28 = vector.load %arg5[%c0_19, %c0_20] : memref<1x512xf32, #tpu.memory_space<vmem>>, vector<1x512xf32>
      %c0_21 = arith.constant 0 : index
      %c0_22 = arith.constant 0 : index
      %29 = vector.load %arg6[%c0_21, %c0_22] : memref<1x512xf32, #tpu.memory_space<vmem>>, vector<1x512xf32>
      %30 = vector.extract_strided_slice %28 {offsets = [0, 0], sizes = [1, 128], strides = [1, 1]} : vector<1x512xf32> to vector<1x128xf32>
      %31 = vector.extract_strided_slice %29 {offsets = [0, 0], sizes = [1, 128], strides = [1, 1]} : vector<1x512xf32> to vector<1x128xf32>
      %32 = vector.extract_strided_slice %28 {offsets = [0, 128], sizes = [1, 128], strides = [1, 1]} : vector<1x512xf32> to vector<1x128xf32>
      %33 = arith.addf %30, %32 : vector<1x128xf32>
      %34 = vector.extract_strided_slice %29 {offsets = [0, 128], sizes = [1, 128], strides = [1, 1]} : vector<1x512xf32> to vector<1x128xf32>
      %35 = arith.addf %31, %34 : vector<1x128xf32>
      %36 = vector.extract_strided_slice %28 {offsets = [0, 256], sizes = [1, 128], strides = [1, 1]} : vector<1x512xf32> to vector<1x128xf32>
      %37 = arith.addf %33, %36 : vector<1x128xf32>
      %38 = vector.extract_strided_slice %29 {offsets = [0, 256], sizes = [1, 128], strides = [1, 1]} : vector<1x512xf32> to vector<1x128xf32>
      %39 = arith.addf %35, %38 : vector<1x128xf32>
      %40 = vector.extract_strided_slice %28 {offsets = [0, 384], sizes = [1, 128], strides = [1, 1]} : vector<1x512xf32> to vector<1x128xf32>
      %41 = arith.addf %37, %40 : vector<1x128xf32>
      %42 = vector.extract_strided_slice %29 {offsets = [0, 384], sizes = [1, 128], strides = [1, 1]} : vector<1x512xf32> to vector<1x128xf32>
      %43 = arith.addf %39, %42 : vector<1x128xf32>
      %44 = tpu.concatenate %41, %41, %41, %41 in 1 : vector<1x128xf32>, vector<1x128xf32>, vector<1x128xf32>, vector<1x128xf32> -> vector<1x512xf32>
      %45 = tpu.concatenate %43, %43, %43, %43 in 1 : vector<1x128xf32>, vector<1x128xf32>, vector<1x128xf32>, vector<1x128xf32> -> vector<1x512xf32>
      %cst_23 = arith.constant 1.562500e-02 : f32
      %46 = vector.broadcast %cst_23 : f32 to vector<1x512xf32>
      %47 = arith.mulf %44, %46 : vector<1x512xf32>
      %cst_24 = arith.constant 1.562500e-02 : f32
      %48 = vector.broadcast %cst_24 : f32 to vector<1x512xf32>
      %49 = arith.mulf %45, %48 : vector<1x512xf32>
      %50 = arith.mulf %47, %47 : vector<1x512xf32>
      %51 = arith.subf %49, %50 : vector<1x512xf32>
      %cst_25 = arith.constant 0.000000e+00 : f32
      %52 = vector.broadcast %cst_25 : f32 to vector<1x512xf32>
      %53 = arith.maximumf %51, %52 : vector<1x512xf32>
      %cst_26 = arith.constant 9.99999974E-6 : f32
      %54 = vector.broadcast %cst_26 : f32 to vector<1x512xf32>
      %55 = arith.addf %53, %54 : vector<1x512xf32>
      %56 = math.rsqrt %55 : vector<1x512xf32>
      %c0_i32_27 = arith.constant 0 : i32
      %c16_i32_28 = arith.constant 16 : i32
      %57 = arith.muli %c0_i32_27, %c16_i32_28 : i32
      %58 = tpu.assume_multiple %57, 16 : i32
      %c0_29 = arith.constant 0 : index
      %59 = arith.index_cast %58 : i32 to index
      %c0_30 = arith.constant 0 : index
      %60 = vector.load %arg4[%c0_29, %59, %c0_30] : memref<1x16x512xbf16, #tpu.memory_space<vmem>>, vector<1x16x512xbf16>
      %61 = vector.shape_cast %60 : vector<1x16x512xbf16> to vector<16x512xbf16>
      %62 = arith.extf %61 : vector<16x512xbf16> to vector<16x512xf32>
      %63 = vector.broadcast %47 : vector<1x512xf32> to vector<16x512xf32>
      %64 = arith.subf %62, %63 : vector<16x512xf32>
      %65 = vector.broadcast %56 : vector<1x512xf32> to vector<16x512xf32>
      %66 = arith.mulf %64, %65 : vector<16x512xf32>
      %cst_31 = arith.constant 0.000000e+00 : f32
      %67 = vector.broadcast %cst_31 : f32 to vector<16x512xf32>
      %68 = arith.maximumf %66, %67 : vector<16x512xf32>
      %69 = arith.truncf %68 : vector<16x512xf32> to vector<16x512xbf16>
      %c0_32 = arith.constant 0 : index
      %70 = arith.index_cast %58 : i32 to index
      %c0_33 = arith.constant 0 : index
      %71 = vector.load %arg4[%c0_32, %70, %c0_33] : memref<1x16x512xbf16, #tpu.memory_space<vmem>>, vector<1x16x512xbf16>
      %72 = vector.shape_cast %71 : vector<1x16x512xbf16> to vector<16x512xbf16>
      %73 = vector.shape_cast %69 : vector<16x512xbf16> to vector<1x16x512xbf16>
      tpu.vector_store %arg4[%c0_32, %70, %c0_33], %73 {strides = array<i32>} : memref<1x16x512xbf16, #tpu.memory_space<vmem>>, vector<1x16x512xbf16>,
      %c1_i32 = arith.constant 1 : i32
    } else {
    }
    return
  }
  func.func @transform_0(%arg0: i32, %arg1: i32) -> (i32, i32, i32) {
    %c0_i32 = arith.constant 0 : i32
    %c0_i32_0 = arith.constant 0 : i32
    return %arg0, %arg1, %c0_i32 : i32, i32, i32
  }
  func.func @transform_1(%arg0: i32, %arg1: i32) -> (i32, i32) {
    %c0_i32 = arith.constant 0 : i32
    %c0_i32_0 = arith.constant 0 : i32
    %c0_i32_1 = arith.constant 0 : i32
    return %c0_i32, %c0_i32_0 : i32, i32
  }
  func.func @transform_2(%arg0: i32, %arg1: i32) -> (i32, i32, i32) {
    %c0_i32 = arith.constant 0 : i32
    %c0_i32_0 = arith.constant 0 : i32
    %c0_i32_1 = arith.constant 0 : i32
    return %arg0, %c0_i32, %c0_i32_0 : i32, i32, i32
  }
}

module attributes {stable_mosaic.version = 11 : i64} {
  func.func @kernel(%arg0: i32, %arg1: i32, %arg2: memref<1x64x128xbf16, #tpu.memory_space<vmem>>, %arg3: memref<128x512xbf16, #tpu.memory_space<vmem>>, %arg4: memref<1x64x512xbf16, #tpu.memory_space<vmem>>, %arg5: memref<1x512xf32, #tpu.memory_space<vmem>>, %arg6: memref<1x512xf32, #tpu.memory_space<vmem>>) attributes {dimension_semantics = [#tpu.dimension_semantics<parallel>, #tpu.dimension_semantics<arbitrary>], iteration_bounds = array<i64: 2, 1>, scalar_prefetch = 0 : i64, scratch_operands = 2 : i64, tpu.core_type = #tpu.core_type<tc>, window_params = [{transform_indices = @transform_0, window_bounds = array<i64: 1, 64, 128>}, {pipeline_mode = #tpu.pipeline_mode<synchronous>, transform_indices = @transform_1, window_bounds = array<i64: 128, 512>}, {transform_indices = @transform_2, window_bounds = array<i64: 1, 64, 512>}]} {
    %c0 = arith.constant 0 : index
    %c0_0 = arith.constant 0 : index
    %c0_1 = arith.constant 0 : index
    %0 = vector.load %arg2[%c0, %c0_0, %c0_1] : memref<1x64x128xbf16, #tpu.memory_space<vmem>>, vector<1x64x128xbf16>
    %1 = vector.shape_cast %0 : vector<1x64x128xbf16> to vector<64x128xbf16>
    %c0_2 = arith.constant 0 : index
    %c0_3 = arith.constant 0 : index
    %2 = vector.load %arg3[%c0_2, %c0_3] : memref<128x512xbf16, #tpu.memory_space<vmem>>, vector<128x512xbf16>
    %cst = arith.constant dense<0.000000e+00> : vector<64x512xf32>
    %3 = tpu.matmul %1, %2, %cst {dimension_numbers = #tpu.dot_dimension_numbers<[1], [0], [0], [1], [0, 0, 1, 1], [], []>} : vector<64x128xbf16>, vector<128x512xbf16>, vector<64x512xf32> -> vector<64x512xf32>
    %c64_i32 = arith.constant 64 : i32
    %4 = arith.muli %arg1, %c64_i32 : i32
    %5 = tpu.assume_multiple %4, 64 : i32
    %6 = arith.truncf %3 : vector<64x512xf32> to vector<64x512xbf16>
    %c0_4 = arith.constant 0 : index
    %7 = arith.index_cast %5 : i32 to index
    %c0_5 = arith.constant 0 : index
    %8 = vector.load %arg4[%c0_4, %7, %c0_5] : memref<1x64x512xbf16, #tpu.memory_space<vmem>>, vector<1x64x512xbf16>
    %9 = vector.shape_cast %8 : vector<1x64x512xbf16> to vector<64x512xbf16>
    %10 = vector.shape_cast %6 : vector<64x512xbf16> to vector<1x64x512xbf16>
    tpu.vector_store %arg4[%c0_4, %7, %c0_5], %10 {strides = array<i32>} : memref<1x64x512xbf16, #tpu.memory_space<vmem>>, vector<1x64x512xbf16>,
    %c0_i32 = arith.constant 0 : i32
    %11 = arith.cmpi eq, %arg1, %c0_i32 : i32
    %12 = arith.extui %11 : i1 to i32
    %c0_i32_6 = arith.constant 0 : i32
    %13 = arith.cmpi ne, %12, %c0_i32_6 : i32
    scf.if %13 {
      %cst_19 = arith.constant 0.000000e+00 : f32
      %28 = vector.broadcast %cst_19 : f32 to vector<1x512xf32>
      %c0_20 = arith.constant 0 : index
      %c0_21 = arith.constant 0 : index
      %29 = vector.load %arg5[%c0_20, %c0_21] : memref<1x512xf32, #tpu.memory_space<vmem>>, vector<1x512xf32>
      tpu.vector_store %arg5[%c0_20, %c0_21], %28 {strides = array<i32>} : memref<1x512xf32, #tpu.memory_space<vmem>>, vector<1x512xf32>,
      %cst_22 = arith.constant 0.000000e+00 : f32
      %30 = vector.broadcast %cst_22 : f32 to vector<1x512xf32>
      %c0_23 = arith.constant 0 : index
      %c0_24 = arith.constant 0 : index
      %31 = vector.load %arg6[%c0_23, %c0_24] : memref<1x512xf32, #tpu.memory_space<vmem>>, vector<1x512xf32>
      tpu.vector_store %arg6[%c0_23, %c0_24], %30 {strides = array<i32>} : memref<1x512xf32, #tpu.memory_space<vmem>>, vector<1x512xf32>,
    } else {
    }
    %c0_7 = arith.constant 0 : index
    %c0_8 = arith.constant 0 : index
    %14 = vector.load %arg5[%c0_7, %c0_8] : memref<1x512xf32, #tpu.memory_space<vmem>>, vector<1x512xf32>
    %cst_9 = arith.constant dense<0.000000e+00> : vector<512xf32>
    %15 = vector.multi_reduction <add>, %3, %cst_9 [0] : vector<64x512xf32> to vector<512xf32>
    %16 = vector.shape_cast %15 : vector<512xf32> to vector<1x512xf32>
    %17 = arith.addf %14, %16 : vector<1x512xf32>
    %c0_10 = arith.constant 0 : index
    %c0_11 = arith.constant 0 : index
    %18 = vector.load %arg5[%c0_10, %c0_11] : memref<1x512xf32, #tpu.memory_space<vmem>>, vector<1x512xf32>
    tpu.vector_store %arg5[%c0_10, %c0_11], %17 {strides = array<i32>} : memref<1x512xf32, #tpu.memory_space<vmem>>, vector<1x512xf32>,
    %c0_12 = arith.constant 0 : index
    %c0_13 = arith.constant 0 : index
    %19 = vector.load %arg6[%c0_12, %c0_13] : memref<1x512xf32, #tpu.memory_space<vmem>>, vector<1x512xf32>
    %20 = arith.mulf %3, %3 : vector<64x512xf32>
    %cst_14 = arith.constant dense<0.000000e+00> : vector<512xf32>
    %21 = vector.multi_reduction <add>, %20, %cst_14 [0] : vector<64x512xf32> to vector<512xf32>
    %22 = vector.shape_cast %21 : vector<512xf32> to vector<1x512xf32>
    %23 = arith.addf %19, %22 : vector<1x512xf32>
    %c0_15 = arith.constant 0 : index
    %c0_16 = arith.constant 0 : index
    %24 = vector.load %arg6[%c0_15, %c0_16] : memref<1x512xf32, #tpu.memory_space<vmem>>, vector<1x512xf32>
    tpu.vector_store %arg6[%c0_15, %c0_16], %23 {strides = array<i32>} : memref<1x512xf32, #tpu.memory_space<vmem>>, vector<1x512xf32>,
    %c0_i32_17 = arith.constant 0 : i32
    %25 = arith.cmpi eq, %arg1, %c0_i32_17 : i32
    %26 = arith.extui %25 : i1 to i32
    %c0_i32_18 = arith.constant 0 : i32
    %27 = arith.cmpi ne, %26, %c0_i32_18 : i32
    scf.if %27 {
      %c0_19 = arith.constant 0 : index
      %c0_20 = arith.constant 0 : index
      %28 = vector.load %arg5[%c0_19, %c0_20] : memref<1x512xf32, #tpu.memory_space<vmem>>, vector<1x512xf32>
      %c0_21 = arith.constant 0 : index
      %c0_22 = arith.constant 0 : index
      %29 = vector.load %arg6[%c0_21, %c0_22] : memref<1x512xf32, #tpu.memory_space<vmem>>, vector<1x512xf32>
      %30 = vector.extract_strided_slice %28 {offsets = [0, 0], sizes = [1, 128], strides = [1, 1]} : vector<1x512xf32> to vector<1x128xf32>
      %31 = vector.extract_strided_slice %29 {offsets = [0, 0], sizes = [1, 128], strides = [1, 1]} : vector<1x512xf32> to vector<1x128xf32>
      %32 = vector.extract_strided_slice %28 {offsets = [0, 128], sizes = [1, 128], strides = [1, 1]} : vector<1x512xf32> to vector<1x128xf32>
      %33 = arith.addf %30, %32 : vector<1x128xf32>
      %34 = vector.extract_strided_slice %29 {offsets = [0, 128], sizes = [1, 128], strides = [1, 1]} : vector<1x512xf32> to vector<1x128xf32>
      %35 = arith.addf %31, %34 : vector<1x128xf32>
      %36 = vector.extract_strided_slice %28 {offsets = [0, 256], sizes = [1, 128], strides = [1, 1]} : vector<1x512xf32> to vector<1x128xf32>
      %37 = arith.addf %33, %36 : vector<1x128xf32>
      %38 = vector.extract_strided_slice %29 {offsets = [0, 256], sizes = [1, 128], strides = [1, 1]} : vector<1x512xf32> to vector<1x128xf32>
      %39 = arith.addf %35, %38 : vector<1x128xf32>
      %40 = vector.extract_strided_slice %28 {offsets = [0, 384], sizes = [1, 128], strides = [1, 1]} : vector<1x512xf32> to vector<1x128xf32>
      %41 = arith.addf %37, %40 : vector<1x128xf32>
      %42 = vector.extract_strided_slice %29 {offsets = [0, 384], sizes = [1, 128], strides = [1, 1]} : vector<1x512xf32> to vector<1x128xf32>
      %43 = arith.addf %39, %42 : vector<1x128xf32>
      %44 = tpu.concatenate %41, %41, %41, %41 in 1 : vector<1x128xf32>, vector<1x128xf32>, vector<1x128xf32>, vector<1x128xf32> -> vector<1x512xf32>
      %45 = tpu.concatenate %43, %43, %43, %43 in 1 : vector<1x128xf32>, vector<1x128xf32>, vector<1x128xf32>, vector<1x128xf32> -> vector<1x512xf32>
      %cst_23 = arith.constant 3.906250e-03 : f32
      %46 = vector.broadcast %cst_23 : f32 to vector<1x512xf32>
      %47 = arith.mulf %44, %46 : vector<1x512xf32>
      %cst_24 = arith.constant 3.906250e-03 : f32
      %48 = vector.broadcast %cst_24 : f32 to vector<1x512xf32>
      %49 = arith.mulf %45, %48 : vector<1x512xf32>
      %50 = arith.mulf %47, %47 : vector<1x512xf32>
      %51 = arith.subf %49, %50 : vector<1x512xf32>
      %cst_25 = arith.constant 0.000000e+00 : f32
      %52 = vector.broadcast %cst_25 : f32 to vector<1x512xf32>
      %53 = arith.maximumf %51, %52 : vector<1x512xf32>
      %cst_26 = arith.constant 9.99999974E-6 : f32
      %54 = vector.broadcast %cst_26 : f32 to vector<1x512xf32>
      %55 = arith.addf %53, %54 : vector<1x512xf32>
      %56 = math.rsqrt %55 : vector<1x512xf32>
      %c0_i32_27 = arith.constant 0 : i32
      %c64_i32_28 = arith.constant 64 : i32
      %57 = arith.muli %c0_i32_27, %c64_i32_28 : i32
      %58 = tpu.assume_multiple %57, 64 : i32
      %c0_29 = arith.constant 0 : index
      %59 = arith.index_cast %58 : i32 to index
      %c0_30 = arith.constant 0 : index
      %60 = vector.load %arg4[%c0_29, %59, %c0_30] : memref<1x64x512xbf16, #tpu.memory_space<vmem>>, vector<1x64x512xbf16>
      %61 = vector.shape_cast %60 : vector<1x64x512xbf16> to vector<64x512xbf16>
      %62 = arith.extf %61 : vector<64x512xbf16> to vector<64x512xf32>
      %63 = vector.broadcast %47 : vector<1x512xf32> to vector<64x512xf32>
      %64 = arith.subf %62, %63 : vector<64x512xf32>
      %65 = vector.broadcast %56 : vector<1x512xf32> to vector<64x512xf32>
      %66 = arith.mulf %64, %65 : vector<64x512xf32>
      %cst_31 = arith.constant 0.000000e+00 : f32
      %67 = vector.broadcast %cst_31 : f32 to vector<64x512xf32>
      %68 = arith.maximumf %66, %67 : vector<64x512xf32>
      %69 = arith.truncf %68 : vector<64x512xf32> to vector<64x512xbf16>
      %c0_32 = arith.constant 0 : index
      %70 = arith.index_cast %58 : i32 to index
      %c0_33 = arith.constant 0 : index
      %71 = vector.load %arg4[%c0_32, %70, %c0_33] : memref<1x64x512xbf16, #tpu.memory_space<vmem>>, vector<1x64x512xbf16>
      %72 = vector.shape_cast %71 : vector<1x64x512xbf16> to vector<64x512xbf16>
      %73 = vector.shape_cast %69 : vector<64x512xbf16> to vector<1x64x512xbf16>
      tpu.vector_store %arg4[%c0_32, %70, %c0_33], %73 {strides = array<i32>} : memref<1x64x512xbf16, #tpu.memory_space<vmem>>, vector<1x64x512xbf16>,
      %c1_i32 = arith.constant 1 : i32
    } else {
    }
    return
  }
  func.func @transform_0(%arg0: i32, %arg1: i32) -> (i32, i32, i32) {
    %c0_i32 = arith.constant 0 : i32
    %c0_i32_0 = arith.constant 0 : i32
    return %arg0, %arg1, %c0_i32 : i32, i32, i32
  }
  func.func @transform_1(%arg0: i32, %arg1: i32) -> (i32, i32) {
    %c0_i32 = arith.constant 0 : i32
    %c0_i32_0 = arith.constant 0 : i32
    %c0_i32_1 = arith.constant 0 : i32
    return %c0_i32, %c0_i32_0 : i32, i32
  }
  func.func @transform_2(%arg0: i32, %arg1: i32) -> (i32, i32, i32) {
    %c0_i32 = arith.constant 0 : i32
    %c0_i32_0 = arith.constant 0 : i32
    %c0_i32_1 = arith.constant 0 : i32
    return %arg0, %c0_i32, %c0_i32_0 : i32, i32, i32
  }
}

module attributes {stable_mosaic.version = 11 : i64} {
  func.func @kernel(%arg0: i32, %arg1: i32, %arg2: memref<1x256x512xbf16, #tpu.memory_space<vmem>>, %arg3: memref<512x128xbf16, #tpu.memory_space<vmem>>, %arg4: memref<1x128xf32, #tpu.memory_space<vmem>>, %arg5: memref<1x256x128xf32, #tpu.memory_space<vmem>>) attributes {dimension_semantics = [#tpu.dimension_semantics<parallel>, #tpu.dimension_semantics<parallel>], iteration_bounds = array<i64: 2, 1>, scalar_prefetch = 0 : i64, scratch_operands = 0 : i64, tpu.core_type = #tpu.core_type<tc>, window_params = [{transform_indices = @transform_0, window_bounds = array<i64: 1, 256, 512>}, {pipeline_mode = #tpu.pipeline_mode<synchronous>, transform_indices = @transform_1, window_bounds = array<i64: 512, 128>}, {pipeline_mode = #tpu.pipeline_mode<synchronous>, transform_indices = @transform_2, window_bounds = array<i64: 1, 128>}, {transform_indices = @transform_3, window_bounds = array<i64: 1, 256, 128>}]} {
    %c0 = arith.constant 0 : index
    %c0_0 = arith.constant 0 : index
    %c0_1 = arith.constant 0 : index
    %0 = vector.load %arg2[%c0, %c0_0, %c0_1] : memref<1x256x512xbf16, #tpu.memory_space<vmem>>, vector<1x256x512xbf16>
    %1 = vector.shape_cast %0 : vector<1x256x512xbf16> to vector<256x512xbf16>
    %c0_2 = arith.constant 0 : index
    %c0_3 = arith.constant 0 : index
    %2 = vector.load %arg3[%c0_2, %c0_3] : memref<512x128xbf16, #tpu.memory_space<vmem>>, vector<512x128xbf16>
    %cst = arith.constant dense<0.000000e+00> : vector<256x128xf32>
    %3 = tpu.matmul %1, %2, %cst {dimension_numbers = #tpu.dot_dimension_numbers<[1], [0], [0], [1], [0, 0, 1, 1], [], []>} : vector<256x512xbf16>, vector<512x128xbf16>, vector<256x128xf32> -> vector<256x128xf32>
    %c0_4 = arith.constant 0 : index
    %c0_5 = arith.constant 0 : index
    %4 = vector.load %arg4[%c0_4, %c0_5] : memref<1x128xf32, #tpu.memory_space<vmem>>, vector<1x128xf32>
    %5 = vector.broadcast %4 : vector<1x128xf32> to vector<256x128xf32>
    %6 = arith.addf %3, %5 : vector<256x128xf32>
    %7 = math.tanh %6 : vector<256x128xf32>
    %c0_6 = arith.constant 0 : index
    %c0_7 = arith.constant 0 : index
    %c0_8 = arith.constant 0 : index
    %8 = vector.load %arg5[%c0_6, %c0_7, %c0_8] : memref<1x256x128xf32, #tpu.memory_space<vmem>>, vector<1x256x128xf32>
    %9 = vector.shape_cast %8 : vector<1x256x128xf32> to vector<256x128xf32>
    %10 = vector.shape_cast %7 : vector<256x128xf32> to vector<1x256x128xf32>
    tpu.vector_store %arg5[%c0_6, %c0_7, %c0_8], %10 {strides = array<i32>} : memref<1x256x128xf32, #tpu.memory_space<vmem>>, vector<1x256x128xf32>,
    return
  }
  func.func @transform_0(%arg0: i32, %arg1: i32) -> (i32, i32, i32) {
    %c0_i32 = arith.constant 0 : i32
    %c0_i32_0 = arith.constant 0 : i32
    return %arg0, %arg1, %c0_i32 : i32, i32, i32
  }
  func.func @transform_1(%arg0: i32, %arg1: i32) -> (i32, i32) {
    %c0_i32 = arith.constant 0 : i32
    %c0_i32_0 = arith.constant 0 : i32
    %c0_i32_1 = arith.constant 0 : i32
    return %c0_i32, %c0_i32_0 : i32, i32
  }
  func.func @transform_2(%arg0: i32, %arg1: i32) -> (i32, i32) {
    %c0_i32 = arith.constant 0 : i32
    %c0_i32_0 = arith.constant 0 : i32
    %c0_i32_1 = arith.constant 0 : i32
    return %c0_i32, %c0_i32_0 : i32, i32
  }
  func.func @transform_3(%arg0: i32, %arg1: i32) -> (i32, i32, i32) {
    %c0_i32 = arith.constant 0 : i32
    %c0_i32_0 = arith.constant 0 : i32
    return %arg0, %arg1, %c0_i32 : i32, i32, i32
  }
}

</mosaic_0001>

<llo_original>
// kernel: generator_forward.10
$region0: #{generator_forward.10}
  #allocation0 [shape = 'u32[]', space=smem, size = 0x4, offset = 0x4, fixed_abs, tag = 'smem constant byte address 0x4 - core index']
  #allocation1 [shape = 'u32[144,128]{1,0:T(1,128)}', space=vmem, size = 0x12000, scoped, tag = 'internal scratch']
  %s0 = inlined_call_operand.vmem [shape: bf16[2,256,256], index: 0, kind: input, shape index: {}]
  %s1 = inlined_call_operand.vmem [shape: bf16[256,128], index: 1, kind: input, shape index: {}]
  %s2 = inlined_call_operand.vmem [shape: f32[1,128], index: 2, kind: input, shape index: {}]
  %s3 = inlined_call_operand.vmem [shape: bf16[2,256,128], index: 3, kind: output, shape index: {}]
  %s4 = sld [smem:[#allocation0]]
  $region45: #{generator_forward.10} parent=0
    _
  %s6 = ssub.s32 1, %s4
  %s7 = scalar_select 0, %s6, %s4
  loop: start=0, step=1, limit=4
  $region2: #{generator_forward.10} parent=0 // loop_pre_header
    _
  $region3: #{generator_forward.10} parent=0 // loop_header
    %s9 = sphi 0, %s13
    %p10 = scmp.ge.s32.totalorder %s9, 4
    %s16 = sphi 0, %s28
    %s17 = sphi 0, %s24
    %s18 = sphi 0, %s16
    %s19 = sphi 0, %s17
    %s20 = sphi 0, %s18
    %s21 = sphi 0, %s19
    %s33 = sphi 0, %s35
    %s36 = sphi 0, %s33
    %s37 = sphi 0, %s36
    %s53 = sphi 0, %s37
    %s57 = sphi 0, %s57
    %s59 = sphi 0, %s57
    %s60 = sphi 0, %s59
    %s74 = sphi 0, %s60
    %s78 = sphi 0, %s78
    %s80 = sphi 0, %s78
    %s81 = sphi 0, %s80
    %s95 = sphi 0, %s81
    %s103 = sphi 0, %s105
    %s106 = sphi 0, %s103
    %s107 = sphi 0, %s106
    %s123 = sphi 0, %s107
  $region4: #{generator_forward.10} parent=0 // loop_header_branch
    %12 = sbr.rel (%p10) target = $region8
  $region5: #{generator_forward.10} parent=0 // loop_body
    %s14 = ssub.s32 %s9, 1
    %s15 = ssub.s32 %s9, 2
    %s22 = sadd.s32 1, %s17
    %p23 = scmp.ge.s32.totalorder %s22, 1
    %s24 = scalar_select %p23, 0, %s22
    %s25 = sadd.s32 1, %s16
    %s26 = scalar_select %p23, %s25, %s16
    %p27 = scmp.ge.s32.totalorder %s26, 2
    %s28 = scalar_select %p27, 0, %s26
    %s29 = ssub.s32 %s16, %s28
    %s30 = ssub.s32 %s17, %s24
    %s31 = sor.u32 %s29, %s30
    %p32 = scmp.eq.s32.totalorder %s31, 0
    %s34 = sadd.s32 %s33, 1
    %s35 = scalar_select %p32, %s33, %s34
    %p38 = pneg %p32
    %p39 = scmp.eq.s32.totalorder %s9, 1
    %p40 = por %p38, %p39
    %p41 = scmp.ne.s32.totalorder %s33, %s36
    %p42 = scmp.eq.s32.totalorder %s9, 0
    %p43 = por %p41, %p42
    %p44 = scmp.ne.s32.totalorder %s33, %s36
    %p45 = scmp.eq.s32.totalorder %s14, 1
    %p46 = por %p44, %p45
    %p47 = scmp.ne.s32.totalorder %s36, %s37
    %p48 = scmp.eq.s32.totalorder %s14, 0
    %p49 = por %p47, %p48
    %p50 = scmp.ne.s32.totalorder %s36, %s37
    %p51 = scmp.eq.s32.totalorder %s15, 1
    %p52 = por %p50, %p51
    %p54 = scmp.ne.s32.totalorder %s37, %s53
    %p55 = scmp.eq.s32.totalorder %s15, 0
    %p56 = por %p54, %p55
    %s58 = sadd.s32 %s57, 1
    %p61 = scmp.eq.s32.totalorder %s9, 1
    %p62 = scmp.ne.s32.totalorder %s57, %s59
    %p63 = scmp.eq.s32.totalorder %s9, 0
    %p64 = por %p62, %p63
    %p65 = scmp.ne.s32.totalorder %s57, %s59
    %p66 = scmp.eq.s32.totalorder %s14, 1
    %p67 = por %p65, %p66
    %p68 = scmp.ne.s32.totalorder %s59, %s60
    %p69 = scmp.eq.s32.totalorder %s14, 0
    %p70 = por %p68, %p69
    %p71 = scmp.ne.s32.totalorder %s59, %s60
    %p72 = scmp.eq.s32.totalorder %s15, 1
    %p73 = por %p71, %p72
    %p75 = scmp.ne.s32.totalorder %s60, %s74
    %p76 = scmp.eq.s32.totalorder %s15, 0
    %p77 = por %p75, %p76
    %s79 = sadd.s32 %s78, 1
    %p82 = scmp.eq.s32.totalorder %s9, 1
    %p83 = scmp.ne.s32.totalorder %s78, %s80
    %p84 = scmp.eq.s32.totalorder %s9, 0
    %p85 = por %p83, %p84
    %p86 = scmp.ne.s32.totalorder %s78, %s80
    %p87 = scmp.eq.s32.totalorder %s14, 1
    %p88 = por %p86, %p87
    %p89 = scmp.ne.s32.totalorder %s80, %s81
    %p90 = scmp.eq.s32.totalorder %s14, 0
    %p91 = por %p89, %p90
    %p92 = scmp.ne.s32.totalorder %s80, %s81
    %p93 = scmp.eq.s32.totalorder %s15, 1
    %p94 = por %p92, %p93
    %p96 = scmp.ne.s32.totalorder %s81, %s95
    %p97 = scmp.eq.s32.totalorder %s15, 0
    %p98 = por %p96, %p97
    %s99 = ssub.s32 %s16, %s28
    %s100 = ssub.s32 %s17, %s24
    %s101 = sor.u32 %s99, %s100
    %p102 = scmp.eq.s32.totalorder %s101, 0
    %s104 = sadd.s32 %s103, 1
    %s105 = scalar_select %p102, %s103, %s104
    %p108 = pneg %p102
    %p109 = scmp.eq.s32.totalorder %s9, 1
    %p110 = por %p108, %p109
    %p111 = scmp.ne.s32.totalorder %s103, %s106
    %p112 = scmp.eq.s32.totalorder %s9, 0
    %p113 = por %p111, %p112
    %p114 = scmp.ne.s32.totalorder %s103, %s106
    %p115 = scmp.eq.s32.totalorder %s14, 1
    %p116 = por %p114, %p115
    %p117 = scmp.ne.s32.totalorder %s106, %s107
    %p118 = scmp.eq.s32.totalorder %s14, 0
    %p119 = por %p117, %p118
    %p120 = scmp.ne.s32.totalorder %s106, %s107
    %p121 = scmp.eq.s32.totalorder %s15, 1
    %p122 = por %p120, %p121
    %p124 = scmp.ne.s32.totalorder %s107, %s123
    %p125 = scmp.eq.s32.totalorder %s15, 0
    %p126 = por %p124, %p125
    %p127 = scmp.le.s32.totalorder 1, %s9
    %p128 = scmp.lt.s32.totalorder %s9, 3
    %p129 = pnand %p127, %p128
    %p130 = pneg %p129
    // Predicated region
    $region9: #{generator_forward.10} parent=5 // pred_check
      _
    $region10: #{generator_forward.10} parent=5 // pred_check_branch
      %132 = sbr.rel (%p129) target = $region12
    $region11: #{generator_forward.10} parent=5 // pred_region
      %s133 = ssub.s32 %s9, 1
      // Predicated region
      $region13: #{generator_forward.10} parent=11 // pred_check
        %p134 = pneg %p70
      $region14: #{generator_forward.10} parent=11 // pred_check_branch
        %136 = sbr.rel (%p134) target = $region16
      $region15: #{generator_forward.10} parent=11 // pred_region
        _
      $region16: #{generator_forward.10} parent=11 // pred_fallthru
        _
      // Predicated region
      $region17: #{generator_forward.10} parent=11 // pred_check
        %p137 = pneg %p91
      $region18: #{generator_forward.10} parent=11 // pred_check_branch
        %139 = sbr.rel (%p137) target = $region20
      $region19: #{generator_forward.10} parent=11 // pred_region
        _
      $region20: #{generator_forward.10} parent=11 // pred_fallthru
        _
    $region12: #{generator_forward.10} parent=5 // pred_fallthru
      _
    %p140 = scmp.lt.s32.totalorder %s9, 2
    // Predicated region
    $region21: #{generator_forward.10} parent=5 // pred_check
      %p141 = pneg %p140
    $region22: #{generator_forward.10} parent=5 // pred_check_branch
      %143 = sbr.rel (%p141) target = $region24
    $region23: #{generator_forward.10} parent=5 // pred_region
      // Predicated region
      $region25: #{generator_forward.10} parent=23 // pred_check
        %p144 = pneg %p43
      $region26: #{generator_forward.10} parent=23 // pred_check_branch
        %146 = sbr.rel (%p144) target = $region28
      $region27: #{generator_forward.10} parent=23 // pred_region
        %s147 = smul.u32 32, %s17
        %p148 = scmp.lt.s32.totalorder %s16, 1
        %s149 = scalar_select %p148, %s16, 1
        %p150 = scmp.lt.s32.totalorder %s147, 31
        %s151 = scalar_select %p150, %s147, 31
        %s152 = smul.addr %s151, 2
        %s153 = smul.addr %s149, 64
        %s154 = sadd.s32 %s152, %s153
        %s155 = smul.addr %s154, 4
        %s156 = scalar_lea.vmem %s0, %s155
        %s157 = smul.u32 32, %s17
      $region28: #{generator_forward.10} parent=23 // pred_fallthru
        _
    $region24: #{generator_forward.10} parent=5 // pred_fallthru
      _
    %p158 = scmp.le.s32.totalorder 1, %s9
    %p159 = scmp.lt.s32.totalorder %s9, 3
    %p160 = pnand %p158, %p159
    %p161 = pneg %p160
    // Predicated region
    $region29: #{generator_forward.10} parent=5 // pred_check
      _
    $region30: #{generator_forward.10} parent=5 // pred_check_branch
      %163 = sbr.rel (%p160) target = $region32
    $region31: #{generator_forward.10} parent=5 // pred_region
      %s164 = ssub.s32 %s9, 1
      %s165 = smul.u32 32, %s19
      %p166 = scmp.lt.s32.totalorder %s18, 1
      %s167 = scalar_select %p166, %s18, 1
      %p168 = scmp.lt.s32.totalorder %s165, 31
      %s169 = scalar_select %p168, %s165, 31
      %s170 = smul.addr %s169, 2
      %s171 = smul.addr %s167, 64
      %s172 = sadd.s32 %s170, %s171
      %s173 = smul.addr %s172, 4
      %s174 = scalar_lea.vmem %s0, %s173
      %p175 = pneg %p49
      %p176 = pneg %p46
      %p177 = pneg %p70
      %p178 = pneg %p67
      %p179 = pneg %p91
      %p180 = pneg %p88
      %p181 = pneg %p119
      %p182 = pneg %p116
      %s183 = smul.u32 32, %s19
      %p184 = scmp.lt.s32.totalorder %s18, 1
      %s185 = scalar_select %p184, %s18, 1
      %p186 = scmp.lt.s32.totalorder %s183, 31
      %s187 = scalar_select %p186, %s183, 31
      %s188 = smul.addr %s185, 32
      %s189 = sadd.s32 %s187, %s188
      %s190 = smul.addr %s189, 4
      %s191 = scalar_lea.vmem %s3, %s190
      %s192 = smul.u32 32, %s19
      %p193 = scmp.lt.s32.totalorder %s18, 1
      %s194 = scalar_select %p193, %s18, 1
      %p195 = scmp.lt.s32.totalorder %s192, 31
      %s196 = scalar_select %p195, %s192, 31
      %s197 = smul.addr %s196, 2
      %s198 = smul.addr %s194, 64
      %s199 = sadd.s32 %s197, %s198
      %s200 = smul.addr %s199, 4
      %s201 = scalar_lea.vmem %s0, %s200
      %s202 = smul.u32 32, %s19
      %s203 = smul.u32 32, %s19
      %p204 = scmp.lt.s32.totalorder %s18, 1
      %s205 = scalar_select %p204, %s18, 1
      %p206 = scmp.lt.s32.totalorder %s203, 31
      %s207 = scalar_select %p206, %s203, 31
      %s208 = smul.addr %s205, 32
      %s209 = sadd.s32 %s207, %s208
      %s210 = smul.addr %s209, 4
      %s211 = scalar_lea.vmem %s3, %s210
      %s212 = smul.u32 32, %s19
      %v214 = vld [vmem:[%s201] sm:$0xff]
      %v215 = vld [vmem:[%s201 + $0x8] sm:$0xff]
      %v216 = vld [vmem:[%s201 + $0x10] sm:$0xff]
      %v217 = vld [vmem:[%s201 + $0x18] sm:$0xff]
      %v218 = vld [vmem:[%s201 + $0x20] sm:$0xff]
      %v219 = vld [vmem:[%s201 + $0x28] sm:$0xff]
      %v220 = vld [vmem:[%s201 + $0x30] sm:$0xff]
      %v221 = vld [vmem:[%s201 + $0x38] sm:$0xff]
      %v222 = vld [vmem:[%s201 + $0x40] sm:$0xff]
      %v223 = vld [vmem:[%s201 + $0x48] sm:$0xff]
      %v224 = vld [vmem:[%s201 + $0x50] sm:$0xff]
      %v225 = vld [vmem:[%s201 + $0x58] sm:$0xff]
      %v226 = vld [vmem:[%s201 + $0x60] sm:$0xff]
      %v227 = vld [vmem:[%s201 + $0x68] sm:$0xff]
      %v228 = vld [vmem:[%s201 + $0x70] sm:$0xff]
      %v229 = vld [vmem:[%s201 + $0x78] sm:$0xff]
      %v230 = vld [vmem:[%s201 + $0x80] sm:$0xff]
      %v231 = vld [vmem:[%s201 + $0x88] sm:$0xff]
      %v232 = vld [vmem:[%s201 + $0x90] sm:$0xff]
      %v233 = vld [vmem:[%s201 + $0x98] sm:$0xff]
      %v234 = vld [vmem:[%s201 + $0xa0] sm:$0xff]
      %v235 = vld [vmem:[%s201 + $0xa8] sm:$0xff]
      %v236 = vld [vmem:[%s201 + $0xb0] sm:$0xff]
      %v237 = vld [vmem:[%s201 + $0xb8] sm:$0xff]
      %v238 = vld [vmem:[%s201 + $0xc0] sm:$0xff]
      %v239 = vld [vmem:[%s201 + $0xc8] sm:$0xff]
      %v240 = vld [vmem:[%s201 + $0xd0] sm:$0xff]
      %v241 = vld [vmem:[%s201 + $0xd8] sm:$0xff]
      %v242 = vld [vmem:[%s201 + $0xe0] sm:$0xff]
      %v243 = vld [vmem:[%s201 + $0xe8] sm:$0xff]
      %v244 = vld [vmem:[%s201 + $0xf0] sm:$0xff]
      %v245 = vld [vmem:[%s201 + $0xf8] sm:$0xff]
      %v246 = vld [vmem:[%s1] sm:$0xf]
      %v247 = vld [vmem:[%s1 + $0x4] sm:$0xf]
      %v248 = vld [vmem:[%s1 + $0x8] sm:$0xf]
      %v249 = vld [vmem:[%s1 + $0xc] sm:$0xf]
      %v250 = vld [vmem:[%s1 + $0x10] sm:$0xf]
      %v251 = vld [vmem:[%s1 + $0x14] sm:$0xf]
      %v252 = vld [vmem:[%s1 + $0x18] sm:$0xf]
      %v253 = vld [vmem:[%s1 + $0x1c] sm:$0xf]
      %v254 = vld [vmem:[%s1 + $0x20] sm:$0xf]
      %v255 = vld [vmem:[%s1 + $0x24] sm:$0xf]
      %v256 = vld [vmem:[%s1 + $0x28] sm:$0xf]
      %v257 = vld [vmem:[%s1 + $0x2c] sm:$0xf]
      %v258 = vld [vmem:[%s1 + $0x30] sm:$0xf]
      %v259 = vld [vmem:[%s1 + $0x34] sm:$0xf]
      %v260 = vld [vmem:[%s1 + $0x38] sm:$0xf]
      %v261 = vld [vmem:[%s1 + $0x3c] sm:$0xf]
      %v262 = vld [vmem:[%s1 + $0x40] sm:$0xf]
      %v263 = vld [vmem:[%s1 + $0x44] sm:$0xf]
      %v264 = vld [vmem:[%s1 + $0x48] sm:$0xf]
      %v265 = vld [vmem:[%s1 + $0x4c] sm:$0xf]
      %v266 = vld [vmem:[%s1 + $0x50] sm:$0xf]
      %v267 = vld [vmem:[%s1 + $0x54] sm:$0xf]
      %v268 = vld [vmem:[%s1 + $0x58] sm:$0xf]
      %v269 = vld [vmem:[%s1 + $0x5c] sm:$0xf]
      %v270 = vld [vmem:[%s1 + $0x60] sm:$0xf]
      %v271 = vld [vmem:[%s1 + $0x64] sm:$0xf]
      %v272 = vld [vmem:[%s1 + $0x68] sm:$0xf]
      %v273 = vld [vmem:[%s1 + $0x6c] sm:$0xf]
      %v274 = vld [vmem:[%s1 + $0x70] sm:$0xf]
      %v275 = vld [vmem:[%s1 + $0x74] sm:$0xf]
      %v276 = vld [vmem:[%s1 + $0x78] sm:$0xf]
      %v277 = vld [vmem:[%s1 + $0x7c] sm:$0xf]
      %v278 = vld [vmem:[%s2] sm:$0x1]
      %v280 = vlaneseq
      %v281 = vshrl.u32 %v280, 7
      %v282 = vsub.s32 0, %v281
      %v283 = vrot.slane %v278, %v282
      %v317 = vunpack.c.l.b16 %v214
      %v318 = vunpack.c.h.b16 %v214
      %v319 = vunpack.c.l.b16 %v215
      %v320 = vunpack.c.h.b16 %v215
      %v321 = vunpack.c.l.b16 %v216
      %v322 = vunpack.c.h.b16 %v216
      %v323 = vunpack.c.l.b16 %v217
      %v324 = vunpack.c.h.b16 %v217
      %v325 = vunpack.c.l.b16 %v218
      %v326 = vunpack.c.h.b16 %v218
      %v327 = vunpack.c.l.b16 %v219
      %v328 = vunpack.c.h.b16 %v219
      %v329 = vunpack.c.l.b16 %v220
      %v330 = vunpack.c.h.b16 %v220
      %v331 = vunpack.c.l.b16 %v221
      %v332 = vunpack.c.h.b16 %v221
      %v333 = vunpack.c.l.b16 %v222
      %v334 = vunpack.c.h.b16 %v222
      %v335 = vunpack.c.l.b16 %v223
      %v336 = vunpack.c.h.b16 %v223
      %v337 = vunpack.c.l.b16 %v224
      %v338 = vunpack.c.h.b16 %v224
      %v339 = vunpack.c.l.b16 %v225
      %v340 = vunpack.c.h.b16 %v225
      %v341 = vunpack.c.l.b16 %v226
      %v342 = vunpack.c.h.b16 %v226
      %v343 = vunpack.c.l.b16 %v227
      %v344 = vunpack.c.h.b16 %v227
      %v345 = vunpack.c.l.b16 %v228
      %v346 = vunpack.c.h.b16 %v228
      %v347 = vunpack.c.l.b16 %v229
      %v348 = vunpack.c.h.b16 %v229
      %v349 = vunpack.c.l.b16 %v230
      %v350 = vunpack.c.h.b16 %v230
      %v351 = vunpack.c.l.b16 %v231
      %v352 = vunpack.c.h.b16 %v231
      %v353 = vunpack.c.l.b16 %v232
      %v354 = vunpack.c.h.b16 %v232
      %v355 = vunpack.c.l.b16 %v233
      %v356 = vunpack.c.h.b16 %v233
      %v357 = vunpack.c.l.b16 %v234
      %v358 = vunpack.c.h.b16 %v234
      %v359 = vunpack.c.l.b16 %v235
      %v360 = vunpack.c.h.b16 %v235
      %v361 = vunpack.c.l.b16 %v236
      %v362 = vunpack.c.h.b16 %v236
      %v363 = vunpack.c.l.b16 %v237
      %v364 = vunpack.c.h.b16 %v237
      %v365 = vunpack.c.l.b16 %v238
      %v366 = vunpack.c.h.b16 %v238
      %v367 = vunpack.c.l.b16 %v239
      %v368 = vunpack.c.h.b16 %v239
      %v369 = vunpack.c.l.b16 %v240
      %v370 = vunpack.c.h.b16 %v240
      %v371 = vunpack.c.l.b16 %v241
      %v372 = vunpack.c.h.b16 %v241
      %v373 = vunpack.c.l.b16 %v242
      %v374 = vunpack.c.h.b16 %v242
      %v375 = vunpack.c.l.b16 %v243
      %v376 = vunpack.c.h.b16 %v243
      %v377 = vunpack.c.l.b16 %v244
      %v378 = vunpack.c.h.b16 %v244
      %v379 = vunpack.c.l.b16 %v245
      %v380 = vunpack.c.h.b16 %v245
      %v381 = vpack.c.b16 %v319, %v317
      %v382 = vpack.c.b16 %v320, %v318
      %v383 = vpack.c.b16 %v323, %v321
      %v384 = vpack.c.b16 %v324, %v322
      %v385 = vpack.c.b16 %v327, %v325
      %v386 = vpack.c.b16 %v328, %v326
      %v387 = vpack.c.b16 %v331, %v329
      %v388 = vpack.c.b16 %v332, %v330
      %v389 = vpack.c.b16 %v335, %v333
      %v390 = vpack.c.b16 %v336, %v334
      %v391 = vpack.c.b16 %v339, %v337
      %v392 = vpack.c.b16 %v340, %v338
      %v393 = vpack.c.b16 %v343, %v341
      %v394 = vpack.c.b16 %v344, %v342
      %v395 = vpack.c.b16 %v347, %v345
      %v396 = vpack.c.b16 %v348, %v346
      %v397 = vpack.c.b16 %v351, %v349
      %v398 = vpack.c.b16 %v352, %v350
      %v399 = vpack.c.b16 %v355, %v353
      %v400 = vpack.c.b16 %v356, %v354
      %v401 = vpack.c.b16 %v359, %v357
      %v402 = vpack.c.b16 %v360, %v358
      %v403 = vpack.c.b16 %v363, %v361
      %v404 = vpack.c.b16 %v364, %v362
      %v405 = vpack.c.b16 %v367, %v365
      %v406 = vpack.c.b16 %v368, %v366
      %v407 = vpack.c.b16 %v371, %v369
      %v408 = vpack.c.b16 %v372, %v370
      %v409 = vpack.c.b16 %v375, %v373
      %v410 = vpack.c.b16 %v376, %v374
      %v411 = vpack.c.b16 %v379, %v377
      %v412 = vpack.c.b16 %v380, %v378
      %v477 = vunpack.c.l.b16 %v246
      %v478 = vunpack.c.l.b16 %v247
      %v479 = vunpack.c.l.b16 %v248
      %v480 = vunpack.c.l.b16 %v249
      %v481 = vunpack.c.l.b16 %v250
      %v482 = vunpack.c.l.b16 %v251
      %v483 = vunpack.c.l.b16 %v252
      %v484 = vunpack.c.l.b16 %v253
      %v485 = vunpack.c.l.b16 %v254
      %v486 = vunpack.c.l.b16 %v255
      %v487 = vunpack.c.l.b16 %v256
      %v488 = vunpack.c.l.b16 %v257
      %v489 = vunpack.c.l.b16 %v258
      %v490 = vunpack.c.l.b16 %v259
      %v491 = vunpack.c.l.b16 %v260
      %v492 = vunpack.c.l.b16 %v261
      %v493 = vunpack.c.l.b16 %v262
      %v494 = vunpack.c.l.b16 %v263
      %v495 = vunpack.c.l.b16 %v264
      %v496 = vunpack.c.l.b16 %v265
      %v497 = vunpack.c.l.b16 %v266
      %v498 = vunpack.c.l.b16 %v267
      %v499 = vunpack.c.l.b16 %v268
      %v500 = vunpack.c.l.b16 %v269
      %v501 = vunpack.c.l.b16 %v270
      %v502 = vunpack.c.l.b16 %v271
      %v503 = vunpack.c.l.b16 %v272
      %v504 = vunpack.c.l.b16 %v273
      %v505 = vunpack.c.l.b16 %v274
      %v506 = vunpack.c.l.b16 %v275
      %v507 = vunpack.c.l.b16 %v276
      %v508 = vunpack.c.l.b16 %v277
      %v509 = vpack.c.b16 %v478, %v477
      %v510 = vpack.c.b16 %v480, %v479
      %v511 = vpack.c.b16 %v482, %v481
      %v512 = vpack.c.b16 %v484, %v483
      %v513 = vpack.c.b16 %v486, %v485
      %v514 = vpack.c.b16 %v488, %v487
      %v515 = vpack.c.b16 %v490, %v489
      %v516 = vpack.c.b16 %v492, %v491
      %v517 = vpack.c.b16 %v494, %v493
      %v518 = vpack.c.b16 %v496, %v495
      %v519 = vpack.c.b16 %v498, %v497
      %v520 = vpack.c.b16 %v500, %v499
      %v521 = vpack.c.b16 %v502, %v501
      %v522 = vpack.c.b16 %v504, %v503
      %v523 = vpack.c.b16 %v506, %v505
      %v524 = vpack.c.b16 %v508, %v507
      %541 = vmatprep.subr.bf16.mxu0 0
      %542 = vmatpush1.bf16.msra.mxu0 %v509
      %543 = vmatprep.subr.bf16.mxu0 0
      %544 = vmatpush1.bf16.msra.mxu0 %v510
      %545 = vmatprep.subr.bf16.mxu0 0
      %546 = vmatpush1.bf16.msra.mxu0 %v511
      %547 = vmatprep.subr.bf16.mxu0 0
      %548 = vmatpush1.bf16.msra.mxu0 %v512
      %549 = vmatprep.subr.bf16.mxu0 0
      %550 = vmatpush1.bf16.msra.mxu0 %v513
      %551 = vmatprep.subr.bf16.mxu0 0
      %552 = vmatpush1.bf16.msra.mxu0 %v514
      %553 = vmatprep.subr.bf16.mxu0 0
      %554 = vmatpush1.bf16.msra.mxu0 %v515
      %555 = vmatprep.subr.bf16.mxu0 0
      %556 = vmatpush1.bf16.msra.mxu0 %v516
      %557 = vmatprep.subr.bf16.mxu0 0
      %558 = vmatpush1.bf16.msra.mxu0 %v517
      %559 = vmatprep.subr.bf16.mxu0 0
      %560 = vmatpush1.bf16.msra.mxu0 %v518
      %561 = vmatprep.subr.bf16.mxu0 0
      %562 = vmatpush1.bf16.msra.mxu0 %v519
      %563 = vmatprep.subr.bf16.mxu0 0
      %564 = vmatpush1.bf16.msra.mxu0 %v520
      %565 = vmatprep.subr.bf16.mxu0 0
      %566 = vmatpush1.bf16.msra.mxu0 %v521
      %567 = vmatprep.subr.bf16.mxu0 0
      %568 = vmatpush1.bf16.msra.mxu0 %v522
      %569 = vmatprep.subr.bf16.mxu0 0
      %570 = vmatpush1.bf16.msra.mxu0 %v523
      %571 = vmatprep.subr.bf16.mxu0 0
      %572 = vmatpush1.bf16.msra.mxu0 %v524
      %573 = vmatprep.mubr.bf16.mxu0 %v382
      %574 = vmatmul.mubr.bf16.gmra.mrb[0].mxu0 %v381
      %v575 = vpop.f32.mrb[0].mxu0
      %v576 = vadd.f32 %v283, %v575
      %v577 = vpop.f32.mrb[0].mxu0
      %v578 = vpop.f32.mrb[0].mxu0
      %v579 = vadd.f32 %v283, %v578
      %v580 = vpop.f32.mrb[0].mxu0
      %581 = vmatprep.mubr.bf16.mxu0 %v384
      %582 = vmatmul.mubr.bf16.gmra.mrb[0].mxu0 %v383
      %v583 = vpop.f32.mrb[0].mxu0
      %v584 = vadd.f32 %v283, %v583
      %v585 = vpop.f32.mrb[0].mxu0
      %v586 = vpop.f32.mrb[0].mxu0
      %v587 = vadd.f32 %v283, %v586
      %v588 = vpop.f32.mrb[0].mxu0
      %589 = vmatprep.mubr.bf16.mxu0 %v386
      %590 = vmatmul.mubr.bf16.gmra.mrb[0].mxu0 %v385
      %v591 = vpop.f32.mrb[0].mxu0
      %v592 = vadd.f32 %v283, %v591
      %v593 = vpop.f32.mrb[0].mxu0
      %v594 = vpop.f32.mrb[0].mxu0
      %v595 = vadd.f32 %v283, %v594
      %v596 = vpop.f32.mrb[0].mxu0
      %597 = vmatprep.mubr.bf16.mxu0 %v388
      %598 = vmatmul.mubr.bf16.gmra.mrb[0].mxu0 %v387
      %v599 = vpop.f32.mrb[0].mxu0
      %v600 = vadd.f32 %v283, %v599
      %v601 = vpop.f32.mrb[0].mxu0
      %v602 = vpop.f32.mrb[0].mxu0
      %v603 = vadd.f32 %v283, %v602
      %v604 = vpop.f32.mrb[0].mxu0
      %605 = vmatprep.mubr.bf16.mxu0 %v390
      %606 = vmatmul.mubr.bf16.gmra.mrb[0].mxu0 %v389
      %v607 = vpop.f32.mrb[0].mxu0
      %v608 = vadd.f32 %v283, %v607
      %v609 = vpop.f32.mrb[0].mxu0
      %v610 = vpop.f32.mrb[0].mxu0
      %v611 = vadd.f32 %v283, %v610
      %v612 = vpop.f32.mrb[0].mxu0
      %613 = vmatprep.mubr.bf16.mxu0 %v392
      %614 = vmatmul.mubr.bf16.gmra.mrb[0].mxu0 %v391
      %v615 = vpop.f32.mrb[0].mxu0
      %v616 = vadd.f32 %v283, %v615
      %v617 = vpop.f32.mrb[0].mxu0
      %v618 = vpop.f32.mrb[0].mxu0
      %v619 = vadd.f32 %v283, %v618
      %v620 = vpop.f32.mrb[0].mxu0
      %621 = vmatprep.mubr.bf16.mxu0 %v394
      %622 = vmatmul.mubr.bf16.gmra.mrb[0].mxu0 %v393
      %v623 = vpop.f32.mrb[0].mxu0
      %v624 = vadd.f32 %v283, %v623
      %v625 = vpop.f32.mrb[0].mxu0
      %v626 = vpop.f32.mrb[0].mxu0
      %v627 = vadd.f32 %v283, %v626
      %v628 = vpop.f32.mrb[0].mxu0
      %629 = vmatprep.mubr.bf16.mxu0 %v396
      %630 = vmatmul.mubr.bf16.gmra.mrb[0].mxu0 %v395
      %v631 = vpop.f32.mrb[0].mxu0
      %v632 = vadd.f32 %v283, %v631
      %v633 = vpop.f32.mrb[0].mxu0
      %v634 = vpop.f32.mrb[0].mxu0
      %v635 = vadd.f32 %v283, %v634
      %v636 = vpop.f32.mrb[0].mxu0
      %637 = vmatprep.mubr.bf16.mxu0 %v398
      %638 = vmatmul.mubr.bf16.gmra.mrb[0].mxu0 %v397
      %v639 = vpop.f32.mrb[0].mxu0
      %v640 = vadd.f32 %v283, %v639
      %v641 = vpop.f32.mrb[0].mxu0
      %v642 = vpop.f32.mrb[0].mxu0
      %v643 = vadd.f32 %v283, %v642
      %v644 = vpop.f32.mrb[0].mxu0
      %645 = vmatprep.mubr.bf16.mxu0 %v400
      %646 = vmatmul.mubr.bf16.gmra.mrb[0].mxu0 %v399
      %v647 = vpop.f32.mrb[0].mxu0
      %v648 = vadd.f32 %v283, %v647
      %v649 = vpop.f32.mrb[0].mxu0
      %v650 = vpop.f32.mrb[0].mxu0
      %v651 = vadd.f32 %v283, %v650
      %v652 = vpop.f32.mrb[0].mxu0
      %653 = vmatprep.mubr.bf16.mxu0 %v402
      %654 = vmatmul.mubr.bf16.gmra.mrb[0].mxu0 %v401
      %v655 = vpop.f32.mrb[0].mxu0
      %v656 = vadd.f32 %v283, %v655
      %v657 = vpop.f32.mrb[0].mxu0
      %v658 = vpop.f32.mrb[0].mxu0
      %v659 = vadd.f32 %v283, %v658
      %v660 = vpop.f32.mrb[0].mxu0
      %661 = vmatprep.mubr.bf16.mxu0 %v404
      %662 = vmatmul.mubr.bf16.gmra.mrb[0].mxu0 %v403
      %v663 = vpop.f32.mrb[0].mxu0
      %v664 = vadd.f32 %v283, %v663
      %v665 = vpop.f32.mrb[0].mxu0
      %v666 = vpop.f32.mrb[0].mxu0
      %v667 = vadd.f32 %v283, %v666
      %v668 = vpop.f32.mrb[0].mxu0
      %669 = vmatprep.mubr.bf16.mxu0 %v406
      %670 = vmatmul.mubr.bf16.gmra.mrb[0].mxu0 %v405
      %v671 = vpop.f32.mrb[0].mxu0
      %v672 = vadd.f32 %v283, %v671
      %v673 = vpop.f32.mrb[0].mxu0
      %v674 = vpop.f32.mrb[0].mxu0
      %v675 = vadd.f32 %v283, %v674
      %v676 = vpop.f32.mrb[0].mxu0
      %677 = vmatprep.mubr.bf16.mxu0 %v408
      %678 = vmatmul.mubr.bf16.gmra.mrb[0].mxu0 %v407
      %v679 = vpop.f32.mrb[0].mxu0
      %v680 = vadd.f32 %v283, %v679
      %v681 = vpop.f32.mrb[0].mxu0
      %v682 = vpop.f32.mrb[0].mxu0
      %v683 = vadd.f32 %v283, %v682
      %v684 = vpop.f32.mrb[0].mxu0
      %685 = vmatprep.mubr.bf16.mxu0 %v410
      %686 = vmatmul.mubr.bf16.gmra.mrb[0].mxu0 %v409
      %v687 = vpop.f32.mrb[0].mxu0
      %v688 = vadd.f32 %v283, %v687
      %v689 = vpop.f32.mrb[0].mxu0
      %v690 = vpop.f32.mrb[0].mxu0
      %v691 = vadd.f32 %v283, %v690
      %v692 = vpop.f32.mrb[0].mxu0
      %693 = vmatprep.mubr.bf16.mxu0 %v412
      %694 = vmatmul.mubr.bf16.gmra.mrb[0].mxu0 %v411
      %v695 = vpop.f32.mrb[0].mxu0
      %v696 = vadd.f32 %v283, %v695
      %v697 = vpop.f32.mrb[0].mxu0
      %v698 = vpop.f32.mrb[0].mxu0
      %v699 = vadd.f32 %v283, %v698
      %v700 = vpop.f32.mrb[0].mxu0
      %701 = vdwg.mxu0
      %v702 = vpack.c.bf16 %v579, %v576
      %v703 = vpack.c.bf16 %v587, %v584
      %v704 = vpack.c.bf16 %v595, %v592
      %v705 = vpack.c.bf16 %v603, %v600
      %v706 = vpack.c.bf16 %v611, %v608
      %v707 = vpack.c.bf16 %v619, %v616
      %v708 = vpack.c.bf16 %v627, %v624
      %v709 = vpack.c.bf16 %v635, %v632
      %v710 = vpack.c.bf16 %v643, %v640
      %v711 = vpack.c.bf16 %v651, %v648
      %v712 = vpack.c.bf16 %v659, %v656
      %v713 = vpack.c.bf16 %v667, %v664
      %v714 = vpack.c.bf16 %v675, %v672
      %v715 = vpack.c.bf16 %v683, %v680
      %v716 = vpack.c.bf16 %v691, %v688
      %v717 = vpack.c.bf16 %v699, %v696
      %v734 = vunpack.c.l.b16 %v702
      %v735 = vunpack.c.h.b16 %v702
      %v736 = vunpack.c.l.b16 %v703
      %v737 = vunpack.c.h.b16 %v703
      %v738 = vunpack.c.l.b16 %v704
      %v739 = vunpack.c.h.b16 %v704
      %v740 = vunpack.c.l.b16 %v705
      %v741 = vunpack.c.h.b16 %v705
      %v742 = vunpack.c.l.b16 %v706
      %v743 = vunpack.c.h.b16 %v706
      %v744 = vunpack.c.l.b16 %v707
      %v745 = vunpack.c.h.b16 %v707
      %v746 = vunpack.c.l.b16 %v708
      %v747 = vunpack.c.h.b16 %v708
      %v748 = vunpack.c.l.b16 %v709
      %v749 = vunpack.c.h.b16 %v709
      %v750 = vunpack.c.l.b16 %v710
      %v751 = vunpack.c.h.b16 %v710
      %v752 = vunpack.c.l.b16 %v711
      %v753 = vunpack.c.h.b16 %v711
      %v754 = vunpack.c.l.b16 %v712
      %v755 = vunpack.c.h.b16 %v712
      %v756 = vunpack.c.l.b16 %v713
      %v757 = vunpack.c.h.b16 %v713
      %v758 = vunpack.c.l.b16 %v714
      %v759 = vunpack.c.h.b16 %v714
      %v760 = vunpack.c.l.b16 %v715
      %v761 = vunpack.c.h.b16 %v715
      %v762 = vunpack.c.l.b16 %v716
      %v763 = vunpack.c.h.b16 %v716
      %v764 = vunpack.c.l.b16 %v717
      %v765 = vunpack.c.h.b16 %v717
      %v766 = vpack.c.b16 %v734, %v734
      %v767 = vpack.c.b16 %v735, %v735
      %v768 = vpack.c.b16 %v736, %v736
      %v769 = vpack.c.b16 %v737, %v737
      %v770 = vpack.c.b16 %v738, %v738
      %v771 = vpack.c.b16 %v739, %v739
      %v772 = vpack.c.b16 %v740, %v740
      %v773 = vpack.c.b16 %v741, %v741
      %v774 = vpack.c.b16 %v742, %v742
      %v775 = vpack.c.b16 %v743, %v743
      %v776 = vpack.c.b16 %v744, %v744
      %v777 = vpack.c.b16 %v745, %v745
      %v778 = vpack.c.b16 %v746, %v746
      %v779 = vpack.c.b16 %v747, %v747
      %v780 = vpack.c.b16 %v748, %v748
      %v781 = vpack.c.b16 %v749, %v749
      %v782 = vpack.c.b16 %v750, %v750
      %v783 = vpack.c.b16 %v751, %v751
      %v784 = vpack.c.b16 %v752, %v752
      %v785 = vpack.c.b16 %v753, %v753
      %v786 = vpack.c.b16 %v754, %v754
      %v787 = vpack.c.b16 %v755, %v755
      %v788 = vpack.c.b16 %v756, %v756
      %v789 = vpack.c.b16 %v757, %v757
      %v790 = vpack.c.b16 %v758, %v758
      %v791 = vpack.c.b16 %v759, %v759
      %v792 = vpack.c.b16 %v760, %v760
      %v793 = vpack.c.b16 %v761, %v761
      %v794 = vpack.c.b16 %v762, %v762
      %v795 = vpack.c.b16 %v763, %v763
      %v796 = vpack.c.b16 %v764, %v764
      %v797 = vpack.c.b16 %v765, %v765
      %830 = vst [vmem:[%s211] sm:$0xf] %v766
      %831 = vst [vmem:[%s211 + $0x4] sm:$0xf] %v767
      %832 = vst [vmem:[%s211 + $0x8] sm:$0xf] %v768
      %833 = vst [vmem:[%s211 + $0xc] sm:$0xf] %v769
      %834 = vst [vmem:[%s211 + $0x10] sm:$0xf] %v770
      %835 = vst [vmem:[%s211 + $0x14] sm:$0xf] %v771
      %836 = vst [vmem:[%s211 + $0x18] sm:$0xf] %v772
      %837 = vst [vmem:[%s211 + $0x1c] sm:$0xf] %v773
      %838 = vst [vmem:[%s211 + $0x20] sm:$0xf] %v774
      %839 = vst [vmem:[%s211 + $0x24] sm:$0xf] %v775
      %840 = vst [vmem:[%s211 + $0x28] sm:$0xf] %v776
      %841 = vst [vmem:[%s211 + $0x2c] sm:$0xf] %v777
      %842 = vst [vmem:[%s211 + $0x30] sm:$0xf] %v778
      %843 = vst [vmem:[%s211 + $0x34] sm:$0xf] %v779
      %844 = vst [vmem:[%s211 + $0x38] sm:$0xf] %v780
      %845 = vst [vmem:[%s211 + $0x3c] sm:$0xf] %v781
      %846 = vst [vmem:[%s211 + $0x40] sm:$0xf] %v782
      %847 = vst [vmem:[%s211 + $0x44] sm:$0xf] %v783
      %848 = vst [vmem:[%s211 + $0x48] sm:$0xf] %v784
      %849 = vst [vmem:[%s211 + $0x4c] sm:$0xf] %v785
      %850 = vst [vmem:[%s211 + $0x50] sm:$0xf] %v786
      %851 = vst [vmem:[%s211 + $0x54] sm:$0xf] %v787
      %852 = vst [vmem:[%s211 + $0x58] sm:$0xf] %v788
      %853 = vst [vmem:[%s211 + $0x5c] sm:$0xf] %v789
      %854 = vst [vmem:[%s211 + $0x60] sm:$0xf] %v790
      %855 = vst [vmem:[%s211 + $0x64] sm:$0xf] %v791
      %856 = vst [vmem:[%s211 + $0x68] sm:$0xf] %v792
      %857 = vst [vmem:[%s211 + $0x6c] sm:$0xf] %v793
      %858 = vst [vmem:[%s211 + $0x70] sm:$0xf] %v794
      %859 = vst [vmem:[%s211 + $0x74] sm:$0xf] %v795
      %860 = vst [vmem:[%s211 + $0x78] sm:$0xf] %v796
      %861 = vst [vmem:[%s211 + $0x7c] sm:$0xf] %v797
      %s862 = smul.u32 32, %s19
      %p863 = scmp.lt.s32.totalorder %s18, 1
      %s864 = scalar_select %p863, %s18, 1
      %p865 = scmp.lt.s32.totalorder %s862, 31
      %s866 = scalar_select %p865, %s862, 31
      %s867 = smul.addr %s864, 32
      %s868 = sadd.s32 %s866, %s867
      %s869 = smul.addr %s868, 4
      %s870 = scalar_lea.vmem %s3, %s869
      // Predicated region
      $region33: #{generator_forward.10} parent=31 // pred_check
        %p871 = pneg %p116
      $region34: #{generator_forward.10} parent=31 // pred_check_branch
        %873 = sbr.rel (%p871) target = $region36
      $region35: #{generator_forward.10} parent=31 // pred_region
        %s874 = smul.u32 32, %s19
      $region36: #{generator_forward.10} parent=31 // pred_fallthru
        _
    $region32: #{generator_forward.10} parent=5 // pred_fallthru
      _
    %p875 = scmp.le.s32.totalorder 2, %s9
    // Predicated region
    $region37: #{generator_forward.10} parent=5 // pred_check
      %p876 = pneg %p875
    $region38: #{generator_forward.10} parent=5 // pred_check_branch
      %878 = sbr.rel (%p876) target = $region40
    $region39: #{generator_forward.10} parent=5 // pred_region
      %s879 = ssub.s32 %s9, 2
      // Predicated region
      $region41: #{generator_forward.10} parent=39 // pred_check
        %p880 = pneg %p122
      $region42: #{generator_forward.10} parent=39 // pred_check_branch
        %882 = sbr.rel (%p880) target = $region44
      $region43: #{generator_forward.10} parent=39 // pred_region
        %s883 = smul.u32 32, %s21
        %p884 = scmp.lt.s32.totalorder %s20, 1
        %s885 = scalar_select %p884, %s20, 1
        %p886 = scmp.lt.s32.totalorder %s883, 31
        %s887 = scalar_select %p886, %s883, 31
        %s888 = smul.addr %s885, 32
        %s889 = sadd.s32 %s887, %s888
        %s890 = smul.addr %s889, 4
        %s891 = scalar_lea.vmem %s3, %s890
      $region44: #{generator_forward.10} parent=39 // pred_fallthru
        _
    $region40: #{generator_forward.10} parent=5 // pred_fallthru
      _
  $region6: #{generator_forward.10} parent=0 // loop_footer
    %s13 = sadd.s32 1, %s9
  $region7: #{generator_forward.10} parent=0 // loop_footer_branch
    %8 = sbr.rel target = $region3
  $region8: #{generator_forward.10} parent=0 // loop_exit
    _

// kernel: generator_forward.11
$region0: #{generator_forward.11}
  #allocation0 [shape = 'u32[]', space=smem, size = 0x4, offset = 0x4, fixed_abs, tag = 'smem constant byte address 0x4 - core index']
  #allocation1 [shape = 'u32[144,128]{1,0:T(1,128)}', space=vmem, size = 0x12000, scoped, tag = 'internal scratch']
  #allocation2 [shape = 'f32[1,128]{1,0:T(1,128)}', space=vmem, size = 0x200, scoped, tag = 'scratch operand']
  #allocation3 [shape = 'f32[1,128]{1,0:T(1,128)}', space=vmem, size = 0x200, scoped, tag = 'scratch operand']
  %s0 = inlined_call_operand.vmem [shape: bf16[2,64,128], index: 0, kind: input, shape index: {}]
  %s1 = inlined_call_operand.vmem [shape: bf16[128,128], index: 1, kind: input, shape index: {}]
  %s2 = inlined_call_operand.vmem [shape: bf16[2,64,128], index: 2, kind: output, shape index: {}]
  %s3 = sld [smem:[#allocation0]]
  $region49: #{generator_forward.11} parent=0
    _
  %s5 = ssub.s32 1, %s3
  %s6 = scalar_select 0, %s5, %s3
  loop: start=0, step=1, limit=4
  $region2: #{generator_forward.11} parent=0 // loop_pre_header
    _
  $region3: #{generator_forward.11} parent=0 // loop_header
    %s8 = sphi 0, %s12
    %p9 = scmp.ge.s32.totalorder %s8, 4
    %s15 = sphi 0, %s27
    %s16 = sphi 0, %s23
    %s17 = sphi 0, %s15
    %s18 = sphi 0, %s16
    %s19 = sphi 0, %s17
    %s20 = sphi 0, %s18
    %s32 = sphi 0, %s34
    %s35 = sphi 0, %s32
    %s36 = sphi 0, %s35
    %s52 = sphi 0, %s36
    %s56 = sphi 0, %s56
    %s58 = sphi 0, %s56
    %s59 = sphi 0, %s58
    %s73 = sphi 0, %s59
    %s79 = sphi 0, %s81
    %s82 = sphi 0, %s79
    %s83 = sphi 0, %s82
    %s99 = sphi 0, %s83
  $region4: #{generator_forward.11} parent=0 // loop_header_branch
    %11 = sbr.rel (%p9) target = $region8
  $region5: #{generator_forward.11} parent=0 // loop_body
    %s13 = ssub.s32 %s8, 1
    %s14 = ssub.s32 %s8, 2
    %s21 = sadd.s32 1, %s16
    %p22 = scmp.ge.s32.totalorder %s21, 1
    %s23 = scalar_select %p22, 0, %s21
    %s24 = sadd.s32 1, %s15
    %s25 = scalar_select %p22, %s24, %s15
    %p26 = scmp.ge.s32.totalorder %s25, 2
    %s27 = scalar_select %p26, 0, %s25
    %s28 = ssub.s32 %s15, %s27
    %s29 = ssub.s32 %s16, %s23
    %s30 = sor.u32 %s28, %s29
    %p31 = scmp.eq.s32.totalorder %s30, 0
    %s33 = sadd.s32 %s32, 1
    %s34 = scalar_select %p31, %s32, %s33
    %p37 = pneg %p31
    %p38 = scmp.eq.s32.totalorder %s8, 1
    %p39 = por %p37, %p38
    %p40 = scmp.ne.s32.totalorder %s32, %s35
    %p41 = scmp.eq.s32.totalorder %s8, 0
    %p42 = por %p40, %p41
    %p43 = scmp.ne.s32.totalorder %s32, %s35
    %p44 = scmp.eq.s32.totalorder %s13, 1
    %p45 = por %p43, %p44
    %p46 = scmp.ne.s32.totalorder %s35, %s36
    %p47 = scmp.eq.s32.totalorder %s13, 0
    %p48 = por %p46, %p47
    %p49 = scmp.ne.s32.totalorder %s35, %s36
    %p50 = scmp.eq.s32.totalorder %s14, 1
    %p51 = por %p49, %p50
    %p53 = scmp.ne.s32.totalorder %s36, %s52
    %p54 = scmp.eq.s32.totalorder %s14, 0
    %p55 = por %p53, %p54
    %s57 = sadd.s32 %s56, 1
    %p60 = scmp.eq.s32.totalorder %s8, 1
    %p61 = scmp.ne.s32.totalorder %s56, %s58
    %p62 = scmp.eq.s32.totalorder %s8, 0
    %p63 = por %p61, %p62
    %p64 = scmp.ne.s32.totalorder %s56, %s58
    %p65 = scmp.eq.s32.totalorder %s13, 1
    %p66 = por %p64, %p65
    %p67 = scmp.ne.s32.totalorder %s58, %s59
    %p68 = scmp.eq.s32.totalorder %s13, 0
    %p69 = por %p67, %p68
    %p70 = scmp.ne.s32.totalorder %s58, %s59
    %p71 = scmp.eq.s32.totalorder %s14, 1
    %p72 = por %p70, %p71
    %p74 = scmp.ne.s32.totalorder %s59, %s73
    %p75 = scmp.eq.s32.totalorder %s14, 0
    %p76 = por %p74, %p75
    %s77 = ssub.s32 %s15, %s27
    %p78 = scmp.eq.s32.totalorder %s77, 0
    %s80 = sadd.s32 %s79, 1
    %s81 = scalar_select %p78, %s79, %s80
    %p84 = pneg %p78
    %p85 = scmp.eq.s32.totalorder %s8, 1
    %p86 = por %p84, %p85
    %p87 = scmp.ne.s32.totalorder %s79, %s82
    %p88 = scmp.eq.s32.totalorder %s8, 0
    %p89 = por %p87, %p88
    %p90 = scmp.ne.s32.totalorder %s79, %s82
    %p91 = scmp.eq.s32.totalorder %s13, 1
    %p92 = por %p90, %p91
    %p93 = scmp.ne.s32.totalorder %s82, %s83
    %p94 = scmp.eq.s32.totalorder %s13, 0
    %p95 = por %p93, %p94
    %p96 = scmp.ne.s32.totalorder %s82, %s83
    %p97 = scmp.eq.s32.totalorder %s14, 1
    %p98 = por %p96, %p97
    %p100 = scmp.ne.s32.totalorder %s83, %s99
    %p101 = scmp.eq.s32.totalorder %s14, 0
    %p102 = por %p100, %p101
    %p103 = scmp.le.s32.totalorder 1, %s8
    %p104 = scmp.lt.s32.totalorder %s8, 3
    %p105 = pnand %p103, %p104
    %p106 = pneg %p105
    // Predicated region
    $region9: #{generator_forward.11} parent=5 // pred_check
      _
    $region10: #{generator_forward.11} parent=5 // pred_check_branch
      %108 = sbr.rel (%p105) target = $region12
    $region11: #{generator_forward.11} parent=5 // pred_region
      %s109 = ssub.s32 %s8, 1
      // Predicated region
      $region13: #{generator_forward.11} parent=11 // pred_check
        %p110 = pneg %p69
      $region14: #{generator_forward.11} parent=11 // pred_check_branch
        %112 = sbr.rel (%p110) target = $region16
      $region15: #{generator_forward.11} parent=11 // pred_region
        _
      $region16: #{generator_forward.11} parent=11 // pred_fallthru
        _
    $region12: #{generator_forward.11} parent=5 // pred_fallthru
      _
    %p113 = scmp.lt.s32.totalorder %s8, 2
    // Predicated region
    $region17: #{generator_forward.11} parent=5 // pred_check
      %p114 = pneg %p113
    $region18: #{generator_forward.11} parent=5 // pred_check_branch
      %116 = sbr.rel (%p114) target = $region20
    $region19: #{generator_forward.11} parent=5 // pred_region
      // Predicated region
      $region21: #{generator_forward.11} parent=19 // pred_check
        %p117 = pneg %p42
      $region22: #{generator_forward.11} parent=19 // pred_check_branch
        %119 = sbr.rel (%p117) target = $region24
      $region23: #{generator_forward.11} parent=19 // pred_region
        %s120 = smul.u32 8, %s16
        %p121 = scmp.lt.s32.totalorder %s15, 1
        %s122 = scalar_select %p121, %s15, 1
        %p123 = scmp.lt.s32.totalorder %s120, 7
        %s124 = scalar_select %p123, %s120, 7
        %s125 = smul.addr %s122, 8
        %s126 = sadd.s32 %s124, %s125
        %s127 = smul.addr %s126, 4
        %s128 = scalar_lea.vmem %s0, %s127
        %s129 = smul.u32 8, %s16
      $region24: #{generator_forward.11} parent=19 // pred_fallthru
        _
    $region20: #{generator_forward.11} parent=5 // pred_fallthru
      _
    %p130 = scmp.le.s32.totalorder 1, %s8
    %p131 = scmp.lt.s32.totalorder %s8, 3
    %p132 = pnand %p130, %p131
    %p133 = pneg %p132
    // Predicated region
    $region25: #{generator_forward.11} parent=5 // pred_check
      _
    $region26: #{generator_forward.11} parent=5 // pred_check_branch
      %135 = sbr.rel (%p132) target = $region28
    $region27: #{generator_forward.11} parent=5 // pred_region
      %s136 = ssub.s32 %s8, 1
      %s137 = smul.u32 8, %s18
      %p138 = scmp.lt.s32.totalorder %s17, 1
      %s139 = scalar_select %p138, %s17, 1
      %p140 = scmp.lt.s32.totalorder %s137, 7
      %s141 = scalar_select %p140, %s137, 7
      %s142 = smul.addr %s139, 8
      %s143 = sadd.s32 %s141, %s142
      %s144 = smul.addr %s143, 4
      %s145 = scalar_lea.vmem %s0, %s144
      %p146 = pneg %p48
      %p147 = pneg %p45
      %p148 = pneg %p69
      %p149 = pneg %p66
      %p150 = pneg %p95
      %p151 = pneg %p92
      %p152 = scmp.lt.s32.totalorder %s17, 1
      %s153 = scalar_select %p152, %s17, 1
      %s154 = smul.addr %s153, 8
      %s155 = smul.addr %s154, 4
      %s156 = scalar_lea.vmem %s2, %s155
      %s157 = smul.u32 8, %s18
      %p158 = scmp.lt.s32.totalorder %s17, 1
      %s159 = scalar_select %p158, %s17, 1
      %p160 = scmp.lt.s32.totalorder %s157, 7
      %s161 = scalar_select %p160, %s157, 7
      %s162 = smul.addr %s159, 8
      %s163 = sadd.s32 %s161, %s162
      %s164 = smul.addr %s163, 4
      %s165 = scalar_lea.vmem %s0, %s164
      %s166 = smul.u32 8, %s18
      %p167 = scmp.lt.s32.totalorder %s17, 1
      %s168 = scalar_select %p167, %s17, 1
      %s169 = smul.addr %s168, 8
      %s170 = smul.addr %s169, 4
      %s171 = scalar_lea.vmem %s2, %s170
      %v173 = vld [vmem:[%s165] sm:$0xf]
      %v174 = vld [vmem:[%s165 + $0x4] sm:$0xf]
      %v175 = vld [vmem:[%s165 + $0x8] sm:$0xf]
      %v176 = vld [vmem:[%s165 + $0xc] sm:$0xf]
      %v177 = vld [vmem:[%s165 + $0x10] sm:$0xf]
      %v178 = vld [vmem:[%s165 + $0x14] sm:$0xf]
      %v179 = vld [vmem:[%s165 + $0x18] sm:$0xf]
      %v180 = vld [vmem:[%s165 + $0x1c] sm:$0xf]
      %v181 = vld [vmem:[%s1] sm:$0xf]
      %v182 = vld [vmem:[%s1 + $0x4] sm:$0xf]
      %v183 = vld [vmem:[%s1 + $0x8] sm:$0xf]
      %v184 = vld [vmem:[%s1 + $0xc] sm:$0xf]
      %v185 = vld [vmem:[%s1 + $0x10] sm:$0xf]
      %v186 = vld [vmem:[%s1 + $0x14] sm:$0xf]
      %v187 = vld [vmem:[%s1 + $0x18] sm:$0xf]
      %v188 = vld [vmem:[%s1 + $0x1c] sm:$0xf]
      %v189 = vld [vmem:[%s1 + $0x20] sm:$0xf]
      %v190 = vld [vmem:[%s1 + $0x24] sm:$0xf]
      %v191 = vld [vmem:[%s1 + $0x28] sm:$0xf]
      %v192 = vld [vmem:[%s1 + $0x2c] sm:$0xf]
      %v193 = vld [vmem:[%s1 + $0x30] sm:$0xf]
      %v194 = vld [vmem:[%s1 + $0x34] sm:$0xf]
      %v195 = vld [vmem:[%s1 + $0x38] sm:$0xf]
      %v196 = vld [vmem:[%s1 + $0x3c] sm:$0xf]
      %v205 = vunpack.c.l.b16 %v173
      %v206 = vunpack.c.l.b16 %v174
      %v207 = vunpack.c.l.b16 %v175
      %v208 = vunpack.c.l.b16 %v176
      %v209 = vunpack.c.l.b16 %v177
      %v210 = vunpack.c.l.b16 %v178
      %v211 = vunpack.c.l.b16 %v179
      %v212 = vunpack.c.l.b16 %v180
      %v213 = vpack.c.b16 %v206, %v205
      %v214 = vpack.c.b16 %v208, %v207
      %v215 = vpack.c.b16 %v210, %v209
      %v216 = vpack.c.b16 %v212, %v211
      %v237 = vunpack.c.l.b16 %v181
      %v238 = vunpack.c.l.b16 %v182
      %v239 = vunpack.c.l.b16 %v183
      %v240 = vunpack.c.l.b16 %v184
      %v241 = vunpack.c.l.b16 %v185
      %v242 = vunpack.c.l.b16 %v186
      %v243 = vunpack.c.l.b16 %v187
      %v244 = vunpack.c.l.b16 %v188
      %v245 = vunpack.c.l.b16 %v189
      %v246 = vunpack.c.l.b16 %v190
      %v247 = vunpack.c.l.b16 %v191
      %v248 = vunpack.c.l.b16 %v192
      %v249 = vunpack.c.l.b16 %v193
      %v250 = vunpack.c.l.b16 %v194
      %v251 = vunpack.c.l.b16 %v195
      %v252 = vunpack.c.l.b16 %v196
      %v253 = vpack.c.b16 %v238, %v237
      %v254 = vpack.c.b16 %v240, %v239
      %v255 = vpack.c.b16 %v242, %v241
      %v256 = vpack.c.b16 %v244, %v243
      %v257 = vpack.c.b16 %v246, %v245
      %v258 = vpack.c.b16 %v248, %v247
      %v259 = vpack.c.b16 %v250, %v249
      %v260 = vpack.c.b16 %v252, %v251
      %269 = vmatprep.subr.bf16.mxu0 0
      %270 = vmatpush1.bf16.msra.mxu0 %v253
      %271 = vmatprep.subr.bf16.mxu0 0
      %272 = vmatpush1.bf16.msra.mxu0 %v254
      %273 = vmatprep.subr.bf16.mxu0 0
      %274 = vmatpush1.bf16.msra.mxu0 %v255
      %275 = vmatprep.subr.bf16.mxu0 0
      %276 = vmatpush1.bf16.msra.mxu0 %v256
      %277 = vmatprep.subr.bf16.mxu0 0
      %278 = vmatpush1.bf16.msra.mxu0 %v257
      %279 = vmatprep.subr.bf16.mxu0 0
      %280 = vmatpush1.bf16.msra.mxu0 %v258
      %281 = vmatprep.subr.bf16.mxu0 0
      %282 = vmatpush1.bf16.msra.mxu0 %v259
      %283 = vmatprep.subr.bf16.mxu0 0
      %284 = vmatpush1.bf16.msra.mxu0 %v260
      %285 = vmatprep.subr.bf16.mxu0 0
      %286 = vmatpush1.bf16.msra.mxu0 0
      %287 = vmatprep.subr.bf16.mxu0 0
      %288 = vmatpush1.bf16.msra.mxu0 0
      %289 = vmatprep.subr.bf16.mxu0 0
      %290 = vmatpush1.bf16.msra.mxu0 0
      %291 = vmatprep.subr.bf16.mxu0 0
      %292 = vmatpush1.bf16.msra.mxu0 0
      %293 = vmatprep.subr.bf16.mxu0 0
      %294 = vmatpush1.bf16.msra.mxu0 0
      %295 = vmatprep.subr.bf16.mxu0 0
      %296 = vmatpush1.bf16.msra.mxu0 0
      %297 = vmatprep.subr.bf16.mxu0 0
      %298 = vmatpush1.bf16.msra.mxu0 0
      %299 = vmatprep.subr.bf16.mxu0 0
      %300 = vmatpush1.bf16.msra.mxu0 0
      %301 = vmatprep.mubr.bf16.mxu0 0
      %302 = vmatmul.mubr.bf16.gmra.mrb[0].mxu0 %v213
      %v303 = vpop.f32.mrb[0].mxu0
      %v304 = vadd.f32 0.0, %v303
      %v305 = vpop.f32.mrb[0].mxu0
      %v306 = vpop.f32.mrb[0].mxu0
      %v307 = vadd.f32 0.0, %v306
      %v308 = vpop.f32.mrb[0].mxu0
      %309 = vmatprep.mubr.bf16.mxu0 0
      %310 = vmatmul.mubr.bf16.gmra.mrb[0].mxu0 %v214
      %v311 = vpop.f32.mrb[0].mxu0
      %v312 = vadd.f32 0.0, %v311
      %v313 = vpop.f32.mrb[0].mxu0
      %v314 = vpop.f32.mrb[0].mxu0
      %v315 = vadd.f32 0.0, %v314
      %v316 = vpop.f32.mrb[0].mxu0
      %317 = vmatprep.mubr.bf16.mxu0 0
      %318 = vmatmul.mubr.bf16.gmra.mrb[0].mxu0 %v215
      %v319 = vpop.f32.mrb[0].mxu0
      %v320 = vadd.f32 0.0, %v319
      %v321 = vpop.f32.mrb[0].mxu0
      %v322 = vpop.f32.mrb[0].mxu0
      %v323 = vadd.f32 0.0, %v322
      %v324 = vpop.f32.mrb[0].mxu0
      %325 = vmatprep.mubr.bf16.mxu0 0
      %326 = vmatmul.mubr.bf16.gmra.mrb[0].mxu0 %v216
      %v327 = vpop.f32.mrb[0].mxu0
      %v328 = vadd.f32 0.0, %v327
      %v329 = vpop.f32.mrb[0].mxu0
      %v330 = vpop.f32.mrb[0].mxu0
      %v331 = vadd.f32 0.0, %v330
      %v332 = vpop.f32.mrb[0].mxu0
      %333 = vdwg.mxu0
      %s334 = smul.u32 %s18, 64
      %v335 = vpack.c.bf16 %v307, %v304
      %v336 = vpack.c.bf16 %v315, %v312
      %v337 = vpack.c.bf16 %v323, %v320
      %v338 = vpack.c.bf16 %v331, %v328
      %v343 = vunpack.c.l.b16 %v335
      %v344 = vunpack.c.h.b16 %v335
      %v345 = vunpack.c.l.b16 %v336
      %v346 = vunpack.c.h.b16 %v336
      %v347 = vunpack.c.l.b16 %v337
      %v348 = vunpack.c.h.b16 %v337
      %v349 = vunpack.c.l.b16 %v338
      %v350 = vunpack.c.h.b16 %v338
      %v351 = vpack.c.b16 %v343, %v343
      %v352 = vpack.c.b16 %v344, %v344
      %v353 = vpack.c.b16 %v345, %v345
      %v354 = vpack.c.b16 %v346, %v346
      %v355 = vpack.c.b16 %v347, %v347
      %v356 = vpack.c.b16 %v348, %v348
      %v357 = vpack.c.b16 %v349, %v349
      %v358 = vpack.c.b16 %v350, %v350
      %s367 = sshra.s32 %s334, 3
      %s368 = sand.u32 %s334, 7
      %s369 = smul.addr %s367, 4
      %s370 = scalar_lea.vmem %s171, %s369
      %371 = vst [vmem:[%s370] sm:$0xf] %v351
      %372 = vst [vmem:[%s370 + $0x4] sm:$0xf] %v352
      %373 = vst [vmem:[%s370 + $0x8] sm:$0xf] %v353
      %374 = vst [vmem:[%s370 + $0xc] sm:$0xf] %v354
      %375 = vst [vmem:[%s370 + $0x10] sm:$0xf] %v355
      %376 = vst [vmem:[%s370 + $0x14] sm:$0xf] %v356
      %377 = vst [vmem:[%s370 + $0x18] sm:$0xf] %v357
      %378 = vst [vmem:[%s370 + $0x1c] sm:$0xf] %v358
      %p379 = scmp.eq.s32.totalorder %s18, 0
      // Predicated region
      $region29: #{generator_forward.11} parent=27 // pred_check
        %p380 = pneg %p379
      $region30: #{generator_forward.11} parent=27 // pred_check_branch
        %382 = sbr.rel (%p380) target = $region32
      $region31: #{generator_forward.11} parent=27 // pred_region
        %383 = vst [vmem:[#allocation2] sm:$0x1] 0.0
        %384 = vst [vmem:[#allocation3] sm:$0x1] 0.0
      $region32: #{generator_forward.11} parent=27 // pred_fallthru
        _
      %v385 = vld [vmem:[#allocation2] sm:$0x1]
      %v386 = vadd.f32 %v304, %v307
      %v387 = vadd.f32 %v386, %v312
      %v388 = vadd.f32 %v387, %v315
      %v389 = vadd.f32 %v388, %v320
      %v390 = vadd.f32 %v389, %v323
      %v391 = vadd.f32 %v390, %v328
      %v392 = vadd.f32 %v391, %v331
      %v393 = vrot.slane %v392, 4
      %v394 = vadd.f32 %v392, %v393
      %v395 = vrot.slane %v394, 2
      %v396 = vadd.f32 %v394, %v395
      %v397 = vrot.slane %v396, 1
      %v398 = vadd.f32 %v396, %v397
      %v399 = vadd.f32 %v385, %v398
      %400 = vst [vmem:[#allocation2] sm:$0x1] %v399
      %v401 = vld [vmem:[#allocation3] sm:$0x1]
      %v402 = vmul.f32 %v304, %v304
      %v403 = vmul.f32 %v307, %v307
      %v404 = vmul.f32 %v312, %v312
      %v405 = vmul.f32 %v315, %v315
      %v406 = vmul.f32 %v320, %v320
      %v407 = vmul.f32 %v323, %v323
      %v408 = vmul.f32 %v328, %v328
      %v409 = vmul.f32 %v331, %v331
      %v410 = vadd.f32 %v402, %v403
      %v411 = vadd.f32 %v410, %v404
      %v412 = vadd.f32 %v411, %v405
      %v413 = vadd.f32 %v412, %v406
      %v414 = vadd.f32 %v413, %v407
      %v415 = vadd.f32 %v414, %v408
      %v416 = vadd.f32 %v415, %v409
      %v417 = vrot.slane %v416, 4
      %v418 = vadd.f32 %v416, %v417
      %v419 = vrot.slane %v418, 2
      %v420 = vadd.f32 %v418, %v419
      %v421 = vrot.slane %v420, 1
      %v422 = vadd.f32 %v420, %v421
      %v423 = vadd.f32 %v401, %v422
      %424 = vst [vmem:[#allocation3] sm:$0x1] %v423
      // Predicated region
      $region33: #{generator_forward.11} parent=27 // pred_check
        %p425 = pneg %p379
      $region34: #{generator_forward.11} parent=27 // pred_check_branch
        %427 = sbr.rel (%p425) target = $region36
      $region35: #{generator_forward.11} parent=27 // pred_region
        %v428 = vld [vmem:[#allocation2] sm:$0x1]
        %v429 = vld [vmem:[#allocation3] sm:$0x1]
        %v430 = vmul.f32 %v428, 0.015625
        %v431 = vmul.f32 %v429, 0.015625
        %v432 = vmul.f32 %v430, %v430
        %v433 = vsub.f32 %v431, %v432
        %v434 = vmax.f32 %v433, 0.0
        %v435 = vadd.f32 %v434, 1e-05
        %v436 = vrsqrt.pop %v435
        %v437 = vld [vmem:[%s171] sm:$0xf]
        %v438 = vld [vmem:[%s171 + $0x4] sm:$0xf]
        %v439 = vld [vmem:[%s171 + $0x8] sm:$0xf]
        %v440 = vld [vmem:[%s171 + $0xc] sm:$0xf]
        %v441 = vld [vmem:[%s171 + $0x10] sm:$0xf]
        %v442 = vld [vmem:[%s171 + $0x14] sm:$0xf]
        %v443 = vld [vmem:[%s171 + $0x18] sm:$0xf]
        %v444 = vld [vmem:[%s171 + $0x1c] sm:$0xf]
        %v445 = vunpack.c.l.bf16 %v437
        %v446 = vunpack.c.l.bf16 %v438
        %v447 = vunpack.c.l.bf16 %v439
        %v448 = vunpack.c.l.bf16 %v440
        %v449 = vunpack.c.l.bf16 %v441
        %v450 = vunpack.c.l.bf16 %v442
        %v451 = vunpack.c.l.bf16 %v443
        %v452 = vunpack.c.l.bf16 %v444
        %v454 = vlaneseq
        %v455 = vshrl.u32 %v454, 7
        %v456 = vsub.s32 0, %v455
        %v457 = vrot.slane %v430, %v456
        %v459 = vsub.f32 %v445, %v457
        %v460 = vsub.f32 %v446, %v457
        %v461 = vsub.f32 %v447, %v457
        %v462 = vsub.f32 %v448, %v457
        %v463 = vsub.f32 %v449, %v457
        %v464 = vsub.f32 %v450, %v457
        %v465 = vsub.f32 %v451, %v457
        %v466 = vsub.f32 %v452, %v457
        %v468 = vlaneseq
        %v469 = vshrl.u32 %v468, 7
        %v470 = vsub.s32 0, %v469
        %v471 = vrot.slane %v436, %v470
        %v473 = vmul.f32 %v459, %v471
        %v474 = vmul.f32 %v460, %v471
        %v475 = vmul.f32 %v461, %v471
        %v476 = vmul.f32 %v462, %v471
        %v477 = vmul.f32 %v463, %v471
        %v478 = vmul.f32 %v464, %v471
        %v479 = vmul.f32 %v465, %v471
        %v480 = vmul.f32 %v466, %v471
        %v481 = vmax.f32 %v473, 0.0
        %v482 = vmax.f32 %v474, 0.0
        %v483 = vmax.f32 %v475, 0.0
        %v484 = vmax.f32 %v476, 0.0
        %v485 = vmax.f32 %v477, 0.0
        %v486 = vmax.f32 %v478, 0.0
        %v487 = vmax.f32 %v479, 0.0
        %v488 = vmax.f32 %v480, 0.0
        %v489 = vpack.c.bf16 %v482, %v481
        %v490 = vpack.c.bf16 %v484, %v483
        %v491 = vpack.c.bf16 %v486, %v485
        %v492 = vpack.c.bf16 %v488, %v487
        %v497 = vunpack.c.l.b16 %v489
        %v498 = vunpack.c.h.b16 %v489
        %v499 = vunpack.c.l.b16 %v490
        %v500 = vunpack.c.h.b16 %v490
        %v501 = vunpack.c.l.b16 %v491
        %v502 = vunpack.c.h.b16 %v491
        %v503 = vunpack.c.l.b16 %v492
        %v504 = vunpack.c.h.b16 %v492
        %v505 = vpack.c.b16 %v497, %v497
        %v506 = vpack.c.b16 %v498, %v498
        %v507 = vpack.c.b16 %v499, %v499
        %v508 = vpack.c.b16 %v500, %v500
        %v509 = vpack.c.b16 %v501, %v501
        %v510 = vpack.c.b16 %v502, %v502
        %v511 = vpack.c.b16 %v503, %v503
        %v512 = vpack.c.b16 %v504, %v504
        %521 = vst [vmem:[%s171] sm:$0xf] %v505
        %522 = vst [vmem:[%s171 + $0x4] sm:$0xf] %v506
        %523 = vst [vmem:[%s171 + $0x8] sm:$0xf] %v507
        %524 = vst [vmem:[%s171 + $0xc] sm:$0xf] %v508
        %525 = vst [vmem:[%s171 + $0x10] sm:$0xf] %v509
        %526 = vst [vmem:[%s171 + $0x14] sm:$0xf] %v510
        %527 = vst [vmem:[%s171 + $0x18] sm:$0xf] %v511
        %528 = vst [vmem:[%s171 + $0x1c] sm:$0xf] %v512
      $region36: #{generator_forward.11} parent=27 // pred_fallthru
        _
      %p529 = scmp.lt.s32.totalorder %s17, 1
      %s530 = scalar_select %p529, %s17, 1
      %s531 = smul.addr %s530, 8
      %s532 = smul.addr %s531, 4
      %s533 = scalar_lea.vmem %s2, %s532
      // Predicated region
      $region37: #{generator_forward.11} parent=27 // pred_check
        %p534 = pneg %p92
      $region38: #{generator_forward.11} parent=27 // pred_check_branch
        %536 = sbr.rel (%p534) target = $region40
      $region39: #{generator_forward.11} parent=27 // pred_region
        _
      $region40: #{generator_forward.11} parent=27 // pred_fallthru
        _
    $region28: #{generator_forward.11} parent=5 // pred_fallthru
      _
    %p537 = scmp.le.s32.totalorder 2, %s8
    // Predicated region
    $region41: #{generator_forward.11} parent=5 // pred_check
      %p538 = pneg %p537
    $region42: #{generator_forward.11} parent=5 // pred_check_branch
      %540 = sbr.rel (%p538) target = $region44
    $region43: #{generator_forward.11} parent=5 // pred_region
      %s541 = ssub.s32 %s8, 2
      // Predicated region
      $region45: #{generator_forward.11} parent=43 // pred_check
        %p542 = pneg %p98
      $region46: #{generator_forward.11} parent=43 // pred_check_branch
        %544 = sbr.rel (%p542) target = $region48
      $region47: #{generator_forward.11} parent=43 // pred_region
        %p545 = scmp.lt.s32.totalorder %s19, 1
        %s546 = scalar_select %p545, %s19, 1
        %s547 = smul.addr %s546, 8
        %s548 = smul.addr %s547, 4
        %s549 = scalar_lea.vmem %s2, %s548
      $region48: #{generator_forward.11} parent=43 // pred_fallthru
        _
    $region44: #{generator_forward.11} parent=5 // pred_fallthru
      _
  $region6: #{generator_forward.11} parent=0 // loop_footer
    %s12 = sadd.s32 1, %s8
  $region7: #{generator_forward.11} parent=0 // loop_footer_branch
    %7 = sbr.rel target = $region3
  $region8: #{generator_forward.11} parent=0 // loop_exit
    _

// kernel: generator_forward.12
$region0: #{generator_forward.12}
  #allocation0 [shape = 'u32[]', space=smem, size = 0x4, offset = 0x4, fixed_abs, tag = 'smem constant byte address 0x4 - core index']
  #allocation1 [shape = 'u32[144,128]{1,0:T(1,128)}', space=vmem, size = 0x12000, scoped, tag = 'internal scratch']
  #allocation2 [shape = 'f32[1,128]{1,0:T(1,128)}', space=vmem, size = 0x200, scoped, tag = 'scratch operand']
  #allocation3 [shape = 'f32[1,128]{1,0:T(1,128)}', space=vmem, size = 0x200, scoped, tag = 'scratch operand']
  %s0 = inlined_call_operand.vmem [shape: bf16[2,16,256], index: 0, kind: input, shape index: {}]
  %s1 = inlined_call_operand.vmem [shape: bf16[256,128], index: 1, kind: input, shape index: {}]
  %s2 = inlined_call_operand.vmem [shape: bf16[2,16,128], index: 2, kind: output, shape index: {}]
  %s3 = sld [smem:[#allocation0]]
  $region49: #{generator_forward.12} parent=0
    _
  %s5 = ssub.s32 1, %s3
  %s6 = scalar_select 0, %s5, %s3
  loop: start=0, step=1, limit=4
  $region2: #{generator_forward.12} parent=0 // loop_pre_header
    _
  $region3: #{generator_forward.12} parent=0 // loop_header
    %s8 = sphi 0, %s12
    %p9 = scmp.ge.s32.totalorder %s8, 4
    %s15 = sphi 0, %s27
    %s16 = sphi 0, %s23
    %s17 = sphi 0, %s15
    %s18 = sphi 0, %s16
    %s19 = sphi 0, %s17
    %s20 = sphi 0, %s18
    %s32 = sphi 0, %s34
    %s35 = sphi 0, %s32
    %s36 = sphi 0, %s35
    %s52 = sphi 0, %s36
    %s56 = sphi 0, %s56
    %s58 = sphi 0, %s56
    %s59 = sphi 0, %s58
    %s73 = sphi 0, %s59
    %s79 = sphi 0, %s81
    %s82 = sphi 0, %s79
    %s83 = sphi 0, %s82
    %s99 = sphi 0, %s83
  $region4: #{generator_forward.12} parent=0 // loop_header_branch
    %11 = sbr.rel (%p9) target = $region8
  $region5: #{generator_forward.12} parent=0 // loop_body
    %s13 = ssub.s32 %s8, 1
    %s14 = ssub.s32 %s8, 2
    %s21 = sadd.s32 1, %s16
    %p22 = scmp.ge.s32.totalorder %s21, 1
    %s23 = scalar_select %p22, 0, %s21
    %s24 = sadd.s32 1, %s15
    %s25 = scalar_select %p22, %s24, %s15
    %p26 = scmp.ge.s32.totalorder %s25, 2
    %s27 = scalar_select %p26, 0, %s25
    %s28 = ssub.s32 %s15, %s27
    %s29 = ssub.s32 %s16, %s23
    %s30 = sor.u32 %s28, %s29
    %p31 = scmp.eq.s32.totalorder %s30, 0
    %s33 = sadd.s32 %s32, 1
    %s34 = scalar_select %p31, %s32, %s33
    %p37 = pneg %p31
    %p38 = scmp.eq.s32.totalorder %s8, 1
    %p39 = por %p37, %p38
    %p40 = scmp.ne.s32.totalorder %s32, %s35
    %p41 = scmp.eq.s32.totalorder %s8, 0
    %p42 = por %p40, %p41
    %p43 = scmp.ne.s32.totalorder %s32, %s35
    %p44 = scmp.eq.s32.totalorder %s13, 1
    %p45 = por %p43, %p44
    %p46 = scmp.ne.s32.totalorder %s35, %s36
    %p47 = scmp.eq.s32.totalorder %s13, 0
    %p48 = por %p46, %p47
    %p49 = scmp.ne.s32.totalorder %s35, %s36
    %p50 = scmp.eq.s32.totalorder %s14, 1
    %p51 = por %p49, %p50
    %p53 = scmp.ne.s32.totalorder %s36, %s52
    %p54 = scmp.eq.s32.totalorder %s14, 0
    %p55 = por %p53, %p54
    %s57 = sadd.s32 %s56, 1
    %p60 = scmp.eq.s32.totalorder %s8, 1
    %p61 = scmp.ne.s32.totalorder %s56, %s58
    %p62 = scmp.eq.s32.totalorder %s8, 0
    %p63 = por %p61, %p62
    %p64 = scmp.ne.s32.totalorder %s56, %s58
    %p65 = scmp.eq.s32.totalorder %s13, 1
    %p66 = por %p64, %p65
    %p67 = scmp.ne.s32.totalorder %s58, %s59
    %p68 = scmp.eq.s32.totalorder %s13, 0
    %p69 = por %p67, %p68
    %p70 = scmp.ne.s32.totalorder %s58, %s59
    %p71 = scmp.eq.s32.totalorder %s14, 1
    %p72 = por %p70, %p71
    %p74 = scmp.ne.s32.totalorder %s59, %s73
    %p75 = scmp.eq.s32.totalorder %s14, 0
    %p76 = por %p74, %p75
    %s77 = ssub.s32 %s15, %s27
    %p78 = scmp.eq.s32.totalorder %s77, 0
    %s80 = sadd.s32 %s79, 1
    %s81 = scalar_select %p78, %s79, %s80
    %p84 = pneg %p78
    %p85 = scmp.eq.s32.totalorder %s8, 1
    %p86 = por %p84, %p85
    %p87 = scmp.ne.s32.totalorder %s79, %s82
    %p88 = scmp.eq.s32.totalorder %s8, 0
    %p89 = por %p87, %p88
    %p90 = scmp.ne.s32.totalorder %s79, %s82
    %p91 = scmp.eq.s32.totalorder %s13, 1
    %p92 = por %p90, %p91
    %p93 = scmp.ne.s32.totalorder %s82, %s83
    %p94 = scmp.eq.s32.totalorder %s13, 0
    %p95 = por %p93, %p94
    %p96 = scmp.ne.s32.totalorder %s82, %s83
    %p97 = scmp.eq.s32.totalorder %s14, 1
    %p98 = por %p96, %p97
    %p100 = scmp.ne.s32.totalorder %s83, %s99
    %p101 = scmp.eq.s32.totalorder %s14, 0
    %p102 = por %p100, %p101
    %p103 = scmp.le.s32.totalorder 1, %s8
    %p104 = scmp.lt.s32.totalorder %s8, 3
    %p105 = pnand %p103, %p104
    %p106 = pneg %p105
    // Predicated region
    $region9: #{generator_forward.12} parent=5 // pred_check
      _
    $region10: #{generator_forward.12} parent=5 // pred_check_branch
      %108 = sbr.rel (%p105) target = $region12
    $region11: #{generator_forward.12} parent=5 // pred_region
      %s109 = ssub.s32 %s8, 1
      // Predicated region
      $region13: #{generator_forward.12} parent=11 // pred_check
        %p110 = pneg %p69
      $region14: #{generator_forward.12} parent=11 // pred_check_branch
        %112 = sbr.rel (%p110) target = $region16
      $region15: #{generator_forward.12} parent=11 // pred_region
        _
      $region16: #{generator_forward.12} parent=11 // pred_fallthru
        _
    $region12: #{generator_forward.12} parent=5 // pred_fallthru
      _
    %p113 = scmp.lt.s32.totalorder %s8, 2
    // Predicated region
    $region17: #{generator_forward.12} parent=5 // pred_check
      %p114 = pneg %p113
    $region18: #{generator_forward.12} parent=5 // pred_check_branch
      %116 = sbr.rel (%p114) target = $region20
    $region19: #{generator_forward.12} parent=5 // pred_region
      // Predicated region
      $region21: #{generator_forward.12} parent=19 // pred_check
        %p117 = pneg %p42
      $region22: #{generator_forward.12} parent=19 // pred_check_branch
        %119 = sbr.rel (%p117) target = $region24
      $region23: #{generator_forward.12} parent=19 // pred_region
        %s120 = smul.u32 2, %s16
        %p121 = scmp.lt.s32.totalorder %s15, 1
        %s122 = scalar_select %p121, %s15, 1
        %p123 = scmp.lt.s32.totalorder %s120, 1
        %s124 = scalar_select %p123, %s120, 1
        %s125 = smul.addr %s124, 2
        %s126 = smul.addr %s122, 4
        %s127 = sadd.s32 %s125, %s126
        %s128 = smul.addr %s127, 4
        %s129 = scalar_lea.vmem %s0, %s128
        %s130 = smul.u32 2, %s16
      $region24: #{generator_forward.12} parent=19 // pred_fallthru
        _
    $region20: #{generator_forward.12} parent=5 // pred_fallthru
      _
    %p131 = scmp.le.s32.totalorder 1, %s8
    %p132 = scmp.lt.s32.totalorder %s8, 3
    %p133 = pnand %p131, %p132
    %p134 = pneg %p133
    // Predicated region
    $region25: #{generator_forward.12} parent=5 // pred_check
      _
    $region26: #{generator_forward.12} parent=5 // pred_check_branch
      %136 = sbr.rel (%p133) target = $region28
    $region27: #{generator_forward.12} parent=5 // pred_region
      %s137 = ssub.s32 %s8, 1
      %s138 = smul.u32 2, %s18
      %p139 = scmp.lt.s32.totalorder %s17, 1
      %s140 = scalar_select %p139, %s17, 1
      %p141 = scmp.lt.s32.totalorder %s138, 1
      %s142 = scalar_select %p141, %s138, 1
      %s143 = smul.addr %s142, 2
      %s144 = smul.addr %s140, 4
      %s145 = sadd.s32 %s143, %s144
      %s146 = smul.addr %s145, 4
      %s147 = scalar_lea.vmem %s0, %s146
      %p148 = pneg %p48
      %p149 = pneg %p45
      %p150 = pneg %p69
      %p151 = pneg %p66
      %p152 = pneg %p95
      %p153 = pneg %p92
      %p154 = scmp.lt.s32.totalorder %s17, 1
      %s155 = scalar_select %p154, %s17, 1
      %s156 = smul.addr %s155, 2
      %s157 = smul.addr %s156, 4
      %s158 = scalar_lea.vmem %s2, %s157
      %s159 = smul.u32 2, %s18
      %p160 = scmp.lt.s32.totalorder %s17, 1
      %s161 = scalar_select %p160, %s17, 1
      %p162 = scmp.lt.s32.totalorder %s159, 1
      %s163 = scalar_select %p162, %s159, 1
      %s164 = smul.addr %s163, 2
      %s165 = smul.addr %s161, 4
      %s166 = sadd.s32 %s164, %s165
      %s167 = smul.addr %s166, 4
      %s168 = scalar_lea.vmem %s0, %s167
      %s169 = smul.u32 2, %s18
      %p170 = scmp.lt.s32.totalorder %s17, 1
      %s171 = scalar_select %p170, %s17, 1
      %s172 = smul.addr %s171, 2
      %s173 = smul.addr %s172, 4
      %s174 = scalar_lea.vmem %s2, %s173
      %v176 = vld [vmem:[%s168] sm:$0xff]
      %v177 = vld [vmem:[%s168 + $0x8] sm:$0xff]
      %v178 = vld [vmem:[%s1] sm:$0xf]
      %v179 = vld [vmem:[%s1 + $0x4] sm:$0xf]
      %v180 = vld [vmem:[%s1 + $0x8] sm:$0xf]
      %v181 = vld [vmem:[%s1 + $0xc] sm:$0xf]
      %v182 = vld [vmem:[%s1 + $0x10] sm:$0xf]
      %v183 = vld [vmem:[%s1 + $0x14] sm:$0xf]
      %v184 = vld [vmem:[%s1 + $0x18] sm:$0xf]
      %v185 = vld [vmem:[%s1 + $0x1c] sm:$0xf]
      %v186 = vld [vmem:[%s1 + $0x20] sm:$0xf]
      %v187 = vld [vmem:[%s1 + $0x24] sm:$0xf]
      %v188 = vld [vmem:[%s1 + $0x28] sm:$0xf]
      %v189 = vld [vmem:[%s1 + $0x2c] sm:$0xf]
      %v190 = vld [vmem:[%s1 + $0x30] sm:$0xf]
      %v191 = vld [vmem:[%s1 + $0x34] sm:$0xf]
      %v192 = vld [vmem:[%s1 + $0x38] sm:$0xf]
      %v193 = vld [vmem:[%s1 + $0x3c] sm:$0xf]
      %v194 = vld [vmem:[%s1 + $0x40] sm:$0xf]
      %v195 = vld [vmem:[%s1 + $0x44] sm:$0xf]
      %v196 = vld [vmem:[%s1 + $0x48] sm:$0xf]
      %v197 = vld [vmem:[%s1 + $0x4c] sm:$0xf]
      %v198 = vld [vmem:[%s1 + $0x50] sm:$0xf]
      %v199 = vld [vmem:[%s1 + $0x54] sm:$0xf]
      %v200 = vld [vmem:[%s1 + $0x58] sm:$0xf]
      %v201 = vld [vmem:[%s1 + $0x5c] sm:$0xf]
      %v202 = vld [vmem:[%s1 + $0x60] sm:$0xf]
      %v203 = vld [vmem:[%s1 + $0x64] sm:$0xf]
      %v204 = vld [vmem:[%s1 + $0x68] sm:$0xf]
      %v205 = vld [vmem:[%s1 + $0x6c] sm:$0xf]
      %v206 = vld [vmem:[%s1 + $0x70] sm:$0xf]
      %v207 = vld [vmem:[%s1 + $0x74] sm:$0xf]
      %v208 = vld [vmem:[%s1 + $0x78] sm:$0xf]
      %v209 = vld [vmem:[%s1 + $0x7c] sm:$0xf]
      %v212 = vunpack.c.l.b16 %v176
      %v213 = vunpack.c.h.b16 %v176
      %v214 = vunpack.c.l.b16 %v177
      %v215 = vunpack.c.h.b16 %v177
      %v216 = vpack.c.b16 %v214, %v212
      %v217 = vpack.c.b16 %v215, %v213
      %v252 = vunpack.c.l.b16 %v178
      %v253 = vunpack.c.l.b16 %v179
      %v254 = vunpack.c.l.b16 %v180
      %v255 = vunpack.c.l.b16 %v181
      %v256 = vunpack.c.l.b16 %v182
      %v257 = vunpack.c.l.b16 %v183
      %v258 = vunpack.c.l.b16 %v184
      %v259 = vunpack.c.l.b16 %v185
      %v260 = vunpack.c.l.b16 %v186
      %v261 = vunpack.c.l.b16 %v187
      %v262 = vunpack.c.l.b16 %v188
      %v263 = vunpack.c.l.b16 %v189
      %v264 = vunpack.c.l.b16 %v190
      %v265 = vunpack.c.l.b16 %v191
      %v266 = vunpack.c.l.b16 %v192
      %v267 = vunpack.c.l.b16 %v193
      %v268 = vunpack.c.l.b16 %v194
      %v269 = vunpack.c.l.b16 %v195
      %v270 = vunpack.c.l.b16 %v196
      %v271 = vunpack.c.l.b16 %v197
      %v272 = vunpack.c.l.b16 %v198
      %v273 = vunpack.c.l.b16 %v199
      %v274 = vunpack.c.l.b16 %v200
      %v275 = vunpack.c.l.b16 %v201
      %v276 = vunpack.c.l.b16 %v202
      %v277 = vunpack.c.l.b16 %v203
      %v278 = vunpack.c.l.b16 %v204
      %v279 = vunpack.c.l.b16 %v205
      %v280 = vunpack.c.l.b16 %v206
      %v281 = vunpack.c.l.b16 %v207
      %v282 = vunpack.c.l.b16 %v208
      %v283 = vunpack.c.l.b16 %v209
      %v284 = vpack.c.b16 %v253, %v252
      %v285 = vpack.c.b16 %v255, %v254
      %v286 = vpack.c.b16 %v257, %v256
      %v287 = vpack.c.b16 %v259, %v258
      %v288 = vpack.c.b16 %v261, %v260
      %v289 = vpack.c.b16 %v263, %v262
      %v290 = vpack.c.b16 %v265, %v264
      %v291 = vpack.c.b16 %v267, %v266
      %v292 = vpack.c.b16 %v269, %v268
      %v293 = vpack.c.b16 %v271, %v270
      %v294 = vpack.c.b16 %v273, %v272
      %v295 = vpack.c.b16 %v275, %v274
      %v296 = vpack.c.b16 %v277, %v276
      %v297 = vpack.c.b16 %v279, %v278
      %v298 = vpack.c.b16 %v281, %v280
      %v299 = vpack.c.b16 %v283, %v282
      %316 = vmatprep.subr.bf16.mxu0 0
      %317 = vmatpush1.bf16.msra.mxu0 %v284
      %318 = vmatprep.subr.bf16.mxu0 0
      %319 = vmatpush1.bf16.msra.mxu0 %v285
      %320 = vmatprep.subr.bf16.mxu0 0
      %321 = vmatpush1.bf16.msra.mxu0 %v286
      %322 = vmatprep.subr.bf16.mxu0 0
      %323 = vmatpush1.bf16.msra.mxu0 %v287
      %324 = vmatprep.subr.bf16.mxu0 0
      %325 = vmatpush1.bf16.msra.mxu0 %v288
      %326 = vmatprep.subr.bf16.mxu0 0
      %327 = vmatpush1.bf16.msra.mxu0 %v289
      %328 = vmatprep.subr.bf16.mxu0 0
      %329 = vmatpush1.bf16.msra.mxu0 %v290
      %330 = vmatprep.subr.bf16.mxu0 0
      %331 = vmatpush1.bf16.msra.mxu0 %v291
      %332 = vmatprep.subr.bf16.mxu0 0
      %333 = vmatpush1.bf16.msra.mxu0 %v292
      %334 = vmatprep.subr.bf16.mxu0 0
      %335 = vmatpush1.bf16.msra.mxu0 %v293
      %336 = vmatprep.subr.bf16.mxu0 0
      %337 = vmatpush1.bf16.msra.mxu0 %v294
      %338 = vmatprep.subr.bf16.mxu0 0
      %339 = vmatpush1.bf16.msra.mxu0 %v295
      %340 = vmatprep.subr.bf16.mxu0 0
      %341 = vmatpush1.bf16.msra.mxu0 %v296
      %342 = vmatprep.subr.bf16.mxu0 0
      %343 = vmatpush1.bf16.msra.mxu0 %v297
      %344 = vmatprep.subr.bf16.mxu0 0
      %345 = vmatpush1.bf16.msra.mxu0 %v298
      %346 = vmatprep.subr.bf16.mxu0 0
      %347 = vmatpush1.bf16.msra.mxu0 %v299
      %348 = vmatprep.mubr.bf16.mxu0 %v217
      %349 = vmatmul.mubr.bf16.gmra.mrb[0].mxu0 %v216
      %v350 = vpop.f32.mrb[0].mxu0
      %v351 = vadd.f32 0.0, %v350
      %v352 = vpop.f32.mrb[0].mxu0
      %v353 = vpop.f32.mrb[0].mxu0
      %v354 = vadd.f32 0.0, %v353
      %v355 = vpop.f32.mrb[0].mxu0
      %356 = vdwg.mxu0
      %s357 = smul.u32 %s18, 16
      %v358 = vpack.c.bf16 %v354, %v351
      %v360 = vunpack.c.l.b16 %v358
      %v361 = vunpack.c.h.b16 %v358
      %v362 = vpack.c.b16 %v360, %v360
      %v363 = vpack.c.b16 %v361, %v361
      %s366 = sshra.s32 %s357, 3
      %s367 = sand.u32 %s357, 7
      %s368 = smul.addr %s366, 4
      %s369 = scalar_lea.vmem %s174, %s368
      %370 = vst [vmem:[%s369] sm:$0xf] %v362
      %371 = vst [vmem:[%s369 + $0x4] sm:$0xf] %v363
      %p372 = scmp.eq.s32.totalorder %s18, 0
      // Predicated region
      $region29: #{generator_forward.12} parent=27 // pred_check
        %p373 = pneg %p372
      $region30: #{generator_forward.12} parent=27 // pred_check_branch
        %375 = sbr.rel (%p373) target = $region32
      $region31: #{generator_forward.12} parent=27 // pred_region
        %376 = vst [vmem:[#allocation2] sm:$0x1] 0.0
        %377 = vst [vmem:[#allocation3] sm:$0x1] 0.0
      $region32: #{generator_forward.12} parent=27 // pred_fallthru
        _
      %v378 = vld [vmem:[#allocation2] sm:$0x1]
      %v379 = vadd.f32 %v351, %v354
      %v380 = vrot.slane %v379, 4
      %v381 = vadd.f32 %v379, %v380
      %v382 = vrot.slane %v381, 2
      %v383 = vadd.f32 %v381, %v382
      %v384 = vrot.slane %v383, 1
      %v385 = vadd.f32 %v383, %v384
      %v386 = vadd.f32 %v378, %v385
      %387 = vst [vmem:[#allocation2] sm:$0x1] %v386
      %v388 = vld [vmem:[#allocation3] sm:$0x1]
      %v389 = vmul.f32 %v351, %v351
      %v390 = vmul.f32 %v354, %v354
      %v391 = vadd.f32 %v389, %v390
      %v392 = vrot.slane %v391, 4
      %v393 = vadd.f32 %v391, %v392
      %v394 = vrot.slane %v393, 2
      %v395 = vadd.f32 %v393, %v394
      %v396 = vrot.slane %v395, 1
      %v397 = vadd.f32 %v395, %v396
      %v398 = vadd.f32 %v388, %v397
      %399 = vst [vmem:[#allocation3] sm:$0x1] %v398
      // Predicated region
      $region33: #{generator_forward.12} parent=27 // pred_check
        %p400 = pneg %p372
      $region34: #{generator_forward.12} parent=27 // pred_check_branch
        %402 = sbr.rel (%p400) target = $region36
      $region35: #{generator_forward.12} parent=27 // pred_region
        %v403 = vld [vmem:[#allocation2] sm:$0x1]
        %v404 = vld [vmem:[#allocation3] sm:$0x1]
        %v405 = vmul.f32 %v403, 0.0625
        %v406 = vmul.f32 %v404, 0.0625
        %v407 = vmul.f32 %v405, %v405
        %v408 = vsub.f32 %v406, %v407
        %v409 = vmax.f32 %v408, 0.0
        %v410 = vadd.f32 %v409, 1e-05
        %v411 = vrsqrt.pop %v410
        %v412 = vld [vmem:[%s174] sm:$0xf]
        %v413 = vld [vmem:[%s174 + $0x4] sm:$0xf]
        %v414 = vunpack.c.l.bf16 %v412
        %v415 = vunpack.c.l.bf16 %v413
        %v417 = vlaneseq
        %v418 = vshrl.u32 %v417, 7
        %v419 = vsub.s32 0, %v418
        %v420 = vrot.slane %v405, %v419
        %v422 = vsub.f32 %v414, %v420
        %v423 = vsub.f32 %v415, %v420
        %v425 = vlaneseq
        %v426 = vshrl.u32 %v425, 7
        %v427 = vsub.s32 0, %v426
        %v428 = vrot.slane %v411, %v427
        %v430 = vmul.f32 %v422, %v428
        %v431 = vmul.f32 %v423, %v428
        %v432 = vmax.f32 %v430, 0.0
        %v433 = vmax.f32 %v431, 0.0
        %v434 = vpack.c.bf16 %v433, %v432
        %v436 = vunpack.c.l.b16 %v434
        %v437 = vunpack.c.h.b16 %v434
        %v438 = vpack.c.b16 %v436, %v436
        %v439 = vpack.c.b16 %v437, %v437
        %442 = vst [vmem:[%s174] sm:$0xf] %v438
        %443 = vst [vmem:[%s174 + $0x4] sm:$0xf] %v439
      $region36: #{generator_forward.12} parent=27 // pred_fallthru
        _
      %p444 = scmp.lt.s32.totalorder %s17, 1
      %s445 = scalar_select %p444, %s17, 1
      %s446 = smul.addr %s445, 2
      %s447 = smul.addr %s446, 4
      %s448 = scalar_lea.vmem %s2, %s447
      // Predicated region
      $region37: #{generator_forward.12} parent=27 // pred_check
        %p449 = pneg %p92
      $region38: #{generator_forward.12} parent=27 // pred_check_branch
        %451 = sbr.rel (%p449) target = $region40
      $region39: #{generator_forward.12} parent=27 // pred_region
        _
      $region40: #{generator_forward.12} parent=27 // pred_fallthru
        _
    $region28: #{generator_forward.12} parent=5 // pred_fallthru
      _
    %p452 = scmp.le.s32.totalorder 2, %s8
    // Predicated region
    $region41: #{generator_forward.12} parent=5 // pred_check
      %p453 = pneg %p452
    $region42: #{generator_forward.12} parent=5 // pred_check_branch
      %455 = sbr.rel (%p453) target = $region44
    $region43: #{generator_forward.12} parent=5 // pred_region
      %s456 = ssub.s32 %s8, 2
      // Predicated region
      $region45: #{generator_forward.12} parent=43 // pred_check
        %p457 = pneg %p98
      $region46: #{generator_forward.12} parent=43 // pred_check_branch
        %459 = sbr.rel (%p457) target = $region48
      $region47: #{generator_forward.12} parent=43 // pred_region
        %p460 = scmp.lt.s32.totalorder %s19, 1
        %s461 = scalar_select %p460, %s19, 1
        %s462 = smul.addr %s461, 2
        %s463 = smul.addr %s462, 4
        %s464 = scalar_lea.vmem %s2, %s463
      $region48: #{generator_forward.12} parent=43 // pred_fallthru
        _
    $region44: #{generator_forward.12} parent=5 // pred_fallthru
      _
  $region6: #{generator_forward.12} parent=0 // loop_footer
    %s12 = sadd.s32 1, %s8
  $region7: #{generator_forward.12} parent=0 // loop_footer_branch
    %7 = sbr.rel target = $region3
  $region8: #{generator_forward.12} parent=0 // loop_exit
    _

// kernel: generator_forward.14
$region0: #{generator_forward.14}
  #allocation0 [shape = 'u32[]', space=smem, size = 0x4, offset = 0x4, fixed_abs, tag = 'smem constant byte address 0x4 - core index']
  #allocation1 [shape = 'u32[144,128]{1,0:T(1,128)}', space=vmem, size = 0x12000, scoped, tag = 'internal scratch']
  #allocation2 [shape = 'f32[1,128]{1,0:T(1,128)}', space=vmem, size = 0x200, scoped, tag = 'scratch operand']
  #allocation3 [shape = 'f32[1,128]{1,0:T(1,128)}', space=vmem, size = 0x200, scoped, tag = 'scratch operand']
  %s0 = inlined_call_operand.vmem [shape: bf16[2,16,384], index: 0, kind: input, shape index: {}]
  %s1 = inlined_call_operand.vmem [shape: bf16[384,128], index: 1, kind: input, shape index: {}]
  %s2 = inlined_call_operand.vmem [shape: bf16[2,16,128], index: 2, kind: input, shape index: {}]
  %s3 = inlined_call_operand.vmem [shape: bf16[2,16,128], index: 3, kind: output, shape index: {}]
  %s4 = sld [smem:[#allocation0]]
  $region53: #{generator_forward.14} parent=0
    _
  %s6 = ssub.s32 1, %s4
  %s7 = scalar_select 0, %s6, %s4
  loop: start=0, step=1, limit=4
  $region2: #{generator_forward.14} parent=0 // loop_pre_header
    _
  $region3: #{generator_forward.14} parent=0 // loop_header
    %s9 = sphi 0, %s13
    %p10 = scmp.ge.s32.totalorder %s9, 4
    %s16 = sphi 0, %s28
    %s17 = sphi 0, %s24
    %s18 = sphi 0, %s16
    %s19 = sphi 0, %s17
    %s20 = sphi 0, %s18
    %s21 = sphi 0, %s19
    %s33 = sphi 0, %s35
    %s36 = sphi 0, %s33
    %s37 = sphi 0, %s36
    %s53 = sphi 0, %s37
    %s57 = sphi 0, %s57
    %s59 = sphi 0, %s57
    %s60 = sphi 0, %s59
    %s74 = sphi 0, %s60
    %s80 = sphi 0, %s82
    %s83 = sphi 0, %s80
    %s84 = sphi 0, %s83
    %s100 = sphi 0, %s84
    %s106 = sphi 0, %s108
    %s109 = sphi 0, %s106
    %s110 = sphi 0, %s109
    %s126 = sphi 0, %s110
  $region4: #{generator_forward.14} parent=0 // loop_header_branch
    %12 = sbr.rel (%p10) target = $region8
  $region5: #{generator_forward.14} parent=0 // loop_body
    %s14 = ssub.s32 %s9, 1
    %s15 = ssub.s32 %s9, 2
    %s22 = sadd.s32 1, %s17
    %p23 = scmp.ge.s32.totalorder %s22, 1
    %s24 = scalar_select %p23, 0, %s22
    %s25 = sadd.s32 1, %s16
    %s26 = scalar_select %p23, %s25, %s16
    %p27 = scmp.ge.s32.totalorder %s26, 2
    %s28 = scalar_select %p27, 0, %s26
    %s29 = ssub.s32 %s16, %s28
    %s30 = ssub.s32 %s17, %s24
    %s31 = sor.u32 %s29, %s30
    %p32 = scmp.eq.s32.totalorder %s31, 0
    %s34 = sadd.s32 %s33, 1
    %s35 = scalar_select %p32, %s33, %s34
    %p38 = pneg %p32
    %p39 = scmp.eq.s32.totalorder %s9, 1
    %p40 = por %p38, %p39
    %p41 = scmp.ne.s32.totalorder %s33, %s36
    %p42 = scmp.eq.s32.totalorder %s9, 0
    %p43 = por %p41, %p42
    %p44 = scmp.ne.s32.totalorder %s33, %s36
    %p45 = scmp.eq.s32.totalorder %s14, 1
    %p46 = por %p44, %p45
    %p47 = scmp.ne.s32.totalorder %s36, %s37
    %p48 = scmp.eq.s32.totalorder %s14, 0
    %p49 = por %p47, %p48
    %p50 = scmp.ne.s32.totalorder %s36, %s37
    %p51 = scmp.eq.s32.totalorder %s15, 1
    %p52 = por %p50, %p51
    %p54 = scmp.ne.s32.totalorder %s37, %s53
    %p55 = scmp.eq.s32.totalorder %s15, 0
    %p56 = por %p54, %p55
    %s58 = sadd.s32 %s57, 1
    %p61 = scmp.eq.s32.totalorder %s9, 1
    %p62 = scmp.ne.s32.totalorder %s57, %s59
    %p63 = scmp.eq.s32.totalorder %s9, 0
    %p64 = por %p62, %p63
    %p65 = scmp.ne.s32.totalorder %s57, %s59
    %p66 = scmp.eq.s32.totalorder %s14, 1
    %p67 = por %p65, %p66
    %p68 = scmp.ne.s32.totalorder %s59, %s60
    %p69 = scmp.eq.s32.totalorder %s14, 0
    %p70 = por %p68, %p69
    %p71 = scmp.ne.s32.totalorder %s59, %s60
    %p72 = scmp.eq.s32.totalorder %s15, 1
    %p73 = por %p71, %p72
    %p75 = scmp.ne.s32.totalorder %s60, %s74
    %p76 = scmp.eq.s32.totalorder %s15, 0
    %p77 = por %p75, %p76
    %s78 = ssub.s32 %s16, %s28
    %p79 = scmp.eq.s32.totalorder %s78, 0
    %s81 = sadd.s32 %s80, 1
    %s82 = scalar_select %p79, %s80, %s81
    %p85 = pneg %p79
    %p86 = scmp.eq.s32.totalorder %s9, 1
    %p87 = por %p85, %p86
    %p88 = scmp.ne.s32.totalorder %s80, %s83
    %p89 = scmp.eq.s32.totalorder %s9, 0
    %p90 = por %p88, %p89
    %p91 = scmp.ne.s32.totalorder %s80, %s83
    %p92 = scmp.eq.s32.totalorder %s14, 1
    %p93 = por %p91, %p92
    %p94 = scmp.ne.s32.totalorder %s83, %s84
    %p95 = scmp.eq.s32.totalorder %s14, 0
    %p96 = por %p94, %p95
    %p97 = scmp.ne.s32.totalorder %s83, %s84
    %p98 = scmp.eq.s32.totalorder %s15, 1
    %p99 = por %p97, %p98
    %p101 = scmp.ne.s32.totalorder %s84, %s100
    %p102 = scmp.eq.s32.totalorder %s15, 0
    %p103 = por %p101, %p102
    %s104 = ssub.s32 %s16, %s28
    %p105 = scmp.eq.s32.totalorder %s104, 0
    %s107 = sadd.s32 %s106, 1
    %s108 = scalar_select %p105, %s106, %s107
    %p111 = pneg %p105
    %p112 = scmp.eq.s32.totalorder %s9, 1
    %p113 = por %p111, %p112
    %p114 = scmp.ne.s32.totalorder %s106, %s109
    %p115 = scmp.eq.s32.totalorder %s9, 0
    %p116 = por %p114, %p115
    %p117 = scmp.ne.s32.totalorder %s106, %s109
    %p118 = scmp.eq.s32.totalorder %s14, 1
    %p119 = por %p117, %p118
    %p120 = scmp.ne.s32.totalorder %s109, %s110
    %p121 = scmp.eq.s32.totalorder %s14, 0
    %p122 = por %p120, %p121
    %p123 = scmp.ne.s32.totalorder %s109, %s110
    %p124 = scmp.eq.s32.totalorder %s15, 1
    %p125 = por %p123, %p124
    %p127 = scmp.ne.s32.totalorder %s110, %s126
    %p128 = scmp.eq.s32.totalorder %s15, 0
    %p129 = por %p127, %p128
    %p130 = scmp.le.s32.totalorder 1, %s9
    %p131 = scmp.lt.s32.totalorder %s9, 3
    %p132 = pnand %p130, %p131
    %p133 = pneg %p132
    // Predicated region
    $region9: #{generator_forward.14} parent=5 // pred_check
      _
    $region10: #{generator_forward.14} parent=5 // pred_check_branch
      %135 = sbr.rel (%p132) target = $region12
    $region11: #{generator_forward.14} parent=5 // pred_region
      %s136 = ssub.s32 %s9, 1
      // Predicated region
      $region13: #{generator_forward.14} parent=11 // pred_check
        %p137 = pneg %p70
      $region14: #{generator_forward.14} parent=11 // pred_check_branch
        %139 = sbr.rel (%p137) target = $region16
      $region15: #{generator_forward.14} parent=11 // pred_region
        _
      $region16: #{generator_forward.14} parent=11 // pred_fallthru
        _
    $region12: #{generator_forward.14} parent=5 // pred_fallthru
      _
    %p140 = scmp.lt.s32.totalorder %s9, 2
    // Predicated region
    $region17: #{generator_forward.14} parent=5 // pred_check
      %p141 = pneg %p140
    $region18: #{generator_forward.14} parent=5 // pred_check_branch
      %143 = sbr.rel (%p141) target = $region20
    $region19: #{generator_forward.14} parent=5 // pred_region
      // Predicated region
      $region21: #{generator_forward.14} parent=19 // pred_check
        %p144 = pneg %p43
      $region22: #{generator_forward.14} parent=19 // pred_check_branch
        %146 = sbr.rel (%p144) target = $region24
      $region23: #{generator_forward.14} parent=19 // pred_region
        %s147 = smul.u32 2, %s17
        %p148 = scmp.lt.s32.totalorder %s16, 1
        %s149 = scalar_select %p148, %s16, 1
        %p150 = scmp.lt.s32.totalorder %s147, 1
        %s151 = scalar_select %p150, %s147, 1
        %s152 = smul.addr %s151, 3
        %s153 = smul.addr %s149, 6
        %s154 = sadd.s32 %s152, %s153
        %s155 = smul.addr %s154, 4
        %s156 = scalar_lea.vmem %s0, %s155
        %s157 = smul.u32 2, %s17
      $region24: #{generator_forward.14} parent=19 // pred_fallthru
        _
      // Predicated region
      $region25: #{generator_forward.14} parent=19 // pred_check
        %p158 = pneg %p90
      $region26: #{generator_forward.14} parent=19 // pred_check_branch
        %160 = sbr.rel (%p158) target = $region28
      $region27: #{generator_forward.14} parent=19 // pred_region
        %p161 = scmp.lt.s32.totalorder %s16, 1
        %s162 = scalar_select %p161, %s16, 1
        %s163 = smul.addr %s162, 2
        %s164 = smul.addr %s163, 4
        %s165 = scalar_lea.vmem %s2, %s164
      $region28: #{generator_forward.14} parent=19 // pred_fallthru
        _
    $region20: #{generator_forward.14} parent=5 // pred_fallthru
      _
    %p166 = scmp.le.s32.totalorder 1, %s9
    %p167 = scmp.lt.s32.totalorder %s9, 3
    %p168 = pnand %p166, %p167
    %p169 = pneg %p168
    // Predicated region
    $region29: #{generator_forward.14} parent=5 // pred_check
      _
    $region30: #{generator_forward.14} parent=5 // pred_check_branch
      %171 = sbr.rel (%p168) target = $region32
    $region31: #{generator_forward.14} parent=5 // pred_region
      %s172 = ssub.s32 %s9, 1
      %s173 = smul.u32 2, %s19
      %p174 = scmp.lt.s32.totalorder %s18, 1
      %s175 = scalar_select %p174, %s18, 1
      %p176 = scmp.lt.s32.totalorder %s173, 1
      %s177 = scalar_select %p176, %s173, 1
      %s178 = smul.addr %s177, 3
      %s179 = smul.addr %s175, 6
      %s180 = sadd.s32 %s178, %s179
      %s181 = smul.addr %s180, 4
      %s182 = scalar_lea.vmem %s0, %s181
      %p183 = pneg %p49
      %p184 = pneg %p46
      %p185 = pneg %p70
      %p186 = pneg %p67
      %p187 = scmp.lt.s32.totalorder %s18, 1
      %s188 = scalar_select %p187, %s18, 1
      %s189 = smul.addr %s188, 2
      %s190 = smul.addr %s189, 4
      %s191 = scalar_lea.vmem %s2, %s190
      %p192 = pneg %p96
      %p193 = pneg %p93
      %p194 = pneg %p122
      %p195 = pneg %p119
      %p196 = scmp.lt.s32.totalorder %s18, 1
      %s197 = scalar_select %p196, %s18, 1
      %s198 = smul.addr %s197, 2
      %s199 = smul.addr %s198, 4
      %s200 = scalar_lea.vmem %s3, %s199
      %s201 = smul.u32 2, %s19
      %p202 = scmp.lt.s32.totalorder %s18, 1
      %s203 = scalar_select %p202, %s18, 1
      %p204 = scmp.lt.s32.totalorder %s201, 1
      %s205 = scalar_select %p204, %s201, 1
      %s206 = smul.addr %s205, 3
      %s207 = smul.addr %s203, 6
      %s208 = sadd.s32 %s206, %s207
      %s209 = smul.addr %s208, 4
      %s210 = scalar_lea.vmem %s0, %s209
      %s211 = smul.u32 2, %s19
      %p212 = scmp.lt.s32.totalorder %s18, 1
      %s213 = scalar_select %p212, %s18, 1
      %s214 = smul.addr %s213, 2
      %s215 = smul.addr %s214, 4
      %s216 = scalar_lea.vmem %s2, %s215
      %p217 = scmp.lt.s32.totalorder %s18, 1
      %s218 = scalar_select %p217, %s18, 1
      %s219 = smul.addr %s218, 2
      %s220 = smul.addr %s219, 4
      %s221 = scalar_lea.vmem %s3, %s220
      %v223 = vld [vmem:[%s210] sm:$0xff]
      %v224 = vld [vmem:[%s210 + $0x8] sm:$0xf]
      %v225 = vld [vmem:[%s210 + $0xc] sm:$0xff]
      %v226 = vld [vmem:[%s210 + $0x14] sm:$0xf]
      %v227 = vld [vmem:[%s1] sm:$0xf]
      %v228 = vld [vmem:[%s1 + $0x4] sm:$0xf]
      %v229 = vld [vmem:[%s1 + $0x8] sm:$0xf]
      %v230 = vld [vmem:[%s1 + $0xc] sm:$0xf]
      %v231 = vld [vmem:[%s1 + $0x10] sm:$0xf]
      %v232 = vld [vmem:[%s1 + $0x14] sm:$0xf]
      %v233 = vld [vmem:[%s1 + $0x18] sm:$0xf]
      %v234 = vld [vmem:[%s1 + $0x1c] sm:$0xf]
      %v235 = vld [vmem:[%s1 + $0x20] sm:$0xf]
      %v236 = vld [vmem:[%s1 + $0x24] sm:$0xf]
      %v237 = vld [vmem:[%s1 + $0x28] sm:$0xf]
      %v238 = vld [vmem:[%s1 + $0x2c] sm:$0xf]
      %v239 = vld [vmem:[%s1 + $0x30] sm:$0xf]
      %v240 = vld [vmem:[%s1 + $0x34] sm:$0xf]
      %v241 = vld [vmem:[%s1 + $0x38] sm:$0xf]
      %v242 = vld [vmem:[%s1 + $0x3c] sm:$0xf]
      %v243 = vld [vmem:[%s1 + $0x40] sm:$0xf]
      %v244 = vld [vmem:[%s1 + $0x44] sm:$0xf]
      %v245 = vld [vmem:[%s1 + $0x48] sm:$0xf]
      %v246 = vld [vmem:[%s1 + $0x4c] sm:$0xf]
      %v247 = vld [vmem:[%s1 + $0x50] sm:$0xf]
      %v248 = vld [vmem:[%s1 + $0x54] sm:$0xf]
      %v249 = vld [vmem:[%s1 + $0x58] sm:$0xf]
      %v250 = vld [vmem:[%s1 + $0x5c] sm:$0xf]
      %v251 = vld [vmem:[%s1 + $0x60] sm:$0xf]
      %v252 = vld [vmem:[%s1 + $0x64] sm:$0xf]
      %v253 = vld [vmem:[%s1 + $0x68] sm:$0xf]
      %v254 = vld [vmem:[%s1 + $0x6c] sm:$0xf]
      %v255 = vld [vmem:[%s1 + $0x70] sm:$0xf]
      %v256 = vld [vmem:[%s1 + $0x74] sm:$0xf]
      %v257 = vld [vmem:[%s1 + $0x78] sm:$0xf]
      %v258 = vld [vmem:[%s1 + $0x7c] sm:$0xf]
      %v259 = vld [vmem:[%s1 + $0x80] sm:$0xf]
      %v260 = vld [vmem:[%s1 + $0x84] sm:$0xf]
      %v261 = vld [vmem:[%s1 + $0x88] sm:$0xf]
      %v262 = vld [vmem:[%s1 + $0x8c] sm:$0xf]
      %v263 = vld [vmem:[%s1 + $0x90] sm:$0xf]
      %v264 = vld [vmem:[%s1 + $0x94] sm:$0xf]
      %v265 = vld [vmem:[%s1 + $0x98] sm:$0xf]
      %v266 = vld [vmem:[%s1 + $0x9c] sm:$0xf]
      %v267 = vld [vmem:[%s1 + $0xa0] sm:$0xf]
      %v268 = vld [vmem:[%s1 + $0xa4] sm:$0xf]
      %v269 = vld [vmem:[%s1 + $0xa8] sm:$0xf]
      %v270 = vld [vmem:[%s1 + $0xac] sm:$0xf]
      %v271 = vld [vmem:[%s1 + $0xb0] sm:$0xf]
      %v272 = vld [vmem:[%s1 + $0xb4] sm:$0xf]
      %v273 = vld [vmem:[%s1 + $0xb8] sm:$0xf]
      %v274 = vld [vmem:[%s1 + $0xbc] sm:$0xf]
      %v279 = vunpack.c.l.b16 %v223
      %v280 = vunpack.c.h.b16 %v223
      %v281 = vunpack.c.l.b16 %v224
      %v282 = vunpack.c.l.b16 %v225
      %v283 = vunpack.c.h.b16 %v225
      %v284 = vunpack.c.l.b16 %v226
      %v285 = vpack.c.b16 %v282, %v279
      %v286 = vpack.c.b16 %v283, %v280
      %v287 = vpack.c.b16 %v284, %v281
      %v339 = vunpack.c.l.b16 %v227
      %v340 = vunpack.c.l.b16 %v228
      %v341 = vunpack.c.l.b16 %v229
      %v342 = vunpack.c.l.b16 %v230
      %v343 = vunpack.c.l.b16 %v231
      %v344 = vunpack.c.l.b16 %v232
      %v345 = vunpack.c.l.b16 %v233
      %v346 = vunpack.c.l.b16 %v234
      %v347 = vunpack.c.l.b16 %v235
      %v348 = vunpack.c.l.b16 %v236
      %v349 = vunpack.c.l.b16 %v237
      %v350 = vunpack.c.l.b16 %v238
      %v351 = vunpack.c.l.b16 %v239
      %v352 = vunpack.c.l.b16 %v240
      %v353 = vunpack.c.l.b16 %v241
      %v354 = vunpack.c.l.b16 %v242
      %v355 = vunpack.c.l.b16 %v243
      %v356 = vunpack.c.l.b16 %v244
      %v357 = vunpack.c.l.b16 %v245
      %v358 = vunpack.c.l.b16 %v246
      %v359 = vunpack.c.l.b16 %v247
      %v360 = vunpack.c.l.b16 %v248
      %v361 = vunpack.c.l.b16 %v249
      %v362 = vunpack.c.l.b16 %v250
      %v363 = vunpack.c.l.b16 %v251
      %v364 = vunpack.c.l.b16 %v252
      %v365 = vunpack.c.l.b16 %v253
      %v366 = vunpack.c.l.b16 %v254
      %v367 = vunpack.c.l.b16 %v255
      %v368 = vunpack.c.l.b16 %v256
      %v369 = vunpack.c.l.b16 %v257
      %v370 = vunpack.c.l.b16 %v258
      %v371 = vunpack.c.l.b16 %v259
      %v372 = vunpack.c.l.b16 %v260
      %v373 = vunpack.c.l.b16 %v261
      %v374 = vunpack.c.l.b16 %v262
      %v375 = vunpack.c.l.b16 %v263
      %v376 = vunpack.c.l.b16 %v264
      %v377 = vunpack.c.l.b16 %v265
      %v378 = vunpack.c.l.b16 %v266
      %v379 = vunpack.c.l.b16 %v267
      %v380 = vunpack.c.l.b16 %v268
      %v381 = vunpack.c.l.b16 %v269
      %v382 = vunpack.c.l.b16 %v270
      %v383 = vunpack.c.l.b16 %v271
      %v384 = vunpack.c.l.b16 %v272
      %v385 = vunpack.c.l.b16 %v273
      %v386 = vunpack.c.l.b16 %v274
      %v387 = vpack.c.b16 %v340, %v339
      %v388 = vpack.c.b16 %v342, %v341
      %v389 = vpack.c.b16 %v344, %v343
      %v390 = vpack.c.b16 %v346, %v345
      %v391 = vpack.c.b16 %v348, %v347
      %v392 = vpack.c.b16 %v350, %v349
      %v393 = vpack.c.b16 %v352, %v351
      %v394 = vpack.c.b16 %v354, %v353
      %v395 = vpack.c.b16 %v356, %v355
      %v396 = vpack.c.b16 %v358, %v357
      %v397 = vpack.c.b16 %v360, %v359
      %v398 = vpack.c.b16 %v362, %v361
      %v399 = vpack.c.b16 %v364, %v363
      %v400 = vpack.c.b16 %v366, %v365
      %v401 = vpack.c.b16 %v368, %v367
      %v402 = vpack.c.b16 %v370, %v369
      %v403 = vpack.c.b16 %v372, %v371
      %v404 = vpack.c.b16 %v374, %v373
      %v405 = vpack.c.b16 %v376, %v375
      %v406 = vpack.c.b16 %v378, %v377
      %v407 = vpack.c.b16 %v380, %v379
      %v408 = vpack.c.b16 %v382, %v381
      %v409 = vpack.c.b16 %v384, %v383
      %v410 = vpack.c.b16 %v386, %v385
      %435 = vmatprep.subr.bf16.mxu0 0
      %436 = vmatpush1.bf16.msra.mxu0 %v387
      %437 = vmatprep.subr.bf16.mxu0 0
      %438 = vmatpush1.bf16.msra.mxu0 %v388
      %439 = vmatprep.subr.bf16.mxu0 0
      %440 = vmatpush1.bf16.msra.mxu0 %v389
      %441 = vmatprep.subr.bf16.mxu0 0
      %442 = vmatpush1.bf16.msra.mxu0 %v390
      %443 = vmatprep.subr.bf16.mxu0 0
      %444 = vmatpush1.bf16.msra.mxu0 %v391
      %445 = vmatprep.subr.bf16.mxu0 0
      %446 = vmatpush1.bf16.msra.mxu0 %v392
      %447 = vmatprep.subr.bf16.mxu0 0
      %448 = vmatpush1.bf16.msra.mxu0 %v393
      %449 = vmatprep.subr.bf16.mxu0 0
      %450 = vmatpush1.bf16.msra.mxu0 %v394
      %451 = vmatprep.subr.bf16.mxu0 0
      %452 = vmatpush1.bf16.msra.mxu0 %v395
      %453 = vmatprep.subr.bf16.mxu0 0
      %454 = vmatpush1.bf16.msra.mxu0 %v396
      %455 = vmatprep.subr.bf16.mxu0 0
      %456 = vmatpush1.bf16.msra.mxu0 %v397
      %457 = vmatprep.subr.bf16.mxu0 0
      %458 = vmatpush1.bf16.msra.mxu0 %v398
      %459 = vmatprep.subr.bf16.mxu0 0
      %460 = vmatpush1.bf16.msra.mxu0 %v399
      %461 = vmatprep.subr.bf16.mxu0 0
      %462 = vmatpush1.bf16.msra.mxu0 %v400
      %463 = vmatprep.subr.bf16.mxu0 0
      %464 = vmatpush1.bf16.msra.mxu0 %v401
      %465 = vmatprep.subr.bf16.mxu0 0
      %466 = vmatpush1.bf16.msra.mxu0 %v402
      %467 = vmatprep.mubr.bf16.mxu0 %v286
      %468 = vmatmul.mubr.bf16.gmra.mrb[0].mxu0 %v285
      %v469 = vpop.f32.mrb[0].mxu0
      %v470 = vadd.f32 0.0, %v469
      %v471 = vpop.f32.mrb[0].mxu0
      %v472 = vpop.f32.mrb[0].mxu0
      %v473 = vadd.f32 0.0, %v472
      %v474 = vpop.f32.mrb[0].mxu0
      %475 = vdwg.mxu0
      %476 = vmatprep.subr.bf16.mxu0 0
      %477 = vmatpush1.bf16.msra.mxu0 %v403
      %478 = vmatprep.subr.bf16.mxu0 0
      %479 = vmatpush1.bf16.msra.mxu0 %v404
      %480 = vmatprep.subr.bf16.mxu0 0
      %481 = vmatpush1.bf16.msra.mxu0 %v405
      %482 = vmatprep.subr.bf16.mxu0 0
      %483 = vmatpush1.bf16.msra.mxu0 %v406
      %484 = vmatprep.subr.bf16.mxu0 0
      %485 = vmatpush1.bf16.msra.mxu0 %v407
      %486 = vmatprep.subr.bf16.mxu0 0
      %487 = vmatpush1.bf16.msra.mxu0 %v408
      %488 = vmatprep.subr.bf16.mxu0 0
      %489 = vmatpush1.bf16.msra.mxu0 %v409
      %490 = vmatprep.subr.bf16.mxu0 0
      %491 = vmatpush1.bf16.msra.mxu0 %v410
      %492 = vmatprep.subr.bf16.mxu0 0
      %493 = vmatpush1.bf16.msra.mxu0 0
      %494 = vmatprep.subr.bf16.mxu0 0
      %495 = vmatpush1.bf16.msra.mxu0 0
      %496 = vmatprep.subr.bf16.mxu0 0
      %497 = vmatpush1.bf16.msra.mxu0 0
      %498 = vmatprep.subr.bf16.mxu0 0
      %499 = vmatpush1.bf16.msra.mxu0 0
      %500 = vmatprep.subr.bf16.mxu0 0
      %501 = vmatpush1.bf16.msra.mxu0 0
      %502 = vmatprep.subr.bf16.mxu0 0
      %503 = vmatpush1.bf16.msra.mxu0 0
      %504 = vmatprep.subr.bf16.mxu0 0
      %505 = vmatpush1.bf16.msra.mxu0 0
      %506 = vmatprep.subr.bf16.mxu0 0
      %507 = vmatpush1.bf16.msra.mxu0 0
      %508 = vmatprep.mubr.bf16.mxu0 0
      %509 = vmatmul.mubr.bf16.gmra.mrb[0].mxu0 %v287
      %v510 = vpop.f32.mrb[0].mxu0
      %v511 = vadd.f32 %v470, %v510
      %v512 = vpop.f32.mrb[0].mxu0
      %v513 = vpop.f32.mrb[0].mxu0
      %v514 = vadd.f32 %v473, %v513
      %v515 = vpop.f32.mrb[0].mxu0
      %516 = vdwg.mxu0
      %s517 = smul.u32 %s19, 16
      %v518 = vpack.c.bf16 %v514, %v511
      %v520 = vunpack.c.l.b16 %v518
      %v521 = vunpack.c.h.b16 %v518
      %v522 = vpack.c.b16 %v520, %v520
      %v523 = vpack.c.b16 %v521, %v521
      %s526 = sshra.s32 %s517, 3
      %s527 = sand.u32 %s517, 7
      %s528 = smul.addr %s526, 4
      %s529 = scalar_lea.vmem %s221, %s528
      %530 = vst [vmem:[%s529] sm:$0xf] %v522
      %531 = vst [vmem:[%s529 + $0x4] sm:$0xf] %v523
      %p532 = scmp.eq.s32.totalorder %s19, 0
      // Predicated region
      $region33: #{generator_forward.14} parent=31 // pred_check
        %p533 = pneg %p532
      $region34: #{generator_forward.14} parent=31 // pred_check_branch
        %535 = sbr.rel (%p533) target = $region36
      $region35: #{generator_forward.14} parent=31 // pred_region
        %536 = vst [vmem:[#allocation2] sm:$0x1] 0.0
        %537 = vst [vmem:[#allocation3] sm:$0x1] 0.0
      $region36: #{generator_forward.14} parent=31 // pred_fallthru
        _
      %v538 = vld [vmem:[#allocation2] sm:$0x1]
      %v539 = vadd.f32 %v511, %v514
      %v540 = vrot.slane %v539, 4
      %v541 = vadd.f32 %v539, %v540
      %v542 = vrot.slane %v541, 2
      %v543 = vadd.f32 %v541, %v542
      %v544 = vrot.slane %v543, 1
      %v545 = vadd.f32 %v543, %v544
      %v546 = vadd.f32 %v538, %v545
      %547 = vst [vmem:[#allocation2] sm:$0x1] %v546
      %v548 = vld [vmem:[#allocation3] sm:$0x1]
      %v549 = vmul.f32 %v511, %v511
      %v550 = vmul.f32 %v514, %v514
      %v551 = vadd.f32 %v549, %v550
      %v552 = vrot.slane %v551, 4
      %v553 = vadd.f32 %v551, %v552
      %v554 = vrot.slane %v553, 2
      %v555 = vadd.f32 %v553, %v554
      %v556 = vrot.slane %v555, 1
      %v557 = vadd.f32 %v555, %v556
      %v558 = vadd.f32 %v548, %v557
      %559 = vst [vmem:[#allocation3] sm:$0x1] %v558
      // Predicated region
      $region37: #{generator_forward.14} parent=31 // pred_check
        %p560 = pneg %p532
      $region38: #{generator_forward.14} parent=31 // pred_check_branch
        %562 = sbr.rel (%p560) target = $region40
      $region39: #{generator_forward.14} parent=31 // pred_region
        %v563 = vld [vmem:[#allocation2] sm:$0x1]
        %v564 = vld [vmem:[#allocation3] sm:$0x1]
        %v565 = vmul.f32 %v563, 0.0625
        %v566 = vmul.f32 %v564, 0.0625
        %v567 = vmul.f32 %v565, %v565
        %v568 = vsub.f32 %v566, %v567
        %v569 = vmax.f32 %v568, 0.0
        %v570 = vadd.f32 %v569, 1e-05
        %v571 = vrsqrt.pop %v570
        %v572 = vld [vmem:[%s221] sm:$0xf]
        %v573 = vld [vmem:[%s221 + $0x4] sm:$0xf]
        %v574 = vunpack.c.l.bf16 %v572
        %v575 = vunpack.c.l.bf16 %v573
        %v577 = vlaneseq
        %v578 = vshrl.u32 %v577, 7
        %v579 = vsub.s32 0, %v578
        %v580 = vrot.slane %v565, %v579
        %v582 = vsub.f32 %v574, %v580
        %v583 = vsub.f32 %v575, %v580
        %v585 = vlaneseq
        %v586 = vshrl.u32 %v585, 7
        %v587 = vsub.s32 0, %v586
        %v588 = vrot.slane %v571, %v587
        %v590 = vmul.f32 %v582, %v588
        %v591 = vmul.f32 %v583, %v588
        %v592 = vld [vmem:[%s216] sm:$0xf]
        %v593 = vld [vmem:[%s216 + $0x4] sm:$0xf]
        %v594 = vunpack.c.l.bf16 %v592
        %v595 = vunpack.c.l.bf16 %v593
        %v596 = vadd.f32 %v590, %v594
        %v597 = vadd.f32 %v591, %v595
        %v598 = vpack.c.bf16 %v597, %v596
        %v600 = vunpack.c.l.b16 %v598
        %v601 = vunpack.c.h.b16 %v598
        %v602 = vpack.c.b16 %v600, %v600
        %v603 = vpack.c.b16 %v601, %v601
        %606 = vst [vmem:[%s221] sm:$0xf] %v602
        %607 = vst [vmem:[%s221 + $0x4] sm:$0xf] %v603
      $region40: #{generator_forward.14} parent=31 // pred_fallthru
        _
      %p608 = scmp.lt.s32.totalorder %s18, 1
      %s609 = scalar_select %p608, %s18, 1
      %s610 = smul.addr %s609, 2
      %s611 = smul.addr %s610, 4
      %s612 = scalar_lea.vmem %s3, %s611
      // Predicated region
      $region41: #{generator_forward.14} parent=31 // pred_check
        %p613 = pneg %p119
      $region42: #{generator_forward.14} parent=31 // pred_check_branch
        %615 = sbr.rel (%p613) target = $region44
      $region43: #{generator_forward.14} parent=31 // pred_region
        _
      $region44: #{generator_forward.14} parent=31 // pred_fallthru
        _
    $region32: #{generator_forward.14} parent=5 // pred_fallthru
      _
    %p616 = scmp.le.s32.totalorder 2, %s9
    // Predicated region
    $region45: #{generator_forward.14} parent=5 // pred_check
      %p617 = pneg %p616
    $region46: #{generator_forward.14} parent=5 // pred_check_branch
      %619 = sbr.rel (%p617) target = $region48
    $region47: #{generator_forward.14} parent=5 // pred_region
      %s620 = ssub.s32 %s9, 2
      // Predicated region
      $region49: #{generator_forward.14} parent=47 // pred_check
        %p621 = pneg %p125
      $region50: #{generator_forward.14} parent=47 // pred_check_branch
        %623 = sbr.rel (%p621) target = $region52
      $region51: #{generator_forward.14} parent=47 // pred_region
        %p624 = scmp.lt.s32.totalorder %s20, 1
        %s625 = scalar_select %p624, %s20, 1
        %s626 = smul.addr %s625, 2
        %s627 = smul.addr %s626, 4
        %s628 = scalar_lea.vmem %s3, %s627
      $region52: #{generator_forward.14} parent=47 // pred_fallthru
        _
    $region48: #{generator_forward.14} parent=5 // pred_fallthru
      _
  $region6: #{generator_forward.14} parent=0 // loop_footer
    %s13 = sadd.s32 1, %s9
  $region7: #{generator_forward.14} parent=0 // loop_footer_branch
    %8 = sbr.rel target = $region3
  $region8: #{generator_forward.14} parent=0 // loop_exit
    _

// kernel: generator_forward.13
$region0: #{generator_forward.13}
  #allocation0 [shape = 'u32[]', space=smem, size = 0x4, offset = 0x4, fixed_abs, tag = 'smem constant byte address 0x4 - core index']
  #allocation1 [shape = 'u32[144,128]{1,0:T(1,128)}', space=vmem, size = 0x12000, scoped, tag = 'internal scratch']
  #allocation2 [shape = 'f32[1,128]{1,0:T(1,128)}', space=vmem, size = 0x200, scoped, tag = 'scratch operand']
  #allocation3 [shape = 'f32[1,128]{1,0:T(1,128)}', space=vmem, size = 0x200, scoped, tag = 'scratch operand']
  %s0 = inlined_call_operand.vmem [shape: bf16[2,16,384], index: 0, kind: input, shape index: {}]
  %s1 = inlined_call_operand.vmem [shape: bf16[384,128], index: 1, kind: input, shape index: {}]
  %s2 = inlined_call_operand.vmem [shape: bf16[2,16,128], index: 2, kind: output, shape index: {}]
  %s3 = sld [smem:[#allocation0]]
  $region49: #{generator_forward.13} parent=0
    _
  %s5 = ssub.s32 1, %s3
  %s6 = scalar_select 0, %s5, %s3
  loop: start=0, step=1, limit=4
  $region2: #{generator_forward.13} parent=0 // loop_pre_header
    _
  $region3: #{generator_forward.13} parent=0 // loop_header
    %s8 = sphi 0, %s12
    %p9 = scmp.ge.s32.totalorder %s8, 4
    %s15 = sphi 0, %s27
    %s16 = sphi 0, %s23
    %s17 = sphi 0, %s15
    %s18 = sphi 0, %s16
    %s19 = sphi 0, %s17
    %s20 = sphi 0, %s18
    %s32 = sphi 0, %s34
    %s35 = sphi 0, %s32
    %s36 = sphi 0, %s35
    %s52 = sphi 0, %s36
    %s56 = sphi 0, %s56
    %s58 = sphi 0, %s56
    %s59 = sphi 0, %s58
    %s73 = sphi 0, %s59
    %s79 = sphi 0, %s81
    %s82 = sphi 0, %s79
    %s83 = sphi 0, %s82
    %s99 = sphi 0, %s83
  $region4: #{generator_forward.13} parent=0 // loop_header_branch
    %11 = sbr.rel (%p9) target = $region8
  $region5: #{generator_forward.13} parent=0 // loop_body
    %s13 = ssub.s32 %s8, 1
    %s14 = ssub.s32 %s8, 2
    %s21 = sadd.s32 1, %s16
    %p22 = scmp.ge.s32.totalorder %s21, 1
    %s23 = scalar_select %p22, 0, %s21
    %s24 = sadd.s32 1, %s15
    %s25 = scalar_select %p22, %s24, %s15
    %p26 = scmp.ge.s32.totalorder %s25, 2
    %s27 = scalar_select %p26, 0, %s25
    %s28 = ssub.s32 %s15, %s27
    %s29 = ssub.s32 %s16, %s23
    %s30 = sor.u32 %s28, %s29
    %p31 = scmp.eq.s32.totalorder %s30, 0
    %s33 = sadd.s32 %s32, 1
    %s34 = scalar_select %p31, %s32, %s33
    %p37 = pneg %p31
    %p38 = scmp.eq.s32.totalorder %s8, 1
    %p39 = por %p37, %p38
    %p40 = scmp.ne.s32.totalorder %s32, %s35
    %p41 = scmp.eq.s32.totalorder %s8, 0
    %p42 = por %p40, %p41
    %p43 = scmp.ne.s32.totalorder %s32, %s35
    %p44 = scmp.eq.s32.totalorder %s13, 1
    %p45 = por %p43, %p44
    %p46 = scmp.ne.s32.totalorder %s35, %s36
    %p47 = scmp.eq.s32.totalorder %s13, 0
    %p48 = por %p46, %p47
    %p49 = scmp.ne.s32.totalorder %s35, %s36
    %p50 = scmp.eq.s32.totalorder %s14, 1
    %p51 = por %p49, %p50
    %p53 = scmp.ne.s32.totalorder %s36, %s52
    %p54 = scmp.eq.s32.totalorder %s14, 0
    %p55 = por %p53, %p54
    %s57 = sadd.s32 %s56, 1
    %p60 = scmp.eq.s32.totalorder %s8, 1
    %p61 = scmp.ne.s32.totalorder %s56, %s58
    %p62 = scmp.eq.s32.totalorder %s8, 0
    %p63 = por %p61, %p62
    %p64 = scmp.ne.s32.totalorder %s56, %s58
    %p65 = scmp.eq.s32.totalorder %s13, 1
    %p66 = por %p64, %p65
    %p67 = scmp.ne.s32.totalorder %s58, %s59
    %p68 = scmp.eq.s32.totalorder %s13, 0
    %p69 = por %p67, %p68
    %p70 = scmp.ne.s32.totalorder %s58, %s59
    %p71 = scmp.eq.s32.totalorder %s14, 1
    %p72 = por %p70, %p71
    %p74 = scmp.ne.s32.totalorder %s59, %s73
    %p75 = scmp.eq.s32.totalorder %s14, 0
    %p76 = por %p74, %p75
    %s77 = ssub.s32 %s15, %s27
    %p78 = scmp.eq.s32.totalorder %s77, 0
    %s80 = sadd.s32 %s79, 1
    %s81 = scalar_select %p78, %s79, %s80
    %p84 = pneg %p78
    %p85 = scmp.eq.s32.totalorder %s8, 1
    %p86 = por %p84, %p85
    %p87 = scmp.ne.s32.totalorder %s79, %s82
    %p88 = scmp.eq.s32.totalorder %s8, 0
    %p89 = por %p87, %p88
    %p90 = scmp.ne.s32.totalorder %s79, %s82
    %p91 = scmp.eq.s32.totalorder %s13, 1
    %p92 = por %p90, %p91
    %p93 = scmp.ne.s32.totalorder %s82, %s83
    %p94 = scmp.eq.s32.totalorder %s13, 0
    %p95 = por %p93, %p94
    %p96 = scmp.ne.s32.totalorder %s82, %s83
    %p97 = scmp.eq.s32.totalorder %s14, 1
    %p98 = por %p96, %p97
    %p100 = scmp.ne.s32.totalorder %s83, %s99
    %p101 = scmp.eq.s32.totalorder %s14, 0
    %p102 = por %p100, %p101
    %p103 = scmp.le.s32.totalorder 1, %s8
    %p104 = scmp.lt.s32.totalorder %s8, 3
    %p105 = pnand %p103, %p104
    %p106 = pneg %p105
    // Predicated region
    $region9: #{generator_forward.13} parent=5 // pred_check
      _
    $region10: #{generator_forward.13} parent=5 // pred_check_branch
      %108 = sbr.rel (%p105) target = $region12
    $region11: #{generator_forward.13} parent=5 // pred_region
      %s109 = ssub.s32 %s8, 1
      // Predicated region
      $region13: #{generator_forward.13} parent=11 // pred_check
        %p110 = pneg %p69
      $region14: #{generator_forward.13} parent=11 // pred_check_branch
        %112 = sbr.rel (%p110) target = $region16
      $region15: #{generator_forward.13} parent=11 // pred_region
        _
      $region16: #{generator_forward.13} parent=11 // pred_fallthru
        _
    $region12: #{generator_forward.13} parent=5 // pred_fallthru
      _
    %p113 = scmp.lt.s32.totalorder %s8, 2
    // Predicated region
    $region17: #{generator_forward.13} parent=5 // pred_check
      %p114 = pneg %p113
    $region18: #{generator_forward.13} parent=5 // pred_check_branch
      %116 = sbr.rel (%p114) target = $region20
    $region19: #{generator_forward.13} parent=5 // pred_region
      // Predicated region
      $region21: #{generator_forward.13} parent=19 // pred_check
        %p117 = pneg %p42
      $region22: #{generator_forward.13} parent=19 // pred_check_branch
        %119 = sbr.rel (%p117) target = $region24
      $region23: #{generator_forward.13} parent=19 // pred_region
        %s120 = smul.u32 2, %s16
        %p121 = scmp.lt.s32.totalorder %s15, 1
        %s122 = scalar_select %p121, %s15, 1
        %p123 = scmp.lt.s32.totalorder %s120, 1
        %s124 = scalar_select %p123, %s120, 1
        %s125 = smul.addr %s124, 3
        %s126 = smul.addr %s122, 6
        %s127 = sadd.s32 %s125, %s126
        %s128 = smul.addr %s127, 4
        %s129 = scalar_lea.vmem %s0, %s128
        %s130 = smul.u32 2, %s16
      $region24: #{generator_forward.13} parent=19 // pred_fallthru
        _
    $region20: #{generator_forward.13} parent=5 // pred_fallthru
      _
    %p131 = scmp.le.s32.totalorder 1, %s8
    %p132 = scmp.lt.s32.totalorder %s8, 3
    %p133 = pnand %p131, %p132
    %p134 = pneg %p133
    // Predicated region
    $region25: #{generator_forward.13} parent=5 // pred_check
      _
    $region26: #{generator_forward.13} parent=5 // pred_check_branch
      %136 = sbr.rel (%p133) target = $region28
    $region27: #{generator_forward.13} parent=5 // pred_region
      %s137 = ssub.s32 %s8, 1
      %s138 = smul.u32 2, %s18
      %p139 = scmp.lt.s32.totalorder %s17, 1
      %s140 = scalar_select %p139, %s17, 1
      %p141 = scmp.lt.s32.totalorder %s138, 1
      %s142 = scalar_select %p141, %s138, 1
      %s143 = smul.addr %s142, 3
      %s144 = smul.addr %s140, 6
      %s145 = sadd.s32 %s143, %s144
      %s146 = smul.addr %s145, 4
      %s147 = scalar_lea.vmem %s0, %s146
      %p148 = pneg %p48
      %p149 = pneg %p45
      %p150 = pneg %p69
      %p151 = pneg %p66
      %p152 = pneg %p95
      %p153 = pneg %p92
      %p154 = scmp.lt.s32.totalorder %s17, 1
      %s155 = scalar_select %p154, %s17, 1
      %s156 = smul.addr %s155, 2
      %s157 = smul.addr %s156, 4
      %s158 = scalar_lea.vmem %s2, %s157
      %s159 = smul.u32 2, %s18
      %p160 = scmp.lt.s32.totalorder %s17, 1
      %s161 = scalar_select %p160, %s17, 1
      %p162 = scmp.lt.s32.totalorder %s159, 1
      %s163 = scalar_select %p162, %s159, 1
      %s164 = smul.addr %s163, 3
      %s165 = smul.addr %s161, 6
      %s166 = sadd.s32 %s164, %s165
      %s167 = smul.addr %s166, 4
      %s168 = scalar_lea.vmem %s0, %s167
      %s169 = smul.u32 2, %s18
      %p170 = scmp.lt.s32.totalorder %s17, 1
      %s171 = scalar_select %p170, %s17, 1
      %s172 = smul.addr %s171, 2
      %s173 = smul.addr %s172, 4
      %s174 = scalar_lea.vmem %s2, %s173
      %v176 = vld [vmem:[%s168] sm:$0xff]
      %v177 = vld [vmem:[%s168 + $0x8] sm:$0xf]
      %v178 = vld [vmem:[%s168 + $0xc] sm:$0xff]
      %v179 = vld [vmem:[%s168 + $0x14] sm:$0xf]
      %v180 = vld [vmem:[%s1] sm:$0xf]
      %v181 = vld [vmem:[%s1 + $0x4] sm:$0xf]
      %v182 = vld [vmem:[%s1 + $0x8] sm:$0xf]
      %v183 = vld [vmem:[%s1 + $0xc] sm:$0xf]
      %v184 = vld [vmem:[%s1 + $0x10] sm:$0xf]
      %v185 = vld [vmem:[%s1 + $0x14] sm:$0xf]
      %v186 = vld [vmem:[%s1 + $0x18] sm:$0xf]
      %v187 = vld [vmem:[%s1 + $0x1c] sm:$0xf]
      %v188 = vld [vmem:[%s1 + $0x20] sm:$0xf]
      %v189 = vld [vmem:[%s1 + $0x24] sm:$0xf]
      %v190 = vld [vmem:[%s1 + $0x28] sm:$0xf]
      %v191 = vld [vmem:[%s1 + $0x2c] sm:$0xf]
      %v192 = vld [vmem:[%s1 + $0x30] sm:$0xf]
      %v193 = vld [vmem:[%s1 + $0x34] sm:$0xf]
      %v194 = vld [vmem:[%s1 + $0x38] sm:$0xf]
      %v195 = vld [vmem:[%s1 + $0x3c] sm:$0xf]
      %v196 = vld [vmem:[%s1 + $0x40] sm:$0xf]
      %v197 = vld [vmem:[%s1 + $0x44] sm:$0xf]
      %v198 = vld [vmem:[%s1 + $0x48] sm:$0xf]
      %v199 = vld [vmem:[%s1 + $0x4c] sm:$0xf]
      %v200 = vld [vmem:[%s1 + $0x50] sm:$0xf]
      %v201 = vld [vmem:[%s1 + $0x54] sm:$0xf]
      %v202 = vld [vmem:[%s1 + $0x58] sm:$0xf]
      %v203 = vld [vmem:[%s1 + $0x5c] sm:$0xf]
      %v204 = vld [vmem:[%s1 + $0x60] sm:$0xf]
      %v205 = vld [vmem:[%s1 + $0x64] sm:$0xf]
      %v206 = vld [vmem:[%s1 + $0x68] sm:$0xf]
      %v207 = vld [vmem:[%s1 + $0x6c] sm:$0xf]
      %v208 = vld [vmem:[%s1 + $0x70] sm:$0xf]
      %v209 = vld [vmem:[%s1 + $0x74] sm:$0xf]
      %v210 = vld [vmem:[%s1 + $0x78] sm:$0xf]
      %v211 = vld [vmem:[%s1 + $0x7c] sm:$0xf]
      %v212 = vld [vmem:[%s1 + $0x80] sm:$0xf]
      %v213 = vld [vmem:[%s1 + $0x84] sm:$0xf]
      %v214 = vld [vmem:[%s1 + $0x88] sm:$0xf]
      %v215 = vld [vmem:[%s1 + $0x8c] sm:$0xf]
      %v216 = vld [vmem:[%s1 + $0x90] sm:$0xf]
      %v217 = vld [vmem:[%s1 + $0x94] sm:$0xf]
      %v218 = vld [vmem:[%s1 + $0x98] sm:$0xf]
      %v219 = vld [vmem:[%s1 + $0x9c] sm:$0xf]
      %v220 = vld [vmem:[%s1 + $0xa0] sm:$0xf]
      %v221 = vld [vmem:[%s1 + $0xa4] sm:$0xf]
      %v222 = vld [vmem:[%s1 + $0xa8] sm:$0xf]
      %v223 = vld [vmem:[%s1 + $0xac] sm:$0xf]
      %v224 = vld [vmem:[%s1 + $0xb0] sm:$0xf]
      %v225 = vld [vmem:[%s1 + $0xb4] sm:$0xf]
      %v226 = vld [vmem:[%s1 + $0xb8] sm:$0xf]
      %v227 = vld [vmem:[%s1 + $0xbc] sm:$0xf]
      %v232 = vunpack.c.l.b16 %v176
      %v233 = vunpack.c.h.b16 %v176
      %v234 = vunpack.c.l.b16 %v177
      %v235 = vunpack.c.l.b16 %v178
      %v236 = vunpack.c.h.b16 %v178
      %v237 = vunpack.c.l.b16 %v179
      %v238 = vpack.c.b16 %v235, %v232
      %v239 = vpack.c.b16 %v236, %v233
      %v240 = vpack.c.b16 %v237, %v234
      %v292 = vunpack.c.l.b16 %v180
      %v293 = vunpack.c.l.b16 %v181
      %v294 = vunpack.c.l.b16 %v182
      %v295 = vunpack.c.l.b16 %v183
      %v296 = vunpack.c.l.b16 %v184
      %v297 = vunpack.c.l.b16 %v185
      %v298 = vunpack.c.l.b16 %v186
      %v299 = vunpack.c.l.b16 %v187
      %v300 = vunpack.c.l.b16 %v188
      %v301 = vunpack.c.l.b16 %v189
      %v302 = vunpack.c.l.b16 %v190
      %v303 = vunpack.c.l.b16 %v191
      %v304 = vunpack.c.l.b16 %v192
      %v305 = vunpack.c.l.b16 %v193
      %v306 = vunpack.c.l.b16 %v194
      %v307 = vunpack.c.l.b16 %v195
      %v308 = vunpack.c.l.b16 %v196
      %v309 = vunpack.c.l.b16 %v197
      %v310 = vunpack.c.l.b16 %v198
      %v311 = vunpack.c.l.b16 %v199
      %v312 = vunpack.c.l.b16 %v200
      %v313 = vunpack.c.l.b16 %v201
      %v314 = vunpack.c.l.b16 %v202
      %v315 = vunpack.c.l.b16 %v203
      %v316 = vunpack.c.l.b16 %v204
      %v317 = vunpack.c.l.b16 %v205
      %v318 = vunpack.c.l.b16 %v206
      %v319 = vunpack.c.l.b16 %v207
      %v320 = vunpack.c.l.b16 %v208
      %v321 = vunpack.c.l.b16 %v209
      %v322 = vunpack.c.l.b16 %v210
      %v323 = vunpack.c.l.b16 %v211
      %v324 = vunpack.c.l.b16 %v212
      %v325 = vunpack.c.l.b16 %v213
      %v326 = vunpack.c.l.b16 %v214
      %v327 = vunpack.c.l.b16 %v215
      %v328 = vunpack.c.l.b16 %v216
      %v329 = vunpack.c.l.b16 %v217
      %v330 = vunpack.c.l.b16 %v218
      %v331 = vunpack.c.l.b16 %v219
      %v332 = vunpack.c.l.b16 %v220
      %v333 = vunpack.c.l.b16 %v221
      %v334 = vunpack.c.l.b16 %v222
      %v335 = vunpack.c.l.b16 %v223
      %v336 = vunpack.c.l.b16 %v224
      %v337 = vunpack.c.l.b16 %v225
      %v338 = vunpack.c.l.b16 %v226
      %v339 = vunpack.c.l.b16 %v227
      %v340 = vpack.c.b16 %v293, %v292
      %v341 = vpack.c.b16 %v295, %v294
      %v342 = vpack.c.b16 %v297, %v296
      %v343 = vpack.c.b16 %v299, %v298
      %v344 = vpack.c.b16 %v301, %v300
      %v345 = vpack.c.b16 %v303, %v302
      %v346 = vpack.c.b16 %v305, %v304
      %v347 = vpack.c.b16 %v307, %v306
      %v348 = vpack.c.b16 %v309, %v308
      %v349 = vpack.c.b16 %v311, %v310
      %v350 = vpack.c.b16 %v313, %v312
      %v351 = vpack.c.b16 %v315, %v314
      %v352 = vpack.c.b16 %v317, %v316
      %v353 = vpack.c.b16 %v319, %v318
      %v354 = vpack.c.b16 %v321, %v320
      %v355 = vpack.c.b16 %v323, %v322
      %v356 = vpack.c.b16 %v325, %v324
      %v357 = vpack.c.b16 %v327, %v326
      %v358 = vpack.c.b16 %v329, %v328
      %v359 = vpack.c.b16 %v331, %v330
      %v360 = vpack.c.b16 %v333, %v332
      %v361 = vpack.c.b16 %v335, %v334
      %v362 = vpack.c.b16 %v337, %v336
      %v363 = vpack.c.b16 %v339, %v338
      %388 = vmatprep.subr.bf16.mxu0 0
      %389 = vmatpush1.bf16.msra.mxu0 %v340
      %390 = vmatprep.subr.bf16.mxu0 0
      %391 = vmatpush1.bf16.msra.mxu0 %v341
      %392 = vmatprep.subr.bf16.mxu0 0
      %393 = vmatpush1.bf16.msra.mxu0 %v342
      %394 = vmatprep.subr.bf16.mxu0 0
      %395 = vmatpush1.bf16.msra.mxu0 %v343
      %396 = vmatprep.subr.bf16.mxu0 0
      %397 = vmatpush1.bf16.msra.mxu0 %v344
      %398 = vmatprep.subr.bf16.mxu0 0
      %399 = vmatpush1.bf16.msra.mxu0 %v345
      %400 = vmatprep.subr.bf16.mxu0 0
      %401 = vmatpush1.bf16.msra.mxu0 %v346
      %402 = vmatprep.subr.bf16.mxu0 0
      %403 = vmatpush1.bf16.msra.mxu0 %v347
      %404 = vmatprep.subr.bf16.mxu0 0
      %405 = vmatpush1.bf16.msra.mxu0 %v348
      %406 = vmatprep.subr.bf16.mxu0 0
      %407 = vmatpush1.bf16.msra.mxu0 %v349
      %408 = vmatprep.subr.bf16.mxu0 0
      %409 = vmatpush1.bf16.msra.mxu0 %v350
      %410 = vmatprep.subr.bf16.mxu0 0
      %411 = vmatpush1.bf16.msra.mxu0 %v351
      %412 = vmatprep.subr.bf16.mxu0 0
      %413 = vmatpush1.bf16.msra.mxu0 %v352
      %414 = vmatprep.subr.bf16.mxu0 0
      %415 = vmatpush1.bf16.msra.mxu0 %v353
      %416 = vmatprep.subr.bf16.mxu0 0
      %417 = vmatpush1.bf16.msra.mxu0 %v354
      %418 = vmatprep.subr.bf16.mxu0 0
      %419 = vmatpush1.bf16.msra.mxu0 %v355
      %420 = vmatprep.mubr.bf16.mxu0 %v239
      %421 = vmatmul.mubr.bf16.gmra.mrb[0].mxu0 %v238
      %v422 = vpop.f32.mrb[0].mxu0
      %v423 = vadd.f32 0.0, %v422
      %v424 = vpop.f32.mrb[0].mxu0
      %v425 = vpop.f32.mrb[0].mxu0
      %v426 = vadd.f32 0.0, %v425
      %v427 = vpop.f32.mrb[0].mxu0
      %428 = vdwg.mxu0
      %429 = vmatprep.subr.bf16.mxu0 0
      %430 = vmatpush1.bf16.msra.mxu0 %v356
      %431 = vmatprep.subr.bf16.mxu0 0
      %432 = vmatpush1.bf16.msra.mxu0 %v357
      %433 = vmatprep.subr.bf16.mxu0 0
      %434 = vmatpush1.bf16.msra.mxu0 %v358
      %435 = vmatprep.subr.bf16.mxu0 0
      %436 = vmatpush1.bf16.msra.mxu0 %v359
      %437 = vmatprep.subr.bf16.mxu0 0
      %438 = vmatpush1.bf16.msra.mxu0 %v360
      %439 = vmatprep.subr.bf16.mxu0 0
      %440 = vmatpush1.bf16.msra.mxu0 %v361
      %441 = vmatprep.subr.bf16.mxu0 0
      %442 = vmatpush1.bf16.msra.mxu0 %v362
      %443 = vmatprep.subr.bf16.mxu0 0
      %444 = vmatpush1.bf16.msra.mxu0 %v363
      %445 = vmatprep.subr.bf16.mxu0 0
      %446 = vmatpush1.bf16.msra.mxu0 0
      %447 = vmatprep.subr.bf16.mxu0 0
      %448 = vmatpush1.bf16.msra.mxu0 0
      %449 = vmatprep.subr.bf16.mxu0 0
      %450 = vmatpush1.bf16.msra.mxu0 0
      %451 = vmatprep.subr.bf16.mxu0 0
      %452 = vmatpush1.bf16.msra.mxu0 0
      %453 = vmatprep.subr.bf16.mxu0 0
      %454 = vmatpush1.bf16.msra.mxu0 0
      %455 = vmatprep.subr.bf16.mxu0 0
      %456 = vmatpush1.bf16.msra.mxu0 0
      %457 = vmatprep.subr.bf16.mxu0 0
      %458 = vmatpush1.bf16.msra.mxu0 0
      %459 = vmatprep.subr.bf16.mxu0 0
      %460 = vmatpush1.bf16.msra.mxu0 0
      %461 = vmatprep.mubr.bf16.mxu0 0
      %462 = vmatmul.mubr.bf16.gmra.mrb[0].mxu0 %v240
      %v463 = vpop.f32.mrb[0].mxu0
      %v464 = vadd.f32 %v423, %v463
      %v465 = vpop.f32.mrb[0].mxu0
      %v466 = vpop.f32.mrb[0].mxu0
      %v467 = vadd.f32 %v426, %v466
      %v468 = vpop.f32.mrb[0].mxu0
      %469 = vdwg.mxu0
      %s470 = smul.u32 %s18, 16
      %v471 = vpack.c.bf16 %v467, %v464
      %v473 = vunpack.c.l.b16 %v471
      %v474 = vunpack.c.h.b16 %v471
      %v475 = vpack.c.b16 %v473, %v473
      %v476 = vpack.c.b16 %v474, %v474
      %s479 = sshra.s32 %s470, 3
      %s480 = sand.u32 %s470, 7
      %s481 = smul.addr %s479, 4
      %s482 = scalar_lea.vmem %s174, %s481
      %483 = vst [vmem:[%s482] sm:$0xf] %v475
      %484 = vst [vmem:[%s482 + $0x4] sm:$0xf] %v476
      %p485 = scmp.eq.s32.totalorder %s18, 0
      // Predicated region
      $region29: #{generator_forward.13} parent=27 // pred_check
        %p486 = pneg %p485
      $region30: #{generator_forward.13} parent=27 // pred_check_branch
        %488 = sbr.rel (%p486) target = $region32
      $region31: #{generator_forward.13} parent=27 // pred_region
        %489 = vst [vmem:[#allocation2] sm:$0x1] 0.0
        %490 = vst [vmem:[#allocation3] sm:$0x1] 0.0
      $region32: #{generator_forward.13} parent=27 // pred_fallthru
        _
      %v491 = vld [vmem:[#allocation2] sm:$0x1]
      %v492 = vadd.f32 %v464, %v467
      %v493 = vrot.slane %v492, 4
      %v494 = vadd.f32 %v492, %v493
      %v495 = vrot.slane %v494, 2
      %v496 = vadd.f32 %v494, %v495
      %v497 = vrot.slane %v496, 1
      %v498 = vadd.f32 %v496, %v497
      %v499 = vadd.f32 %v491, %v498
      %500 = vst [vmem:[#allocation2] sm:$0x1] %v499
      %v501 = vld [vmem:[#allocation3] sm:$0x1]
      %v502 = vmul.f32 %v464, %v464
      %v503 = vmul.f32 %v467, %v467
      %v504 = vadd.f32 %v502, %v503
      %v505 = vrot.slane %v504, 4
      %v506 = vadd.f32 %v504, %v505
      %v507 = vrot.slane %v506, 2
      %v508 = vadd.f32 %v506, %v507
      %v509 = vrot.slane %v508, 1
      %v510 = vadd.f32 %v508, %v509
      %v511 = vadd.f32 %v501, %v510
      %512 = vst [vmem:[#allocation3] sm:$0x1] %v511
      // Predicated region
      $region33: #{generator_forward.13} parent=27 // pred_check
        %p513 = pneg %p485
      $region34: #{generator_forward.13} parent=27 // pred_check_branch
        %515 = sbr.rel (%p513) target = $region36
      $region35: #{generator_forward.13} parent=27 // pred_region
        %v516 = vld [vmem:[#allocation2] sm:$0x1]
        %v517 = vld [vmem:[#allocation3] sm:$0x1]
        %v518 = vmul.f32 %v516, 0.0625
        %v519 = vmul.f32 %v517, 0.0625
        %v520 = vmul.f32 %v518, %v518
        %v521 = vsub.f32 %v519, %v520
        %v522 = vmax.f32 %v521, 0.0
        %v523 = vadd.f32 %v522, 1e-05
        %v524 = vrsqrt.pop %v523
        %v525 = vld [vmem:[%s174] sm:$0xf]
        %v526 = vld [vmem:[%s174 + $0x4] sm:$0xf]
        %v527 = vunpack.c.l.bf16 %v525
        %v528 = vunpack.c.l.bf16 %v526
        %v530 = vlaneseq
        %v531 = vshrl.u32 %v530, 7
        %v532 = vsub.s32 0, %v531
        %v533 = vrot.slane %v518, %v532
        %v535 = vsub.f32 %v527, %v533
        %v536 = vsub.f32 %v528, %v533
        %v538 = vlaneseq
        %v539 = vshrl.u32 %v538, 7
        %v540 = vsub.s32 0, %v539
        %v541 = vrot.slane %v524, %v540
        %v543 = vmul.f32 %v535, %v541
        %v544 = vmul.f32 %v536, %v541
        %v545 = vmax.f32 %v543, 0.0
        %v546 = vmax.f32 %v544, 0.0
        %v547 = vpack.c.bf16 %v546, %v545
        %v549 = vunpack.c.l.b16 %v547
        %v550 = vunpack.c.h.b16 %v547
        %v551 = vpack.c.b16 %v549, %v549
        %v552 = vpack.c.b16 %v550, %v550
        %555 = vst [vmem:[%s174] sm:$0xf] %v551
        %556 = vst [vmem:[%s174 + $0x4] sm:$0xf] %v552
      $region36: #{generator_forward.13} parent=27 // pred_fallthru
        _
      %p557 = scmp.lt.s32.totalorder %s17, 1
      %s558 = scalar_select %p557, %s17, 1
      %s559 = smul.addr %s558, 2
      %s560 = smul.addr %s559, 4
      %s561 = scalar_lea.vmem %s2, %s560
      // Predicated region
      $region37: #{generator_forward.13} parent=27 // pred_check
        %p562 = pneg %p92
      $region38: #{generator_forward.13} parent=27 // pred_check_branch
        %564 = sbr.rel (%p562) target = $region40
      $region39: #{generator_forward.13} parent=27 // pred_region
        _
      $region40: #{generator_forward.13} parent=27 // pred_fallthru
        _
    $region28: #{generator_forward.13} parent=5 // pred_fallthru
      _
    %p565 = scmp.le.s32.totalorder 2, %s8
    // Predicated region
    $region41: #{generator_forward.13} parent=5 // pred_check
      %p566 = pneg %p565
    $region42: #{generator_forward.13} parent=5 // pred_check_branch
      %568 = sbr.rel (%p566) target = $region44
    $region43: #{generator_forward.13} parent=5 // pred_region
      %s569 = ssub.s32 %s8, 2
      // Predicated region
      $region45: #{generator_forward.13} parent=43 // pred_check
        %p570 = pneg %p98
      $region46: #{generator_forward.13} parent=43 // pred_check_branch
        %572 = sbr.rel (%p570) target = $region48
      $region47: #{generator_forward.13} parent=43 // pred_region
        %p573 = scmp.lt.s32.totalorder %s19, 1
        %s574 = scalar_select %p573, %s19, 1
        %s575 = smul.addr %s574, 2
        %s576 = smul.addr %s575, 4
        %s577 = scalar_lea.vmem %s2, %s576
      $region48: #{generator_forward.13} parent=43 // pred_fallthru
        _
    $region44: #{generator_forward.13} parent=5 // pred_fallthru
      _
  $region6: #{generator_forward.13} parent=0 // loop_footer
    %s12 = sadd.s32 1, %s8
  $region7: #{generator_forward.13} parent=0 // loop_footer_branch
    %7 = sbr.rel target = $region3
  $region8: #{generator_forward.13} parent=0 // loop_exit
    _

// kernel: generator_forward.17
$region0: #{generator_forward.17}
  #allocation0 [shape = 'u32[]', space=smem, size = 0x4, offset = 0x4, fixed_abs, tag = 'smem constant byte address 0x4 - core index']
  #allocation1 [shape = 'u32[144,128]{1,0:T(1,128)}', space=vmem, size = 0x12000, scoped, tag = 'internal scratch']
  #allocation2 [shape = 'f32[1,512]{1,0:T(1,128)}', space=vmem, size = 0x800, scoped, tag = 'scratch operand']
  #allocation3 [shape = 'f32[1,512]{1,0:T(1,128)}', space=vmem, size = 0x800, scoped, tag = 'scratch operand']
  %s0 = inlined_call_operand.vmem [shape: bf16[2,16,128], index: 0, kind: input, shape index: {}]
  %s1 = inlined_call_operand.vmem [shape: bf16[128,512], index: 1, kind: input, shape index: {}]
  %s2 = inlined_call_operand.vmem [shape: bf16[2,16,512], index: 2, kind: output, shape index: {}]
  %s3 = sld [smem:[#allocation0]]
  $region49: #{generator_forward.17} parent=0
    _
  %s5 = ssub.s32 1, %s3
  %s6 = scalar_select 0, %s5, %s3
  loop: start=0, step=1, limit=4
  $region2: #{generator_forward.17} parent=0 // loop_pre_header
    _
  $region3: #{generator_forward.17} parent=0 // loop_header
    %s8 = sphi 0, %s12
    %p9 = scmp.ge.s32.totalorder %s8, 4
    %s15 = sphi 0, %s27
    %s16 = sphi 0, %s23
    %s17 = sphi 0, %s15
    %s18 = sphi 0, %s16
    %s19 = sphi 0, %s17
    %s20 = sphi 0, %s18
    %s32 = sphi 0, %s34
    %s35 = sphi 0, %s32
    %s36 = sphi 0, %s35
    %s52 = sphi 0, %s36
    %s56 = sphi 0, %s56
    %s58 = sphi 0, %s56
    %s59 = sphi 0, %s58
    %s73 = sphi 0, %s59
    %s79 = sphi 0, %s81
    %s82 = sphi 0, %s79
    %s83 = sphi 0, %s82
    %s99 = sphi 0, %s83
  $region4: #{generator_forward.17} parent=0 // loop_header_branch
    %11 = sbr.rel (%p9) target = $region8
  $region5: #{generator_forward.17} parent=0 // loop_body
    %s13 = ssub.s32 %s8, 1
    %s14 = ssub.s32 %s8, 2
    %s21 = sadd.s32 1, %s16
    %p22 = scmp.ge.s32.totalorder %s21, 1
    %s23 = scalar_select %p22, 0, %s21
    %s24 = sadd.s32 1, %s15
    %s25 = scalar_select %p22, %s24, %s15
    %p26 = scmp.ge.s32.totalorder %s25, 2
    %s27 = scalar_select %p26, 0, %s25
    %s28 = ssub.s32 %s15, %s27
    %s29 = ssub.s32 %s16, %s23
    %s30 = sor.u32 %s28, %s29
    %p31 = scmp.eq.s32.totalorder %s30, 0
    %s33 = sadd.s32 %s32, 1
    %s34 = scalar_select %p31, %s32, %s33
    %p37 = pneg %p31
    %p38 = scmp.eq.s32.totalorder %s8, 1
    %p39 = por %p37, %p38
    %p40 = scmp.ne.s32.totalorder %s32, %s35
    %p41 = scmp.eq.s32.totalorder %s8, 0
    %p42 = por %p40, %p41
    %p43 = scmp.ne.s32.totalorder %s32, %s35
    %p44 = scmp.eq.s32.totalorder %s13, 1
    %p45 = por %p43, %p44
    %p46 = scmp.ne.s32.totalorder %s35, %s36
    %p47 = scmp.eq.s32.totalorder %s13, 0
    %p48 = por %p46, %p47
    %p49 = scmp.ne.s32.totalorder %s35, %s36
    %p50 = scmp.eq.s32.totalorder %s14, 1
    %p51 = por %p49, %p50
    %p53 = scmp.ne.s32.totalorder %s36, %s52
    %p54 = scmp.eq.s32.totalorder %s14, 0
    %p55 = por %p53, %p54
    %s57 = sadd.s32 %s56, 1
    %p60 = scmp.eq.s32.totalorder %s8, 1
    %p61 = scmp.ne.s32.totalorder %s56, %s58
    %p62 = scmp.eq.s32.totalorder %s8, 0
    %p63 = por %p61, %p62
    %p64 = scmp.ne.s32.totalorder %s56, %s58
    %p65 = scmp.eq.s32.totalorder %s13, 1
    %p66 = por %p64, %p65
    %p67 = scmp.ne.s32.totalorder %s58, %s59
    %p68 = scmp.eq.s32.totalorder %s13, 0
    %p69 = por %p67, %p68
    %p70 = scmp.ne.s32.totalorder %s58, %s59
    %p71 = scmp.eq.s32.totalorder %s14, 1
    %p72 = por %p70, %p71
    %p74 = scmp.ne.s32.totalorder %s59, %s73
    %p75 = scmp.eq.s32.totalorder %s14, 0
    %p76 = por %p74, %p75
    %s77 = ssub.s32 %s15, %s27
    %p78 = scmp.eq.s32.totalorder %s77, 0
    %s80 = sadd.s32 %s79, 1
    %s81 = scalar_select %p78, %s79, %s80
    %p84 = pneg %p78
    %p85 = scmp.eq.s32.totalorder %s8, 1
    %p86 = por %p84, %p85
    %p87 = scmp.ne.s32.totalorder %s79, %s82
    %p88 = scmp.eq.s32.totalorder %s8, 0
    %p89 = por %p87, %p88
    %p90 = scmp.ne.s32.totalorder %s79, %s82
    %p91 = scmp.eq.s32.totalorder %s13, 1
    %p92 = por %p90, %p91
    %p93 = scmp.ne.s32.totalorder %s82, %s83
    %p94 = scmp.eq.s32.totalorder %s13, 0
    %p95 = por %p93, %p94
    %p96 = scmp.ne.s32.totalorder %s82, %s83
    %p97 = scmp.eq.s32.totalorder %s14, 1
    %p98 = por %p96, %p97
    %p100 = scmp.ne.s32.totalorder %s83, %s99
    %p101 = scmp.eq.s32.totalorder %s14, 0
    %p102 = por %p100, %p101
    %p103 = scmp.le.s32.totalorder 1, %s8
    %p104 = scmp.lt.s32.totalorder %s8, 3
    %p105 = pnand %p103, %p104
    %p106 = pneg %p105
    // Predicated region
    $region9: #{generator_forward.17} parent=5 // pred_check
      _
    $region10: #{generator_forward.17} parent=5 // pred_check_branch
      %108 = sbr.rel (%p105) target = $region12
    $region11: #{generator_forward.17} parent=5 // pred_region
      %s109 = ssub.s32 %s8, 1
      // Predicated region
      $region13: #{generator_forward.17} parent=11 // pred_check
        %p110 = pneg %p69
      $region14: #{generator_forward.17} parent=11 // pred_check_branch
        %112 = sbr.rel (%p110) target = $region16
      $region15: #{generator_forward.17} parent=11 // pred_region
        _
      $region16: #{generator_forward.17} parent=11 // pred_fallthru
        _
    $region12: #{generator_forward.17} parent=5 // pred_fallthru
      _
    %p113 = scmp.lt.s32.totalorder %s8, 2
    // Predicated region
    $region17: #{generator_forward.17} parent=5 // pred_check
      %p114 = pneg %p113
    $region18: #{generator_forward.17} parent=5 // pred_check_branch
      %116 = sbr.rel (%p114) target = $region20
    $region19: #{generator_forward.17} parent=5 // pred_region
      // Predicated region
      $region21: #{generator_forward.17} parent=19 // pred_check
        %p117 = pneg %p42
      $region22: #{generator_forward.17} parent=19 // pred_check_branch
        %119 = sbr.rel (%p117) target = $region24
      $region23: #{generator_forward.17} parent=19 // pred_region
        %s120 = smul.u32 2, %s16
        %p121 = scmp.lt.s32.totalorder %s15, 1
        %s122 = scalar_select %p121, %s15, 1
        %p123 = scmp.lt.s32.totalorder %s120, 1
        %s124 = scalar_select %p123, %s120, 1
        %s125 = smul.addr %s122, 2
        %s126 = sadd.s32 %s124, %s125
        %s127 = smul.addr %s126, 4
        %s128 = scalar_lea.vmem %s0, %s127
        %s129 = smul.u32 2, %s16
      $region24: #{generator_forward.17} parent=19 // pred_fallthru
        _
    $region20: #{generator_forward.17} parent=5 // pred_fallthru
      _
    %p130 = scmp.le.s32.totalorder 1, %s8
    %p131 = scmp.lt.s32.totalorder %s8, 3
    %p132 = pnand %p130, %p131
    %p133 = pneg %p132
    // Predicated region
    $region25: #{generator_forward.17} parent=5 // pred_check
      _
    $region26: #{generator_forward.17} parent=5 // pred_check_branch
      %135 = sbr.rel (%p132) target = $region28
    $region27: #{generator_forward.17} parent=5 // pred_region
      %s136 = ssub.s32 %s8, 1
      %s137 = smul.u32 2, %s18
      %p138 = scmp.lt.s32.totalorder %s17, 1
      %s139 = scalar_select %p138, %s17, 1
      %p140 = scmp.lt.s32.totalorder %s137, 1
      %s141 = scalar_select %p140, %s137, 1
      %s142 = smul.addr %s139, 2
      %s143 = sadd.s32 %s141, %s142
      %s144 = smul.addr %s143, 4
      %s145 = scalar_lea.vmem %s0, %s144
      %p146 = pneg %p48
      %p147 = pneg %p45
      %p148 = pneg %p69
      %p149 = pneg %p66
      %p150 = pneg %p95
      %p151 = pneg %p92
      %p152 = scmp.lt.s32.totalorder %s17, 1
      %s153 = scalar_select %p152, %s17, 1
      %s154 = smul.addr %s153, 8
      %s155 = smul.addr %s154, 4
      %s156 = scalar_lea.vmem %s2, %s155
      %s157 = smul.u32 2, %s18
      %p158 = scmp.lt.s32.totalorder %s17, 1
      %s159 = scalar_select %p158, %s17, 1
      %p160 = scmp.lt.s32.totalorder %s157, 1
      %s161 = scalar_select %p160, %s157, 1
      %s162 = smul.addr %s159, 2
      %s163 = sadd.s32 %s161, %s162
      %s164 = smul.addr %s163, 4
      %s165 = scalar_lea.vmem %s0, %s164
      %s166 = smul.u32 2, %s18
      %p167 = scmp.lt.s32.totalorder %s17, 1
      %s168 = scalar_select %p167, %s17, 1
      %s169 = smul.addr %s168, 8
      %s170 = smul.addr %s169, 4
      %s171 = scalar_lea.vmem %s2, %s170
      %v173 = vld [vmem:[%s165] sm:$0xf]
      %v174 = vld [vmem:[%s165 + $0x4] sm:$0xf]
      %v175 = vld [vmem:[%s1] sm:$0xff]
      %v176 = vld [vmem:[%s1 + $0x8] sm:$0xff]
      %v177 = vld [vmem:[%s1 + $0x10] sm:$0xff]
      %v178 = vld [vmem:[%s1 + $0x18] sm:$0xff]
      %v179 = vld [vmem:[%s1 + $0x20] sm:$0xff]
      %v180 = vld [vmem:[%s1 + $0x28] sm:$0xff]
      %v181 = vld [vmem:[%s1 + $0x30] sm:$0xff]
      %v182 = vld [vmem:[%s1 + $0x38] sm:$0xff]
      %v183 = vld [vmem:[%s1 + $0x40] sm:$0xff]
      %v184 = vld [vmem:[%s1 + $0x48] sm:$0xff]
      %v185 = vld [vmem:[%s1 + $0x50] sm:$0xff]
      %v186 = vld [vmem:[%s1 + $0x58] sm:$0xff]
      %v187 = vld [vmem:[%s1 + $0x60] sm:$0xff]
      %v188 = vld [vmem:[%s1 + $0x68] sm:$0xff]
      %v189 = vld [vmem:[%s1 + $0x70] sm:$0xff]
      %v190 = vld [vmem:[%s1 + $0x78] sm:$0xff]
      %v191 = vld [vmem:[%s1 + $0x80] sm:$0xff]
      %v192 = vld [vmem:[%s1 + $0x88] sm:$0xff]
      %v193 = vld [vmem:[%s1 + $0x90] sm:$0xff]
      %v194 = vld [vmem:[%s1 + $0x98] sm:$0xff]
      %v195 = vld [vmem:[%s1 + $0xa0] sm:$0xff]
      %v196 = vld [vmem:[%s1 + $0xa8] sm:$0xff]
      %v197 = vld [vmem:[%s1 + $0xb0] sm:$0xff]
      %v198 = vld [vmem:[%s1 + $0xb8] sm:$0xff]
      %v199 = vld [vmem:[%s1 + $0xc0] sm:$0xff]
      %v200 = vld [vmem:[%s1 + $0xc8] sm:$0xff]
      %v201 = vld [vmem:[%s1 + $0xd0] sm:$0xff]
      %v202 = vld [vmem:[%s1 + $0xd8] sm:$0xff]
      %v203 = vld [vmem:[%s1 + $0xe0] sm:$0xff]
      %v204 = vld [vmem:[%s1 + $0xe8] sm:$0xff]
      %v205 = vld [vmem:[%s1 + $0xf0] sm:$0xff]
      %v206 = vld [vmem:[%s1 + $0xf8] sm:$0xff]
      %v209 = vunpack.c.l.b16 %v173
      %v210 = vunpack.c.l.b16 %v174
      %v211 = vpack.c.b16 %v210, %v209
      %v245 = vunpack.c.l.b16 %v175
      %v246 = vunpack.c.h.b16 %v175
      %v247 = vunpack.c.l.b16 %v176
      %v248 = vunpack.c.h.b16 %v176
      %v249 = vunpack.c.l.b16 %v177
      %v250 = vunpack.c.h.b16 %v177
      %v251 = vunpack.c.l.b16 %v178
      %v252 = vunpack.c.h.b16 %v178
      %v253 = vunpack.c.l.b16 %v179
      %v254 = vunpack.c.h.b16 %v179
      %v255 = vunpack.c.l.b16 %v180
      %v256 = vunpack.c.h.b16 %v180
      %v257 = vunpack.c.l.b16 %v181
      %v258 = vunpack.c.h.b16 %v181
      %v259 = vunpack.c.l.b16 %v182
      %v260 = vunpack.c.h.b16 %v182
      %v261 = vunpack.c.l.b16 %v183
      %v262 = vunpack.c.h.b16 %v183
      %v263 = vunpack.c.l.b16 %v184
      %v264 = vunpack.c.h.b16 %v184
      %v265 = vunpack.c.l.b16 %v185
      %v266 = vunpack.c.h.b16 %v185
      %v267 = vunpack.c.l.b16 %v186
      %v268 = vunpack.c.h.b16 %v186
      %v269 = vunpack.c.l.b16 %v187
      %v270 = vunpack.c.h.b16 %v187
      %v271 = vunpack.c.l.b16 %v188
      %v272 = vunpack.c.h.b16 %v188
      %v273 = vunpack.c.l.b16 %v189
      %v274 = vunpack.c.h.b16 %v189
      %v275 = vunpack.c.l.b16 %v190
      %v276 = vunpack.c.h.b16 %v190
      %v277 = vunpack.c.l.b16 %v191
      %v278 = vunpack.c.h.b16 %v191
      %v279 = vunpack.c.l.b16 %v192
      %v280 = vunpack.c.h.b16 %v192
      %v281 = vunpack.c.l.b16 %v193
      %v282 = vunpack.c.h.b16 %v193
      %v283 = vunpack.c.l.b16 %v194
      %v284 = vunpack.c.h.b16 %v194
      %v285 = vunpack.c.l.b16 %v195
      %v286 = vunpack.c.h.b16 %v195
      %v287 = vunpack.c.l.b16 %v196
      %v288 = vunpack.c.h.b16 %v196
      %v289 = vunpack.c.l.b16 %v197
      %v290 = vunpack.c.h.b16 %v197
      %v291 = vunpack.c.l.b16 %v198
      %v292 = vunpack.c.h.b16 %v198
      %v293 = vunpack.c.l.b16 %v199
      %v294 = vunpack.c.h.b16 %v199
      %v295 = vunpack.c.l.b16 %v200
      %v296 = vunpack.c.h.b16 %v200
      %v297 = vunpack.c.l.b16 %v201
      %v298 = vunpack.c.h.b16 %v201
      %v299 = vunpack.c.l.b16 %v202
      %v300 = vunpack.c.h.b16 %v202
      %v301 = vunpack.c.l.b16 %v203
      %v302 = vunpack.c.h.b16 %v203
      %v303 = vunpack.c.l.b16 %v204
      %v304 = vunpack.c.h.b16 %v204
      %v305 = vunpack.c.l.b16 %v205
      %v306 = vunpack.c.h.b16 %v205
      %v307 = vunpack.c.l.b16 %v206
      %v308 = vunpack.c.h.b16 %v206
      %v309 = vpack.c.b16 %v249, %v245
      %v310 = vpack.c.b16 %v250, %v246
      %v311 = vpack.c.b16 %v251, %v247
      %v312 = vpack.c.b16 %v252, %v248
      %v313 = vpack.c.b16 %v257, %v253
      %v314 = vpack.c.b16 %v258, %v254
      %v315 = vpack.c.b16 %v259, %v255
      %v316 = vpack.c.b16 %v260, %v256
      %v317 = vpack.c.b16 %v265, %v261
      %v318 = vpack.c.b16 %v266, %v262
      %v319 = vpack.c.b16 %v267, %v263
      %v320 = vpack.c.b16 %v268, %v264
      %v321 = vpack.c.b16 %v273, %v269
      %v322 = vpack.c.b16 %v274, %v270
      %v323 = vpack.c.b16 %v275, %v271
      %v324 = vpack.c.b16 %v276, %v272
      %v325 = vpack.c.b16 %v281, %v277
      %v326 = vpack.c.b16 %v282, %v278
      %v327 = vpack.c.b16 %v283, %v279
      %v328 = vpack.c.b16 %v284, %v280
      %v329 = vpack.c.b16 %v289, %v285
      %v330 = vpack.c.b16 %v290, %v286
      %v331 = vpack.c.b16 %v291, %v287
      %v332 = vpack.c.b16 %v292, %v288
      %v333 = vpack.c.b16 %v297, %v293
      %v334 = vpack.c.b16 %v298, %v294
      %v335 = vpack.c.b16 %v299, %v295
      %v336 = vpack.c.b16 %v300, %v296
      %v337 = vpack.c.b16 %v305, %v301
      %v338 = vpack.c.b16 %v306, %v302
      %v339 = vpack.c.b16 %v307, %v303
      %v340 = vpack.c.b16 %v308, %v304
      %373 = vmatprep.subr.bf16.mxu0 %v310
      %374 = vmatpush1.bf16.msra.mxu0 %v309
      %375 = vmatprep.subr.bf16.mxu0 %v314
      %376 = vmatpush1.bf16.msra.mxu0 %v313
      %377 = vmatprep.subr.bf16.mxu0 %v318
      %378 = vmatpush1.bf16.msra.mxu0 %v317
      %379 = vmatprep.subr.bf16.mxu0 %v322
      %380 = vmatpush1.bf16.msra.mxu0 %v321
      %381 = vmatprep.subr.bf16.mxu0 %v326
      %382 = vmatpush1.bf16.msra.mxu0 %v325
      %383 = vmatprep.subr.bf16.mxu0 %v330
      %384 = vmatpush1.bf16.msra.mxu0 %v329
      %385 = vmatprep.subr.bf16.mxu0 %v334
      %386 = vmatpush1.bf16.msra.mxu0 %v333
      %387 = vmatprep.subr.bf16.mxu0 %v338
      %388 = vmatpush1.bf16.msra.mxu0 %v337
      %389 = vmatprep.subr.bf16.mxu0 0
      %390 = vmatpush1.bf16.msra.mxu0 0
      %391 = vmatprep.subr.bf16.mxu0 0
      %392 = vmatpush1.bf16.msra.mxu0 0
      %393 = vmatprep.subr.bf16.mxu0 0
      %394 = vmatpush1.bf16.msra.mxu0 0
      %395 = vmatprep.subr.bf16.mxu0 0
      %396 = vmatpush1.bf16.msra.mxu0 0
      %397 = vmatprep.subr.bf16.mxu0 0
      %398 = vmatpush1.bf16.msra.mxu0 0
      %399 = vmatprep.subr.bf16.mxu0 0
      %400 = vmatpush1.bf16.msra.mxu0 0
      %401 = vmatprep.subr.bf16.mxu0 0
      %402 = vmatpush1.bf16.msra.mxu0 0
      %403 = vmatprep.subr.bf16.mxu0 0
      %404 = vmatpush1.bf16.msra.mxu0 0
      %405 = vmatprep.mubr.bf16.mxu0 0
      %406 = vmatmul.mubr.bf16.gmra.mrb[0].mxu0 %v211
      %v407 = vpop.f32.mrb[0].mxu0
      %v408 = vadd.f32 0.0, %v407
      %v409 = vpop.f32.mrb[0].mxu0
      %v410 = vadd.f32 0.0, %v409
      %v411 = vpop.f32.mrb[0].mxu0
      %v412 = vadd.f32 0.0, %v411
      %v413 = vpop.f32.mrb[0].mxu0
      %v414 = vadd.f32 0.0, %v413
      %415 = vdwg.mxu0
      %416 = vmatprep.subr.bf16.mxu0 %v312
      %417 = vmatpush1.bf16.msra.mxu0 %v311
      %418 = vmatprep.subr.bf16.mxu0 %v316
      %419 = vmatpush1.bf16.msra.mxu0 %v315
      %420 = vmatprep.subr.bf16.mxu0 %v320
      %421 = vmatpush1.bf16.msra.mxu0 %v319
      %422 = vmatprep.subr.bf16.mxu0 %v324
      %423 = vmatpush1.bf16.msra.mxu0 %v323
      %424 = vmatprep.subr.bf16.mxu0 %v328
      %425 = vmatpush1.bf16.msra.mxu0 %v327
      %426 = vmatprep.subr.bf16.mxu0 %v332
      %427 = vmatpush1.bf16.msra.mxu0 %v331
      %428 = vmatprep.subr.bf16.mxu0 %v336
      %429 = vmatpush1.bf16.msra.mxu0 %v335
      %430 = vmatprep.subr.bf16.mxu0 %v340
      %431 = vmatpush1.bf16.msra.mxu0 %v339
      %432 = vmatprep.subr.bf16.mxu0 0
      %433 = vmatpush1.bf16.msra.mxu0 0
      %434 = vmatprep.subr.bf16.mxu0 0
      %435 = vmatpush1.bf16.msra.mxu0 0
      %436 = vmatprep.subr.bf16.mxu0 0
      %437 = vmatpush1.bf16.msra.mxu0 0
      %438 = vmatprep.subr.bf16.mxu0 0
      %439 = vmatpush1.bf16.msra.mxu0 0
      %440 = vmatprep.subr.bf16.mxu0 0
      %441 = vmatpush1.bf16.msra.mxu0 0
      %442 = vmatprep.subr.bf16.mxu0 0
      %443 = vmatpush1.bf16.msra.mxu0 0
      %444 = vmatprep.subr.bf16.mxu0 0
      %445 = vmatpush1.bf16.msra.mxu0 0
      %446 = vmatprep.subr.bf16.mxu0 0
      %447 = vmatpush1.bf16.msra.mxu0 0
      %448 = vmatprep.mubr.bf16.mxu0 0
      %449 = vmatmul.mubr.bf16.gmra.mrb[0].mxu0 %v211
      %v450 = vpop.f32.mrb[0].mxu0
      %v451 = vadd.f32 0.0, %v450
      %v452 = vpop.f32.mrb[0].mxu0
      %v453 = vadd.f32 0.0, %v452
      %v454 = vpop.f32.mrb[0].mxu0
      %v455 = vadd.f32 0.0, %v454
      %v456 = vpop.f32.mrb[0].mxu0
      %v457 = vadd.f32 0.0, %v456
      %458 = vdwg.mxu0
      %s459 = smul.u32 %s18, 16
      %v460 = vpack.c.bf16 %v412, %v408
      %v461 = vpack.c.bf16 %v414, %v410
      %v462 = vpack.c.bf16 %v455, %v451
      %v463 = vpack.c.bf16 %v457, %v453
      %v468 = vunpack.c.l.b16 %v460
      %v469 = vunpack.c.l.b16 %v461
      %v470 = vunpack.c.l.b16 %v462
      %v471 = vunpack.c.l.b16 %v463
      %v472 = vunpack.c.h.b16 %v460
      %v473 = vunpack.c.h.b16 %v461
      %v474 = vunpack.c.h.b16 %v462
      %v475 = vunpack.c.h.b16 %v463
      %v476 = vpack.c.b16 %v469, %v468
      %v477 = vpack.c.b16 %v471, %v470
      %v478 = vpack.c.b16 %v473, %v472
      %v479 = vpack.c.b16 %v475, %v474
      %s484 = sshra.s32 %s459, 3
      %s485 = sand.u32 %s459, 7
      %s486 = smul.u32 %s484, 4
      %s487 = smul.addr %s486, 4
      %s488 = scalar_lea.vmem %s171, %s487
      %489 = vst [vmem:[%s488] sm:$0xff] %v476
      %490 = vst [vmem:[%s488 + $0x8] sm:$0xff] %v477
      %491 = vst [vmem:[%s488 + $0x10] sm:$0xff] %v478
      %492 = vst [vmem:[%s488 + $0x18] sm:$0xff] %v479
      %p493 = scmp.eq.s32.totalorder %s18, 0
      // Predicated region
      $region29: #{generator_forward.17} parent=27 // pred_check
        %p494 = pneg %p493
      $region30: #{generator_forward.17} parent=27 // pred_check_branch
        %496 = sbr.rel (%p494) target = $region32
      $region31: #{generator_forward.17} parent=27 // pred_region
        %v497 = vlaneseq
        %vm498 = vcmp.ge.s32.totalorder %v497, 0
        %vm499 = vcmp.lt.s32.totalorder %v497, 512
        %vm500 = vmand %vm498, %vm499
        %501 = vst.msk [vmem:[#allocation2] sm:$0xf] %vm500, 0.0
        %502 = vst.msk [vmem:[#allocation3] sm:$0xf] %vm500, 0.0
      $region32: #{generator_forward.17} parent=27 // pred_fallthru
        _
      %v503 = vld [vmem:[#allocation2] sm:$0xf]
      %v504 = vadd.f32 %v408, %v412
      %v505 = vrot.slane %v504, 4
      %v506 = vadd.f32 %v504, %v505
      %v507 = vrot.slane %v506, 2
      %v508 = vadd.f32 %v506, %v507
      %v509 = vrot.slane %v508, 1
      %v510 = vadd.f32 %v508, %v509
      %v511 = vadd.f32 %v410, %v414
      %v512 = vrot.slane %v511, 4
      %v513 = vadd.f32 %v511, %v512
      %v514 = vrot.slane %v513, 2
      %v515 = vadd.f32 %v513, %v514
      %v516 = vrot.slane %v515, 1
      %v517 = vadd.f32 %v515, %v516
      %v518 = vadd.f32 %v451, %v455
      %v519 = vrot.slane %v518, 4
      %v520 = vadd.f32 %v518, %v519
      %v521 = vrot.slane %v520, 2
      %v522 = vadd.f32 %v520, %v521
      %v523 = vrot.slane %v522, 1
      %v524 = vadd.f32 %v522, %v523
      %v525 = vadd.f32 %v453, %v457
      %v526 = vrot.slane %v525, 4
      %v527 = vadd.f32 %v525, %v526
      %v528 = vrot.slane %v527, 2
      %v529 = vadd.f32 %v527, %v528
      %v530 = vrot.slane %v529, 1
      %v531 = vadd.f32 %v529, %v530
      %v536 = vcombine.low %v510, %v517
      %v537 = vcombine.low %v524, %v531
      %v539 = vunpack.c.l.s4 1966171168
      %v540 = vunpack.c.0.s8 %v539
      %v541 = vlaneseq
      %v542 = vshrl.u32 %v541, 7
      %v543 = vsub.s32 %v540, %v542
      %v544 = vrot.slane %v536, %v543
      %v546 = vunpack.c.l.s4 1966171168
      %v547 = vunpack.c.0.s8 %v546
      %v548 = vlaneseq
      %v549 = vshrl.u32 %v548, 7
      %v550 = vsub.s32 %v547, %v549
      %v551 = vrot.slane %v537, %v550
      %v552 = vcombine.low %v544, %v551
      %v554 = vunpack.c.l.s4 1966171168
      %v555 = vunpack.c.0.s8 %v554
      %v556 = vlaneseq
      %v557 = vshrl.u32 %v556, 7
      %v558 = vsub.s32 %v555, %v557
      %v559 = vrot.slane %v552, %v558
      %v561 = vadd.f32 %v503, %v559
      %v562 = vlaneseq
      %vm563 = vcmp.ge.s32.totalorder %v562, 0
      %vm564 = vcmp.lt.s32.totalorder %v562, 512
      %vm565 = vmand %vm563, %vm564
      %566 = vst.msk [vmem:[#allocation2] sm:$0xf] %vm565, %v561
      %v567 = vld [vmem:[#allocation3] sm:$0xf]
      %v568 = vmul.f32 %v408, %v408
      %v569 = vmul.f32 %v410, %v410
      %v570 = vmul.f32 %v451, %v451
      %v571 = vmul.f32 %v453, %v453
      %v572 = vmul.f32 %v412, %v412
      %v573 = vmul.f32 %v414, %v414
      %v574 = vmul.f32 %v455, %v455
      %v575 = vmul.f32 %v457, %v457
      %v576 = vadd.f32 %v568, %v572
      %v577 = vrot.slane %v576, 4
      %v578 = vadd.f32 %v576, %v577
      %v579 = vrot.slane %v578, 2
      %v580 = vadd.f32 %v578, %v579
      %v581 = vrot.slane %v580, 1
      %v582 = vadd.f32 %v580, %v581
      %v583 = vadd.f32 %v569, %v573
      %v584 = vrot.slane %v583, 4
      %v585 = vadd.f32 %v583, %v584
      %v586 = vrot.slane %v585, 2
      %v587 = vadd.f32 %v585, %v586
      %v588 = vrot.slane %v587, 1
      %v589 = vadd.f32 %v587, %v588
      %v590 = vadd.f32 %v570, %v574
      %v591 = vrot.slane %v590, 4
      %v592 = vadd.f32 %v590, %v591
      %v593 = vrot.slane %v592, 2
      %v594 = vadd.f32 %v592, %v593
      %v595 = vrot.slane %v594, 1
      %v596 = vadd.f32 %v594, %v595
      %v597 = vadd.f32 %v571, %v575
      %v598 = vrot.slane %v597, 4
      %v599 = vadd.f32 %v597, %v598
      %v600 = vrot.slane %v599, 2
      %v601 = vadd.f32 %v599, %v600
      %v602 = vrot.slane %v601, 1
      %v603 = vadd.f32 %v601, %v602
      %v608 = vcombine.low %v582, %v589
      %v609 = vcombine.low %v596, %v603
      %v611 = vunpack.c.l.s4 1966171168
      %v612 = vunpack.c.0.s8 %v611
      %v613 = vlaneseq
      %v614 = vshrl.u32 %v613, 7
      %v615 = vsub.s32 %v612, %v614
      %v616 = vrot.slane %v608, %v615
      %v618 = vunpack.c.l.s4 1966171168
      %v619 = vunpack.c.0.s8 %v618
      %v620 = vlaneseq
      %v621 = vshrl.u32 %v620, 7
      %v622 = vsub.s32 %v619, %v621
      %v623 = vrot.slane %v609, %v622
      %v624 = vcombine.low %v616, %v623
      %v626 = vunpack.c.l.s4 1966171168
      %v627 = vunpack.c.0.s8 %v626
      %v628 = vlaneseq
      %v629 = vshrl.u32 %v628, 7
      %v630 = vsub.s32 %v627, %v629
      %v631 = vrot.slane %v624, %v630
      %v633 = vadd.f32 %v567, %v631
      %634 = vst.msk [vmem:[#allocation3] sm:$0xf] %vm565, %v633
      // Predicated region
      $region33: #{generator_forward.17} parent=27 // pred_check
        %p635 = pneg %p493
      $region34: #{generator_forward.17} parent=27 // pred_check_branch
        %637 = sbr.rel (%p635) target = $region36
      $region35: #{generator_forward.17} parent=27 // pred_region
        %v638 = vld [vmem:[#allocation2] sm:$0xf]
        %v639 = vld [vmem:[#allocation3] sm:$0xf]
        %v641 = vrot.slane %v638, 1
        %v643 = vadd.f32 %v638, %v641
        %v645 = vrot.slane %v639, 1
        %v647 = vadd.f32 %v639, %v645
        %v648 = vrot.slane %v638, 2
        %v650 = vadd.f32 %v643, %v648
        %v651 = vrot.slane %v639, 2
        %v653 = vadd.f32 %v647, %v651
        %v654 = vrot.slane %v638, 3
        %v656 = vadd.f32 %v650, %v654
        %v657 = vrot.slane %v639, 3
        %v659 = vadd.f32 %v653, %v657
        %v660 = vmul.f32 %v656, 0.015625
        %v661 = vmul.f32 %v659, 0.015625
        %v662 = vmul.f32 %v660, %v660
        %v663 = vsub.f32 %v661, %v662
        %v664 = vmax.f32 %v663, 0.0
        %v665 = vadd.f32 %v664, 1e-05
        %v666 = vrsqrt.pop %v665
        %s667 = smul.u32 0, 4
        %s668 = smul.addr %s667, 4
        %s669 = scalar_lea.vmem %s171, %s668
        %v670 = vld [vmem:[%s669] sm:$0xff]
        %v671 = vld [vmem:[%s669 + $0x8] sm:$0xff]
        %v672 = vld [vmem:[%s669 + $0x10] sm:$0xff]
        %v673 = vld [vmem:[%s669 + $0x18] sm:$0xff]
        %v674 = vunpack.c.l.bf16 %v670
        %v675 = vunpack.c.h.bf16 %v670
        %v676 = vunpack.c.l.bf16 %v671
        %v677 = vunpack.c.h.bf16 %v671
        %v678 = vunpack.c.l.bf16 %v672
        %v679 = vunpack.c.h.bf16 %v672
        %v680 = vunpack.c.l.bf16 %v673
        %v681 = vunpack.c.h.bf16 %v673
        %v682 = vlaneseq
        %v683 = vshrl.u32 %v682, 7
        %v684 = vsub.s32 0, %v683
        %v685 = vrot.slane %v660, %v684
        %v686 = vsub.f32 %v674, %v685
        %v687 = vsub.f32 %v675, %v685
        %v688 = vsub.f32 %v676, %v685
        %v689 = vsub.f32 %v677, %v685
        %v690 = vsub.f32 %v678, %v685
        %v691 = vsub.f32 %v679, %v685
        %v692 = vsub.f32 %v680, %v685
        %v693 = vsub.f32 %v681, %v685
        %v694 = vlaneseq
        %v695 = vshrl.u32 %v694, 7
        %v696 = vsub.s32 0, %v695
        %v697 = vrot.slane %v666, %v696
        %v698 = vmul.f32 %v686, %v697
        %v699 = vmul.f32 %v687, %v697
        %v700 = vmul.f32 %v688, %v697
        %v701 = vmul.f32 %v689, %v697
        %v702 = vmul.f32 %v690, %v697
        %v703 = vmul.f32 %v691, %v697
        %v704 = vmul.f32 %v692, %v697
        %v705 = vmul.f32 %v693, %v697
        %v706 = vmax.f32 %v698, 0.0
        %v707 = vmax.f32 %v699, 0.0
        %v708 = vmax.f32 %v700, 0.0
        %v709 = vmax.f32 %v701, 0.0
        %v710 = vmax.f32 %v702, 0.0
        %v711 = vmax.f32 %v703, 0.0
        %v712 = vmax.f32 %v704, 0.0
        %v713 = vmax.f32 %v705, 0.0
        %v714 = vpack.c.bf16 %v710, %v706
        %v715 = vpack.c.bf16 %v711, %v707
        %v716 = vpack.c.bf16 %v712, %v708
        %v717 = vpack.c.bf16 %v713, %v709
        %v722 = vunpack.c.l.b16 %v714
        %v723 = vunpack.c.l.b16 %v715
        %v724 = vunpack.c.l.b16 %v716
        %v725 = vunpack.c.l.b16 %v717
        %v726 = vunpack.c.h.b16 %v714
        %v727 = vunpack.c.h.b16 %v715
        %v728 = vunpack.c.h.b16 %v716
        %v729 = vunpack.c.h.b16 %v717
        %v730 = vpack.c.b16 %v723, %v722
        %v731 = vpack.c.b16 %v725, %v724
        %v732 = vpack.c.b16 %v727, %v726
        %v733 = vpack.c.b16 %v729, %v728
        %738 = vst [vmem:[%s669] sm:$0xff] %v730
        %739 = vst [vmem:[%s669 + $0x8] sm:$0xff] %v731
        %740 = vst [vmem:[%s669 + $0x10] sm:$0xff] %v732
        %741 = vst [vmem:[%s669 + $0x18] sm:$0xff] %v733
      $region36: #{generator_forward.17} parent=27 // pred_fallthru
        _
      %p742 = scmp.lt.s32.totalorder %s17, 1
      %s743 = scalar_select %p742, %s17, 1
      %s744 = smul.addr %s743, 8
      %s745 = smul.addr %s744, 4
      %s746 = scalar_lea.vmem %s2, %s745
      // Predicated region
      $region37: #{generator_forward.17} parent=27 // pred_check
        %p747 = pneg %p92
      $region38: #{generator_forward.17} parent=27 // pred_check_branch
        %749 = sbr.rel (%p747) target = $region40
      $region39: #{generator_forward.17} parent=27 // pred_region
        _
      $region40: #{generator_forward.17} parent=27 // pred_fallthru
        _
    $region28: #{generator_forward.17} parent=5 // pred_fallthru
      _
    %p750 = scmp.le.s32.totalorder 2, %s8
    // Predicated region
    $region41: #{generator_forward.17} parent=5 // pred_check
      %p751 = pneg %p750
    $region42: #{generator_forward.17} parent=5 // pred_check_branch
      %753 = sbr.rel (%p751) target = $region44
    $region43: #{generator_forward.17} parent=5 // pred_region
      %s754 = ssub.s32 %s8, 2
      // Predicated region
      $region45: #{generator_forward.17} parent=43 // pred_check
        %p755 = pneg %p98
      $region46: #{generator_forward.17} parent=43 // pred_check_branch
        %757 = sbr.rel (%p755) target = $region48
      $region47: #{generator_forward.17} parent=43 // pred_region
        %p758 = scmp.lt.s32.totalorder %s19, 1
        %s759 = scalar_select %p758, %s19, 1
        %s760 = smul.addr %s759, 8
        %s761 = smul.addr %s760, 4
        %s762 = scalar_lea.vmem %s2, %s761
      $region48: #{generator_forward.17} parent=43 // pred_fallthru
        _
    $region44: #{generator_forward.17} parent=5 // pred_fallthru
      _
  $region6: #{generator_forward.17} parent=0 // loop_footer
    %s12 = sadd.s32 1, %s8
  $region7: #{generator_forward.17} parent=0 // loop_footer_branch
    %7 = sbr.rel target = $region3
  $region8: #{generator_forward.17} parent=0 // loop_exit
    _

// kernel: generator_forward.18
$region0: #{generator_forward.18}
  #allocation0 [shape = 'u32[]', space=smem, size = 0x4, offset = 0x4, fixed_abs, tag = 'smem constant byte address 0x4 - core index']
  #allocation1 [shape = 'u32[144,128]{1,0:T(1,128)}', space=vmem, size = 0x12000, scoped, tag = 'internal scratch']
  #allocation2 [shape = 'f32[1,512]{1,0:T(1,128)}', space=vmem, size = 0x800, scoped, tag = 'scratch operand']
  #allocation3 [shape = 'f32[1,512]{1,0:T(1,128)}', space=vmem, size = 0x800, scoped, tag = 'scratch operand']
  %s0 = inlined_call_operand.vmem [shape: bf16[2,64,128], index: 0, kind: input, shape index: {}]
  %s1 = inlined_call_operand.vmem [shape: bf16[128,512], index: 1, kind: input, shape index: {}]
  %s2 = inlined_call_operand.vmem [shape: bf16[2,64,512], index: 2, kind: output, shape index: {}]
  %s3 = sld [smem:[#allocation0]]
  $region49: #{generator_forward.18} parent=0
    _
  %s5 = ssub.s32 1, %s3
  %s6 = scalar_select 0, %s5, %s3
  loop: start=0, step=1, limit=4
  $region2: #{generator_forward.18} parent=0 // loop_pre_header
    _
  $region3: #{generator_forward.18} parent=0 // loop_header
    %s8 = sphi 0, %s12
    %p9 = scmp.ge.s32.totalorder %s8, 4
    %s15 = sphi 0, %s27
    %s16 = sphi 0, %s23
    %s17 = sphi 0, %s15
    %s18 = sphi 0, %s16
    %s19 = sphi 0, %s17
    %s20 = sphi 0, %s18
    %s32 = sphi 0, %s34
    %s35 = sphi 0, %s32
    %s36 = sphi 0, %s35
    %s52 = sphi 0, %s36
    %s56 = sphi 0, %s56
    %s58 = sphi 0, %s56
    %s59 = sphi 0, %s58
    %s73 = sphi 0, %s59
    %s79 = sphi 0, %s81
    %s82 = sphi 0, %s79
    %s83 = sphi 0, %s82
    %s99 = sphi 0, %s83
  $region4: #{generator_forward.18} parent=0 // loop_header_branch
    %11 = sbr.rel (%p9) target = $region8
  $region5: #{generator_forward.18} parent=0 // loop_body
    %s13 = ssub.s32 %s8, 1
    %s14 = ssub.s32 %s8, 2
    %s21 = sadd.s32 1, %s16
    %p22 = scmp.ge.s32.totalorder %s21, 1
    %s23 = scalar_select %p22, 0, %s21
    %s24 = sadd.s32 1, %s15
    %s25 = scalar_select %p22, %s24, %s15
    %p26 = scmp.ge.s32.totalorder %s25, 2
    %s27 = scalar_select %p26, 0, %s25
    %s28 = ssub.s32 %s15, %s27
    %s29 = ssub.s32 %s16, %s23
    %s30 = sor.u32 %s28, %s29
    %p31 = scmp.eq.s32.totalorder %s30, 0
    %s33 = sadd.s32 %s32, 1
    %s34 = scalar_select %p31, %s32, %s33
    %p37 = pneg %p31
    %p38 = scmp.eq.s32.totalorder %s8, 1
    %p39 = por %p37, %p38
    %p40 = scmp.ne.s32.totalorder %s32, %s35
    %p41 = scmp.eq.s32.totalorder %s8, 0
    %p42 = por %p40, %p41
    %p43 = scmp.ne.s32.totalorder %s32, %s35
    %p44 = scmp.eq.s32.totalorder %s13, 1
    %p45 = por %p43, %p44
    %p46 = scmp.ne.s32.totalorder %s35, %s36
    %p47 = scmp.eq.s32.totalorder %s13, 0
    %p48 = por %p46, %p47
    %p49 = scmp.ne.s32.totalorder %s35, %s36
    %p50 = scmp.eq.s32.totalorder %s14, 1
    %p51 = por %p49, %p50
    %p53 = scmp.ne.s32.totalorder %s36, %s52
    %p54 = scmp.eq.s32.totalorder %s14, 0
    %p55 = por %p53, %p54
    %s57 = sadd.s32 %s56, 1
    %p60 = scmp.eq.s32.totalorder %s8, 1
    %p61 = scmp.ne.s32.totalorder %s56, %s58
    %p62 = scmp.eq.s32.totalorder %s8, 0
    %p63 = por %p61, %p62
    %p64 = scmp.ne.s32.totalorder %s56, %s58
    %p65 = scmp.eq.s32.totalorder %s13, 1
    %p66 = por %p64, %p65
    %p67 = scmp.ne.s32.totalorder %s58, %s59
    %p68 = scmp.eq.s32.totalorder %s13, 0
    %p69 = por %p67, %p68
    %p70 = scmp.ne.s32.totalorder %s58, %s59
    %p71 = scmp.eq.s32.totalorder %s14, 1
    %p72 = por %p70, %p71
    %p74 = scmp.ne.s32.totalorder %s59, %s73
    %p75 = scmp.eq.s32.totalorder %s14, 0
    %p76 = por %p74, %p75
    %s77 = ssub.s32 %s15, %s27
    %p78 = scmp.eq.s32.totalorder %s77, 0
    %s80 = sadd.s32 %s79, 1
    %s81 = scalar_select %p78, %s79, %s80
    %p84 = pneg %p78
    %p85 = scmp.eq.s32.totalorder %s8, 1
    %p86 = por %p84, %p85
    %p87 = scmp.ne.s32.totalorder %s79, %s82
    %p88 = scmp.eq.s32.totalorder %s8, 0
    %p89 = por %p87, %p88
    %p90 = scmp.ne.s32.totalorder %s79, %s82
    %p91 = scmp.eq.s32.totalorder %s13, 1
    %p92 = por %p90, %p91
    %p93 = scmp.ne.s32.totalorder %s82, %s83
    %p94 = scmp.eq.s32.totalorder %s13, 0
    %p95 = por %p93, %p94
    %p96 = scmp.ne.s32.totalorder %s82, %s83
    %p97 = scmp.eq.s32.totalorder %s14, 1
    %p98 = por %p96, %p97
    %p100 = scmp.ne.s32.totalorder %s83, %s99
    %p101 = scmp.eq.s32.totalorder %s14, 0
    %p102 = por %p100, %p101
    %p103 = scmp.le.s32.totalorder 1, %s8
    %p104 = scmp.lt.s32.totalorder %s8, 3
    %p105 = pnand %p103, %p104
    %p106 = pneg %p105
    // Predicated region
    $region9: #{generator_forward.18} parent=5 // pred_check
      _
    $region10: #{generator_forward.18} parent=5 // pred_check_branch
      %108 = sbr.rel (%p105) target = $region12
    $region11: #{generator_forward.18} parent=5 // pred_region
      %s109 = ssub.s32 %s8, 1
      // Predicated region
      $region13: #{generator_forward.18} parent=11 // pred_check
        %p110 = pneg %p69
      $region14: #{generator_forward.18} parent=11 // pred_check_branch
        %112 = sbr.rel (%p110) target = $region16
      $region15: #{generator_forward.18} parent=11 // pred_region
        _
      $region16: #{generator_forward.18} parent=11 // pred_fallthru
        _
    $region12: #{generator_forward.18} parent=5 // pred_fallthru
      _
    %p113 = scmp.lt.s32.totalorder %s8, 2
    // Predicated region
    $region17: #{generator_forward.18} parent=5 // pred_check
      %p114 = pneg %p113
    $region18: #{generator_forward.18} parent=5 // pred_check_branch
      %116 = sbr.rel (%p114) target = $region20
    $region19: #{generator_forward.18} parent=5 // pred_region
      // Predicated region
      $region21: #{generator_forward.18} parent=19 // pred_check
        %p117 = pneg %p42
      $region22: #{generator_forward.18} parent=19 // pred_check_branch
        %119 = sbr.rel (%p117) target = $region24
      $region23: #{generator_forward.18} parent=19 // pred_region
        %s120 = smul.u32 8, %s16
        %p121 = scmp.lt.s32.totalorder %s15, 1
        %s122 = scalar_select %p121, %s15, 1
        %p123 = scmp.lt.s32.totalorder %s120, 7
        %s124 = scalar_select %p123, %s120, 7
        %s125 = smul.addr %s122, 8
        %s126 = sadd.s32 %s124, %s125
        %s127 = smul.addr %s126, 4
        %s128 = scalar_lea.vmem %s0, %s127
        %s129 = smul.u32 8, %s16
      $region24: #{generator_forward.18} parent=19 // pred_fallthru
        _
    $region20: #{generator_forward.18} parent=5 // pred_fallthru
      _
    %p130 = scmp.le.s32.totalorder 1, %s8
    %p131 = scmp.lt.s32.totalorder %s8, 3
    %p132 = pnand %p130, %p131
    %p133 = pneg %p132
    // Predicated region
    $region25: #{generator_forward.18} parent=5 // pred_check
      _
    $region26: #{generator_forward.18} parent=5 // pred_check_branch
      %135 = sbr.rel (%p132) target = $region28
    $region27: #{generator_forward.18} parent=5 // pred_region
      %s136 = ssub.s32 %s8, 1
      %s137 = smul.u32 8, %s18
      %p138 = scmp.lt.s32.totalorder %s17, 1
      %s139 = scalar_select %p138, %s17, 1
      %p140 = scmp.lt.s32.totalorder %s137, 7
      %s141 = scalar_select %p140, %s137, 7
      %s142 = smul.addr %s139, 8
      %s143 = sadd.s32 %s141, %s142
      %s144 = smul.addr %s143, 4
      %s145 = scalar_lea.vmem %s0, %s144
      %p146 = pneg %p48
      %p147 = pneg %p45
      %p148 = pneg %p69
      %p149 = pneg %p66
      %p150 = pneg %p95
      %p151 = pneg %p92
      %p152 = scmp.lt.s32.totalorder %s17, 1
      %s153 = scalar_select %p152, %s17, 1
      %s154 = smul.addr %s153, 32
      %s155 = smul.addr %s154, 4
      %s156 = scalar_lea.vmem %s2, %s155
      %s157 = smul.u32 8, %s18
      %p158 = scmp.lt.s32.totalorder %s17, 1
      %s159 = scalar_select %p158, %s17, 1
      %p160 = scmp.lt.s32.totalorder %s157, 7
      %s161 = scalar_select %p160, %s157, 7
      %s162 = smul.addr %s159, 8
      %s163 = sadd.s32 %s161, %s162
      %s164 = smul.addr %s163, 4
      %s165 = scalar_lea.vmem %s0, %s164
      %s166 = smul.u32 8, %s18
      %p167 = scmp.lt.s32.totalorder %s17, 1
      %s168 = scalar_select %p167, %s17, 1
      %s169 = smul.addr %s168, 32
      %s170 = smul.addr %s169, 4
      %s171 = scalar_lea.vmem %s2, %s170
      %v173 = vld [vmem:[%s165] sm:$0xf]
      %v174 = vld [vmem:[%s165 + $0x4] sm:$0xf]
      %v175 = vld [vmem:[%s165 + $0x8] sm:$0xf]
      %v176 = vld [vmem:[%s165 + $0xc] sm:$0xf]
      %v177 = vld [vmem:[%s165 + $0x10] sm:$0xf]
      %v178 = vld [vmem:[%s165 + $0x14] sm:$0xf]
      %v179 = vld [vmem:[%s165 + $0x18] sm:$0xf]
      %v180 = vld [vmem:[%s165 + $0x1c] sm:$0xf]
      %v181 = vld [vmem:[%s1] sm:$0xff]
      %v182 = vld [vmem:[%s1 + $0x8] sm:$0xff]
      %v183 = vld [vmem:[%s1 + $0x10] sm:$0xff]
      %v184 = vld [vmem:[%s1 + $0x18] sm:$0xff]
      %v185 = vld [vmem:[%s1 + $0x20] sm:$0xff]
      %v186 = vld [vmem:[%s1 + $0x28] sm:$0xff]
      %v187 = vld [vmem:[%s1 + $0x30] sm:$0xff]
      %v188 = vld [vmem:[%s1 + $0x38] sm:$0xff]
      %v189 = vld [vmem:[%s1 + $0x40] sm:$0xff]
      %v190 = vld [vmem:[%s1 + $0x48] sm:$0xff]
      %v191 = vld [vmem:[%s1 + $0x50] sm:$0xff]
      %v192 = vld [vmem:[%s1 + $0x58] sm:$0xff]
      %v193 = vld [vmem:[%s1 + $0x60] sm:$0xff]
      %v194 = vld [vmem:[%s1 + $0x68] sm:$0xff]
      %v195 = vld [vmem:[%s1 + $0x70] sm:$0xff]
      %v196 = vld [vmem:[%s1 + $0x78] sm:$0xff]
      %v197 = vld [vmem:[%s1 + $0x80] sm:$0xff]
      %v198 = vld [vmem:[%s1 + $0x88] sm:$0xff]
      %v199 = vld [vmem:[%s1 + $0x90] sm:$0xff]
      %v200 = vld [vmem:[%s1 + $0x98] sm:$0xff]
      %v201 = vld [vmem:[%s1 + $0xa0] sm:$0xff]
      %v202 = vld [vmem:[%s1 + $0xa8] sm:$0xff]
      %v203 = vld [vmem:[%s1 + $0xb0] sm:$0xff]
      %v204 = vld [vmem:[%s1 + $0xb8] sm:$0xff]
      %v205 = vld [vmem:[%s1 + $0xc0] sm:$0xff]
      %v206 = vld [vmem:[%s1 + $0xc8] sm:$0xff]
      %v207 = vld [vmem:[%s1 + $0xd0] sm:$0xff]
      %v208 = vld [vmem:[%s1 + $0xd8] sm:$0xff]
      %v209 = vld [vmem:[%s1 + $0xe0] sm:$0xff]
      %v210 = vld [vmem:[%s1 + $0xe8] sm:$0xff]
      %v211 = vld [vmem:[%s1 + $0xf0] sm:$0xff]
      %v212 = vld [vmem:[%s1 + $0xf8] sm:$0xff]
      %v221 = vunpack.c.l.b16 %v173
      %v222 = vunpack.c.l.b16 %v174
      %v223 = vunpack.c.l.b16 %v175
      %v224 = vunpack.c.l.b16 %v176
      %v225 = vunpack.c.l.b16 %v177
      %v226 = vunpack.c.l.b16 %v178
      %v227 = vunpack.c.l.b16 %v179
      %v228 = vunpack.c.l.b16 %v180
      %v229 = vpack.c.b16 %v222, %v221
      %v230 = vpack.c.b16 %v224, %v223
      %v231 = vpack.c.b16 %v226, %v225
      %v232 = vpack.c.b16 %v228, %v227
      %v269 = vunpack.c.l.b16 %v181
      %v270 = vunpack.c.h.b16 %v181
      %v271 = vunpack.c.l.b16 %v182
      %v272 = vunpack.c.h.b16 %v182
      %v273 = vunpack.c.l.b16 %v183
      %v274 = vunpack.c.h.b16 %v183
      %v275 = vunpack.c.l.b16 %v184
      %v276 = vunpack.c.h.b16 %v184
      %v277 = vunpack.c.l.b16 %v185
      %v278 = vunpack.c.h.b16 %v185
      %v279 = vunpack.c.l.b16 %v186
      %v280 = vunpack.c.h.b16 %v186
      %v281 = vunpack.c.l.b16 %v187
      %v282 = vunpack.c.h.b16 %v187
      %v283 = vunpack.c.l.b16 %v188
      %v284 = vunpack.c.h.b16 %v188
      %v285 = vunpack.c.l.b16 %v189
      %v286 = vunpack.c.h.b16 %v189
      %v287 = vunpack.c.l.b16 %v190
      %v288 = vunpack.c.h.b16 %v190
      %v289 = vunpack.c.l.b16 %v191
      %v290 = vunpack.c.h.b16 %v191
      %v291 = vunpack.c.l.b16 %v192
      %v292 = vunpack.c.h.b16 %v192
      %v293 = vunpack.c.l.b16 %v193
      %v294 = vunpack.c.h.b16 %v193
      %v295 = vunpack.c.l.b16 %v194
      %v296 = vunpack.c.h.b16 %v194
      %v297 = vunpack.c.l.b16 %v195
      %v298 = vunpack.c.h.b16 %v195
      %v299 = vunpack.c.l.b16 %v196
      %v300 = vunpack.c.h.b16 %v196
      %v301 = vunpack.c.l.b16 %v197
      %v302 = vunpack.c.h.b16 %v197
      %v303 = vunpack.c.l.b16 %v198
      %v304 = vunpack.c.h.b16 %v198
      %v305 = vunpack.c.l.b16 %v199
      %v306 = vunpack.c.h.b16 %v199
      %v307 = vunpack.c.l.b16 %v200
      %v308 = vunpack.c.h.b16 %v200
      %v309 = vunpack.c.l.b16 %v201
      %v310 = vunpack.c.h.b16 %v201
      %v311 = vunpack.c.l.b16 %v202
      %v312 = vunpack.c.h.b16 %v202
      %v313 = vunpack.c.l.b16 %v203
      %v314 = vunpack.c.h.b16 %v203
      %v315 = vunpack.c.l.b16 %v204
      %v316 = vunpack.c.h.b16 %v204
      %v317 = vunpack.c.l.b16 %v205
      %v318 = vunpack.c.h.b16 %v205
      %v319 = vunpack.c.l.b16 %v206
      %v320 = vunpack.c.h.b16 %v206
      %v321 = vunpack.c.l.b16 %v207
      %v322 = vunpack.c.h.b16 %v207
      %v323 = vunpack.c.l.b16 %v208
      %v324 = vunpack.c.h.b16 %v208
      %v325 = vunpack.c.l.b16 %v209
      %v326 = vunpack.c.h.b16 %v209
      %v327 = vunpack.c.l.b16 %v210
      %v328 = vunpack.c.h.b16 %v210
      %v329 = vunpack.c.l.b16 %v211
      %v330 = vunpack.c.h.b16 %v211
      %v331 = vunpack.c.l.b16 %v212
      %v332 = vunpack.c.h.b16 %v212
      %v333 = vpack.c.b16 %v273, %v269
      %v334 = vpack.c.b16 %v274, %v270
      %v335 = vpack.c.b16 %v275, %v271
      %v336 = vpack.c.b16 %v276, %v272
      %v337 = vpack.c.b16 %v281, %v277
      %v338 = vpack.c.b16 %v282, %v278
      %v339 = vpack.c.b16 %v283, %v279
      %v340 = vpack.c.b16 %v284, %v280
      %v341 = vpack.c.b16 %v289, %v285
      %v342 = vpack.c.b16 %v290, %v286
      %v343 = vpack.c.b16 %v291, %v287
      %v344 = vpack.c.b16 %v292, %v288
      %v345 = vpack.c.b16 %v297, %v293
      %v346 = vpack.c.b16 %v298, %v294
      %v347 = vpack.c.b16 %v299, %v295
      %v348 = vpack.c.b16 %v300, %v296
      %v349 = vpack.c.b16 %v305, %v301
      %v350 = vpack.c.b16 %v306, %v302
      %v351 = vpack.c.b16 %v307, %v303
      %v352 = vpack.c.b16 %v308, %v304
      %v353 = vpack.c.b16 %v313, %v309
      %v354 = vpack.c.b16 %v314, %v310
      %v355 = vpack.c.b16 %v315, %v311
      %v356 = vpack.c.b16 %v316, %v312
      %v357 = vpack.c.b16 %v321, %v317
      %v358 = vpack.c.b16 %v322, %v318
      %v359 = vpack.c.b16 %v323, %v319
      %v360 = vpack.c.b16 %v324, %v320
      %v361 = vpack.c.b16 %v329, %v325
      %v362 = vpack.c.b16 %v330, %v326
      %v363 = vpack.c.b16 %v331, %v327
      %v364 = vpack.c.b16 %v332, %v328
      %397 = vmatprep.subr.bf16.mxu0 %v334
      %398 = vmatpush1.bf16.msra.mxu0 %v333
      %399 = vmatprep.subr.bf16.mxu0 %v338
      %400 = vmatpush1.bf16.msra.mxu0 %v337
      %401 = vmatprep.subr.bf16.mxu0 %v342
      %402 = vmatpush1.bf16.msra.mxu0 %v341
      %403 = vmatprep.subr.bf16.mxu0 %v346
      %404 = vmatpush1.bf16.msra.mxu0 %v345
      %405 = vmatprep.subr.bf16.mxu0 %v350
      %406 = vmatpush1.bf16.msra.mxu0 %v349
      %407 = vmatprep.subr.bf16.mxu0 %v354
      %408 = vmatpush1.bf16.msra.mxu0 %v353
      %409 = vmatprep.subr.bf16.mxu0 %v358
      %410 = vmatpush1.bf16.msra.mxu0 %v357
      %411 = vmatprep.subr.bf16.mxu0 %v362
      %412 = vmatpush1.bf16.msra.mxu0 %v361
      %413 = vmatprep.subr.bf16.mxu0 0
      %414 = vmatpush1.bf16.msra.mxu0 0
      %415 = vmatprep.subr.bf16.mxu0 0
      %416 = vmatpush1.bf16.msra.mxu0 0
      %417 = vmatprep.subr.bf16.mxu0 0
      %418 = vmatpush1.bf16.msra.mxu0 0
      %419 = vmatprep.subr.bf16.mxu0 0
      %420 = vmatpush1.bf16.msra.mxu0 0
      %421 = vmatprep.subr.bf16.mxu0 0
      %422 = vmatpush1.bf16.msra.mxu0 0
      %423 = vmatprep.subr.bf16.mxu0 0
      %424 = vmatpush1.bf16.msra.mxu0 0
      %425 = vmatprep.subr.bf16.mxu0 0
      %426 = vmatpush1.bf16.msra.mxu0 0
      %427 = vmatprep.subr.bf16.mxu0 0
      %428 = vmatpush1.bf16.msra.mxu0 0
      %429 = vmatprep.mubr.bf16.mxu0 0
      %430 = vmatmul.mubr.bf16.gmra.mrb[0].mxu0 %v229
      %v431 = vpop.f32.mrb[0].mxu0
      %v432 = vadd.f32 0.0, %v431
      %v433 = vpop.f32.mrb[0].mxu0
      %v434 = vadd.f32 0.0, %v433
      %v435 = vpop.f32.mrb[0].mxu0
      %v436 = vadd.f32 0.0, %v435
      %v437 = vpop.f32.mrb[0].mxu0
      %v438 = vadd.f32 0.0, %v437
      %439 = vmatprep.mubr.bf16.mxu0 0
      %440 = vmatmul.mubr.bf16.gmra.mrb[0].mxu0 %v230
      %v441 = vpop.f32.mrb[0].mxu0
      %v442 = vadd.f32 0.0, %v441
      %v443 = vpop.f32.mrb[0].mxu0
      %v444 = vadd.f32 0.0, %v443
      %v445 = vpop.f32.mrb[0].mxu0
      %v446 = vadd.f32 0.0, %v445
      %v447 = vpop.f32.mrb[0].mxu0
      %v448 = vadd.f32 0.0, %v447
      %449 = vmatprep.mubr.bf16.mxu0 0
      %450 = vmatmul.mubr.bf16.gmra.mrb[0].mxu0 %v231
      %v451 = vpop.f32.mrb[0].mxu0
      %v452 = vadd.f32 0.0, %v451
      %v453 = vpop.f32.mrb[0].mxu0
      %v454 = vadd.f32 0.0, %v453
      %v455 = vpop.f32.mrb[0].mxu0
      %v456 = vadd.f32 0.0, %v455
      %v457 = vpop.f32.mrb[0].mxu0
      %v458 = vadd.f32 0.0, %v457
      %459 = vmatprep.mubr.bf16.mxu0 0
      %460 = vmatmul.mubr.bf16.gmra.mrb[0].mxu0 %v232
      %v461 = vpop.f32.mrb[0].mxu0
      %v462 = vadd.f32 0.0, %v461
      %v463 = vpop.f32.mrb[0].mxu0
      %v464 = vadd.f32 0.0, %v463
      %v465 = vpop.f32.mrb[0].mxu0
      %v466 = vadd.f32 0.0, %v465
      %v467 = vpop.f32.mrb[0].mxu0
      %v468 = vadd.f32 0.0, %v467
      %469 = vdwg.mxu0
      %470 = vmatprep.subr.bf16.mxu0 %v336
      %471 = vmatpush1.bf16.msra.mxu0 %v335
      %472 = vmatprep.subr.bf16.mxu0 %v340
      %473 = vmatpush1.bf16.msra.mxu0 %v339
      %474 = vmatprep.subr.bf16.mxu0 %v344
      %475 = vmatpush1.bf16.msra.mxu0 %v343
      %476 = vmatprep.subr.bf16.mxu0 %v348
      %477 = vmatpush1.bf16.msra.mxu0 %v347
      %478 = vmatprep.subr.bf16.mxu0 %v352
      %479 = vmatpush1.bf16.msra.mxu0 %v351
      %480 = vmatprep.subr.bf16.mxu0 %v356
      %481 = vmatpush1.bf16.msra.mxu0 %v355
      %482 = vmatprep.subr.bf16.mxu0 %v360
      %483 = vmatpush1.bf16.msra.mxu0 %v359
      %484 = vmatprep.subr.bf16.mxu0 %v364
      %485 = vmatpush1.bf16.msra.mxu0 %v363
      %486 = vmatprep.subr.bf16.mxu0 0
      %487 = vmatpush1.bf16.msra.mxu0 0
      %488 = vmatprep.subr.bf16.mxu0 0
      %489 = vmatpush1.bf16.msra.mxu0 0
      %490 = vmatprep.subr.bf16.mxu0 0
      %491 = vmatpush1.bf16.msra.mxu0 0
      %492 = vmatprep.subr.bf16.mxu0 0
      %493 = vmatpush1.bf16.msra.mxu0 0
      %494 = vmatprep.subr.bf16.mxu0 0
      %495 = vmatpush1.bf16.msra.mxu0 0
      %496 = vmatprep.subr.bf16.mxu0 0
      %497 = vmatpush1.bf16.msra.mxu0 0
      %498 = vmatprep.subr.bf16.mxu0 0
      %499 = vmatpush1.bf16.msra.mxu0 0
      %500 = vmatprep.subr.bf16.mxu0 0
      %501 = vmatpush1.bf16.msra.mxu0 0
      %502 = vmatprep.mubr.bf16.mxu0 0
      %503 = vmatmul.mubr.bf16.gmra.mrb[0].mxu0 %v229
      %v504 = vpop.f32.mrb[0].mxu0
      %v505 = vadd.f32 0.0, %v504
      %v506 = vpop.f32.mrb[0].mxu0
      %v507 = vadd.f32 0.0, %v506
      %v508 = vpop.f32.mrb[0].mxu0
      %v509 = vadd.f32 0.0, %v508
      %v510 = vpop.f32.mrb[0].mxu0
      %v511 = vadd.f32 0.0, %v510
      %512 = vmatprep.mubr.bf16.mxu0 0
      %513 = vmatmul.mubr.bf16.gmra.mrb[0].mxu0 %v230
      %v514 = vpop.f32.mrb[0].mxu0
      %v515 = vadd.f32 0.0, %v514
      %v516 = vpop.f32.mrb[0].mxu0
      %v517 = vadd.f32 0.0, %v516
      %v518 = vpop.f32.mrb[0].mxu0
      %v519 = vadd.f32 0.0, %v518
      %v520 = vpop.f32.mrb[0].mxu0
      %v521 = vadd.f32 0.0, %v520
      %522 = vmatprep.mubr.bf16.mxu0 0
      %523 = vmatmul.mubr.bf16.gmra.mrb[0].mxu0 %v231
      %v524 = vpop.f32.mrb[0].mxu0
      %v525 = vadd.f32 0.0, %v524
      %v526 = vpop.f32.mrb[0].mxu0
      %v527 = vadd.f32 0.0, %v526
      %v528 = vpop.f32.mrb[0].mxu0
      %v529 = vadd.f32 0.0, %v528
      %v530 = vpop.f32.mrb[0].mxu0
      %v531 = vadd.f32 0.0, %v530
      %532 = vmatprep.mubr.bf16.mxu0 0
      %533 = vmatmul.mubr.bf16.gmra.mrb[0].mxu0 %v232
      %v534 = vpop.f32.mrb[0].mxu0
      %v535 = vadd.f32 0.0, %v534
      %v536 = vpop.f32.mrb[0].mxu0
      %v537 = vadd.f32 0.0, %v536
      %v538 = vpop.f32.mrb[0].mxu0
      %v539 = vadd.f32 0.0, %v538
      %v540 = vpop.f32.mrb[0].mxu0
      %v541 = vadd.f32 0.0, %v540
      %542 = vdwg.mxu0
      %s543 = smul.u32 %s18, 64
      %v544 = vpack.c.bf16 %v436, %v432
      %v545 = vpack.c.bf16 %v438, %v434
      %v546 = vpack.c.bf16 %v509, %v505
      %v547 = vpack.c.bf16 %v511, %v507
      %v548 = vpack.c.bf16 %v446, %v442
      %v549 = vpack.c.bf16 %v448, %v444
      %v550 = vpack.c.bf16 %v519, %v515
      %v551 = vpack.c.bf16 %v521, %v517
      %v552 = vpack.c.bf16 %v456, %v452
      %v553 = vpack.c.bf16 %v458, %v454
      %v554 = vpack.c.bf16 %v529, %v525
      %v555 = vpack.c.bf16 %v531, %v527
      %v556 = vpack.c.bf16 %v466, %v462
      %v557 = vpack.c.bf16 %v468, %v464
      %v558 = vpack.c.bf16 %v539, %v535
      %v559 = vpack.c.bf16 %v541, %v537
      %v576 = vunpack.c.l.b16 %v544
      %v577 = vunpack.c.l.b16 %v545
      %v578 = vunpack.c.l.b16 %v546
      %v579 = vunpack.c.l.b16 %v547
      %v580 = vunpack.c.h.b16 %v544
      %v581 = vunpack.c.h.b16 %v545
      %v582 = vunpack.c.h.b16 %v546
      %v583 = vunpack.c.h.b16 %v547
      %v584 = vunpack.c.l.b16 %v548
      %v585 = vunpack.c.l.b16 %v549
      %v586 = vunpack.c.l.b16 %v550
      %v587 = vunpack.c.l.b16 %v551
      %v588 = vunpack.c.h.b16 %v548
      %v589 = vunpack.c.h.b16 %v549
      %v590 = vunpack.c.h.b16 %v550
      %v591 = vunpack.c.h.b16 %v551
      %v592 = vunpack.c.l.b16 %v552
      %v593 = vunpack.c.l.b16 %v553
      %v594 = vunpack.c.l.b16 %v554
      %v595 = vunpack.c.l.b16 %v555
      %v596 = vunpack.c.h.b16 %v552
      %v597 = vunpack.c.h.b16 %v553
      %v598 = vunpack.c.h.b16 %v554
      %v599 = vunpack.c.h.b16 %v555
      %v600 = vunpack.c.l.b16 %v556
      %v601 = vunpack.c.l.b16 %v557
      %v602 = vunpack.c.l.b16 %v558
      %v603 = vunpack.c.l.b16 %v559
      %v604 = vunpack.c.h.b16 %v556
      %v605 = vunpack.c.h.b16 %v557
      %v606 = vunpack.c.h.b16 %v558
      %v607 = vunpack.c.h.b16 %v559
      %v608 = vpack.c.b16 %v577, %v576
      %v609 = vpack.c.b16 %v579, %v578
      %v610 = vpack.c.b16 %v581, %v580
      %v611 = vpack.c.b16 %v583, %v582
      %v612 = vpack.c.b16 %v585, %v584
      %v613 = vpack.c.b16 %v587, %v586
      %v614 = vpack.c.b16 %v589, %v588
      %v615 = vpack.c.b16 %v591, %v590
      %v616 = vpack.c.b16 %v593, %v592
      %v617 = vpack.c.b16 %v595, %v594
      %v618 = vpack.c.b16 %v597, %v596
      %v619 = vpack.c.b16 %v599, %v598
      %v620 = vpack.c.b16 %v601, %v600
      %v621 = vpack.c.b16 %v603, %v602
      %v622 = vpack.c.b16 %v605, %v604
      %v623 = vpack.c.b16 %v607, %v606
      %s640 = sshra.s32 %s543, 3
      %s641 = sand.u32 %s543, 7
      %s642 = smul.u32 %s640, 4
      %s643 = smul.addr %s642, 4
      %s644 = scalar_lea.vmem %s171, %s643
      %645 = vst [vmem:[%s644] sm:$0xff] %v608
      %646 = vst [vmem:[%s644 + $0x8] sm:$0xff] %v609
      %647 = vst [vmem:[%s644 + $0x10] sm:$0xff] %v610
      %648 = vst [vmem:[%s644 + $0x18] sm:$0xff] %v611
      %649 = vst [vmem:[%s644 + $0x20] sm:$0xff] %v612
      %650 = vst [vmem:[%s644 + $0x28] sm:$0xff] %v613
      %651 = vst [vmem:[%s644 + $0x30] sm:$0xff] %v614
      %652 = vst [vmem:[%s644 + $0x38] sm:$0xff] %v615
      %653 = vst [vmem:[%s644 + $0x40] sm:$0xff] %v616
      %654 = vst [vmem:[%s644 + $0x48] sm:$0xff] %v617
      %655 = vst [vmem:[%s644 + $0x50] sm:$0xff] %v618
      %656 = vst [vmem:[%s644 + $0x58] sm:$0xff] %v619
      %657 = vst [vmem:[%s644 + $0x60] sm:$0xff] %v620
      %658 = vst [vmem:[%s644 + $0x68] sm:$0xff] %v621
      %659 = vst [vmem:[%s644 + $0x70] sm:$0xff] %v622
      %660 = vst [vmem:[%s644 + $0x78] sm:$0xff] %v623
      %p661 = scmp.eq.s32.totalorder %s18, 0
      // Predicated region
      $region29: #{generator_forward.18} parent=27 // pred_check
        %p662 = pneg %p661
      $region30: #{generator_forward.18} parent=27 // pred_check_branch
        %664 = sbr.rel (%p662) target = $region32
      $region31: #{generator_forward.18} parent=27 // pred_region
        %v665 = vlaneseq
        %vm666 = vcmp.ge.s32.totalorder %v665, 0
        %vm667 = vcmp.lt.s32.totalorder %v665, 512
        %vm668 = vmand %vm666, %vm667
        %669 = vst.msk [vmem:[#allocation2] sm:$0xf] %vm668, 0.0
        %670 = vst.msk [vmem:[#allocation3] sm:$0xf] %vm668, 0.0
      $region32: #{generator_forward.18} parent=27 // pred_fallthru
        _
      %v671 = vld [vmem:[#allocation2] sm:$0xf]
      %v672 = vadd.f32 %v432, %v436
      %v673 = vadd.f32 %v672, %v442
      %v674 = vadd.f32 %v673, %v446
      %v675 = vadd.f32 %v674, %v452
      %v676 = vadd.f32 %v675, %v456
      %v677 = vadd.f32 %v676, %v462
      %v678 = vadd.f32 %v677, %v466
      %v679 = vrot.slane %v678, 4
      %v680 = vadd.f32 %v678, %v679
      %v681 = vrot.slane %v680, 2
      %v682 = vadd.f32 %v680, %v681
      %v683 = vrot.slane %v682, 1
      %v684 = vadd.f32 %v682, %v683
      %v685 = vadd.f32 %v434, %v438
      %v686 = vadd.f32 %v685, %v444
      %v687 = vadd.f32 %v686, %v448
      %v688 = vadd.f32 %v687, %v454
      %v689 = vadd.f32 %v688, %v458
      %v690 = vadd.f32 %v689, %v464
      %v691 = vadd.f32 %v690, %v468
      %v692 = vrot.slane %v691, 4
      %v693 = vadd.f32 %v691, %v692
      %v694 = vrot.slane %v693, 2
      %v695 = vadd.f32 %v693, %v694
      %v696 = vrot.slane %v695, 1
      %v697 = vadd.f32 %v695, %v696
      %v698 = vadd.f32 %v505, %v509
      %v699 = vadd.f32 %v698, %v515
      %v700 = vadd.f32 %v699, %v519
      %v701 = vadd.f32 %v700, %v525
      %v702 = vadd.f32 %v701, %v529
      %v703 = vadd.f32 %v702, %v535
      %v704 = vadd.f32 %v703, %v539
      %v705 = vrot.slane %v704, 4
      %v706 = vadd.f32 %v704, %v705
      %v707 = vrot.slane %v706, 2
      %v708 = vadd.f32 %v706, %v707
      %v709 = vrot.slane %v708, 1
      %v710 = vadd.f32 %v708, %v709
      %v711 = vadd.f32 %v507, %v511
      %v712 = vadd.f32 %v711, %v517
      %v713 = vadd.f32 %v712, %v521
      %v714 = vadd.f32 %v713, %v527
      %v715 = vadd.f32 %v714, %v531
      %v716 = vadd.f32 %v715, %v537
      %v717 = vadd.f32 %v716, %v541
      %v718 = vrot.slane %v717, 4
      %v719 = vadd.f32 %v717, %v718
      %v720 = vrot.slane %v719, 2
      %v721 = vadd.f32 %v719, %v720
      %v722 = vrot.slane %v721, 1
      %v723 = vadd.f32 %v721, %v722
      %v728 = vcombine.low %v684, %v697
      %v729 = vcombine.low %v710, %v723
      %v731 = vunpack.c.l.s4 1966171168
      %v732 = vunpack.c.0.s8 %v731
      %v733 = vlaneseq
      %v734 = vshrl.u32 %v733, 7
      %v735 = vsub.s32 %v732, %v734
      %v736 = vrot.slane %v728, %v735
      %v738 = vunpack.c.l.s4 1966171168
      %v739 = vunpack.c.0.s8 %v738
      %v740 = vlaneseq
      %v741 = vshrl.u32 %v740, 7
      %v742 = vsub.s32 %v739, %v741
      %v743 = vrot.slane %v729, %v742
      %v744 = vcombine.low %v736, %v743
      %v746 = vunpack.c.l.s4 1966171168
      %v747 = vunpack.c.0.s8 %v746
      %v748 = vlaneseq
      %v749 = vshrl.u32 %v748, 7
      %v750 = vsub.s32 %v747, %v749
      %v751 = vrot.slane %v744, %v750
      %v753 = vadd.f32 %v671, %v751
      %v754 = vlaneseq
      %vm755 = vcmp.ge.s32.totalorder %v754, 0
      %vm756 = vcmp.lt.s32.totalorder %v754, 512
      %vm757 = vmand %vm755, %vm756
      %758 = vst.msk [vmem:[#allocation2] sm:$0xf] %vm757, %v753
      %v759 = vld [vmem:[#allocation3] sm:$0xf]
      %v760 = vmul.f32 %v432, %v432
      %v761 = vmul.f32 %v434, %v434
      %v762 = vmul.f32 %v505, %v505
      %v763 = vmul.f32 %v507, %v507
      %v764 = vmul.f32 %v436, %v436
      %v765 = vmul.f32 %v438, %v438
      %v766 = vmul.f32 %v509, %v509
      %v767 = vmul.f32 %v511, %v511
      %v768 = vmul.f32 %v442, %v442
      %v769 = vmul.f32 %v444, %v444
      %v770 = vmul.f32 %v515, %v515
      %v771 = vmul.f32 %v517, %v517
      %v772 = vmul.f32 %v446, %v446
      %v773 = vmul.f32 %v448, %v448
      %v774 = vmul.f32 %v519, %v519
      %v775 = vmul.f32 %v521, %v521
      %v776 = vmul.f32 %v452, %v452
      %v777 = vmul.f32 %v454, %v454
      %v778 = vmul.f32 %v525, %v525
      %v779 = vmul.f32 %v527, %v527
      %v780 = vmul.f32 %v456, %v456
      %v781 = vmul.f32 %v458, %v458
      %v782 = vmul.f32 %v529, %v529
      %v783 = vmul.f32 %v531, %v531
      %v784 = vmul.f32 %v462, %v462
      %v785 = vmul.f32 %v464, %v464
      %v786 = vmul.f32 %v535, %v535
      %v787 = vmul.f32 %v537, %v537
      %v788 = vmul.f32 %v466, %v466
      %v789 = vmul.f32 %v468, %v468
      %v790 = vmul.f32 %v539, %v539
      %v791 = vmul.f32 %v541, %v541
      %v792 = vadd.f32 %v760, %v764
      %v793 = vadd.f32 %v792, %v768
      %v794 = vadd.f32 %v793, %v772
      %v795 = vadd.f32 %v794, %v776
      %v796 = vadd.f32 %v795, %v780
      %v797 = vadd.f32 %v796, %v784
      %v798 = vadd.f32 %v797, %v788
      %v799 = vrot.slane %v798, 4
      %v800 = vadd.f32 %v798, %v799
      %v801 = vrot.slane %v800, 2
      %v802 = vadd.f32 %v800, %v801
      %v803 = vrot.slane %v802, 1
      %v804 = vadd.f32 %v802, %v803
      %v805 = vadd.f32 %v761, %v765
      %v806 = vadd.f32 %v805, %v769
      %v807 = vadd.f32 %v806, %v773
      %v808 = vadd.f32 %v807, %v777
      %v809 = vadd.f32 %v808, %v781
      %v810 = vadd.f32 %v809, %v785
      %v811 = vadd.f32 %v810, %v789
      %v812 = vrot.slane %v811, 4
      %v813 = vadd.f32 %v811, %v812
      %v814 = vrot.slane %v813, 2
      %v815 = vadd.f32 %v813, %v814
      %v816 = vrot.slane %v815, 1
      %v817 = vadd.f32 %v815, %v816
      %v818 = vadd.f32 %v762, %v766
      %v819 = vadd.f32 %v818, %v770
      %v820 = vadd.f32 %v819, %v774
      %v821 = vadd.f32 %v820, %v778
      %v822 = vadd.f32 %v821, %v782
      %v823 = vadd.f32 %v822, %v786
      %v824 = vadd.f32 %v823, %v790
      %v825 = vrot.slane %v824, 4
      %v826 = vadd.f32 %v824, %v825
      %v827 = vrot.slane %v826, 2
      %v828 = vadd.f32 %v826, %v827
      %v829 = vrot.slane %v828, 1
      %v830 = vadd.f32 %v828, %v829
      %v831 = vadd.f32 %v763, %v767
      %v832 = vadd.f32 %v831, %v771
      %v833 = vadd.f32 %v832, %v775
      %v834 = vadd.f32 %v833, %v779
      %v835 = vadd.f32 %v834, %v783
      %v836 = vadd.f32 %v835, %v787
      %v837 = vadd.f32 %v836, %v791
      %v838 = vrot.slane %v837, 4
      %v839 = vadd.f32 %v837, %v838
      %v840 = vrot.slane %v839, 2
      %v841 = vadd.f32 %v839, %v840
      %v842 = vrot.slane %v841, 1
      %v843 = vadd.f32 %v841, %v842
      %v848 = vcombine.low %v804, %v817
      %v849 = vcombine.low %v830, %v843
      %v851 = vunpack.c.l.s4 1966171168
      %v852 = vunpack.c.0.s8 %v851
      %v853 = vlaneseq
      %v854 = vshrl.u32 %v853, 7
      %v855 = vsub.s32 %v852, %v854
      %v856 = vrot.slane %v848, %v855
      %v858 = vunpack.c.l.s4 1966171168
      %v859 = vunpack.c.0.s8 %v858
      %v860 = vlaneseq
      %v861 = vshrl.u32 %v860, 7
      %v862 = vsub.s32 %v859, %v861
      %v863 = vrot.slane %v849, %v862
      %v864 = vcombine.low %v856, %v863
      %v866 = vunpack.c.l.s4 1966171168
      %v867 = vunpack.c.0.s8 %v866
      %v868 = vlaneseq
      %v869 = vshrl.u32 %v868, 7
      %v870 = vsub.s32 %v867, %v869
      %v871 = vrot.slane %v864, %v870
      %v873 = vadd.f32 %v759, %v871
      %874 = vst.msk [vmem:[#allocation3] sm:$0xf] %vm757, %v873
      // Predicated region
      $region33: #{generator_forward.18} parent=27 // pred_check
        %p875 = pneg %p661
      $region34: #{generator_forward.18} parent=27 // pred_check_branch
        %877 = sbr.rel (%p875) target = $region36
      $region35: #{generator_forward.18} parent=27 // pred_region
        %v878 = vld [vmem:[#allocation2] sm:$0xf]
        %v879 = vld [vmem:[#allocation3] sm:$0xf]
        %v881 = vrot.slane %v878, 1
        %v883 = vadd.f32 %v878, %v881
        %v885 = vrot.slane %v879, 1
        %v887 = vadd.f32 %v879, %v885
        %v888 = vrot.slane %v878, 2
        %v890 = vadd.f32 %v883, %v888
        %v891 = vrot.slane %v879, 2
        %v893 = vadd.f32 %v887, %v891
        %v894 = vrot.slane %v878, 3
        %v896 = vadd.f32 %v890, %v894
        %v897 = vrot.slane %v879, 3
        %v899 = vadd.f32 %v893, %v897
        %v900 = vmul.f32 %v896, 0.00390625
        %v901 = vmul.f32 %v899, 0.00390625
        %v902 = vmul.f32 %v900, %v900
        %v903 = vsub.f32 %v901, %v902
        %v904 = vmax.f32 %v903, 0.0
        %v905 = vadd.f32 %v904, 1e-05
        %v906 = vrsqrt.pop %v905
        %s907 = smul.u32 0, 4
        %s908 = smul.addr %s907, 4
        %s909 = scalar_lea.vmem %s171, %s908
        %v910 = vld [vmem:[%s909] sm:$0xff]
        %v911 = vld [vmem:[%s909 + $0x8] sm:$0xff]
        %v912 = vld [vmem:[%s909 + $0x10] sm:$0xff]
        %v913 = vld [vmem:[%s909 + $0x18] sm:$0xff]
        %v914 = vld [vmem:[%s909 + $0x20] sm:$0xff]
        %v915 = vld [vmem:[%s909 + $0x28] sm:$0xff]
        %v916 = vld [vmem:[%s909 + $0x30] sm:$0xff]
        %v917 = vld [vmem:[%s909 + $0x38] sm:$0xff]
        %v918 = vld [vmem:[%s909 + $0x40] sm:$0xff]
        %v919 = vld [vmem:[%s909 + $0x48] sm:$0xff]
        %v920 = vld [vmem:[%s909 + $0x50] sm:$0xff]
        %v921 = vld [vmem:[%s909 + $0x58] sm:$0xff]
        %v922 = vld [vmem:[%s909 + $0x60] sm:$0xff]
        %v923 = vld [vmem:[%s909 + $0x68] sm:$0xff]
        %v924 = vld [vmem:[%s909 + $0x70] sm:$0xff]
        %v925 = vld [vmem:[%s909 + $0x78] sm:$0xff]
        %v926 = vunpack.c.l.bf16 %v910
        %v927 = vunpack.c.h.bf16 %v910
        %v928 = vunpack.c.l.bf16 %v911
        %v929 = vunpack.c.h.bf16 %v911
        %v930 = vunpack.c.l.bf16 %v912
        %v931 = vunpack.c.h.bf16 %v912
        %v932 = vunpack.c.l.bf16 %v913
        %v933 = vunpack.c.h.bf16 %v913
        %v934 = vunpack.c.l.bf16 %v914
        %v935 = vunpack.c.h.bf16 %v914
        %v936 = vunpack.c.l.bf16 %v915
        %v937 = vunpack.c.h.bf16 %v915
        %v938 = vunpack.c.l.bf16 %v916
        %v939 = vunpack.c.h.bf16 %v916
        %v940 = vunpack.c.l.bf16 %v917
        %v941 = vunpack.c.h.bf16 %v917
        %v942 = vunpack.c.l.bf16 %v918
        %v943 = vunpack.c.h.bf16 %v918
        %v944 = vunpack.c.l.bf16 %v919
        %v945 = vunpack.c.h.bf16 %v919
        %v946 = vunpack.c.l.bf16 %v920
        %v947 = vunpack.c.h.bf16 %v920
        %v948 = vunpack.c.l.bf16 %v921
        %v949 = vunpack.c.h.bf16 %v921
        %v950 = vunpack.c.l.bf16 %v922
        %v951 = vunpack.c.h.bf16 %v922
        %v952 = vunpack.c.l.bf16 %v923
        %v953 = vunpack.c.h.bf16 %v923
        %v954 = vunpack.c.l.bf16 %v924
        %v955 = vunpack.c.h.bf16 %v924
        %v956 = vunpack.c.l.bf16 %v925
        %v957 = vunpack.c.h.bf16 %v925
        %v958 = vlaneseq
        %v959 = vshrl.u32 %v958, 7
        %v960 = vsub.s32 0, %v959
        %v961 = vrot.slane %v900, %v960
        %v962 = vsub.f32 %v926, %v961
        %v963 = vsub.f32 %v927, %v961
        %v964 = vsub.f32 %v928, %v961
        %v965 = vsub.f32 %v929, %v961
        %v966 = vsub.f32 %v930, %v961
        %v967 = vsub.f32 %v931, %v961
        %v968 = vsub.f32 %v932, %v961
        %v969 = vsub.f32 %v933, %v961
        %v970 = vsub.f32 %v934, %v961
        %v971 = vsub.f32 %v935, %v961
        %v972 = vsub.f32 %v936, %v961
        %v973 = vsub.f32 %v937, %v961
        %v974 = vsub.f32 %v938, %v961
        %v975 = vsub.f32 %v939, %v961
        %v976 = vsub.f32 %v940, %v961
        %v977 = vsub.f32 %v941, %v961
        %v978 = vsub.f32 %v942, %v961
        %v979 = vsub.f32 %v943, %v961
        %v980 = vsub.f32 %v944, %v961
        %v981 = vsub.f32 %v945, %v961
        %v982 = vsub.f32 %v946, %v961
        %v983 = vsub.f32 %v947, %v961
        %v984 = vsub.f32 %v948, %v961
        %v985 = vsub.f32 %v949, %v961
        %v986 = vsub.f32 %v950, %v961
        %v987 = vsub.f32 %v951, %v961
        %v988 = vsub.f32 %v952, %v961
        %v989 = vsub.f32 %v953, %v961
        %v990 = vsub.f32 %v954, %v961
        %v991 = vsub.f32 %v955, %v961
        %v992 = vsub.f32 %v956, %v961
        %v993 = vsub.f32 %v957, %v961
        %v994 = vlaneseq
        %v995 = vshrl.u32 %v994, 7
        %v996 = vsub.s32 0, %v995
        %v997 = vrot.slane %v906, %v996
        %v998 = vmul.f32 %v962, %v997
        %v999 = vmul.f32 %v963, %v997
        %v1000 = vmul.f32 %v964, %v997
        %v1001 = vmul.f32 %v965, %v997
        %v1002 = vmul.f32 %v966, %v997
        %v1003 = vmul.f32 %v967, %v997
        %v1004 = vmul.f32 %v968, %v997
        %v1005 = vmul.f32 %v969, %v997
        %v1006 = vmul.f32 %v970, %v997
        %v1007 = vmul.f32 %v971, %v997
        %v1008 = vmul.f32 %v972, %v997
        %v1009 = vmul.f32 %v973, %v997
        %v1010 = vmul.f32 %v974, %v997
        %v1011 = vmul.f32 %v975, %v997
        %v1012 = vmul.f32 %v976, %v997
        %v1013 = vmul.f32 %v977, %v997
        %v1014 = vmul.f32 %v978, %v997
        %v1015 = vmul.f32 %v979, %v997
        %v1016 = vmul.f32 %v980, %v997
        %v1017 = vmul.f32 %v981, %v997
        %v1018 = vmul.f32 %v982, %v997
        %v1019 = vmul.f32 %v983, %v997
        %v1020 = vmul.f32 %v984, %v997
        %v1021 = vmul.f32 %v985, %v997
        %v1022 = vmul.f32 %v986, %v997
        %v1023 = vmul.f32 %v987, %v997
        %v1024 = vmul.f32 %v988, %v997
        %v1025 = vmul.f32 %v989, %v997
        %v1026 = vmul.f32 %v990, %v997
        %v1027 = vmul.f32 %v991, %v997
        %v1028 = vmul.f32 %v992, %v997
        %v1029 = vmul.f32 %v993, %v997
        %v1030 = vmax.f32 %v998, 0.0
        %v1031 = vmax.f32 %v999, 0.0
        %v1032 = vmax.f32 %v1000, 0.0
        %v1033 = vmax.f32 %v1001, 0.0
        %v1034 = vmax.f32 %v1002, 0.0
        %v1035 = vmax.f32 %v1003, 0.0
        %v1036 = vmax.f32 %v1004, 0.0
        %v1037 = vmax.f32 %v1005, 0.0
        %v1038 = vmax.f32 %v1006, 0.0
        %v1039 = vmax.f32 %v1007, 0.0
        %v1040 = vmax.f32 %v1008, 0.0
        %v1041 = vmax.f32 %v1009, 0.0
        %v1042 = vmax.f32 %v1010, 0.0
        %v1043 = vmax.f32 %v1011, 0.0
        %v1044 = vmax.f32 %v1012, 0.0
        %v1045 = vmax.f32 %v1013, 0.0
        %v1046 = vmax.f32 %v1014, 0.0
        %v1047 = vmax.f32 %v1015, 0.0
        %v1048 = vmax.f32 %v1016, 0.0
        %v1049 = vmax.f32 %v1017, 0.0
        %v1050 = vmax.f32 %v1018, 0.0
        %v1051 = vmax.f32 %v1019, 0.0
        %v1052 = vmax.f32 %v1020, 0.0
        %v1053 = vmax.f32 %v1021, 0.0
        %v1054 = vmax.f32 %v1022, 0.0
        %v1055 = vmax.f32 %v1023, 0.0
        %v1056 = vmax.f32 %v1024, 0.0
        %v1057 = vmax.f32 %v1025, 0.0
        %v1058 = vmax.f32 %v1026, 0.0
        %v1059 = vmax.f32 %v1027, 0.0
        %v1060 = vmax.f32 %v1028, 0.0
        %v1061 = vmax.f32 %v1029, 0.0
        %v1062 = vpack.c.bf16 %v1034, %v1030
        %v1063 = vpack.c.bf16 %v1035, %v1031
        %v1064 = vpack.c.bf16 %v1036, %v1032
        %v1065 = vpack.c.bf16 %v1037, %v1033
        %v1066 = vpack.c.bf16 %v1042, %v1038
        %v1067 = vpack.c.bf16 %v1043, %v1039
        %v1068 = vpack.c.bf16 %v1044, %v1040
        %v1069 = vpack.c.bf16 %v1045, %v1041
        %v1070 = vpack.c.bf16 %v1050, %v1046
        %v1071 = vpack.c.bf16 %v1051, %v1047
        %v1072 = vpack.c.bf16 %v1052, %v1048
        %v1073 = vpack.c.bf16 %v1053, %v1049
        %v1074 = vpack.c.bf16 %v1058, %v1054
        %v1075 = vpack.c.bf16 %v1059, %v1055
        %v1076 = vpack.c.bf16 %v1060, %v1056
        %v1077 = vpack.c.bf16 %v1061, %v1057
        %v1094 = vunpack.c.l.b16 %v1062
        %v1095 = vunpack.c.l.b16 %v1063
        %v1096 = vunpack.c.l.b16 %v1064
        %v1097 = vunpack.c.l.b16 %v1065
        %v1098 = vunpack.c.h.b16 %v1062
        %v1099 = vunpack.c.h.b16 %v1063
        %v1100 = vunpack.c.h.b16 %v1064
        %v1101 = vunpack.c.h.b16 %v1065
        %v1102 = vunpack.c.l.b16 %v1066
        %v1103 = vunpack.c.l.b16 %v1067
        %v1104 = vunpack.c.l.b16 %v1068
        %v1105 = vunpack.c.l.b16 %v1069
        %v1106 = vunpack.c.h.b16 %v1066
        %v1107 = vunpack.c.h.b16 %v1067
        %v1108 = vunpack.c.h.b16 %v1068
        %v1109 = vunpack.c.h.b16 %v1069
        %v1110 = vunpack.c.l.b16 %v1070
        %v1111 = vunpack.c.l.b16 %v1071
        %v1112 = vunpack.c.l.b16 %v1072
        %v1113 = vunpack.c.l.b16 %v1073
        %v1114 = vunpack.c.h.b16 %v1070
        %v1115 = vunpack.c.h.b16 %v1071
        %v1116 = vunpack.c.h.b16 %v1072
        %v1117 = vunpack.c.h.b16 %v1073
        %v1118 = vunpack.c.l.b16 %v1074
        %v1119 = vunpack.c.l.b16 %v1075
        %v1120 = vunpack.c.l.b16 %v1076
        %v1121 = vunpack.c.l.b16 %v1077
        %v1122 = vunpack.c.h.b16 %v1074
        %v1123 = vunpack.c.h.b16 %v1075
        %v1124 = vunpack.c.h.b16 %v1076
        %v1125 = vunpack.c.h.b16 %v1077
        %v1126 = vpack.c.b16 %v1095, %v1094
        %v1127 = vpack.c.b16 %v1097, %v1096
        %v1128 = vpack.c.b16 %v1099, %v1098
        %v1129 = vpack.c.b16 %v1101, %v1100
        %v1130 = vpack.c.b16 %v1103, %v1102
        %v1131 = vpack.c.b16 %v1105, %v1104
        %v1132 = vpack.c.b16 %v1107, %v1106
        %v1133 = vpack.c.b16 %v1109, %v1108
        %v1134 = vpack.c.b16 %v1111, %v1110
        %v1135 = vpack.c.b16 %v1113, %v1112
        %v1136 = vpack.c.b16 %v1115, %v1114
        %v1137 = vpack.c.b16 %v1117, %v1116
        %v1138 = vpack.c.b16 %v1119, %v1118
        %v1139 = vpack.c.b16 %v1121, %v1120
        %v1140 = vpack.c.b16 %v1123, %v1122
        %v1141 = vpack.c.b16 %v1125, %v1124
        %1158 = vst [vmem:[%s909] sm:$0xff] %v1126
        %1159 = vst [vmem:[%s909 + $0x8] sm:$0xff] %v1127
        %1160 = vst [vmem:[%s909 + $0x10] sm:$0xff] %v1128
        %1161 = vst [vmem:[%s909 + $0x18] sm:$0xff] %v1129
        %1162 = vst [vmem:[%s909 + $0x20] sm:$0xff] %v1130
        %1163 = vst [vmem:[%s909 + $0x28] sm:$0xff] %v1131
        %1164 = vst [vmem:[%s909 + $0x30] sm:$0xff] %v1132
        %1165 = vst [vmem:[%s909 + $0x38] sm:$0xff] %v1133
        %1166 = vst [vmem:[%s909 + $0x40] sm:$0xff] %v1134
        %1167 = vst [vmem:[%s909 + $0x48] sm:$0xff] %v1135
        %1168 = vst [vmem:[%s909 + $0x50] sm:$0xff] %v1136
        %1169 = vst [vmem:[%s909 + $0x58] sm:$0xff] %v1137
        %1170 = vst [vmem:[%s909 + $0x60] sm:$0xff] %v1138
        %1171 = vst [vmem:[%s909 + $0x68] sm:$0xff] %v1139
        %1172 = vst [vmem:[%s909 + $0x70] sm:$0xff] %v1140
        %1173 = vst [vmem:[%s909 + $0x78] sm:$0xff] %v1141
      $region36: #{generator_forward.18} parent=27 // pred_fallthru
        _
      %p1174 = scmp.lt.s32.totalorder %s17, 1
      %s1175 = scalar_select %p1174, %s17, 1
      %s1176 = smul.addr %s1175, 32
      %s1177 = smul.addr %s1176, 4
      %s1178 = scalar_lea.vmem %s2, %s1177
      // Predicated region
      $region37: #{generator_forward.18} parent=27 // pred_check
        %p1179 = pneg %p92
      $region38: #{generator_forward.18} parent=27 // pred_check_branch
        %1181 = sbr.rel (%p1179) target = $region40
      $region39: #{generator_forward.18} parent=27 // pred_region
        _
      $region40: #{generator_forward.18} parent=27 // pred_fallthru
        _
    $region28: #{generator_forward.18} parent=5 // pred_fallthru
      _
    %p1182 = scmp.le.s32.totalorder 2, %s8
    // Predicated region
    $region41: #{generator_forward.18} parent=5 // pred_check
      %p1183 = pneg %p1182
    $region42: #{generator_forward.18} parent=5 // pred_check_branch
      %1185 = sbr.rel (%p1183) target = $region44
    $region43: #{generator_forward.18} parent=5 // pred_region
      %s1186 = ssub.s32 %s8, 2
      // Predicated region
      $region45: #{generator_forward.18} parent=43 // pred_check
        %p1187 = pneg %p98
      $region46: #{generator_forward.18} parent=43 // pred_check_branch
        %1189 = sbr.rel (%p1187) target = $region48
      $region47: #{generator_forward.18} parent=43 // pred_region
        %p1190 = scmp.lt.s32.totalorder %s19, 1
        %s1191 = scalar_select %p1190, %s19, 1
        %s1192 = smul.addr %s1191, 32
        %s1193 = smul.addr %s1192, 4
        %s1194 = scalar_lea.vmem %s2, %s1193
      $region48: #{generator_forward.18} parent=43 // pred_fallthru
        _
    $region44: #{generator_forward.18} parent=5 // pred_fallthru
      _
  $region6: #{generator_forward.18} parent=0 // loop_footer
    %s12 = sadd.s32 1, %s8
  $region7: #{generator_forward.18} parent=0 // loop_footer_branch
    %7 = sbr.rel target = $region3
  $region8: #{generator_forward.18} parent=0 // loop_exit
    _

// kernel: generator_forward.19
$region0: #{generator_forward.19}
  #allocation0 [shape = 'u32[]', space=smem, size = 0x4, offset = 0x4, fixed_abs, tag = 'smem constant byte address 0x4 - core index']
  #allocation1 [shape = 'u32[144,128]{1,0:T(1,128)}', space=vmem, size = 0x12000, scoped, tag = 'internal scratch']
  %s0 = inlined_call_operand.vmem [shape: bf16[2,256,512], index: 0, kind: input, shape index: {}]
  %s1 = inlined_call_operand.vmem [shape: bf16[512,128], index: 1, kind: input, shape index: {}]
  %s2 = inlined_call_operand.vmem [shape: f32[1,128], index: 2, kind: input, shape index: {}]
  %s3 = inlined_call_operand.vmem [shape: f32[2,256,128], index: 3, kind: output, shape index: {}]
  %s4 = sld [smem:[#allocation0]]
  $region45: #{generator_forward.19} parent=0
    _
  %s6 = ssub.s32 1, %s4
  %s7 = scalar_select 0, %s6, %s4
  loop: start=0, step=1, limit=4
  $region2: #{generator_forward.19} parent=0 // loop_pre_header
    _
  $region3: #{generator_forward.19} parent=0 // loop_header
    %s9 = sphi 0, %s13
    %p10 = scmp.ge.s32.totalorder %s9, 4
    %s16 = sphi 0, %s28
    %s17 = sphi 0, %s24
    %s18 = sphi 0, %s16
    %s19 = sphi 0, %s17
    %s20 = sphi 0, %s18
    %s21 = sphi 0, %s19
    %s33 = sphi 0, %s35
    %s36 = sphi 0, %s33
    %s37 = sphi 0, %s36
    %s53 = sphi 0, %s37
    %s57 = sphi 0, %s57
    %s59 = sphi 0, %s57
    %s60 = sphi 0, %s59
    %s74 = sphi 0, %s60
    %s78 = sphi 0, %s78
    %s80 = sphi 0, %s78
    %s81 = sphi 0, %s80
    %s95 = sphi 0, %s81
    %s103 = sphi 0, %s105
    %s106 = sphi 0, %s103
    %s107 = sphi 0, %s106
    %s123 = sphi 0, %s107
  $region4: #{generator_forward.19} parent=0 // loop_header_branch
    %12 = sbr.rel (%p10) target = $region8
  $region5: #{generator_forward.19} parent=0 // loop_body
    %s14 = ssub.s32 %s9, 1
    %s15 = ssub.s32 %s9, 2
    %s22 = sadd.s32 1, %s17
    %p23 = scmp.ge.s32.totalorder %s22, 1
    %s24 = scalar_select %p23, 0, %s22
    %s25 = sadd.s32 1, %s16
    %s26 = scalar_select %p23, %s25, %s16
    %p27 = scmp.ge.s32.totalorder %s26, 2
    %s28 = scalar_select %p27, 0, %s26
    %s29 = ssub.s32 %s16, %s28
    %s30 = ssub.s32 %s17, %s24
    %s31 = sor.u32 %s29, %s30
    %p32 = scmp.eq.s32.totalorder %s31, 0
    %s34 = sadd.s32 %s33, 1
    %s35 = scalar_select %p32, %s33, %s34
    %p38 = pneg %p32
    %p39 = scmp.eq.s32.totalorder %s9, 1
    %p40 = por %p38, %p39
    %p41 = scmp.ne.s32.totalorder %s33, %s36
    %p42 = scmp.eq.s32.totalorder %s9, 0
    %p43 = por %p41, %p42
    %p44 = scmp.ne.s32.totalorder %s33, %s36
    %p45 = scmp.eq.s32.totalorder %s14, 1
    %p46 = por %p44, %p45
    %p47 = scmp.ne.s32.totalorder %s36, %s37
    %p48 = scmp.eq.s32.totalorder %s14, 0
    %p49 = por %p47, %p48
    %p50 = scmp.ne.s32.totalorder %s36, %s37
    %p51 = scmp.eq.s32.totalorder %s15, 1
    %p52 = por %p50, %p51
    %p54 = scmp.ne.s32.totalorder %s37, %s53
    %p55 = scmp.eq.s32.totalorder %s15, 0
    %p56 = por %p54, %p55
    %s58 = sadd.s32 %s57, 1
    %p61 = scmp.eq.s32.totalorder %s9, 1
    %p62 = scmp.ne.s32.totalorder %s57, %s59
    %p63 = scmp.eq.s32.totalorder %s9, 0
    %p64 = por %p62, %p63
    %p65 = scmp.ne.s32.totalorder %s57, %s59
    %p66 = scmp.eq.s32.totalorder %s14, 1
    %p67 = por %p65, %p66
    %p68 = scmp.ne.s32.totalorder %s59, %s60
    %p69 = scmp.eq.s32.totalorder %s14, 0
    %p70 = por %p68, %p69
    %p71 = scmp.ne.s32.totalorder %s59, %s60
    %p72 = scmp.eq.s32.totalorder %s15, 1
    %p73 = por %p71, %p72
    %p75 = scmp.ne.s32.totalorder %s60, %s74
    %p76 = scmp.eq.s32.totalorder %s15, 0
    %p77 = por %p75, %p76
    %s79 = sadd.s32 %s78, 1
    %p82 = scmp.eq.s32.totalorder %s9, 1
    %p83 = scmp.ne.s32.totalorder %s78, %s80
    %p84 = scmp.eq.s32.totalorder %s9, 0
    %p85 = por %p83, %p84
    %p86 = scmp.ne.s32.totalorder %s78, %s80
    %p87 = scmp.eq.s32.totalorder %s14, 1
    %p88 = por %p86, %p87
    %p89 = scmp.ne.s32.totalorder %s80, %s81
    %p90 = scmp.eq.s32.totalorder %s14, 0
    %p91 = por %p89, %p90
    %p92 = scmp.ne.s32.totalorder %s80, %s81
    %p93 = scmp.eq.s32.totalorder %s15, 1
    %p94 = por %p92, %p93
    %p96 = scmp.ne.s32.totalorder %s81, %s95
    %p97 = scmp.eq.s32.totalorder %s15, 0
    %p98 = por %p96, %p97
    %s99 = ssub.s32 %s16, %s28
    %s100 = ssub.s32 %s17, %s24
    %s101 = sor.u32 %s99, %s100
    %p102 = scmp.eq.s32.totalorder %s101, 0
    %s104 = sadd.s32 %s103, 1
    %s105 = scalar_select %p102, %s103, %s104
    %p108 = pneg %p102
    %p109 = scmp.eq.s32.totalorder %s9, 1
    %p110 = por %p108, %p109
    %p111 = scmp.ne.s32.totalorder %s103, %s106
    %p112 = scmp.eq.s32.totalorder %s9, 0
    %p113 = por %p111, %p112
    %p114 = scmp.ne.s32.totalorder %s103, %s106
    %p115 = scmp.eq.s32.totalorder %s14, 1
    %p116 = por %p114, %p115
    %p117 = scmp.ne.s32.totalorder %s106, %s107
    %p118 = scmp.eq.s32.totalorder %s14, 0
    %p119 = por %p117, %p118
    %p120 = scmp.ne.s32.totalorder %s106, %s107
    %p121 = scmp.eq.s32.totalorder %s15, 1
    %p122 = por %p120, %p121
    %p124 = scmp.ne.s32.totalorder %s107, %s123
    %p125 = scmp.eq.s32.totalorder %s15, 0
    %p126 = por %p124, %p125
    %p127 = scmp.le.s32.totalorder 1, %s9
    %p128 = scmp.lt.s32.totalorder %s9, 3
    %p129 = pnand %p127, %p128
    %p130 = pneg %p129
    // Predicated region
    $region9: #{generator_forward.19} parent=5 // pred_check
      _
    $region10: #{generator_forward.19} parent=5 // pred_check_branch
      %132 = sbr.rel (%p129) target = $region12
    $region11: #{generator_forward.19} parent=5 // pred_region
      %s133 = ssub.s32 %s9, 1
      // Predicated region
      $region13: #{generator_forward.19} parent=11 // pred_check
        %p134 = pneg %p70
      $region14: #{generator_forward.19} parent=11 // pred_check_branch
        %136 = sbr.rel (%p134) target = $region16
      $region15: #{generator_forward.19} parent=11 // pred_region
        _
      $region16: #{generator_forward.19} parent=11 // pred_fallthru
        _
      // Predicated region
      $region17: #{generator_forward.19} parent=11 // pred_check
        %p137 = pneg %p91
      $region18: #{generator_forward.19} parent=11 // pred_check_branch
        %139 = sbr.rel (%p137) target = $region20
      $region19: #{generator_forward.19} parent=11 // pred_region
        _
      $region20: #{generator_forward.19} parent=11 // pred_fallthru
        _
    $region12: #{generator_forward.19} parent=5 // pred_fallthru
      _
    %p140 = scmp.lt.s32.totalorder %s9, 2
    // Predicated region
    $region21: #{generator_forward.19} parent=5 // pred_check
      %p141 = pneg %p140
    $region22: #{generator_forward.19} parent=5 // pred_check_branch
      %143 = sbr.rel (%p141) target = $region24
    $region23: #{generator_forward.19} parent=5 // pred_region
      // Predicated region
      $region25: #{generator_forward.19} parent=23 // pred_check
        %p144 = pneg %p43
      $region26: #{generator_forward.19} parent=23 // pred_check_branch
        %146 = sbr.rel (%p144) target = $region28
      $region27: #{generator_forward.19} parent=23 // pred_region
        %s147 = smul.u32 32, %s17
        %p148 = scmp.lt.s32.totalorder %s16, 1
        %s149 = scalar_select %p148, %s16, 1
        %p150 = scmp.lt.s32.totalorder %s147, 31
        %s151 = scalar_select %p150, %s147, 31
        %s152 = smul.addr %s151, 4
        %s153 = smul.addr %s149, 128
        %s154 = sadd.s32 %s152, %s153
        %s155 = smul.addr %s154, 4
        %s156 = scalar_lea.vmem %s0, %s155
        %s157 = smul.u32 32, %s17
      $region28: #{generator_forward.19} parent=23 // pred_fallthru
        _
    $region24: #{generator_forward.19} parent=5 // pred_fallthru
      _
    %p158 = scmp.le.s32.totalorder 1, %s9
    %p159 = scmp.lt.s32.totalorder %s9, 3
    %p160 = pnand %p158, %p159
    %p161 = pneg %p160
    // Predicated region
    $region29: #{generator_forward.19} parent=5 // pred_check
      _
    $region30: #{generator_forward.19} parent=5 // pred_check_branch
      %163 = sbr.rel (%p160) target = $region32
    $region31: #{generator_forward.19} parent=5 // pred_region
      %s164 = ssub.s32 %s9, 1
      %s165 = smul.u32 32, %s19
      %p166 = scmp.lt.s32.totalorder %s18, 1
      %s167 = scalar_select %p166, %s18, 1
      %p168 = scmp.lt.s32.totalorder %s165, 31
      %s169 = scalar_select %p168, %s165, 31
      %s170 = smul.addr %s169, 4
      %s171 = smul.addr %s167, 128
      %s172 = sadd.s32 %s170, %s171
      %s173 = smul.addr %s172, 4
      %s174 = scalar_lea.vmem %s0, %s173
      %p175 = pneg %p49
      %p176 = pneg %p46
      %p177 = pneg %p70
      %p178 = pneg %p67
      %p179 = pneg %p91
      %p180 = pneg %p88
      %p181 = pneg %p119
      %p182 = pneg %p116
      %s183 = smul.u32 32, %s19
      %p184 = scmp.lt.s32.totalorder %s18, 1
      %s185 = scalar_select %p184, %s18, 1
      %p186 = scmp.lt.s32.totalorder %s183, 31
      %s187 = scalar_select %p186, %s183, 31
      %s188 = smul.addr %s185, 32
      %s189 = sadd.s32 %s187, %s188
      %s190 = smul.addr %s189, 8
      %s191 = scalar_lea.vmem %s3, %s190
      %s192 = smul.u32 32, %s19
      %p193 = scmp.lt.s32.totalorder %s18, 1
      %s194 = scalar_select %p193, %s18, 1
      %p195 = scmp.lt.s32.totalorder %s192, 31
      %s196 = scalar_select %p195, %s192, 31
      %s197 = smul.addr %s196, 4
      %s198 = smul.addr %s194, 128
      %s199 = sadd.s32 %s197, %s198
      %s200 = smul.addr %s199, 4
      %s201 = scalar_lea.vmem %s0, %s200
      %s202 = smul.u32 32, %s19
      %s203 = smul.u32 32, %s19
      %p204 = scmp.lt.s32.totalorder %s18, 1
      %s205 = scalar_select %p204, %s18, 1
      %p206 = scmp.lt.s32.totalorder %s203, 31
      %s207 = scalar_select %p206, %s203, 31
      %s208 = smul.addr %s205, 32
      %s209 = sadd.s32 %s207, %s208
      %s210 = smul.addr %s209, 8
      %s211 = scalar_lea.vmem %s3, %s210
      %s212 = smul.u32 32, %s19
      %v214 = vld [vmem:[%s201] sm:$0xff]
      %v215 = vld [vmem:[%s201 + $0x8] sm:$0xff]
      %v216 = vld [vmem:[%s201 + $0x10] sm:$0xff]
      %v217 = vld [vmem:[%s201 + $0x18] sm:$0xff]
      %v218 = vld [vmem:[%s201 + $0x20] sm:$0xff]
      %v219 = vld [vmem:[%s201 + $0x28] sm:$0xff]
      %v220 = vld [vmem:[%s201 + $0x30] sm:$0xff]
      %v221 = vld [vmem:[%s201 + $0x38] sm:$0xff]
      %v222 = vld [vmem:[%s201 + $0x40] sm:$0xff]
      %v223 = vld [vmem:[%s201 + $0x48] sm:$0xff]
      %v224 = vld [vmem:[%s201 + $0x50] sm:$0xff]
      %v225 = vld [vmem:[%s201 + $0x58] sm:$0xff]
      %v226 = vld [vmem:[%s201 + $0x60] sm:$0xff]
      %v227 = vld [vmem:[%s201 + $0x68] sm:$0xff]
      %v228 = vld [vmem:[%s201 + $0x70] sm:$0xff]
      %v229 = vld [vmem:[%s201 + $0x78] sm:$0xff]
      %v230 = vld [vmem:[%s201 + $0x80] sm:$0xff]
      %v231 = vld [vmem:[%s201 + $0x88] sm:$0xff]
      %v232 = vld [vmem:[%s201 + $0x90] sm:$0xff]
      %v233 = vld [vmem:[%s201 + $0x98] sm:$0xff]
      %v234 = vld [vmem:[%s201 + $0xa0] sm:$0xff]
      %v235 = vld [vmem:[%s201 + $0xa8] sm:$0xff]
      %v236 = vld [vmem:[%s201 + $0xb0] sm:$0xff]
      %v237 = vld [vmem:[%s201 + $0xb8] sm:$0xff]
      %v238 = vld [vmem:[%s201 + $0xc0] sm:$0xff]
      %v239 = vld [vmem:[%s201 + $0xc8] sm:$0xff]
      %v240 = vld [vmem:[%s201 + $0xd0] sm:$0xff]
      %v241 = vld [vmem:[%s201 + $0xd8] sm:$0xff]
      %v242 = vld [vmem:[%s201 + $0xe0] sm:$0xff]
      %v243 = vld [vmem:[%s201 + $0xe8] sm:$0xff]
      %v244 = vld [vmem:[%s201 + $0xf0] sm:$0xff]
      %v245 = vld [vmem:[%s201 + $0xf8] sm:$0xff]
      %v246 = vld [vmem:[%s201 + $0x100] sm:$0xff]
      %v247 = vld [vmem:[%s201 + $0x108] sm:$0xff]
      %v248 = vld [vmem:[%s201 + $0x110] sm:$0xff]
      %v249 = vld [vmem:[%s201 + $0x118] sm:$0xff]
      %v250 = vld [vmem:[%s201 + $0x120] sm:$0xff]
      %v251 = vld [vmem:[%s201 + $0x128] sm:$0xff]
      %v252 = vld [vmem:[%s201 + $0x130] sm:$0xff]
      %v253 = vld [vmem:[%s201 + $0x138] sm:$0xff]
      %v254 = vld [vmem:[%s201 + $0x140] sm:$0xff]
      %v255 = vld [vmem:[%s201 + $0x148] sm:$0xff]
      %v256 = vld [vmem:[%s201 + $0x150] sm:$0xff]
      %v257 = vld [vmem:[%s201 + $0x158] sm:$0xff]
      %v258 = vld [vmem:[%s201 + $0x160] sm:$0xff]
      %v259 = vld [vmem:[%s201 + $0x168] sm:$0xff]
      %v260 = vld [vmem:[%s201 + $0x170] sm:$0xff]
      %v261 = vld [vmem:[%s201 + $0x178] sm:$0xff]
      %v262 = vld [vmem:[%s201 + $0x180] sm:$0xff]
      %v263 = vld [vmem:[%s201 + $0x188] sm:$0xff]
      %v264 = vld [vmem:[%s201 + $0x190] sm:$0xff]
      %v265 = vld [vmem:[%s201 + $0x198] sm:$0xff]
      %v266 = vld [vmem:[%s201 + $0x1a0] sm:$0xff]
      %v267 = vld [vmem:[%s201 + $0x1a8] sm:$0xff]
      %v268 = vld [vmem:[%s201 + $0x1b0] sm:$0xff]
      %v269 = vld [vmem:[%s201 + $0x1b8] sm:$0xff]
      %v270 = vld [vmem:[%s201 + $0x1c0] sm:$0xff]
      %v271 = vld [vmem:[%s201 + $0x1c8] sm:$0xff]
      %v272 = vld [vmem:[%s201 + $0x1d0] sm:$0xff]
      %v273 = vld [vmem:[%s201 + $0x1d8] sm:$0xff]
      %v274 = vld [vmem:[%s201 + $0x1e0] sm:$0xff]
      %v275 = vld [vmem:[%s201 + $0x1e8] sm:$0xff]
      %v276 = vld [vmem:[%s201 + $0x1f0] sm:$0xff]
      %v277 = vld [vmem:[%s201 + $0x1f8] sm:$0xff]
      %v278 = vld [vmem:[%s1] sm:$0xf]
      %v279 = vld [vmem:[%s1 + $0x4] sm:$0xf]
      %v280 = vld [vmem:[%s1 + $0x8] sm:$0xf]
      %v281 = vld [vmem:[%s1 + $0xc] sm:$0xf]
      %v282 = vld [vmem:[%s1 + $0x10] sm:$0xf]
      %v283 = vld [vmem:[%s1 + $0x14] sm:$0xf]
      %v284 = vld [vmem:[%s1 + $0x18] sm:$0xf]
      %v285 = vld [vmem:[%s1 + $0x1c] sm:$0xf]
      %v286 = vld [vmem:[%s1 + $0x20] sm:$0xf]
      %v287 = vld [vmem:[%s1 + $0x24] sm:$0xf]
      %v288 = vld [vmem:[%s1 + $0x28] sm:$0xf]
      %v289 = vld [vmem:[%s1 + $0x2c] sm:$0xf]
      %v290 = vld [vmem:[%s1 + $0x30] sm:$0xf]
      %v291 = vld [vmem:[%s1 + $0x34] sm:$0xf]
      %v292 = vld [vmem:[%s1 + $0x38] sm:$0xf]
      %v293 = vld [vmem:[%s1 + $0x3c] sm:$0xf]
      %v294 = vld [vmem:[%s1 + $0x40] sm:$0xf]
      %v295 = vld [vmem:[%s1 + $0x44] sm:$0xf]
      %v296 = vld [vmem:[%s1 + $0x48] sm:$0xf]
      %v297 = vld [vmem:[%s1 + $0x4c] sm:$0xf]
      %v298 = vld [vmem:[%s1 + $0x50] sm:$0xf]
      %v299 = vld [vmem:[%s1 + $0x54] sm:$0xf]
      %v300 = vld [vmem:[%s1 + $0x58] sm:$0xf]
      %v301 = vld [vmem:[%s1 + $0x5c] sm:$0xf]
      %v302 = vld [vmem:[%s1 + $0x60] sm:$0xf]
      %v303 = vld [vmem:[%s1 + $0x64] sm:$0xf]
      %v304 = vld [vmem:[%s1 + $0x68] sm:$0xf]
      %v305 = vld [vmem:[%s1 + $0x6c] sm:$0xf]
      %v306 = vld [vmem:[%s1 + $0x70] sm:$0xf]
      %v307 = vld [vmem:[%s1 + $0x74] sm:$0xf]
      %v308 = vld [vmem:[%s1 + $0x78] sm:$0xf]
      %v309 = vld [vmem:[%s1 + $0x7c] sm:$0xf]
      %v310 = vld [vmem:[%s1 + $0x80] sm:$0xf]
      %v311 = vld [vmem:[%s1 + $0x84] sm:$0xf]
      %v312 = vld [vmem:[%s1 + $0x88] sm:$0xf]
      %v313 = vld [vmem:[%s1 + $0x8c] sm:$0xf]
      %v314 = vld [vmem:[%s1 + $0x90] sm:$0xf]
      %v315 = vld [vmem:[%s1 + $0x94] sm:$0xf]
      %v316 = vld [vmem:[%s1 + $0x98] sm:$0xf]
      %v317 = vld [vmem:[%s1 + $0x9c] sm:$0xf]
      %v318 = vld [vmem:[%s1 + $0xa0] sm:$0xf]
      %v319 = vld [vmem:[%s1 + $0xa4] sm:$0xf]
      %v320 = vld [vmem:[%s1 + $0xa8] sm:$0xf]
      %v321 = vld [vmem:[%s1 + $0xac] sm:$0xf]
      %v322 = vld [vmem:[%s1 + $0xb0] sm:$0xf]
      %v323 = vld [vmem:[%s1 + $0xb4] sm:$0xf]
      %v324 = vld [vmem:[%s1 + $0xb8] sm:$0xf]
      %v325 = vld [vmem:[%s1 + $0xbc] sm:$0xf]
      %v326 = vld [vmem:[%s1 + $0xc0] sm:$0xf]
      %v327 = vld [vmem:[%s1 + $0xc4] sm:$0xf]
      %v328 = vld [vmem:[%s1 + $0xc8] sm:$0xf]
      %v329 = vld [vmem:[%s1 + $0xcc] sm:$0xf]
      %v330 = vld [vmem:[%s1 + $0xd0] sm:$0xf]
      %v331 = vld [vmem:[%s1 + $0xd4] sm:$0xf]
      %v332 = vld [vmem:[%s1 + $0xd8] sm:$0xf]
      %v333 = vld [vmem:[%s1 + $0xdc] sm:$0xf]
      %v334 = vld [vmem:[%s1 + $0xe0] sm:$0xf]
      %v335 = vld [vmem:[%s1 + $0xe4] sm:$0xf]
      %v336 = vld [vmem:[%s1 + $0xe8] sm:$0xf]
      %v337 = vld [vmem:[%s1 + $0xec] sm:$0xf]
      %v338 = vld [vmem:[%s1 + $0xf0] sm:$0xf]
      %v339 = vld [vmem:[%s1 + $0xf4] sm:$0xf]
      %v340 = vld [vmem:[%s1 + $0xf8] sm:$0xf]
      %v341 = vld [vmem:[%s1 + $0xfc] sm:$0xf]
      %v342 = vld [vmem:[%s2] sm:$0x1]
      %v344 = vlaneseq
      %v345 = vshrl.u32 %v344, 7
      %v346 = vsub.s32 0, %v345
      %v347 = vrot.slane %v342, %v346
      %v413 = vunpack.c.l.b16 %v214
      %v414 = vunpack.c.h.b16 %v214
      %v415 = vunpack.c.l.b16 %v215
      %v416 = vunpack.c.h.b16 %v215
      %v417 = vunpack.c.l.b16 %v216
      %v418 = vunpack.c.h.b16 %v216
      %v419 = vunpack.c.l.b16 %v217
      %v420 = vunpack.c.h.b16 %v217
      %v421 = vunpack.c.l.b16 %v218
      %v422 = vunpack.c.h.b16 %v218
      %v423 = vunpack.c.l.b16 %v219
      %v424 = vunpack.c.h.b16 %v219
      %v425 = vunpack.c.l.b16 %v220
      %v426 = vunpack.c.h.b16 %v220
      %v427 = vunpack.c.l.b16 %v221
      %v428 = vunpack.c.h.b16 %v221
      %v429 = vunpack.c.l.b16 %v222
      %v430 = vunpack.c.h.b16 %v222
      %v431 = vunpack.c.l.b16 %v223
      %v432 = vunpack.c.h.b16 %v223
      %v433 = vunpack.c.l.b16 %v224
      %v434 = vunpack.c.h.b16 %v224
      %v435 = vunpack.c.l.b16 %v225
      %v436 = vunpack.c.h.b16 %v225
      %v437 = vunpack.c.l.b16 %v226
      %v438 = vunpack.c.h.b16 %v226
      %v439 = vunpack.c.l.b16 %v227
      %v440 = vunpack.c.h.b16 %v227
      %v441 = vunpack.c.l.b16 %v228
      %v442 = vunpack.c.h.b16 %v228
      %v443 = vunpack.c.l.b16 %v229
      %v444 = vunpack.c.h.b16 %v229
      %v445 = vunpack.c.l.b16 %v230
      %v446 = vunpack.c.h.b16 %v230
      %v447 = vunpack.c.l.b16 %v231
      %v448 = vunpack.c.h.b16 %v231
      %v449 = vunpack.c.l.b16 %v232
      %v450 = vunpack.c.h.b16 %v232
      %v451 = vunpack.c.l.b16 %v233
      %v452 = vunpack.c.h.b16 %v233
      %v453 = vunpack.c.l.b16 %v234
      %v454 = vunpack.c.h.b16 %v234
      %v455 = vunpack.c.l.b16 %v235
      %v456 = vunpack.c.h.b16 %v235
      %v457 = vunpack.c.l.b16 %v236
      %v458 = vunpack.c.h.b16 %v236
      %v459 = vunpack.c.l.b16 %v237
      %v460 = vunpack.c.h.b16 %v237
      %v461 = vunpack.c.l.b16 %v238
      %v462 = vunpack.c.h.b16 %v238
      %v463 = vunpack.c.l.b16 %v239
      %v464 = vunpack.c.h.b16 %v239
      %v465 = vunpack.c.l.b16 %v240
      %v466 = vunpack.c.h.b16 %v240
      %v467 = vunpack.c.l.b16 %v241
      %v468 = vunpack.c.h.b16 %v241
      %v469 = vunpack.c.l.b16 %v242
      %v470 = vunpack.c.h.b16 %v242
      %v471 = vunpack.c.l.b16 %v243
      %v472 = vunpack.c.h.b16 %v243
      %v473 = vunpack.c.l.b16 %v244
      %v474 = vunpack.c.h.b16 %v244
      %v475 = vunpack.c.l.b16 %v245
      %v476 = vunpack.c.h.b16 %v245
      %v477 = vunpack.c.l.b16 %v246
      %v478 = vunpack.c.h.b16 %v246
      %v479 = vunpack.c.l.b16 %v247
      %v480 = vunpack.c.h.b16 %v247
      %v481 = vunpack.c.l.b16 %v248
      %v482 = vunpack.c.h.b16 %v248
      %v483 = vunpack.c.l.b16 %v249
      %v484 = vunpack.c.h.b16 %v249
      %v485 = vunpack.c.l.b16 %v250
      %v486 = vunpack.c.h.b16 %v250
      %v487 = vunpack.c.l.b16 %v251
      %v488 = vunpack.c.h.b16 %v251
      %v489 = vunpack.c.l.b16 %v252
      %v490 = vunpack.c.h.b16 %v252
      %v491 = vunpack.c.l.b16 %v253
      %v492 = vunpack.c.h.b16 %v253
      %v493 = vunpack.c.l.b16 %v254
      %v494 = vunpack.c.h.b16 %v254
      %v495 = vunpack.c.l.b16 %v255
      %v496 = vunpack.c.h.b16 %v255
      %v497 = vunpack.c.l.b16 %v256
      %v498 = vunpack.c.h.b16 %v256
      %v499 = vunpack.c.l.b16 %v257
      %v500 = vunpack.c.h.b16 %v257
      %v501 = vunpack.c.l.b16 %v258
      %v502 = vunpack.c.h.b16 %v258
      %v503 = vunpack.c.l.b16 %v259
      %v504 = vunpack.c.h.b16 %v259
      %v505 = vunpack.c.l.b16 %v260
      %v506 = vunpack.c.h.b16 %v260
      %v507 = vunpack.c.l.b16 %v261
      %v508 = vunpack.c.h.b16 %v261
      %v509 = vunpack.c.l.b16 %v262
      %v510 = vunpack.c.h.b16 %v262
      %v511 = vunpack.c.l.b16 %v263
      %v512 = vunpack.c.h.b16 %v263
      %v513 = vunpack.c.l.b16 %v264
      %v514 = vunpack.c.h.b16 %v264
      %v515 = vunpack.c.l.b16 %v265
      %v516 = vunpack.c.h.b16 %v265
      %v517 = vunpack.c.l.b16 %v266
      %v518 = vunpack.c.h.b16 %v266
      %v519 = vunpack.c.l.b16 %v267
      %v520 = vunpack.c.h.b16 %v267
      %v521 = vunpack.c.l.b16 %v268
      %v522 = vunpack.c.h.b16 %v268
      %v523 = vunpack.c.l.b16 %v269
      %v524 = vunpack.c.h.b16 %v269
      %v525 = vunpack.c.l.b16 %v270
      %v526 = vunpack.c.h.b16 %v270
      %v527 = vunpack.c.l.b16 %v271
      %v528 = vunpack.c.h.b16 %v271
      %v529 = vunpack.c.l.b16 %v272
      %v530 = vunpack.c.h.b16 %v272
      %v531 = vunpack.c.l.b16 %v273
      %v532 = vunpack.c.h.b16 %v273
      %v533 = vunpack.c.l.b16 %v274
      %v534 = vunpack.c.h.b16 %v274
      %v535 = vunpack.c.l.b16 %v275
      %v536 = vunpack.c.h.b16 %v275
      %v537 = vunpack.c.l.b16 %v276
      %v538 = vunpack.c.h.b16 %v276
      %v539 = vunpack.c.l.b16 %v277
      %v540 = vunpack.c.h.b16 %v277
      %v541 = vpack.c.b16 %v417, %v413
      %v542 = vpack.c.b16 %v418, %v414
      %v543 = vpack.c.b16 %v419, %v415
      %v544 = vpack.c.b16 %v420, %v416
      %v545 = vpack.c.b16 %v425, %v421
      %v546 = vpack.c.b16 %v426, %v422
      %v547 = vpack.c.b16 %v427, %v423
      %v548 = vpack.c.b16 %v428, %v424
      %v549 = vpack.c.b16 %v433, %v429
      %v550 = vpack.c.b16 %v434, %v430
      %v551 = vpack.c.b16 %v435, %v431
      %v552 = vpack.c.b16 %v436, %v432
      %v553 = vpack.c.b16 %v441, %v437
      %v554 = vpack.c.b16 %v442, %v438
      %v555 = vpack.c.b16 %v443, %v439
      %v556 = vpack.c.b16 %v444, %v440
      %v557 = vpack.c.b16 %v449, %v445
      %v558 = vpack.c.b16 %v450, %v446
      %v559 = vpack.c.b16 %v451, %v447
      %v560 = vpack.c.b16 %v452, %v448
      %v561 = vpack.c.b16 %v457, %v453
      %v562 = vpack.c.b16 %v458, %v454
      %v563 = vpack.c.b16 %v459, %v455
      %v564 = vpack.c.b16 %v460, %v456
      %v565 = vpack.c.b16 %v465, %v461
      %v566 = vpack.c.b16 %v466, %v462
      %v567 = vpack.c.b16 %v467, %v463
      %v568 = vpack.c.b16 %v468, %v464
      %v569 = vpack.c.b16 %v473, %v469
      %v570 = vpack.c.b16 %v474, %v470
      %v571 = vpack.c.b16 %v475, %v471
      %v572 = vpack.c.b16 %v476, %v472
      %v573 = vpack.c.b16 %v481, %v477
      %v574 = vpack.c.b16 %v482, %v478
      %v575 = vpack.c.b16 %v483, %v479
      %v576 = vpack.c.b16 %v484, %v480
      %v577 = vpack.c.b16 %v489, %v485
      %v578 = vpack.c.b16 %v490, %v486
      %v579 = vpack.c.b16 %v491, %v487
      %v580 = vpack.c.b16 %v492, %v488
      %v581 = vpack.c.b16 %v497, %v493
      %v582 = vpack.c.b16 %v498, %v494
      %v583 = vpack.c.b16 %v499, %v495
      %v584 = vpack.c.b16 %v500, %v496
      %v585 = vpack.c.b16 %v505, %v501
      %v586 = vpack.c.b16 %v506, %v502
      %v587 = vpack.c.b16 %v507, %v503
      %v588 = vpack.c.b16 %v508, %v504
      %v589 = vpack.c.b16 %v513, %v509
      %v590 = vpack.c.b16 %v514, %v510
      %v591 = vpack.c.b16 %v515, %v511
      %v592 = vpack.c.b16 %v516, %v512
      %v593 = vpack.c.b16 %v521, %v517
      %v594 = vpack.c.b16 %v522, %v518
      %v595 = vpack.c.b16 %v523, %v519
      %v596 = vpack.c.b16 %v524, %v520
      %v597 = vpack.c.b16 %v529, %v525
      %v598 = vpack.c.b16 %v530, %v526
      %v599 = vpack.c.b16 %v531, %v527
      %v600 = vpack.c.b16 %v532, %v528
      %v601 = vpack.c.b16 %v537, %v533
      %v602 = vpack.c.b16 %v538, %v534
      %v603 = vpack.c.b16 %v539, %v535
      %v604 = vpack.c.b16 %v540, %v536
      %v733 = vunpack.c.l.b16 %v278
      %v734 = vunpack.c.l.b16 %v279
      %v735 = vunpack.c.l.b16 %v280
      %v736 = vunpack.c.l.b16 %v281
      %v737 = vunpack.c.l.b16 %v282
      %v738 = vunpack.c.l.b16 %v283
      %v739 = vunpack.c.l.b16 %v284
      %v740 = vunpack.c.l.b16 %v285
      %v741 = vunpack.c.l.b16 %v286
      %v742 = vunpack.c.l.b16 %v287
      %v743 = vunpack.c.l.b16 %v288
      %v744 = vunpack.c.l.b16 %v289
      %v745 = vunpack.c.l.b16 %v290
      %v746 = vunpack.c.l.b16 %v291
      %v747 = vunpack.c.l.b16 %v292
      %v748 = vunpack.c.l.b16 %v293
      %v749 = vunpack.c.l.b16 %v294
      %v750 = vunpack.c.l.b16 %v295
      %v751 = vunpack.c.l.b16 %v296
      %v752 = vunpack.c.l.b16 %v297
      %v753 = vunpack.c.l.b16 %v298
      %v754 = vunpack.c.l.b16 %v299
      %v755 = vunpack.c.l.b16 %v300
      %v756 = vunpack.c.l.b16 %v301
      %v757 = vunpack.c.l.b16 %v302
      %v758 = vunpack.c.l.b16 %v303
      %v759 = vunpack.c.l.b16 %v304
      %v760 = vunpack.c.l.b16 %v305
      %v761 = vunpack.c.l.b16 %v306
      %v762 = vunpack.c.l.b16 %v307
      %v763 = vunpack.c.l.b16 %v308
      %v764 = vunpack.c.l.b16 %v309
      %v765 = vunpack.c.l.b16 %v310
      %v766 = vunpack.c.l.b16 %v311
      %v767 = vunpack.c.l.b16 %v312
      %v768 = vunpack.c.l.b16 %v313
      %v769 = vunpack.c.l.b16 %v314
      %v770 = vunpack.c.l.b16 %v315
      %v771 = vunpack.c.l.b16 %v316
      %v772 = vunpack.c.l.b16 %v317
      %v773 = vunpack.c.l.b16 %v318
      %v774 = vunpack.c.l.b16 %v319
      %v775 = vunpack.c.l.b16 %v320
      %v776 = vunpack.c.l.b16 %v321
      %v777 = vunpack.c.l.b16 %v322
      %v778 = vunpack.c.l.b16 %v323
      %v779 = vunpack.c.l.b16 %v324
      %v780 = vunpack.c.l.b16 %v325
      %v781 = vunpack.c.l.b16 %v326
      %v782 = vunpack.c.l.b16 %v327
      %v783 = vunpack.c.l.b16 %v328
      %v784 = vunpack.c.l.b16 %v329
      %v785 = vunpack.c.l.b16 %v330
      %v786 = vunpack.c.l.b16 %v331
      %v787 = vunpack.c.l.b16 %v332
      %v788 = vunpack.c.l.b16 %v333
      %v789 = vunpack.c.l.b16 %v334
      %v790 = vunpack.c.l.b16 %v335
      %v791 = vunpack.c.l.b16 %v336
      %v792 = vunpack.c.l.b16 %v337
      %v793 = vunpack.c.l.b16 %v338
      %v794 = vunpack.c.l.b16 %v339
      %v795 = vunpack.c.l.b16 %v340
      %v796 = vunpack.c.l.b16 %v341
      %v797 = vpack.c.b16 %v734, %v733
      %v798 = vpack.c.b16 %v736, %v735
      %v799 = vpack.c.b16 %v738, %v737
      %v800 = vpack.c.b16 %v740, %v739
      %v801 = vpack.c.b16 %v742, %v741
      %v802 = vpack.c.b16 %v744, %v743
      %v803 = vpack.c.b16 %v746, %v745
      %v804 = vpack.c.b16 %v748, %v747
      %v805 = vpack.c.b16 %v750, %v749
      %v806 = vpack.c.b16 %v752, %v751
      %v807 = vpack.c.b16 %v754, %v753
      %v808 = vpack.c.b16 %v756, %v755
      %v809 = vpack.c.b16 %v758, %v757
      %v810 = vpack.c.b16 %v760, %v759
      %v811 = vpack.c.b16 %v762, %v761
      %v812 = vpack.c.b16 %v764, %v763
      %v813 = vpack.c.b16 %v766, %v765
      %v814 = vpack.c.b16 %v768, %v767
      %v815 = vpack.c.b16 %v770, %v769
      %v816 = vpack.c.b16 %v772, %v771
      %v817 = vpack.c.b16 %v774, %v773
      %v818 = vpack.c.b16 %v776, %v775
      %v819 = vpack.c.b16 %v778, %v777
      %v820 = vpack.c.b16 %v780, %v779
      %v821 = vpack.c.b16 %v782, %v781
      %v822 = vpack.c.b16 %v784, %v783
      %v823 = vpack.c.b16 %v786, %v785
      %v824 = vpack.c.b16 %v788, %v787
      %v825 = vpack.c.b16 %v790, %v789
      %v826 = vpack.c.b16 %v792, %v791
      %v827 = vpack.c.b16 %v794, %v793
      %v828 = vpack.c.b16 %v796, %v795
      %861 = vmatprep.subr.bf16.mxu0 0
      %862 = vmatpush1.bf16.msra.mxu0 %v797
      %863 = vmatprep.subr.bf16.mxu0 0
      %864 = vmatpush1.bf16.msra.mxu0 %v798
      %865 = vmatprep.subr.bf16.mxu0 0
      %866 = vmatpush1.bf16.msra.mxu0 %v799
      %867 = vmatprep.subr.bf16.mxu0 0
      %868 = vmatpush1.bf16.msra.mxu0 %v800
      %869 = vmatprep.subr.bf16.mxu0 0
      %870 = vmatpush1.bf16.msra.mxu0 %v801
      %871 = vmatprep.subr.bf16.mxu0 0
      %872 = vmatpush1.bf16.msra.mxu0 %v802
      %873 = vmatprep.subr.bf16.mxu0 0
      %874 = vmatpush1.bf16.msra.mxu0 %v803
      %875 = vmatprep.subr.bf16.mxu0 0
      %876 = vmatpush1.bf16.msra.mxu0 %v804
      %877 = vmatprep.subr.bf16.mxu0 0
      %878 = vmatpush1.bf16.msra.mxu0 %v805
      %879 = vmatprep.subr.bf16.mxu0 0
      %880 = vmatpush1.bf16.msra.mxu0 %v806
      %881 = vmatprep.subr.bf16.mxu0 0
      %882 = vmatpush1.bf16.msra.mxu0 %v807
      %883 = vmatprep.subr.bf16.mxu0 0
      %884 = vmatpush1.bf16.msra.mxu0 %v808
      %885 = vmatprep.subr.bf16.mxu0 0
      %886 = vmatpush1.bf16.msra.mxu0 %v809
      %887 = vmatprep.subr.bf16.mxu0 0
      %888 = vmatpush1.bf16.msra.mxu0 %v810
      %889 = vmatprep.subr.bf16.mxu0 0
      %890 = vmatpush1.bf16.msra.mxu0 %v811
      %891 = vmatprep.subr.bf16.mxu0 0
      %892 = vmatpush1.bf16.msra.mxu0 %v812
      %893 = vmatprep.mubr.bf16.mxu0 %v542
      %894 = vmatmul.mubr.bf16.gmra.mrb[0].mxu0 %v541
      %v895 = vpop.f32.mrb[0].mxu0
      %v896 = vadd.f32 %v347, %v895
      %v897 = vpop.f32.mrb[0].mxu0
      %v898 = vpop.f32.mrb[0].mxu0
      %v899 = vadd.f32 %v347, %v898
      %v900 = vpop.f32.mrb[0].mxu0
      %901 = vmatprep.mubr.bf16.mxu0 %v546
      %902 = vmatmul.mubr.bf16.gmra.mrb[0].mxu0 %v545
      %v903 = vpop.f32.mrb[0].mxu0
      %v904 = vadd.f32 %v347, %v903
      %v905 = vpop.f32.mrb[0].mxu0
      %v906 = vpop.f32.mrb[0].mxu0
      %v907 = vadd.f32 %v347, %v906
      %v908 = vpop.f32.mrb[0].mxu0
      %909 = vmatprep.mubr.bf16.mxu0 %v550
      %910 = vmatmul.mubr.bf16.gmra.mrb[0].mxu0 %v549
      %v911 = vpop.f32.mrb[0].mxu0
      %v912 = vadd.f32 %v347, %v911
      %v913 = vpop.f32.mrb[0].mxu0
      %v914 = vpop.f32.mrb[0].mxu0
      %v915 = vadd.f32 %v347, %v914
      %v916 = vpop.f32.mrb[0].mxu0
      %917 = vmatprep.mubr.bf16.mxu0 %v554
      %918 = vmatmul.mubr.bf16.gmra.mrb[0].mxu0 %v553
      %v919 = vpop.f32.mrb[0].mxu0
      %v920 = vadd.f32 %v347, %v919
      %v921 = vpop.f32.mrb[0].mxu0
      %v922 = vpop.f32.mrb[0].mxu0
      %v923 = vadd.f32 %v347, %v922
      %v924 = vpop.f32.mrb[0].mxu0
      %925 = vmatprep.mubr.bf16.mxu0 %v558
      %926 = vmatmul.mubr.bf16.gmra.mrb[0].mxu0 %v557
      %v927 = vpop.f32.mrb[0].mxu0
      %v928 = vadd.f32 %v347, %v927
      %v929 = vpop.f32.mrb[0].mxu0
      %v930 = vpop.f32.mrb[0].mxu0
      %v931 = vadd.f32 %v347, %v930
      %v932 = vpop.f32.mrb[0].mxu0
      %933 = vmatprep.mubr.bf16.mxu0 %v562
      %934 = vmatmul.mubr.bf16.gmra.mrb[0].mxu0 %v561
      %v935 = vpop.f32.mrb[0].mxu0
      %v936 = vadd.f32 %v347, %v935
      %v937 = vpop.f32.mrb[0].mxu0
      %v938 = vpop.f32.mrb[0].mxu0
      %v939 = vadd.f32 %v347, %v938
      %v940 = vpop.f32.mrb[0].mxu0
      %941 = vmatprep.mubr.bf16.mxu0 %v566
      %942 = vmatmul.mubr.bf16.gmra.mrb[0].mxu0 %v565
      %v943 = vpop.f32.mrb[0].mxu0
      %v944 = vadd.f32 %v347, %v943
      %v945 = vpop.f32.mrb[0].mxu0
      %v946 = vpop.f32.mrb[0].mxu0
      %v947 = vadd.f32 %v347, %v946
      %v948 = vpop.f32.mrb[0].mxu0
      %949 = vmatprep.mubr.bf16.mxu0 %v570
      %950 = vmatmul.mubr.bf16.gmra.mrb[0].mxu0 %v569
      %v951 = vpop.f32.mrb[0].mxu0
      %v952 = vadd.f32 %v347, %v951
      %v953 = vpop.f32.mrb[0].mxu0
      %v954 = vpop.f32.mrb[0].mxu0
      %v955 = vadd.f32 %v347, %v954
      %v956 = vpop.f32.mrb[0].mxu0
      %957 = vmatprep.mubr.bf16.mxu0 %v574
      %958 = vmatmul.mubr.bf16.gmra.mrb[0].mxu0 %v573
      %v959 = vpop.f32.mrb[0].mxu0
      %v960 = vadd.f32 %v347, %v959
      %v961 = vpop.f32.mrb[0].mxu0
      %v962 = vpop.f32.mrb[0].mxu0
      %v963 = vadd.f32 %v347, %v962
      %v964 = vpop.f32.mrb[0].mxu0
      %965 = vmatprep.mubr.bf16.mxu0 %v578
      %966 = vmatmul.mubr.bf16.gmra.mrb[0].mxu0 %v577
      %v967 = vpop.f32.mrb[0].mxu0
      %v968 = vadd.f32 %v347, %v967
      %v969 = vpop.f32.mrb[0].mxu0
      %v970 = vpop.f32.mrb[0].mxu0
      %v971 = vadd.f32 %v347, %v970
      %v972 = vpop.f32.mrb[0].mxu0
      %973 = vmatprep.mubr.bf16.mxu0 %v582
      %974 = vmatmul.mubr.bf16.gmra.mrb[0].mxu0 %v581
      %v975 = vpop.f32.mrb[0].mxu0
      %v976 = vadd.f32 %v347, %v975
      %v977 = vpop.f32.mrb[0].mxu0
      %v978 = vpop.f32.mrb[0].mxu0
      %v979 = vadd.f32 %v347, %v978
      %v980 = vpop.f32.mrb[0].mxu0
      %981 = vmatprep.mubr.bf16.mxu0 %v586
      %982 = vmatmul.mubr.bf16.gmra.mrb[0].mxu0 %v585
      %v983 = vpop.f32.mrb[0].mxu0
      %v984 = vadd.f32 %v347, %v983
      %v985 = vpop.f32.mrb[0].mxu0
      %v986 = vpop.f32.mrb[0].mxu0
      %v987 = vadd.f32 %v347, %v986
      %v988 = vpop.f32.mrb[0].mxu0
      %989 = vmatprep.mubr.bf16.mxu0 %v590
      %990 = vmatmul.mubr.bf16.gmra.mrb[0].mxu0 %v589
      %v991 = vpop.f32.mrb[0].mxu0
      %v992 = vadd.f32 %v347, %v991
      %v993 = vpop.f32.mrb[0].mxu0
      %v994 = vpop.f32.mrb[0].mxu0
      %v995 = vadd.f32 %v347, %v994
      %v996 = vpop.f32.mrb[0].mxu0
      %997 = vmatprep.mubr.bf16.mxu0 %v594
      %998 = vmatmul.mubr.bf16.gmra.mrb[0].mxu0 %v593
      %v999 = vpop.f32.mrb[0].mxu0
      %v1000 = vadd.f32 %v347, %v999
      %v1001 = vpop.f32.mrb[0].mxu0
      %v1002 = vpop.f32.mrb[0].mxu0
      %v1003 = vadd.f32 %v347, %v1002
      %v1004 = vpop.f32.mrb[0].mxu0
      %1005 = vmatprep.mubr.bf16.mxu0 %v598
      %1006 = vmatmul.mubr.bf16.gmra.mrb[0].mxu0 %v597
      %v1007 = vpop.f32.mrb[0].mxu0
      %v1008 = vadd.f32 %v347, %v1007
      %v1009 = vpop.f32.mrb[0].mxu0
      %v1010 = vpop.f32.mrb[0].mxu0
      %v1011 = vadd.f32 %v347, %v1010
      %v1012 = vpop.f32.mrb[0].mxu0
      %1013 = vmatprep.mubr.bf16.mxu0 %v602
      %1014 = vmatmul.mubr.bf16.gmra.mrb[0].mxu0 %v601
      %v1015 = vpop.f32.mrb[0].mxu0
      %v1016 = vadd.f32 %v347, %v1015
      %v1017 = vpop.f32.mrb[0].mxu0
      %v1018 = vpop.f32.mrb[0].mxu0
      %v1019 = vadd.f32 %v347, %v1018
      %v1020 = vpop.f32.mrb[0].mxu0
      %1021 = vdwg.mxu0
      %1022 = vmatprep.subr.bf16.mxu0 0
      %1023 = vmatpush1.bf16.msra.mxu0 %v813
      %1024 = vmatprep.subr.bf16.mxu0 0
      %1025 = vmatpush1.bf16.msra.mxu0 %v814
      %1026 = vmatprep.subr.bf16.mxu0 0
      %1027 = vmatpush1.bf16.msra.mxu0 %v815
      %1028 = vmatprep.subr.bf16.mxu0 0
      %1029 = vmatpush1.bf16.msra.mxu0 %v816
      %1030 = vmatprep.subr.bf16.mxu0 0
      %1031 = vmatpush1.bf16.msra.mxu0 %v817
      %1032 = vmatprep.subr.bf16.mxu0 0
      %1033 = vmatpush1.bf16.msra.mxu0 %v818
      %1034 = vmatprep.subr.bf16.mxu0 0
      %1035 = vmatpush1.bf16.msra.mxu0 %v819
      %1036 = vmatprep.subr.bf16.mxu0 0
      %1037 = vmatpush1.bf16.msra.mxu0 %v820
      %1038 = vmatprep.subr.bf16.mxu0 0
      %1039 = vmatpush1.bf16.msra.mxu0 %v821
      %1040 = vmatprep.subr.bf16.mxu0 0
      %1041 = vmatpush1.bf16.msra.mxu0 %v822
      %1042 = vmatprep.subr.bf16.mxu0 0
      %1043 = vmatpush1.bf16.msra.mxu0 %v823
      %1044 = vmatprep.subr.bf16.mxu0 0
      %1045 = vmatpush1.bf16.msra.mxu0 %v824
      %1046 = vmatprep.subr.bf16.mxu0 0
      %1047 = vmatpush1.bf16.msra.mxu0 %v825
      %1048 = vmatprep.subr.bf16.mxu0 0
      %1049 = vmatpush1.bf16.msra.mxu0 %v826
      %1050 = vmatprep.subr.bf16.mxu0 0
      %1051 = vmatpush1.bf16.msra.mxu0 %v827
      %1052 = vmatprep.subr.bf16.mxu0 0
      %1053 = vmatpush1.bf16.msra.mxu0 %v828
      %1054 = vmatprep.mubr.bf16.mxu0 %v544
      %1055 = vmatmul.mubr.bf16.gmra.mrb[0].mxu0 %v543
      %v1056 = vpop.f32.mrb[0].mxu0
      %v1057 = vadd.f32 %v896, %v1056
      %v1058 = vpop.f32.mrb[0].mxu0
      %v1059 = vpop.f32.mrb[0].mxu0
      %v1060 = vadd.f32 %v899, %v1059
      %v1061 = vpop.f32.mrb[0].mxu0
      %1062 = vmatprep.mubr.bf16.mxu0 %v548
      %1063 = vmatmul.mubr.bf16.gmra.mrb[0].mxu0 %v547
      %v1064 = vpop.f32.mrb[0].mxu0
      %v1065 = vadd.f32 %v904, %v1064
      %v1066 = vpop.f32.mrb[0].mxu0
      %v1067 = vpop.f32.mrb[0].mxu0
      %v1068 = vadd.f32 %v907, %v1067
      %v1069 = vpop.f32.mrb[0].mxu0
      %1070 = vmatprep.mubr.bf16.mxu0 %v552
      %1071 = vmatmul.mubr.bf16.gmra.mrb[0].mxu0 %v551
      %v1072 = vpop.f32.mrb[0].mxu0
      %v1073 = vadd.f32 %v912, %v1072
      %v1074 = vpop.f32.mrb[0].mxu0
      %v1075 = vpop.f32.mrb[0].mxu0
      %v1076 = vadd.f32 %v915, %v1075
      %v1077 = vpop.f32.mrb[0].mxu0
      %1078 = vmatprep.mubr.bf16.mxu0 %v556
      %1079 = vmatmul.mubr.bf16.gmra.mrb[0].mxu0 %v555
      %v1080 = vpop.f32.mrb[0].mxu0
      %v1081 = vadd.f32 %v920, %v1080
      %v1082 = vpop.f32.mrb[0].mxu0
      %v1083 = vpop.f32.mrb[0].mxu0
      %v1084 = vadd.f32 %v923, %v1083
      %v1085 = vpop.f32.mrb[0].mxu0
      %1086 = vmatprep.mubr.bf16.mxu0 %v560
      %1087 = vmatmul.mubr.bf16.gmra.mrb[0].mxu0 %v559
      %v1088 = vpop.f32.mrb[0].mxu0
      %v1089 = vadd.f32 %v928, %v1088
      %v1090 = vpop.f32.mrb[0].mxu0
      %v1091 = vpop.f32.mrb[0].mxu0
      %v1092 = vadd.f32 %v931, %v1091
      %v1093 = vpop.f32.mrb[0].mxu0
      %1094 = vmatprep.mubr.bf16.mxu0 %v564
      %1095 = vmatmul.mubr.bf16.gmra.mrb[0].mxu0 %v563
      %v1096 = vpop.f32.mrb[0].mxu0
      %v1097 = vadd.f32 %v936, %v1096
      %v1098 = vpop.f32.mrb[0].mxu0
      %v1099 = vpop.f32.mrb[0].mxu0
      %v1100 = vadd.f32 %v939, %v1099
      %v1101 = vpop.f32.mrb[0].mxu0
      %1102 = vmatprep.mubr.bf16.mxu0 %v568
      %1103 = vmatmul.mubr.bf16.gmra.mrb[0].mxu0 %v567
      %v1104 = vpop.f32.mrb[0].mxu0
      %v1105 = vadd.f32 %v944, %v1104
      %v1106 = vpop.f32.mrb[0].mxu0
      %v1107 = vpop.f32.mrb[0].mxu0
      %v1108 = vadd.f32 %v947, %v1107
      %v1109 = vpop.f32.mrb[0].mxu0
      %1110 = vmatprep.mubr.bf16.mxu0 %v572
      %1111 = vmatmul.mubr.bf16.gmra.mrb[0].mxu0 %v571
      %v1112 = vpop.f32.mrb[0].mxu0
      %v1113 = vadd.f32 %v952, %v1112
      %v1114 = vpop.f32.mrb[0].mxu0
      %v1115 = vpop.f32.mrb[0].mxu0
      %v1116 = vadd.f32 %v955, %v1115
      %v1117 = vpop.f32.mrb[0].mxu0
      %1118 = vmatprep.mubr.bf16.mxu0 %v576
      %1119 = vmatmul.mubr.bf16.gmra.mrb[0].mxu0 %v575
      %v1120 = vpop.f32.mrb[0].mxu0
      %v1121 = vadd.f32 %v960, %v1120
      %v1122 = vpop.f32.mrb[0].mxu0
      %v1123 = vpop.f32.mrb[0].mxu0
      %v1124 = vadd.f32 %v963, %v1123
      %v1125 = vpop.f32.mrb[0].mxu0
      %1126 = vmatprep.mubr.bf16.mxu0 %v580
      %1127 = vmatmul.mubr.bf16.gmra.mrb[0].mxu0 %v579
      %v1128 = vpop.f32.mrb[0].mxu0
      %v1129 = vadd.f32 %v968, %v1128
      %v1130 = vpop.f32.mrb[0].mxu0
      %v1131 = vpop.f32.mrb[0].mxu0
      %v1132 = vadd.f32 %v971, %v1131
      %v1133 = vpop.f32.mrb[0].mxu0
      %1134 = vmatprep.mubr.bf16.mxu0 %v584
      %1135 = vmatmul.mubr.bf16.gmra.mrb[0].mxu0 %v583
      %v1136 = vpop.f32.mrb[0].mxu0
      %v1137 = vadd.f32 %v976, %v1136
      %v1138 = vpop.f32.mrb[0].mxu0
      %v1139 = vpop.f32.mrb[0].mxu0
      %v1140 = vadd.f32 %v979, %v1139
      %v1141 = vpop.f32.mrb[0].mxu0
      %1142 = vmatprep.mubr.bf16.mxu0 %v588
      %1143 = vmatmul.mubr.bf16.gmra.mrb[0].mxu0 %v587
      %v1144 = vpop.f32.mrb[0].mxu0
      %v1145 = vadd.f32 %v984, %v1144
      %v1146 = vpop.f32.mrb[0].mxu0
      %v1147 = vpop.f32.mrb[0].mxu0
      %v1148 = vadd.f32 %v987, %v1147
      %v1149 = vpop.f32.mrb[0].mxu0
      %1150 = vmatprep.mubr.bf16.mxu0 %v592
      %1151 = vmatmul.mubr.bf16.gmra.mrb[0].mxu0 %v591
      %v1152 = vpop.f32.mrb[0].mxu0
      %v1153 = vadd.f32 %v992, %v1152
      %v1154 = vpop.f32.mrb[0].mxu0
      %v1155 = vpop.f32.mrb[0].mxu0
      %v1156 = vadd.f32 %v995, %v1155
      %v1157 = vpop.f32.mrb[0].mxu0
      %1158 = vmatprep.mubr.bf16.mxu0 %v596
      %1159 = vmatmul.mubr.bf16.gmra.mrb[0].mxu0 %v595
      %v1160 = vpop.f32.mrb[0].mxu0
      %v1161 = vadd.f32 %v1000, %v1160
      %v1162 = vpop.f32.mrb[0].mxu0
      %v1163 = vpop.f32.mrb[0].mxu0
      %v1164 = vadd.f32 %v1003, %v1163
      %v1165 = vpop.f32.mrb[0].mxu0
      %1166 = vmatprep.mubr.bf16.mxu0 %v600
      %1167 = vmatmul.mubr.bf16.gmra.mrb[0].mxu0 %v599
      %v1168 = vpop.f32.mrb[0].mxu0
      %v1169 = vadd.f32 %v1008, %v1168
      %v1170 = vpop.f32.mrb[0].mxu0
      %v1171 = vpop.f32.mrb[0].mxu0
      %v1172 = vadd.f32 %v1011, %v1171
      %v1173 = vpop.f32.mrb[0].mxu0
      %1174 = vmatprep.mubr.bf16.mxu0 %v604
      %1175 = vmatmul.mubr.bf16.gmra.mrb[0].mxu0 %v603
      %v1176 = vpop.f32.mrb[0].mxu0
      %v1177 = vadd.f32 %v1016, %v1176
      %v1178 = vpop.f32.mrb[0].mxu0
      %v1179 = vpop.f32.mrb[0].mxu0
      %v1180 = vadd.f32 %v1019, %v1179
      %v1181 = vpop.f32.mrb[0].mxu0
      %1182 = vdwg.mxu0
      %v1183 = vtanh.pop %v1057
      %v1184 = vtanh.pop %v1060
      %v1185 = vtanh.pop %v1065
      %v1186 = vtanh.pop %v1068
      %v1187 = vtanh.pop %v1073
      %v1188 = vtanh.pop %v1076
      %v1189 = vtanh.pop %v1081
      %v1190 = vtanh.pop %v1084
      %v1191 = vtanh.pop %v1089
      %v1192 = vtanh.pop %v1092
      %v1193 = vtanh.pop %v1097
      %v1194 = vtanh.pop %v1100
      %v1195 = vtanh.pop %v1105
      %v1196 = vtanh.pop %v1108
      %v1197 = vtanh.pop %v1113
      %v1198 = vtanh.pop %v1116
      %v1199 = vtanh.pop %v1121
      %v1200 = vtanh.pop %v1124
      %v1201 = vtanh.pop %v1129
      %v1202 = vtanh.pop %v1132
      %v1203 = vtanh.pop %v1137
      %v1204 = vtanh.pop %v1140
      %v1205 = vtanh.pop %v1145
      %v1206 = vtanh.pop %v1148
      %v1207 = vtanh.pop %v1153
      %v1208 = vtanh.pop %v1156
      %v1209 = vtanh.pop %v1161
      %v1210 = vtanh.pop %v1164
      %v1211 = vtanh.pop %v1169
      %v1212 = vtanh.pop %v1172
      %v1213 = vtanh.pop %v1177
      %v1214 = vtanh.pop %v1180
      %1215 = vst [vmem:[%s211] sm:$0xff] %v1183
      %1216 = vst [vmem:[%s211 + $0x8] sm:$0xff] %v1184
      %1217 = vst [vmem:[%s211 + $0x10] sm:$0xff] %v1185
      %1218 = vst [vmem:[%s211 + $0x18] sm:$0xff] %v1186
      %1219 = vst [vmem:[%s211 + $0x20] sm:$0xff] %v1187
      %1220 = vst [vmem:[%s211 + $0x28] sm:$0xff] %v1188
      %1221 = vst [vmem:[%s211 + $0x30] sm:$0xff] %v1189
      %1222 = vst [vmem:[%s211 + $0x38] sm:$0xff] %v1190
      %1223 = vst [vmem:[%s211 + $0x40] sm:$0xff] %v1191
      %1224 = vst [vmem:[%s211 + $0x48] sm:$0xff] %v1192
      %1225 = vst [vmem:[%s211 + $0x50] sm:$0xff] %v1193
      %1226 = vst [vmem:[%s211 + $0x58] sm:$0xff] %v1194
      %1227 = vst [vmem:[%s211 + $0x60] sm:$0xff] %v1195
      %1228 = vst [vmem:[%s211 + $0x68] sm:$0xff] %v1196
      %1229 = vst [vmem:[%s211 + $0x70] sm:$0xff] %v1197
      %1230 = vst [vmem:[%s211 + $0x78] sm:$0xff] %v1198
      %1231 = vst [vmem:[%s211 + $0x80] sm:$0xff] %v1199
      %1232 = vst [vmem:[%s211 + $0x88] sm:$0xff] %v1200
      %1233 = vst [vmem:[%s211 + $0x90] sm:$0xff] %v1201
      %1234 = vst [vmem:[%s211 + $0x98] sm:$0xff] %v1202
      %1235 = vst [vmem:[%s211 + $0xa0] sm:$0xff] %v1203
      %1236 = vst [vmem:[%s211 + $0xa8] sm:$0xff] %v1204
      %1237 = vst [vmem:[%s211 + $0xb0] sm:$0xff] %v1205
      %1238 = vst [vmem:[%s211 + $0xb8] sm:$0xff] %v1206
      %1239 = vst [vmem:[%s211 + $0xc0] sm:$0xff] %v1207
      %1240 = vst [vmem:[%s211 + $0xc8] sm:$0xff] %v1208
      %1241 = vst [vmem:[%s211 + $0xd0] sm:$0xff] %v1209
      %1242 = vst [vmem:[%s211 + $0xd8] sm:$0xff] %v1210
      %1243 = vst [vmem:[%s211 + $0xe0] sm:$0xff] %v1211
      %1244 = vst [vmem:[%s211 + $0xe8] sm:$0xff] %v1212
      %1245 = vst [vmem:[%s211 + $0xf0] sm:$0xff] %v1213
      %1246 = vst [vmem:[%s211 + $0xf8] sm:$0xff] %v1214
      %s1247 = smul.u32 32, %s19
      %p1248 = scmp.lt.s32.totalorder %s18, 1
      %s1249 = scalar_select %p1248, %s18, 1
      %p1250 = scmp.lt.s32.totalorder %s1247, 31
      %s1251 = scalar_select %p1250, %s1247, 31
      %s1252 = smul.addr %s1249, 32
      %s1253 = sadd.s32 %s1251, %s1252
      %s1254 = smul.addr %s1253, 8
      %s1255 = scalar_lea.vmem %s3, %s1254
      // Predicated region
      $region33: #{generator_forward.19} parent=31 // pred_check
        %p1256 = pneg %p116
      $region34: #{generator_forward.19} parent=31 // pred_check_branch
        %1258 = sbr.rel (%p1256) target = $region36
      $region35: #{generator_forward.19} parent=31 // pred_region
        %s1259 = smul.u32 32, %s19
      $region36: #{generator_forward.19} parent=31 // pred_fallthru
        _
    $region32: #{generator_forward.19} parent=5 // pred_fallthru
      _
    %p1260 = scmp.le.s32.totalorder 2, %s9
    // Predicated region
    $region37: #{generator_forward.19} parent=5 // pred_check
      %p1261 = pneg %p1260
    $region38: #{generator_forward.19} parent=5 // pred_check_branch
      %1263 = sbr.rel (%p1261) target = $region40
    $region39: #{generator_forward.19} parent=5 // pred_region
      %s1264 = ssub.s32 %s9, 2
      // Predicated region
      $region41: #{generator_forward.19} parent=39 // pred_check
        %p1265 = pneg %p122
      $region42: #{generator_forward.19} parent=39 // pred_check_branch
        %1267 = sbr.rel (%p1265) target = $region44
      $region43: #{generator_forward.19} parent=39 // pred_region
        %s1268 = smul.u32 32, %s21
        %p1269 = scmp.lt.s32.totalorder %s20, 1
        %s1270 = scalar_select %p1269, %s20, 1
        %p1271 = scmp.lt.s32.totalorder %s1268, 31
        %s1272 = scalar_select %p1271, %s1268, 31
        %s1273 = smul.addr %s1270, 32
        %s1274 = sadd.s32 %s1272, %s1273
        %s1275 = smul.addr %s1274, 8
        %s1276 = scalar_lea.vmem %s3, %s1275
      $region44: #{generator_forward.19} parent=39 // pred_fallthru
        _
    $region40: #{generator_forward.19} parent=5 // pred_fallthru
      _
  $region6: #{generator_forward.19} parent=0 // loop_footer
    %s13 = sadd.s32 1, %s9
  $region7: #{generator_forward.19} parent=0 // loop_footer_branch
    %8 = sbr.rel target = $region3
  $region8: #{generator_forward.19} parent=0 // loop_exit
    _

</llo_original>
